<compile_context>
chip_gen: v5e
topology: v5e:2x2
jax: 0.10.0
libtpu: 0.0.40
codegen_flags: <defaults>
</compile_context>

<pallas_src>
import functools

import jax
import jax.numpy as jnp
import numpy as np
from jax.experimental import pallas as pl
from jax.experimental.pallas import tpu as pltpu

EPS_NORM = 1e-8          # gvp._norm_no_nan eps
EPS_LN = 1e-5            # nn.LayerNorm eps
MAX_TILE = 256           # row tile for node/edge kernels (multiple of 128)
BF16 = jnp.bfloat16


# ----------------------------------------------------------------------------
# tiling / padding helpers
# ----------------------------------------------------------------------------
def _round_up(x, m):
    return (x + m - 1) // m * m


def _tiling(m, max_tile=MAX_TILE):
    """Return (tile, padded_rows).  tile is a multiple of 16 or == padded rows."""
    m16 = _round_up(max(int(m), 1), 16)
    if m16 <= max_tile:
        return m16, m16
    return max_tile, _round_up(int(m), max_tile)


def _tile_for(m_padded, max_tile=MAX_TILE):
    if m_padded <= max_tile:
        return m_padded
    assert m_padded % max_tile == 0
    return max_tile


def _pad_rows(x, rows):
    pad = rows - x.shape[0]
    if pad == 0:
        return x
    return jnp.pad(x, ((0, pad), (0, 0)))


def _row_spec(tm, width):
    return pl.BlockSpec((tm, width), lambda i: (i, 0))


def _full_spec(arr):
    return pl.BlockSpec(arr.shape, lambda i: (0, 0))


_GVP_KEYS = ("whT", "ws_sT", "ws_nT", "b", "wvT")


def _gvp_weights(p):
    return [p[k] for k in _GVP_KEYS]


# ----------------------------------------------------------------------------
# in-kernel building blocks (operate on loaded values, not refs)
# ----------------------------------------------------------------------------
def _ln_block(s, vx, vy, vz, g, be):
    """gvp.LayerNorm: standard LN on scalars, RMS-style norm on vector channels."""
    mu = jnp.mean(s, axis=-1, keepdims=True)
    d = s - mu
    var = jnp.mean(d * d, axis=-1, keepdims=True)
    s_out = d * jax.lax.rsqrt(var + EPS_LN) * g + be
    sq = jnp.maximum(vx * vx + vy * vy + vz * vz, EPS_NORM)       # per-channel |v|^2
    inv = jax.lax.rsqrt(jnp.mean(sq, axis=-1, keepdims=True))     # 1/sqrt(mean over C)
    return s_out, vx * inv, vy * inv, vz * inv


def _gvp_block(s, vx, vy, vz, whT, wssT, wsnT, b, wvT, relu, vsig):
    """One GVP (vector_gate=False). xyz planes stacked -> single wh/wv matmuls."""
    tm = s.shape[0]
    vcat = jnp.concatenate([vx, vy, vz], axis=0).astype(BF16)       # (3*tm, VI)
    vh = jnp.dot(vcat, whT, preferred_element_type=jnp.float32)     # (3*tm, H)
    vhx, vhy, vhz = vh[:tm], vh[tm:2 * tm], vh[2 * tm:]
    vn = jnp.sqrt(jnp.maximum(vhx * vhx + vhy * vhy + vhz * vhz, EPS_NORM))
    so = (jnp.dot(s.astype(BF16), wssT, preferred_element_type=jnp.float32)
          + jnp.dot(vn.astype(BF16), wsnT, preferred_element_type=jnp.float32)
          + b)
    if relu:
        so = jnp.maximum(so, 0.0)
    if wvT is None:
        return so
    vo = jnp.dot(vh.astype(BF16), wvT, preferred_element_type=jnp.float32)  # (3*tm, VO)
    vox, voy, voz = vo[:tm], vo[tm:2 * tm], vo[2 * tm:]
    if vsig:  # vector_act = sigmoid of per-channel vector norm
        gn = jnp.sqrt(jnp.maximum(vox * vox + voy * voy + voz * voz, EPS_NORM))
        gate = jax.nn.sigmoid(gn)
        vox, voy, voz = vox * gate, voy * gate, voz * gate
    return so, vox, voy, voz


# ----------------------------------------------------------------------------
# fused Pallas kernels
# ----------------------------------------------------------------------------
def _ln_gvp_kernel(s_ref, vx_ref, vy_ref, vz_ref,
                   g_ref, be_ref, whT_ref, wssT_ref, wsnT_ref, b_ref, wvT_ref,
                   so_ref, vox_ref, voy_ref, voz_ref, *, relu, vsig):
    s, vx, vy, vz = _ln_block(s_ref[...], vx_ref[...], vy_ref[...], vz_ref[...],
                              g_ref[...], be_ref[...])
    so, vox, voy, voz = _gvp_block(s, vx, vy, vz,
                                   whT_ref[...], wssT_ref[...], wsnT_ref[...],
                                   b_ref[...], wvT_ref[...], relu, vsig)
    so_ref[...] = so
    vox_ref[...] = vox
    voy_ref[...] = voy
    voz_ref[...] = voz


def _ln_gvp_scalar_kernel(s_ref, vx_ref, vy_ref, vz_ref,
                          g_ref, be_ref, whT_ref, wssT_ref, wsnT_ref, b_ref,
                          so_ref, *, relu):
    s, vx, vy, vz = _ln_block(s_ref[...], vx_ref[...], vy_ref[...], vz_ref[...],
                              g_ref[...], be_ref[...])
    so_ref[...] = _gvp_block(s, vx, vy, vz,
                             whT_ref[...], wssT_ref[...], wsnT_ref[...],
                             b_ref[...], None, relu, False)


def _msg_chain_kernel(s_ref, vx_ref, vy_ref, vz_ref, *refs):
    """3 chained GVPs of the GVPConv message function (relu/sig, relu/sig, none)."""
    w = [r[...] for r in refs[:15]]
    so_ref, vox_ref, voy_ref, voz_ref = refs[15:]
    s, vx, vy, vz = s_ref[...], vx_ref[...], vy_ref[...], vz_ref[...]
    s, vx, vy, vz = _gvp_block(s, vx, vy, vz, *w[0:5], relu=True, vsig=True)
    s, vx, vy, vz = _gvp_block(s, vx, vy, vz, *w[5:10], relu=True, vsig=True)
    s, vx, vy, vz = _gvp_block(s, vx, vy, vz, *w[10:15], relu=False, vsig=False)
    so_ref[...] = s.astype(so_ref.dtype)
    vox_ref[...] = vx.astype(vox_ref.dtype)
    voy_ref[...] = vy.astype(voy_ref.dtype)
    voz_ref[...] = vz.astype(voz_ref.dtype)


def _node_update_kernel(s_ref, vx_ref, vy_ref, vz_ref,
                        ds_ref, dvx_ref, dvy_ref, dvz_ref, *refs):
    """residual + LN(norm0) + 2-GVP feed-forward + residual + LN(norm1)."""
    n0g, n0b = refs[0][...], refs[1][...]
    w1 = [refs[i][...] for i in range(2, 7)]
    w2 = [refs[i][...] for i in range(7, 12)]
    n1g, n1b = refs[12][...], refs[13][...]
    so_ref, vox_ref, voy_ref, voz_ref = refs[14:]

    s = s_ref[...] + ds_ref[...]
    vx = vx_ref[...] + dvx_ref[...]
    vy = vy_ref[...] + dvy_ref[...]
    vz = vz_ref[...] + dvz_ref[...]
    s, vx, vy, vz = _ln_block(s, vx, vy, vz, n0g, n0b)

    fs, fvx, fvy, fvz = _gvp_block(s, vx, vy, vz, *w1, relu=True, vsig=True)
    fs, fvx, fvy, fvz = _gvp_block(fs, fvx, fvy, fvz, *w2, relu=False, vsig=False)

    s, vx, vy, vz = _ln_block(s + fs, vx + fvx, vy + fvy, vz + fvz, n1g, n1b)
    so_ref[...] = s
    vox_ref[...] = vx
    voy_ref[...] = vy
    voz_ref[...] = vz


def _segmean_kernel(dst_ref, ms_ref, mvx_ref, mvy_ref, mvz_ref,
                    os_ref, ovx_ref, ovy_ref, ovz_ref, cnt_ref, *, n_nodes):
    """Edge-tiled scatter-mean to target nodes via one-hot matmul accumulation."""
    e = pl.program_id(0)

    @pl.when(e == 0)
    def _init():
        os_ref[...] = jnp.zeros_like(os_ref)
        ovx_ref[...] = jnp.zeros_like(ovx_ref)
        ovy_ref[...] = jnp.zeros_like(ovy_ref)
        ovz_ref[...] = jnp.zeros_like(ovz_ref)
        cnt_ref[...] = jnp.zeros_like(cnt_ref)

    dst = dst_ref[...]                                              # (1, TE) int32
    te = dst.shape[1]
    rows = jax.lax.broadcasted_iota(jnp.int32, (n_nodes, te), 0)    # (N, TE)
    onehot = (rows == dst).astype(jnp.float32)                      # padded edges -> 0
    cnt_ref[...] += jnp.sum(onehot, axis=1, keepdims=True)          # counts in f32
    oh = onehot.astype(BF16)
    os_ref[...] += jnp.dot(oh, ms_ref[...], preferred_element_type=jnp.float32)
    ovx_ref[...] += jnp.dot(oh, mvx_ref[...], preferred_element_type=jnp.float32)
    ovy_ref[...] += jnp.dot(oh, mvy_ref[...], preferred_element_type=jnp.float32)
    ovz_ref[...] += jnp.dot(oh, mvz_ref[...], preferred_element_type=jnp.float32)

    @pl.when(e == pl.num_programs(0) - 1)
    def _finalize():
        inv = pl.reciprocal(jnp.maximum(cnt_ref[...], 1.0), approx=True)
        os_ref[...] = os_ref[...] * inv
        ovx_ref[...] = ovx_ref[...] * inv
        ovy_ref[...] = ovy_ref[...] * inv
        ovz_ref[...] = ovz_ref[...] * inv


# ----------------------------------------------------------------------------
# pallas_call wrappers (inputs assumed already row-padded)
# ----------------------------------------------------------------------------
def ln_gvp_apply(ln_p, gvp_p, s, vx, vy, vz):
    M, SI = s.shape
    VI = vx.shape[1]
    SO = gvp_p["b"].shape[1]
    tm = _tile_for(M)
    grid = (M // tm,)
    cp = pltpu.CompilerParams(dimension_semantics=("parallel",))

    in_specs = ([_row_spec(tm, SI)] + [_row_spec(tm, VI)] * 3 +
                [_full_spec(ln_p["g"]), _full_spec(ln_p["b"]),
                 _full_spec(gvp_p["whT"]), _full_spec(gvp_p["ws_sT"]),
                 _full_spec(gvp_p["ws_nT"]), _full_spec(gvp_p["b"])])
    args = [s, vx, vy, vz, ln_p["g"], ln_p["b"],
            gvp_p["whT"], gvp_p["ws_sT"], gvp_p["ws_nT"], gvp_p["b"]]

    if gvp_p["wvT"] is None:
        out_shape = jax.ShapeDtypeStruct((M, SO), jnp.float32)
        out_specs = _row_spec(tm, SO)
        kern = functools.partial(_ln_gvp_scalar_kernel, relu=gvp_p["relu"])
        return pl.pallas_call(kern, grid=grid, in_specs=in_specs,
                              out_specs=out_specs, out_shape=out_shape,
                              compiler_params=cp)(*args)

    VO = gvp_p["wvT"].shape[1]
    in_specs.append(_full_spec(gvp_p["wvT"]))
    args.append(gvp_p["wvT"])
    out_shape = tuple(jax.ShapeDtypeStruct((M, w), jnp.float32)
                      for w in (SO, VO, VO, VO))
    out_specs = tuple(_row_spec(tm, w) for w in (SO, VO, VO, VO))
    kern = functools.partial(_ln_gvp_kernel, relu=gvp_p["relu"], vsig=gvp_p["vsig"])
    return pl.pallas_call(kern, grid=grid, in_specs=in_specs,
                          out_specs=out_specs, out_shape=out_shape,
                          compiler_params=cp)(*args)


def msg_chain_apply(gvps, ms, mvx, mvy, mvz):
    E, SI = ms.shape
    VI = mvx.shape[1]
    te = _tile_for(E)
    grid = (E // te,)
    SO = gvps[-1]["b"].shape[1]
    VO = gvps[-1]["wvT"].shape[1]
    weights = []
    for gp in gvps:
        weights += _gvp_weights(gp)
    in_specs = ([_row_spec(te, SI)] + [_row_spec(te, VI)] * 3 +
                [_full_spec(w) for w in weights])
    out_shape = tuple(jax.ShapeDtypeStruct((E, w), BF16) for w in (SO, VO, VO, VO))
    out_specs = tuple(_row_spec(te, w) for w in (SO, VO, VO, VO))
    return pl.pallas_call(
        _msg_chain_kernel, grid=grid, in_specs=in_specs, out_specs=out_specs,
        out_shape=out_shape,
        compiler_params=pltpu.CompilerParams(dimension_semantics=("parallel",)),
    )(ms, mvx, mvy, mvz, *weights)


def segment_mean_apply(dst_scatter, ms, mvx, mvy, mvz, n_nodes):
    E, SO = ms.shape
    VO = mvx.shape[1]
    te = _tile_for(E)                 # te == E (grid 1) or 256 (multiple of 128)
    grid = (E // te,)
    dst2 = dst_scatter.reshape(1, E).astype(jnp.int32)
    in_specs = [pl.BlockSpec((1, te), lambda e: (0, e)),
                pl.BlockSpec((te, SO), lambda e: (e, 0)),
                pl.BlockSpec((te, VO), lambda e: (e, 0)),
                pl.BlockSpec((te, VO), lambda e: (e, 0)),
                pl.BlockSpec((te, VO), lambda e: (e, 0))]
    out_shape = tuple(jax.ShapeDtypeStruct((n_nodes, w), jnp.float32)
                      for w in (SO, VO, VO, VO))
    out_specs = tuple(pl.BlockSpec((n_nodes, w), lambda e: (0, 0))
                      for w in (SO, VO, VO, VO))
    kern = functools.partial(_segmean_kernel, n_nodes=n_nodes)
    return pl.pallas_call(
        kern, grid=grid, in_specs=in_specs, out_specs=out_specs,
        out_shape=out_shape,
        scratch_shapes=[pltpu.VMEM((n_nodes, 1), jnp.float32)],
        compiler_params=pltpu.CompilerParams(dimension_semantics=("arbitrary",)),
    )(dst2, ms, mvx, mvy, mvz)


def node_update_apply(lp, s, vx, vy, vz, ds, dvx, dvy, dvz):
    M, S = s.shape
    V = vx.shape[1]
    tm = _tile_for(M)
    grid = (M // tm,)
    weights = ([lp["norm0"]["g"], lp["norm0"]["b"]]
               + _gvp_weights(lp["ff"][0]) + _gvp_weights(lp["ff"][1])
               + [lp["norm1"]["g"], lp["norm1"]["b"]])
    in_specs = ([_row_spec(tm, S)] + [_row_spec(tm, V)] * 3 +
                [_row_spec(tm, S)] + [_row_spec(tm, V)] * 3 +
                [_full_spec(w) for w in weights])
    out_shape = tuple(jax.ShapeDtypeStruct((M, w), jnp.float32)
                      for w in (S, V, V, V))
    out_specs = tuple(_row_spec(tm, w) for w in (S, V, V, V))
    return pl.pallas_call(
        _node_update_kernel, grid=grid, in_specs=in_specs, out_specs=out_specs,
        out_shape=out_shape,
        compiler_params=pltpu.CompilerParams(dimension_semantics=("parallel",)),
    )(s, vx, vy, vz, ds, dvx, dvy, dvz, *weights)


# ----------------------------------------------------------------------------
# parameter init (deterministic, PyTorch-Linear-style uniform; matmul weights bf16)
# ----------------------------------------------------------------------------
def _init_linear(key, out_d, in_d, bias=True):
    bound = 1.0 / np.sqrt(in_d)
    kw, kb = jax.random.split(key)
    w = jax.random.uniform(kw, (out_d, in_d), jnp.float32, -bound, bound)
    b = (jax.random.uniform(kb, (out_d,), jnp.float32, -bound, bound)
         if bias else None)
    return w, b


def init_gvp(key, in_dims, out_dims, activations):
    si, vi = in_dims
    so, vo = out_dims
    h = max(vi, vo)
    k1, k2, k3 = jax.random.split(key, 3)
    wh, _ = _init_linear(k1, h, vi, bias=False)
    ws, bs = _init_linear(k2, so, si + h, bias=True)
    p = dict(
        whT=wh.T.astype(BF16),             # [VI, H]
        ws_sT=ws[:, :si].T.astype(BF16),   # [SI, SO]
        ws_nT=ws[:, si:].T.astype(BF16),   # [H,  SO]
        b=bs.reshape(1, so),               # [1,  SO]  (f32)
        relu=(activations[0] == "relu"),
        vsig=(activations[1] == "sigmoid") and vo > 0,
        wvT=None,
    )
    if vo:
        wv, _ = _init_linear(k3, vo, h, bias=False)
        p["wvT"] = wv.T.astype(BF16)       # [H, VO]
    return p


def init_ln(s_dim):
    return dict(g=jnp.ones((1, s_dim), jnp.float32),
                b=jnp.zeros((1, s_dim), jnp.float32))


def init_model(key, node_in, node_h, edge_in, edge_h, num_layers):
    ks = jax.random.split(key, 3 + num_layers)
    ns, nv = node_h
    se, ve = edge_h
    params = {
        "wv_ln": init_ln(node_in[0]),
        "wv_gvp": init_gvp(ks[0], node_in, node_h, (None, None)),
        "we_ln": init_ln(edge_in[0]),
        "we_gvp": init_gvp(ks[1], edge_in, edge_h, (None, None)),
        "layers": [],
        "wout_ln": init_ln(ns),
        "wout_gvp": init_gvp(ks[2 + num_layers], node_h, (ns, 0),
                             ("relu", "sigmoid")),
    }
    msg_in = (2 * ns + se, 2 * nv + ve)
    hid = (4 * ns, 2 * nv)
    for l in range(num_layers):
        lk = jax.random.split(ks[2 + l], 5)
        params["layers"].append(dict(
            msg=[init_gvp(lk[0], msg_in, node_h, ("relu", "sigmoid")),
                 init_gvp(lk[1], node_h, node_h, ("relu", "sigmoid")),
                 init_gvp(lk[2], node_h, node_h, (None, None))],
            norm0=init_ln(ns),
            norm1=init_ln(ns),
            ff=[init_gvp(lk[3], node_h, hid, ("relu", "sigmoid")),
                init_gvp(lk[4], hid, node_h, (None, None))],
        ))
    return params


# ----------------------------------------------------------------------------
# model forward (index glue in JAX, compute in fused Pallas kernels)
# ----------------------------------------------------------------------------
def gvp_model_forward(params, hV_s, hV_v, edge_index, hE_s, hE_v):
    N = hV_s.shape[0]
    E = hE_s.shape[0]
    _, n_pad = _tiling(N)
    _, e_pad = _tiling(E)

    # split [M, C, 3] vector tensors into coordinate planes and pad rows once
    vvx, vvy, vvz = hV_v[..., 0], hV_v[..., 1], hV_v[..., 2]
    evx, evy, evz = hE_v[..., 0], hE_v[..., 1], hE_v[..., 2]
    ns_ = _pad_rows(hV_s, n_pad)
    vvx, vvy, vvz = (_pad_rows(a, n_pad) for a in (vvx, vvy, vvz))
    es_ = _pad_rows(hE_s, e_pad)
    evx, evy, evz = (_pad_rows(a, e_pad) for a in (evx, evy, evz))

    src = edge_index[0].astype(jnp.int32)   # j (source)
    dst = edge_index[1].astype(jnp.int32)   # i (target) — aggregation index
    pad_e = e_pad - E
    if pad_e:
        src_g = jnp.concatenate([src, jnp.zeros((pad_e,), jnp.int32)])
        dst_g = jnp.concatenate([dst, jnp.zeros((pad_e,), jnp.int32)])
        # padded edges scatter to an out-of-range sentinel -> contribute nothing
        dst_s = jnp.concatenate([dst, jnp.full((pad_e,), n_pad, jnp.int32)])
    else:
        src_g, dst_g, dst_s = src, dst, dst

    # W_v / W_e : LayerNorm -> GVP(activations=(None, None)), fused per row tile
    s, vx, vy, vz = ln_gvp_apply(params["wv_ln"], params["wv_gvp"],
                                 ns_, vvx, vvy, vvz)
    se_, ex, ey, ez = ln_gvp_apply(params["we_ln"], params["we_gvp"],
                                   es_, evx, evy, evz)

    for lp in params["layers"]:
        # message inputs: cat[(s_j, v_j), (s_E, v_E), (s_i, v_i)]  (gather glue in XLA)
        ms = jnp.concatenate([s[src_g], se_, s[dst_g]], axis=-1)
        mvx = jnp.concatenate([vx[src_g], ex, vx[dst_g]], axis=-1)
        mvy = jnp.concatenate([vy[src_g], ey, vy[dst_g]], axis=-1)
        mvz = jnp.concatenate([vz[src_g], ez, vz[dst_g]], axis=-1)

        # 3 chained message GVPs in one fused kernel (bf16 message outputs)
        ms, mvx, mvy, mvz = msg_chain_apply(lp["msg"], ms, mvx, mvy, mvz)

        # mean aggregation at target nodes (edge-tiled accumulating one-hot matmul)
        dsagg, dvx, dvy, dvz = segment_mean_apply(dst_s, ms, mvx, mvy, mvz, n_pad)

        # residual + norm0 + feed-forward GVPs + residual + norm1, one fused kernel
        # (dropout = identity in eval mode)
        s, vx, vy, vz = node_update_apply(lp, s, vx, vy, vz, dsagg, dvx, dvy, dvz)

    # W_out : LayerNorm -> GVP(node_h, (ns, 0)) with scalar relu, fused
    out = ln_gvp_apply(params["wout_ln"], params["wout_gvp"], s, vx, vy, vz)
    return out[:N]
    # TODO(synk): `self.residue_embdding` exists in __init__ but is unused in the
    # reference forward(), so it is intentionally not applied here.


# ----------------------------------------------------------------------------
if __name__ == "__main__":
    node_in = (16, 3)    # (scalar, vector) node input dims
    node_h = (32, 8)     # node hidden dims
    edge_in = (16, 1)    # edge input dims
    edge_h = (32, 4)     # edge hidden dims
    num_layers = 2
    N = 16               # nodes

    key = jax.random.PRNGKey(0)
    kp, k1, k2, k3, k4 = jax.random.split(key, 5)
    params = init_model(kp, node_in, node_h, edge_in, edge_h, num_layers)

    hV_s = jax.random.normal(k1, (N, node_in[0]), jnp.float32)
    hV_v = jax.random.normal(k2, (N, node_in[1], 3), jnp.float32)

    # each node has 3 outgoing edges -> E = 48
    src = jnp.repeat(jnp.arange(N), 3)
    dst = (src + jnp.tile(jnp.arange(1, 4), N)) % N
    edge_index = jnp.stack([src, dst]).astype(jnp.int32)
    E = int(src.shape[0])

    hE_s = jax.random.normal(k3, (E, edge_in[0]), jnp.float32)
    hE_v = jax.random.normal(k4, (E, edge_in[1], 3), jnp.float32)

    fwd = jax.jit(functools.partial(gvp_model_forward, params))
    out = fwd(hV_s, hV_v, edge_index, hE_s, hE_v)
    out = jax.block_until_ready(out)
    assert out.shape == (N, node_h[0]) and out.dtype == jnp.float32
    assert bool(jnp.all(jnp.isfinite(out)))
    print("KERNEL_OK")
</pallas_src>

<mosaic_0001>
module attributes {stable_mosaic.version = 11 : i64} {
  func.func @_ln_gvp_kernel(%arg0: i32, %arg1: memref<16x16xf32, #tpu.memory_space<vmem>>, %arg2: memref<16x3xf32, #tpu.memory_space<vmem>>, %arg3: memref<16x3xf32, #tpu.memory_space<vmem>>, %arg4: memref<16x3xf32, #tpu.memory_space<vmem>>, %arg5: memref<1x16xf32, #tpu.memory_space<vmem>>, %arg6: memref<1x16xf32, #tpu.memory_space<vmem>>, %arg7: memref<3x8xbf16, #tpu.memory_space<vmem>>, %arg8: memref<16x32xbf16, #tpu.memory_space<vmem>>, %arg9: memref<8x32xbf16, #tpu.memory_space<vmem>>, %arg10: memref<1x32xf32, #tpu.memory_space<vmem>>, %arg11: memref<8x8xbf16, #tpu.memory_space<vmem>>, %arg12: memref<16x32xf32, #tpu.memory_space<vmem>>, %arg13: memref<16x8xf32, #tpu.memory_space<vmem>>, %arg14: memref<16x8xf32, #tpu.memory_space<vmem>>, %arg15: memref<16x8xf32, #tpu.memory_space<vmem>>) attributes {dimension_semantics = [#tpu.dimension_semantics<parallel>], iteration_bounds = array<i64: 1>, scalar_prefetch = 0 : i64, scratch_operands = 0 : i64, tpu.core_type = #tpu.core_type<tc>, window_params = [{transform_indices = @transform_0, window_bounds = array<i64: 16, 16>}, {transform_indices = @transform_1, window_bounds = array<i64: 16, 3>}, {transform_indices = @transform_2, window_bounds = array<i64: 16, 3>}, {transform_indices = @transform_3, window_bounds = array<i64: 16, 3>}, {pipeline_mode = #tpu.pipeline_mode<synchronous>, transform_indices = @transform_4, window_bounds = array<i64: 1, 16>}, {pipeline_mode = #tpu.pipeline_mode<synchronous>, transform_indices = @transform_5, window_bounds = array<i64: 1, 16>}, {pipeline_mode = #tpu.pipeline_mode<synchronous>, transform_indices = @transform_6, window_bounds = array<i64: 3, 8>}, {pipeline_mode = #tpu.pipeline_mode<synchronous>, transform_indices = @transform_7, window_bounds = array<i64: 16, 32>}, {pipeline_mode = #tpu.pipeline_mode<synchronous>, transform_indices = @transform_8, window_bounds = array<i64: 8, 32>}, {pipeline_mode = #tpu.pipeline_mode<synchronous>, transform_indices = @transform_9, window_bounds = array<i64: 1, 32>}, {pipeline_mode = #tpu.pipeline_mode<synchronous>, transform_indices = @transform_10, window_bounds = array<i64: 8, 8>}, {transform_indices = @transform_11, window_bounds = array<i64: 16, 32>}, {transform_indices = @transform_12, window_bounds = array<i64: 16, 8>}, {transform_indices = @transform_13, window_bounds = array<i64: 16, 8>}, {transform_indices = @transform_14, window_bounds = array<i64: 16, 8>}]} {
    %c0 = arith.constant 0 : index
    %c0_0 = arith.constant 0 : index
    %0 = vector.load %arg1[%c0, %c0_0] : memref<16x16xf32, #tpu.memory_space<vmem>>, vector<16x16xf32>
    %c0_1 = arith.constant 0 : index
    %c0_2 = arith.constant 0 : index
    %1 = vector.load %arg2[%c0_1, %c0_2] : memref<16x3xf32, #tpu.memory_space<vmem>>, vector<16x3xf32>
    %c0_3 = arith.constant 0 : index
    %c0_4 = arith.constant 0 : index
    %2 = vector.load %arg3[%c0_3, %c0_4] : memref<16x3xf32, #tpu.memory_space<vmem>>, vector<16x3xf32>
    %c0_5 = arith.constant 0 : index
    %c0_6 = arith.constant 0 : index
    %3 = vector.load %arg4[%c0_5, %c0_6] : memref<16x3xf32, #tpu.memory_space<vmem>>, vector<16x3xf32>
    %c0_7 = arith.constant 0 : index
    %c0_8 = arith.constant 0 : index
    %4 = vector.load %arg5[%c0_7, %c0_8] : memref<1x16xf32, #tpu.memory_space<vmem>>, vector<1x16xf32>
    %c0_9 = arith.constant 0 : index
    %c0_10 = arith.constant 0 : index
    %5 = vector.load %arg6[%c0_9, %c0_10] : memref<1x16xf32, #tpu.memory_space<vmem>>, vector<1x16xf32>
    %cst = arith.constant dense<0.000000e+00> : vector<16xf32>
    %6 = vector.multi_reduction <add>, %0, %cst [1] : vector<16x16xf32> to vector<16xf32>
    %7 = vector.shape_cast %6 : vector<16xf32> to vector<16x1xf32>
    %cst_11 = arith.constant 1.600000e+01 : f32
    %8 = vector.broadcast %cst_11 : f32 to vector<16x1xf32>
    %9 = arith.divf %7, %8 : vector<16x1xf32>
    %10 = vector.broadcast %9 : vector<16x1xf32> to vector<16x16xf32>
    %11 = arith.subf %0, %10 : vector<16x16xf32>
    %12 = arith.mulf %11, %11 : vector<16x16xf32>
    %cst_12 = arith.constant dense<0.000000e+00> : vector<16xf32>
    %13 = vector.multi_reduction <add>, %12, %cst_12 [1] : vector<16x16xf32> to vector<16xf32>
    %14 = vector.shape_cast %13 : vector<16xf32> to vector<16x1xf32>
    %cst_13 = arith.constant 1.600000e+01 : f32
    %15 = vector.broadcast %cst_13 : f32 to vector<16x1xf32>
    %16 = arith.divf %14, %15 : vector<16x1xf32>
    %cst_14 = arith.constant 9.99999974E-6 : f32
    %17 = vector.broadcast %cst_14 : f32 to vector<16x1xf32>
    %18 = arith.addf %16, %17 : vector<16x1xf32>
    %19 = math.rsqrt %18 : vector<16x1xf32>
    %20 = vector.broadcast %19 : vector<16x1xf32> to vector<16x16xf32>
    %21 = arith.mulf %11, %20 : vector<16x16xf32>
    %22 = vector.broadcast %4 : vector<1x16xf32> to vector<16x16xf32>
    %23 = arith.mulf %21, %22 : vector<16x16xf32>
    %24 = vector.broadcast %5 : vector<1x16xf32> to vector<16x16xf32>
    %25 = arith.addf %23, %24 : vector<16x16xf32>
    %26 = arith.mulf %1, %1 : vector<16x3xf32>
    %27 = arith.mulf %2, %2 : vector<16x3xf32>
    %28 = arith.addf %26, %27 : vector<16x3xf32>
    %29 = arith.mulf %3, %3 : vector<16x3xf32>
    %30 = arith.addf %28, %29 : vector<16x3xf32>
    %cst_15 = arith.constant 9.99999993E-9 : f32
    %31 = vector.broadcast %cst_15 : f32 to vector<16x3xf32>
    %32 = arith.maximumf %30, %31 : vector<16x3xf32>
    %cst_16 = arith.constant dense<0.000000e+00> : vector<16xf32>
    %33 = vector.multi_reduction <add>, %32, %cst_16 [1] : vector<16x3xf32> to vector<16xf32>
    %34 = vector.shape_cast %33 : vector<16xf32> to vector<16x1xf32>
    %cst_17 = arith.constant 3.000000e+00 : f32
    %35 = vector.broadcast %cst_17 : f32 to vector<16x1xf32>
    %36 = arith.divf %34, %35 : vector<16x1xf32>
    %37 = math.rsqrt %36 : vector<16x1xf32>
    %38 = vector.broadcast %37 : vector<16x1xf32> to vector<16x3xf32>
    %39 = arith.mulf %1, %38 : vector<16x3xf32>
    %40 = vector.broadcast %37 : vector<16x1xf32> to vector<16x3xf32>
    %41 = arith.mulf %2, %40 : vector<16x3xf32>
    %42 = vector.broadcast %37 : vector<16x1xf32> to vector<16x3xf32>
    %43 = arith.mulf %3, %42 : vector<16x3xf32>
    %c0_18 = arith.constant 0 : index
    %c0_19 = arith.constant 0 : index
    %44 = vector.load %arg7[%c0_18, %c0_19] : memref<3x8xbf16, #tpu.memory_space<vmem>>, vector<3x8xbf16>
    %c0_20 = arith.constant 0 : index
    %c0_21 = arith.constant 0 : index
    %45 = vector.load %arg8[%c0_20, %c0_21] : memref<16x32xbf16, #tpu.memory_space<vmem>>, vector<16x32xbf16>
    %c0_22 = arith.constant 0 : index
    %c0_23 = arith.constant 0 : index
    %46 = vector.load %arg9[%c0_22, %c0_23] : memref<8x32xbf16, #tpu.memory_space<vmem>>, vector<8x32xbf16>
    %c0_24 = arith.constant 0 : index
    %c0_25 = arith.constant 0 : index
    %47 = vector.load %arg10[%c0_24, %c0_25] : memref<1x32xf32, #tpu.memory_space<vmem>>, vector<1x32xf32>
    %c0_26 = arith.constant 0 : index
    %c0_27 = arith.constant 0 : index
    %48 = vector.load %arg11[%c0_26, %c0_27] : memref<8x8xbf16, #tpu.memory_space<vmem>>, vector<8x8xbf16>
    %49 = tpu.concatenate %39, %41, %43 in 0 : vector<16x3xf32>, vector<16x3xf32>, vector<16x3xf32> -> vector<48x3xf32>
    %50 = arith.truncf %49 : vector<48x3xf32> to vector<48x3xbf16>
    %cst_28 = arith.constant dense<0.000000e+00> : vector<48x8xf32>
    %51 = tpu.matmul %50, %44, %cst_28 {dimension_numbers = #tpu.dot_dimension_numbers<[1], [0], [0], [1], [0, 0, 1, 1], [], []>} : vector<48x3xbf16>, vector<3x8xbf16>, vector<48x8xf32> -> vector<48x8xf32>
    %52 = vector.extract_strided_slice %51 {offsets = [0, 0], sizes = [16, 8], strides = [1, 1]} : vector<48x8xf32> to vector<16x8xf32>
    %53 = vector.extract_strided_slice %51 {offsets = [16, 0], sizes = [16, 8], strides = [1, 1]} : vector<48x8xf32> to vector<16x8xf32>
    %54 = vector.extract_strided_slice %51 {offsets = [32, 0], sizes = [16, 8], strides = [1, 1]} : vector<48x8xf32> to vector<16x8xf32>
    %55 = arith.mulf %52, %52 : vector<16x8xf32>
    %56 = arith.mulf %53, %53 : vector<16x8xf32>
    %57 = arith.addf %55, %56 : vector<16x8xf32>
    %58 = arith.mulf %54, %54 : vector<16x8xf32>
    %59 = arith.addf %57, %58 : vector<16x8xf32>
    %cst_29 = arith.constant 9.99999993E-9 : f32
    %60 = vector.broadcast %cst_29 : f32 to vector<16x8xf32>
    %61 = arith.maximumf %59, %60 : vector<16x8xf32>
    %62 = math.sqrt %61 : vector<16x8xf32>
    %63 = arith.truncf %25 : vector<16x16xf32> to vector<16x16xbf16>
    %cst_30 = arith.constant dense<0.000000e+00> : vector<16x32xf32>
    %64 = tpu.matmul %63, %45, %cst_30 {dimension_numbers = #tpu.dot_dimension_numbers<[1], [0], [0], [1], [0, 0, 1, 1], [], []>} : vector<16x16xbf16>, vector<16x32xbf16>, vector<16x32xf32> -> vector<16x32xf32>
    %65 = arith.truncf %62 : vector<16x8xf32> to vector<16x8xbf16>
    %cst_31 = arith.constant dense<0.000000e+00> : vector<16x32xf32>
    %66 = tpu.matmul %65, %46, %cst_31 {dimension_numbers = #tpu.dot_dimension_numbers<[1], [0], [0], [1], [0, 0, 1, 1], [], []>} : vector<16x8xbf16>, vector<8x32xbf16>, vector<16x32xf32> -> vector<16x32xf32>
    %67 = arith.addf %64, %66 : vector<16x32xf32>
    %68 = vector.broadcast %47 : vector<1x32xf32> to vector<16x32xf32>
    %69 = arith.addf %67, %68 : vector<16x32xf32>
    %70 = arith.truncf %51 : vector<48x8xf32> to vector<48x8xbf16>
    %cst_32 = arith.constant dense<0.000000e+00> : vector<48x8xf32>
    %71 = tpu.matmul %70, %48, %cst_32 {dimension_numbers = #tpu.dot_dimension_numbers<[1], [0], [0], [1], [0, 0, 1, 1], [], []>} : vector<48x8xbf16>, vector<8x8xbf16>, vector<48x8xf32> -> vector<48x8xf32>
    %72 = vector.extract_strided_slice %71 {offsets = [0, 0], sizes = [16, 8], strides = [1, 1]} : vector<48x8xf32> to vector<16x8xf32>
    %73 = vector.extract_strided_slice %71 {offsets = [16, 0], sizes = [16, 8], strides = [1, 1]} : vector<48x8xf32> to vector<16x8xf32>
    %74 = vector.extract_strided_slice %71 {offsets = [32, 0], sizes = [16, 8], strides = [1, 1]} : vector<48x8xf32> to vector<16x8xf32>
    %c0_33 = arith.constant 0 : index
    %c0_34 = arith.constant 0 : index
    %75 = vector.load %arg12[%c0_33, %c0_34] : memref<16x32xf32, #tpu.memory_space<vmem>>, vector<16x32xf32>
    tpu.vector_store %arg12[%c0_33, %c0_34], %69 {strides = array<i32>} : memref<16x32xf32, #tpu.memory_space<vmem>>, vector<16x32xf32>,
    %c0_35 = arith.constant 0 : index
    %c0_36 = arith.constant 0 : index
    %76 = vector.load %arg13[%c0_35, %c0_36] : memref<16x8xf32, #tpu.memory_space<vmem>>, vector<16x8xf32>
    tpu.vector_store %arg13[%c0_35, %c0_36], %72 {strides = array<i32>} : memref<16x8xf32, #tpu.memory_space<vmem>>, vector<16x8xf32>,
    %c0_37 = arith.constant 0 : index
    %c0_38 = arith.constant 0 : index
    %77 = vector.load %arg14[%c0_37, %c0_38] : memref<16x8xf32, #tpu.memory_space<vmem>>, vector<16x8xf32>
    tpu.vector_store %arg14[%c0_37, %c0_38], %73 {strides = array<i32>} : memref<16x8xf32, #tpu.memory_space<vmem>>, vector<16x8xf32>,
    %c0_39 = arith.constant 0 : index
    %c0_40 = arith.constant 0 : index
    %78 = vector.load %arg15[%c0_39, %c0_40] : memref<16x8xf32, #tpu.memory_space<vmem>>, vector<16x8xf32>
    tpu.vector_store %arg15[%c0_39, %c0_40], %74 {strides = array<i32>} : memref<16x8xf32, #tpu.memory_space<vmem>>, vector<16x8xf32>,
    return
  }
  func.func @transform_0(%arg0: i32) -> (i32, i32) {
    %c0_i32 = arith.constant 0 : i32
    %c0_i32_0 = arith.constant 0 : i32
    return %arg0, %c0_i32 : i32, i32
  }
  func.func @transform_1(%arg0: i32) -> (i32, i32) {
    %c0_i32 = arith.constant 0 : i32
    %c0_i32_0 = arith.constant 0 : i32
    return %arg0, %c0_i32 : i32, i32
  }
  func.func @transform_2(%arg0: i32) -> (i32, i32) {
    %c0_i32 = arith.constant 0 : i32
    %c0_i32_0 = arith.constant 0 : i32
    return %arg0, %c0_i32 : i32, i32
  }
  func.func @transform_3(%arg0: i32) -> (i32, i32) {
    %c0_i32 = arith.constant 0 : i32
    %c0_i32_0 = arith.constant 0 : i32
    return %arg0, %c0_i32 : i32, i32
  }
  func.func @transform_4(%arg0: i32) -> (i32, i32) {
    %c0_i32 = arith.constant 0 : i32
    %c0_i32_0 = arith.constant 0 : i32
    %c0_i32_1 = arith.constant 0 : i32
    return %c0_i32, %c0_i32_0 : i32, i32
  }
  func.func @transform_5(%arg0: i32) -> (i32, i32) {
    %c0_i32 = arith.constant 0 : i32
    %c0_i32_0 = arith.constant 0 : i32
    %c0_i32_1 = arith.constant 0 : i32
    return %c0_i32, %c0_i32_0 : i32, i32
  }
  func.func @transform_6(%arg0: i32) -> (i32, i32) {
    %c0_i32 = arith.constant 0 : i32
    %c0_i32_0 = arith.constant 0 : i32
    %c0_i32_1 = arith.constant 0 : i32
    return %c0_i32, %c0_i32_0 : i32, i32
  }
  func.func @transform_7(%arg0: i32) -> (i32, i32) {
    %c0_i32 = arith.constant 0 : i32
    %c0_i32_0 = arith.constant 0 : i32
    %c0_i32_1 = arith.constant 0 : i32
    return %c0_i32, %c0_i32_0 : i32, i32
  }
  func.func @transform_8(%arg0: i32) -> (i32, i32) {
    %c0_i32 = arith.constant 0 : i32
    %c0_i32_0 = arith.constant 0 : i32
    %c0_i32_1 = arith.constant 0 : i32
    return %c0_i32, %c0_i32_0 : i32, i32
  }
  func.func @transform_9(%arg0: i32) -> (i32, i32) {
    %c0_i32 = arith.constant 0 : i32
    %c0_i32_0 = arith.constant 0 : i32
    %c0_i32_1 = arith.constant 0 : i32
    return %c0_i32, %c0_i32_0 : i32, i32
  }
  func.func @transform_10(%arg0: i32) -> (i32, i32) {
    %c0_i32 = arith.constant 0 : i32
    %c0_i32_0 = arith.constant 0 : i32
    %c0_i32_1 = arith.constant 0 : i32
    return %c0_i32, %c0_i32_0 : i32, i32
  }
  func.func @transform_11(%arg0: i32) -> (i32, i32) {
    %c0_i32 = arith.constant 0 : i32
    %c0_i32_0 = arith.constant 0 : i32
    return %arg0, %c0_i32 : i32, i32
  }
  func.func @transform_12(%arg0: i32) -> (i32, i32) {
    %c0_i32 = arith.constant 0 : i32
    %c0_i32_0 = arith.constant 0 : i32
    return %arg0, %c0_i32 : i32, i32
  }
  func.func @transform_13(%arg0: i32) -> (i32, i32) {
    %c0_i32 = arith.constant 0 : i32
    %c0_i32_0 = arith.constant 0 : i32
    return %arg0, %c0_i32 : i32, i32
  }
  func.func @transform_14(%arg0: i32) -> (i32, i32) {
    %c0_i32 = arith.constant 0 : i32
    %c0_i32_0 = arith.constant 0 : i32
    return %arg0, %c0_i32 : i32, i32
  }
}

module attributes {stable_mosaic.version = 11 : i64} {
  func.func @_ln_gvp_kernel(%arg0: i32, %arg1: memref<48x16xf32, #tpu.memory_space<vmem>>, %arg2: memref<48x1xf32, #tpu.memory_space<vmem>>, %arg3: memref<48x1xf32, #tpu.memory_space<vmem>>, %arg4: memref<48x1xf32, #tpu.memory_space<vmem>>, %arg5: memref<1x16xf32, #tpu.memory_space<vmem>>, %arg6: memref<1x16xf32, #tpu.memory_space<vmem>>, %arg7: memref<1x4xbf16, #tpu.memory_space<vmem>>, %arg8: memref<16x32xbf16, #tpu.memory_space<vmem>>, %arg9: memref<4x32xbf16, #tpu.memory_space<vmem>>, %arg10: memref<1x32xf32, #tpu.memory_space<vmem>>, %arg11: memref<4x4xbf16, #tpu.memory_space<vmem>>, %arg12: memref<48x32xf32, #tpu.memory_space<vmem>>, %arg13: memref<48x4xf32, #tpu.memory_space<vmem>>, %arg14: memref<48x4xf32, #tpu.memory_space<vmem>>, %arg15: memref<48x4xf32, #tpu.memory_space<vmem>>) attributes {dimension_semantics = [#tpu.dimension_semantics<parallel>], iteration_bounds = array<i64: 1>, scalar_prefetch = 0 : i64, scratch_operands = 0 : i64, tpu.core_type = #tpu.core_type<tc>, window_params = [{transform_indices = @transform_0, window_bounds = array<i64: 48, 16>}, {transform_indices = @transform_1, window_bounds = array<i64: 48, 1>}, {transform_indices = @transform_2, window_bounds = array<i64: 48, 1>}, {transform_indices = @transform_3, window_bounds = array<i64: 48, 1>}, {pipeline_mode = #tpu.pipeline_mode<synchronous>, transform_indices = @transform_4, window_bounds = array<i64: 1, 16>}, {pipeline_mode = #tpu.pipeline_mode<synchronous>, transform_indices = @transform_5, window_bounds = array<i64: 1, 16>}, {pipeline_mode = #tpu.pipeline_mode<synchronous>, transform_indices = @transform_6, window_bounds = array<i64: 1, 4>}, {pipeline_mode = #tpu.pipeline_mode<synchronous>, transform_indices = @transform_7, window_bounds = array<i64: 16, 32>}, {pipeline_mode = #tpu.pipeline_mode<synchronous>, transform_indices = @transform_8, window_bounds = array<i64: 4, 32>}, {pipeline_mode = #tpu.pipeline_mode<synchronous>, transform_indices = @transform_9, window_bounds = array<i64: 1, 32>}, {pipeline_mode = #tpu.pipeline_mode<synchronous>, transform_indices = @transform_10, window_bounds = array<i64: 4, 4>}, {transform_indices = @transform_11, window_bounds = array<i64: 48, 32>}, {transform_indices = @transform_12, window_bounds = array<i64: 48, 4>}, {transform_indices = @transform_13, window_bounds = array<i64: 48, 4>}, {transform_indices = @transform_14, window_bounds = array<i64: 48, 4>}]} {
    %c0 = arith.constant 0 : index
    %c0_0 = arith.constant 0 : index
    %0 = vector.load %arg1[%c0, %c0_0] : memref<48x16xf32, #tpu.memory_space<vmem>>, vector<48x16xf32>
    %c0_1 = arith.constant 0 : index
    %c0_2 = arith.constant 0 : index
    %1 = vector.load %arg2[%c0_1, %c0_2] : memref<48x1xf32, #tpu.memory_space<vmem>>, vector<48x1xf32>
    %c0_3 = arith.constant 0 : index
    %c0_4 = arith.constant 0 : index
    %2 = vector.load %arg3[%c0_3, %c0_4] : memref<48x1xf32, #tpu.memory_space<vmem>>, vector<48x1xf32>
    %c0_5 = arith.constant 0 : index
    %c0_6 = arith.constant 0 : index
    %3 = vector.load %arg4[%c0_5, %c0_6] : memref<48x1xf32, #tpu.memory_space<vmem>>, vector<48x1xf32>
    %c0_7 = arith.constant 0 : index
    %c0_8 = arith.constant 0 : index
    %4 = vector.load %arg5[%c0_7, %c0_8] : memref<1x16xf32, #tpu.memory_space<vmem>>, vector<1x16xf32>
    %c0_9 = arith.constant 0 : index
    %c0_10 = arith.constant 0 : index
    %5 = vector.load %arg6[%c0_9, %c0_10] : memref<1x16xf32, #tpu.memory_space<vmem>>, vector<1x16xf32>
    %cst = arith.constant dense<0.000000e+00> : vector<48xf32>
    %6 = vector.multi_reduction <add>, %0, %cst [1] : vector<48x16xf32> to vector<48xf32>
    %7 = vector.shape_cast %6 : vector<48xf32> to vector<48x1xf32>
    %cst_11 = arith.constant 1.600000e+01 : f32
    %8 = vector.broadcast %cst_11 : f32 to vector<48x1xf32>
    %9 = arith.divf %7, %8 : vector<48x1xf32>
    %10 = vector.broadcast %9 : vector<48x1xf32> to vector<48x16xf32>
    %11 = arith.subf %0, %10 : vector<48x16xf32>
    %12 = arith.mulf %11, %11 : vector<48x16xf32>
    %cst_12 = arith.constant dense<0.000000e+00> : vector<48xf32>
    %13 = vector.multi_reduction <add>, %12, %cst_12 [1] : vector<48x16xf32> to vector<48xf32>
    %14 = vector.shape_cast %13 : vector<48xf32> to vector<48x1xf32>
    %cst_13 = arith.constant 1.600000e+01 : f32
    %15 = vector.broadcast %cst_13 : f32 to vector<48x1xf32>
    %16 = arith.divf %14, %15 : vector<48x1xf32>
    %cst_14 = arith.constant 9.99999974E-6 : f32
    %17 = vector.broadcast %cst_14 : f32 to vector<48x1xf32>
    %18 = arith.addf %16, %17 : vector<48x1xf32>
    %19 = math.rsqrt %18 : vector<48x1xf32>
    %20 = vector.broadcast %19 : vector<48x1xf32> to vector<48x16xf32>
    %21 = arith.mulf %11, %20 : vector<48x16xf32>
    %22 = vector.broadcast %4 : vector<1x16xf32> to vector<48x16xf32>
    %23 = arith.mulf %21, %22 : vector<48x16xf32>
    %24 = vector.broadcast %5 : vector<1x16xf32> to vector<48x16xf32>
    %25 = arith.addf %23, %24 : vector<48x16xf32>
    %26 = arith.mulf %1, %1 : vector<48x1xf32>
    %27 = arith.mulf %2, %2 : vector<48x1xf32>
    %28 = arith.addf %26, %27 : vector<48x1xf32>
    %29 = arith.mulf %3, %3 : vector<48x1xf32>
    %30 = arith.addf %28, %29 : vector<48x1xf32>
    %cst_15 = arith.constant 9.99999993E-9 : f32
    %31 = vector.broadcast %cst_15 : f32 to vector<48x1xf32>
    %32 = arith.maximumf %30, %31 : vector<48x1xf32>
    %cst_16 = arith.constant dense<0.000000e+00> : vector<48xf32>
    %33 = vector.multi_reduction <add>, %32, %cst_16 [1] : vector<48x1xf32> to vector<48xf32>
    %34 = vector.shape_cast %33 : vector<48xf32> to vector<48x1xf32>
    %cst_17 = arith.constant 1.000000e+00 : f32
    %35 = vector.broadcast %cst_17 : f32 to vector<48x1xf32>
    %36 = arith.divf %34, %35 : vector<48x1xf32>
    %37 = math.rsqrt %36 : vector<48x1xf32>
    %38 = arith.mulf %1, %37 : vector<48x1xf32>
    %39 = arith.mulf %2, %37 : vector<48x1xf32>
    %40 = arith.mulf %3, %37 : vector<48x1xf32>
    %c0_18 = arith.constant 0 : index
    %c0_19 = arith.constant 0 : index
    %41 = vector.load %arg7[%c0_18, %c0_19] : memref<1x4xbf16, #tpu.memory_space<vmem>>, vector<1x4xbf16>
    %c0_20 = arith.constant 0 : index
    %c0_21 = arith.constant 0 : index
    %42 = vector.load %arg8[%c0_20, %c0_21] : memref<16x32xbf16, #tpu.memory_space<vmem>>, vector<16x32xbf16>
    %c0_22 = arith.constant 0 : index
    %c0_23 = arith.constant 0 : index
    %43 = vector.load %arg9[%c0_22, %c0_23] : memref<4x32xbf16, #tpu.memory_space<vmem>>, vector<4x32xbf16>
    %c0_24 = arith.constant 0 : index
    %c0_25 = arith.constant 0 : index
    %44 = vector.load %arg10[%c0_24, %c0_25] : memref<1x32xf32, #tpu.memory_space<vmem>>, vector<1x32xf32>
    %c0_26 = arith.constant 0 : index
    %c0_27 = arith.constant 0 : index
    %45 = vector.load %arg11[%c0_26, %c0_27] : memref<4x4xbf16, #tpu.memory_space<vmem>>, vector<4x4xbf16>
    %46 = tpu.concatenate %38, %39, %40 in 0 : vector<48x1xf32>, vector<48x1xf32>, vector<48x1xf32> -> vector<144x1xf32>
    %47 = arith.truncf %46 : vector<144x1xf32> to vector<144x1xbf16>
    %cst_28 = arith.constant dense<0.000000e+00> : vector<144x4xf32>
    %48 = tpu.matmul %47, %41, %cst_28 {dimension_numbers = #tpu.dot_dimension_numbers<[1], [0], [0], [1], [0, 0, 1, 1], [], []>} : vector<144x1xbf16>, vector<1x4xbf16>, vector<144x4xf32> -> vector<144x4xf32>
    %49 = vector.extract_strided_slice %48 {offsets = [0, 0], sizes = [48, 4], strides = [1, 1]} : vector<144x4xf32> to vector<48x4xf32>
    %50 = vector.extract_strided_slice %48 {offsets = [48, 0], sizes = [48, 4], strides = [1, 1]} : vector<144x4xf32> to vector<48x4xf32>
    %51 = vector.extract_strided_slice %48 {offsets = [96, 0], sizes = [48, 4], strides = [1, 1]} : vector<144x4xf32> to vector<48x4xf32>
    %52 = arith.mulf %49, %49 : vector<48x4xf32>
    %53 = arith.mulf %50, %50 : vector<48x4xf32>
    %54 = arith.addf %52, %53 : vector<48x4xf32>
    %55 = arith.mulf %51, %51 : vector<48x4xf32>
    %56 = arith.addf %54, %55 : vector<48x4xf32>
    %cst_29 = arith.constant 9.99999993E-9 : f32
    %57 = vector.broadcast %cst_29 : f32 to vector<48x4xf32>
    %58 = arith.maximumf %56, %57 : vector<48x4xf32>
    %59 = math.sqrt %58 : vector<48x4xf32>
    %60 = arith.truncf %25 : vector<48x16xf32> to vector<48x16xbf16>
    %cst_30 = arith.constant dense<0.000000e+00> : vector<48x32xf32>
    %61 = tpu.matmul %60, %42, %cst_30 {dimension_numbers = #tpu.dot_dimension_numbers<[1], [0], [0], [1], [0, 0, 1, 1], [], []>} : vector<48x16xbf16>, vector<16x32xbf16>, vector<48x32xf32> -> vector<48x32xf32>
    %62 = arith.truncf %59 : vector<48x4xf32> to vector<48x4xbf16>
    %cst_31 = arith.constant dense<0.000000e+00> : vector<48x32xf32>
    %63 = tpu.matmul %62, %43, %cst_31 {dimension_numbers = #tpu.dot_dimension_numbers<[1], [0], [0], [1], [0, 0, 1, 1], [], []>} : vector<48x4xbf16>, vector<4x32xbf16>, vector<48x32xf32> -> vector<48x32xf32>
    %64 = arith.addf %61, %63 : vector<48x32xf32>
    %65 = vector.broadcast %44 : vector<1x32xf32> to vector<48x32xf32>
    %66 = arith.addf %64, %65 : vector<48x32xf32>
    %67 = arith.truncf %48 : vector<144x4xf32> to vector<144x4xbf16>
    %cst_32 = arith.constant dense<0.000000e+00> : vector<144x4xf32>
    %68 = tpu.matmul %67, %45, %cst_32 {dimension_numbers = #tpu.dot_dimension_numbers<[1], [0], [0], [1], [0, 0, 1, 1], [], []>} : vector<144x4xbf16>, vector<4x4xbf16>, vector<144x4xf32> -> vector<144x4xf32>
    %69 = vector.extract_strided_slice %68 {offsets = [0, 0], sizes = [48, 4], strides = [1, 1]} : vector<144x4xf32> to vector<48x4xf32>
    %70 = vector.extract_strided_slice %68 {offsets = [48, 0], sizes = [48, 4], strides = [1, 1]} : vector<144x4xf32> to vector<48x4xf32>
    %71 = vector.extract_strided_slice %68 {offsets = [96, 0], sizes = [48, 4], strides = [1, 1]} : vector<144x4xf32> to vector<48x4xf32>
    %c0_33 = arith.constant 0 : index
    %c0_34 = arith.constant 0 : index
    %72 = vector.load %arg12[%c0_33, %c0_34] : memref<48x32xf32, #tpu.memory_space<vmem>>, vector<48x32xf32>
    tpu.vector_store %arg12[%c0_33, %c0_34], %66 {strides = array<i32>} : memref<48x32xf32, #tpu.memory_space<vmem>>, vector<48x32xf32>,
    %c0_35 = arith.constant 0 : index
    %c0_36 = arith.constant 0 : index
    %73 = vector.load %arg13[%c0_35, %c0_36] : memref<48x4xf32, #tpu.memory_space<vmem>>, vector<48x4xf32>
    tpu.vector_store %arg13[%c0_35, %c0_36], %69 {strides = array<i32>} : memref<48x4xf32, #tpu.memory_space<vmem>>, vector<48x4xf32>,
    %c0_37 = arith.constant 0 : index
    %c0_38 = arith.constant 0 : index
    %74 = vector.load %arg14[%c0_37, %c0_38] : memref<48x4xf32, #tpu.memory_space<vmem>>, vector<48x4xf32>
    tpu.vector_store %arg14[%c0_37, %c0_38], %70 {strides = array<i32>} : memref<48x4xf32, #tpu.memory_space<vmem>>, vector<48x4xf32>,
    %c0_39 = arith.constant 0 : index
    %c0_40 = arith.constant 0 : index
    %75 = vector.load %arg15[%c0_39, %c0_40] : memref<48x4xf32, #tpu.memory_space<vmem>>, vector<48x4xf32>
    tpu.vector_store %arg15[%c0_39, %c0_40], %71 {strides = array<i32>} : memref<48x4xf32, #tpu.memory_space<vmem>>, vector<48x4xf32>,
    return
  }
  func.func @transform_0(%arg0: i32) -> (i32, i32) {
    %c0_i32 = arith.constant 0 : i32
    %c0_i32_0 = arith.constant 0 : i32
    return %arg0, %c0_i32 : i32, i32
  }
  func.func @transform_1(%arg0: i32) -> (i32, i32) {
    %c0_i32 = arith.constant 0 : i32
    %c0_i32_0 = arith.constant 0 : i32
    return %arg0, %c0_i32 : i32, i32
  }
  func.func @transform_2(%arg0: i32) -> (i32, i32) {
    %c0_i32 = arith.constant 0 : i32
    %c0_i32_0 = arith.constant 0 : i32
    return %arg0, %c0_i32 : i32, i32
  }
  func.func @transform_3(%arg0: i32) -> (i32, i32) {
    %c0_i32 = arith.constant 0 : i32
    %c0_i32_0 = arith.constant 0 : i32
    return %arg0, %c0_i32 : i32, i32
  }
  func.func @transform_4(%arg0: i32) -> (i32, i32) {
    %c0_i32 = arith.constant 0 : i32
    %c0_i32_0 = arith.constant 0 : i32
    %c0_i32_1 = arith.constant 0 : i32
    return %c0_i32, %c0_i32_0 : i32, i32
  }
  func.func @transform_5(%arg0: i32) -> (i32, i32) {
    %c0_i32 = arith.constant 0 : i32
    %c0_i32_0 = arith.constant 0 : i32
    %c0_i32_1 = arith.constant 0 : i32
    return %c0_i32, %c0_i32_0 : i32, i32
  }
  func.func @transform_6(%arg0: i32) -> (i32, i32) {
    %c0_i32 = arith.constant 0 : i32
    %c0_i32_0 = arith.constant 0 : i32
    %c0_i32_1 = arith.constant 0 : i32
    return %c0_i32, %c0_i32_0 : i32, i32
  }
  func.func @transform_7(%arg0: i32) -> (i32, i32) {
    %c0_i32 = arith.constant 0 : i32
    %c0_i32_0 = arith.constant 0 : i32
    %c0_i32_1 = arith.constant 0 : i32
    return %c0_i32, %c0_i32_0 : i32, i32
  }
  func.func @transform_8(%arg0: i32) -> (i32, i32) {
    %c0_i32 = arith.constant 0 : i32
    %c0_i32_0 = arith.constant 0 : i32
    %c0_i32_1 = arith.constant 0 : i32
    return %c0_i32, %c0_i32_0 : i32, i32
  }
  func.func @transform_9(%arg0: i32) -> (i32, i32) {
    %c0_i32 = arith.constant 0 : i32
    %c0_i32_0 = arith.constant 0 : i32
    %c0_i32_1 = arith.constant 0 : i32
    return %c0_i32, %c0_i32_0 : i32, i32
  }
  func.func @transform_10(%arg0: i32) -> (i32, i32) {
    %c0_i32 = arith.constant 0 : i32
    %c0_i32_0 = arith.constant 0 : i32
    %c0_i32_1 = arith.constant 0 : i32
    return %c0_i32, %c0_i32_0 : i32, i32
  }
  func.func @transform_11(%arg0: i32) -> (i32, i32) {
    %c0_i32 = arith.constant 0 : i32
    %c0_i32_0 = arith.constant 0 : i32
    return %arg0, %c0_i32 : i32, i32
  }
  func.func @transform_12(%arg0: i32) -> (i32, i32) {
    %c0_i32 = arith.constant 0 : i32
    %c0_i32_0 = arith.constant 0 : i32
    return %arg0, %c0_i32 : i32, i32
  }
  func.func @transform_13(%arg0: i32) -> (i32, i32) {
    %c0_i32 = arith.constant 0 : i32
    %c0_i32_0 = arith.constant 0 : i32
    return %arg0, %c0_i32 : i32, i32
  }
  func.func @transform_14(%arg0: i32) -> (i32, i32) {
    %c0_i32 = arith.constant 0 : i32
    %c0_i32_0 = arith.constant 0 : i32
    return %arg0, %c0_i32 : i32, i32
  }
}

module attributes {stable_mosaic.version = 11 : i64} {
  func.func @_segmean_kernel(%arg0: i32, %arg1: memref<1x48xi32, #tpu.memory_space<vmem>>, %arg2: memref<48x32xbf16, #tpu.memory_space<vmem>>, %arg3: memref<48x8xbf16, #tpu.memory_space<vmem>>, %arg4: memref<48x8xbf16, #tpu.memory_space<vmem>>, %arg5: memref<48x8xbf16, #tpu.memory_space<vmem>>, %arg6: memref<16x32xf32, #tpu.memory_space<vmem>>, %arg7: memref<16x8xf32, #tpu.memory_space<vmem>>, %arg8: memref<16x8xf32, #tpu.memory_space<vmem>>, %arg9: memref<16x8xf32, #tpu.memory_space<vmem>>, %arg10: memref<16x1xf32, #tpu.memory_space<vmem>>) attributes {dimension_semantics = [#tpu.dimension_semantics<arbitrary>], iteration_bounds = array<i64: 1>, scalar_prefetch = 0 : i64, scratch_operands = 1 : i64, tpu.core_type = #tpu.core_type<tc>, window_params = [{transform_indices = @transform_0, window_bounds = array<i64: 1, 48>}, {transform_indices = @transform_1, window_bounds = array<i64: 48, 32>}, {transform_indices = @transform_2, window_bounds = array<i64: 48, 8>}, {transform_indices = @transform_3, window_bounds = array<i64: 48, 8>}, {transform_indices = @transform_4, window_bounds = array<i64: 48, 8>}, {pipeline_mode = #tpu.pipeline_mode<synchronous>, transform_indices = @transform_5, window_bounds = array<i64: 16, 32>}, {pipeline_mode = #tpu.pipeline_mode<synchronous>, transform_indices = @transform_6, window_bounds = array<i64: 16, 8>}, {pipeline_mode = #tpu.pipeline_mode<synchronous>, transform_indices = @transform_7, window_bounds = array<i64: 16, 8>}, {pipeline_mode = #tpu.pipeline_mode<synchronous>, transform_indices = @transform_8, window_bounds = array<i64: 16, 8>}]} {
    %c0_i32 = arith.constant 0 : i32
    %0 = arith.cmpi eq, %arg0, %c0_i32 : i32
    %1 = arith.extui %0 : i1 to i32
    %c0_i32_0 = arith.constant 0 : i32
    %2 = arith.cmpi ne, %1, %c0_i32_0 : i32
    scf.if %2 {
      %cst_36 = arith.constant 0.000000e+00 : f32
      %38 = vector.broadcast %cst_36 : f32 to vector<16x32xf32>
      %c0_37 = arith.constant 0 : index
      %c0_38 = arith.constant 0 : index
      %39 = vector.load %arg6[%c0_37, %c0_38] : memref<16x32xf32, #tpu.memory_space<vmem>>, vector<16x32xf32>
      tpu.vector_store %arg6[%c0_37, %c0_38], %38 {strides = array<i32>} : memref<16x32xf32, #tpu.memory_space<vmem>>, vector<16x32xf32>,
      %cst_39 = arith.constant 0.000000e+00 : f32
      %40 = vector.broadcast %cst_39 : f32 to vector<16x8xf32>
      %c0_40 = arith.constant 0 : index
      %c0_41 = arith.constant 0 : index
      %41 = vector.load %arg7[%c0_40, %c0_41] : memref<16x8xf32, #tpu.memory_space<vmem>>, vector<16x8xf32>
      tpu.vector_store %arg7[%c0_40, %c0_41], %40 {strides = array<i32>} : memref<16x8xf32, #tpu.memory_space<vmem>>, vector<16x8xf32>,
      %cst_42 = arith.constant 0.000000e+00 : f32
      %42 = vector.broadcast %cst_42 : f32 to vector<16x8xf32>
      %c0_43 = arith.constant 0 : index
      %c0_44 = arith.constant 0 : index
      %43 = vector.load %arg8[%c0_43, %c0_44] : memref<16x8xf32, #tpu.memory_space<vmem>>, vector<16x8xf32>
      tpu.vector_store %arg8[%c0_43, %c0_44], %42 {strides = array<i32>} : memref<16x8xf32, #tpu.memory_space<vmem>>, vector<16x8xf32>,
      %cst_45 = arith.constant 0.000000e+00 : f32
      %44 = vector.broadcast %cst_45 : f32 to vector<16x8xf32>
      %c0_46 = arith.constant 0 : index
      %c0_47 = arith.constant 0 : index
      %45 = vector.load %arg9[%c0_46, %c0_47] : memref<16x8xf32, #tpu.memory_space<vmem>>, vector<16x8xf32>
      tpu.vector_store %arg9[%c0_46, %c0_47], %44 {strides = array<i32>} : memref<16x8xf32, #tpu.memory_space<vmem>>, vector<16x8xf32>,
      %cst_48 = arith.constant 0.000000e+00 : f32
      %46 = vector.broadcast %cst_48 : f32 to vector<16x1xf32>
      %c0_49 = arith.constant 0 : index
      %c0_50 = arith.constant 0 : index
      %47 = vector.load %arg10[%c0_49, %c0_50] : memref<16x1xf32, #tpu.memory_space<vmem>>, vector<16x1xf32>
      tpu.vector_store %arg10[%c0_49, %c0_50], %46 {strides = array<i32>} : memref<16x1xf32, #tpu.memory_space<vmem>>, vector<16x1xf32>,
    } else {
    }
    %c0 = arith.constant 0 : index
    %c0_1 = arith.constant 0 : index
    %3 = vector.load %arg1[%c0, %c0_1] : memref<1x48xi32, #tpu.memory_space<vmem>>, vector<1x48xi32>
    %4 = tpu.iota {dimensions = array<i32: 0>} : vector<16x48xi32>
    %5 = vector.broadcast %3 : vector<1x48xi32> to vector<16x48xi32>
    %6 = arith.cmpi eq, %4, %5 : vector<16x48xi32>
    %7 = arith.extui %6 : vector<16x48xi1> to vector<16x48xi32>
    %8 = arith.sitofp %7 : vector<16x48xi32> to vector<16x48xf32>
    %c0_2 = arith.constant 0 : index
    %c0_3 = arith.constant 0 : index
    %9 = vector.load %arg10[%c0_2, %c0_3] : memref<16x1xf32, #tpu.memory_space<vmem>>, vector<16x1xf32>
    %cst = arith.constant dense<0.000000e+00> : vector<16xf32>
    %10 = vector.multi_reduction <add>, %8, %cst [1] : vector<16x48xf32> to vector<16xf32>
    %11 = vector.shape_cast %10 : vector<16xf32> to vector<16x1xf32>
    %12 = arith.addf %9, %11 : vector<16x1xf32>
    %c0_4 = arith.constant 0 : index
    %c0_5 = arith.constant 0 : index
    %13 = vector.load %arg10[%c0_4, %c0_5] : memref<16x1xf32, #tpu.memory_space<vmem>>, vector<16x1xf32>
    tpu.vector_store %arg10[%c0_4, %c0_5], %12 {strides = array<i32>} : memref<16x1xf32, #tpu.memory_space<vmem>>, vector<16x1xf32>,
    %14 = arith.truncf %8 : vector<16x48xf32> to vector<16x48xbf16>
    %c0_6 = arith.constant 0 : index
    %c0_7 = arith.constant 0 : index
    %15 = vector.load %arg6[%c0_6, %c0_7] : memref<16x32xf32, #tpu.memory_space<vmem>>, vector<16x32xf32>
    %c0_8 = arith.constant 0 : index
    %c0_9 = arith.constant 0 : index
    %16 = vector.load %arg2[%c0_8, %c0_9] : memref<48x32xbf16, #tpu.memory_space<vmem>>, vector<48x32xbf16>
    %cst_10 = arith.constant dense<0.000000e+00> : vector<16x32xf32>
    %17 = tpu.matmul %14, %16, %cst_10 {dimension_numbers = #tpu.dot_dimension_numbers<[1], [0], [0], [1], [0, 0, 1, 1], [], []>} : vector<16x48xbf16>, vector<48x32xbf16>, vector<16x32xf32> -> vector<16x32xf32>
    %18 = arith.addf %15, %17 : vector<16x32xf32>
    %c0_11 = arith.constant 0 : index
    %c0_12 = arith.constant 0 : index
    %19 = vector.load %arg6[%c0_11, %c0_12] : memref<16x32xf32, #tpu.memory_space<vmem>>, vector<16x32xf32>
    tpu.vector_store %arg6[%c0_11, %c0_12], %18 {strides = array<i32>} : memref<16x32xf32, #tpu.memory_space<vmem>>, vector<16x32xf32>,
    %c0_13 = arith.constant 0 : index
    %c0_14 = arith.constant 0 : index
    %20 = vector.load %arg7[%c0_13, %c0_14] : memref<16x8xf32, #tpu.memory_space<vmem>>, vector<16x8xf32>
    %c0_15 = arith.constant 0 : index
    %c0_16 = arith.constant 0 : index
    %21 = vector.load %arg3[%c0_15, %c0_16] : memref<48x8xbf16, #tpu.memory_space<vmem>>, vector<48x8xbf16>
    %cst_17 = arith.constant dense<0.000000e+00> : vector<16x8xf32>
    %22 = tpu.matmul %14, %21, %cst_17 {dimension_numbers = #tpu.dot_dimension_numbers<[1], [0], [0], [1], [0, 0, 1, 1], [], []>} : vector<16x48xbf16>, vector<48x8xbf16>, vector<16x8xf32> -> vector<16x8xf32>
    %23 = arith.addf %20, %22 : vector<16x8xf32>
    %c0_18 = arith.constant 0 : index
    %c0_19 = arith.constant 0 : index
    %24 = vector.load %arg7[%c0_18, %c0_19] : memref<16x8xf32, #tpu.memory_space<vmem>>, vector<16x8xf32>
    tpu.vector_store %arg7[%c0_18, %c0_19], %23 {strides = array<i32>} : memref<16x8xf32, #tpu.memory_space<vmem>>, vector<16x8xf32>,
    %c0_20 = arith.constant 0 : index
    %c0_21 = arith.constant 0 : index
    %25 = vector.load %arg8[%c0_20, %c0_21] : memref<16x8xf32, #tpu.memory_space<vmem>>, vector<16x8xf32>
    %c0_22 = arith.constant 0 : index
    %c0_23 = arith.constant 0 : index
    %26 = vector.load %arg4[%c0_22, %c0_23] : memref<48x8xbf16, #tpu.memory_space<vmem>>, vector<48x8xbf16>
    %cst_24 = arith.constant dense<0.000000e+00> : vector<16x8xf32>
    %27 = tpu.matmul %14, %26, %cst_24 {dimension_numbers = #tpu.dot_dimension_numbers<[1], [0], [0], [1], [0, 0, 1, 1], [], []>} : vector<16x48xbf16>, vector<48x8xbf16>, vector<16x8xf32> -> vector<16x8xf32>
    %28 = arith.addf %25, %27 : vector<16x8xf32>
    %c0_25 = arith.constant 0 : index
    %c0_26 = arith.constant 0 : index
    %29 = vector.load %arg8[%c0_25, %c0_26] : memref<16x8xf32, #tpu.memory_space<vmem>>, vector<16x8xf32>
    tpu.vector_store %arg8[%c0_25, %c0_26], %28 {strides = array<i32>} : memref<16x8xf32, #tpu.memory_space<vmem>>, vector<16x8xf32>,
    %c0_27 = arith.constant 0 : index
    %c0_28 = arith.constant 0 : index
    %30 = vector.load %arg9[%c0_27, %c0_28] : memref<16x8xf32, #tpu.memory_space<vmem>>, vector<16x8xf32>
    %c0_29 = arith.constant 0 : index
    %c0_30 = arith.constant 0 : index
    %31 = vector.load %arg5[%c0_29, %c0_30] : memref<48x8xbf16, #tpu.memory_space<vmem>>, vector<48x8xbf16>
    %cst_31 = arith.constant dense<0.000000e+00> : vector<16x8xf32>
    %32 = tpu.matmul %14, %31, %cst_31 {dimension_numbers = #tpu.dot_dimension_numbers<[1], [0], [0], [1], [0, 0, 1, 1], [], []>} : vector<16x48xbf16>, vector<48x8xbf16>, vector<16x8xf32> -> vector<16x8xf32>
    %33 = arith.addf %30, %32 : vector<16x8xf32>
    %c0_32 = arith.constant 0 : index
    %c0_33 = arith.constant 0 : index
    %34 = vector.load %arg9[%c0_32, %c0_33] : memref<16x8xf32, #tpu.memory_space<vmem>>, vector<16x8xf32>
    tpu.vector_store %arg9[%c0_32, %c0_33], %33 {strides = array<i32>} : memref<16x8xf32, #tpu.memory_space<vmem>>, vector<16x8xf32>,
    %c0_i32_34 = arith.constant 0 : i32
    %35 = arith.cmpi eq, %arg0, %c0_i32_34 : i32
    %36 = arith.extui %35 : i1 to i32
    %c0_i32_35 = arith.constant 0 : i32
    %37 = arith.cmpi ne, %36, %c0_i32_35 : i32
    scf.if %37 {
      %c0_36 = arith.constant 0 : index
      %c0_37 = arith.constant 0 : index
      %38 = vector.load %arg10[%c0_36, %c0_37] : memref<16x1xf32, #tpu.memory_space<vmem>>, vector<16x1xf32>
      %cst_38 = arith.constant 1.000000e+00 : f32
      %39 = vector.broadcast %cst_38 : f32 to vector<16x1xf32>
      %40 = arith.maximumf %38, %39 : vector<16x1xf32>
      %41 = tpu.reciprocal %40 {approx = true} : vector<16x1xf32> -> vector<16x1xf32>
      %c0_39 = arith.constant 0 : index
      %c0_40 = arith.constant 0 : index
      %42 = vector.load %arg6[%c0_39, %c0_40] : memref<16x32xf32, #tpu.memory_space<vmem>>, vector<16x32xf32>
      %43 = vector.broadcast %41 : vector<16x1xf32> to vector<16x32xf32>
      %44 = arith.mulf %42, %43 : vector<16x32xf32>
      %c0_41 = arith.constant 0 : index
      %c0_42 = arith.constant 0 : index
      %45 = vector.load %arg6[%c0_41, %c0_42] : memref<16x32xf32, #tpu.memory_space<vmem>>, vector<16x32xf32>
      tpu.vector_store %arg6[%c0_41, %c0_42], %44 {strides = array<i32>} : memref<16x32xf32, #tpu.memory_space<vmem>>, vector<16x32xf32>,
      %c0_43 = arith.constant 0 : index
      %c0_44 = arith.constant 0 : index
      %46 = vector.load %arg7[%c0_43, %c0_44] : memref<16x8xf32, #tpu.memory_space<vmem>>, vector<16x8xf32>
      %47 = vector.broadcast %41 : vector<16x1xf32> to vector<16x8xf32>
      %48 = arith.mulf %46, %47 : vector<16x8xf32>
      %c0_45 = arith.constant 0 : index
      %c0_46 = arith.constant 0 : index
      %49 = vector.load %arg7[%c0_45, %c0_46] : memref<16x8xf32, #tpu.memory_space<vmem>>, vector<16x8xf32>
      tpu.vector_store %arg7[%c0_45, %c0_46], %48 {strides = array<i32>} : memref<16x8xf32, #tpu.memory_space<vmem>>, vector<16x8xf32>,
      %c0_47 = arith.constant 0 : index
      %c0_48 = arith.constant 0 : index
      %50 = vector.load %arg8[%c0_47, %c0_48] : memref<16x8xf32, #tpu.memory_space<vmem>>, vector<16x8xf32>
      %51 = vector.broadcast %41 : vector<16x1xf32> to vector<16x8xf32>
      %52 = arith.mulf %50, %51 : vector<16x8xf32>
      %c0_49 = arith.constant 0 : index
      %c0_50 = arith.constant 0 : index
      %53 = vector.load %arg8[%c0_49, %c0_50] : memref<16x8xf32, #tpu.memory_space<vmem>>, vector<16x8xf32>
      tpu.vector_store %arg8[%c0_49, %c0_50], %52 {strides = array<i32>} : memref<16x8xf32, #tpu.memory_space<vmem>>, vector<16x8xf32>,
      %c0_51 = arith.constant 0 : index
      %c0_52 = arith.constant 0 : index
      %54 = vector.load %arg9[%c0_51, %c0_52] : memref<16x8xf32, #tpu.memory_space<vmem>>, vector<16x8xf32>
      %55 = vector.broadcast %41 : vector<16x1xf32> to vector<16x8xf32>
      %56 = arith.mulf %54, %55 : vector<16x8xf32>
      %c0_53 = arith.constant 0 : index
      %c0_54 = arith.constant 0 : index
      %57 = vector.load %arg9[%c0_53, %c0_54] : memref<16x8xf32, #tpu.memory_space<vmem>>, vector<16x8xf32>
      tpu.vector_store %arg9[%c0_53, %c0_54], %56 {strides = array<i32>} : memref<16x8xf32, #tpu.memory_space<vmem>>, vector<16x8xf32>,
    } else {
    }
    return
  }
  func.func @transform_0(%arg0: i32) -> (i32, i32) {
    %c0_i32 = arith.constant 0 : i32
    %c0_i32_0 = arith.constant 0 : i32
    return %c0_i32, %arg0 : i32, i32
  }
  func.func @transform_1(%arg0: i32) -> (i32, i32) {
    %c0_i32 = arith.constant 0 : i32
    %c0_i32_0 = arith.constant 0 : i32
    return %arg0, %c0_i32 : i32, i32
  }
  func.func @transform_2(%arg0: i32) -> (i32, i32) {
    %c0_i32 = arith.constant 0 : i32
    %c0_i32_0 = arith.constant 0 : i32
    return %arg0, %c0_i32 : i32, i32
  }
  func.func @transform_3(%arg0: i32) -> (i32, i32) {
    %c0_i32 = arith.constant 0 : i32
    %c0_i32_0 = arith.constant 0 : i32
    return %arg0, %c0_i32 : i32, i32
  }
  func.func @transform_4(%arg0: i32) -> (i32, i32) {
    %c0_i32 = arith.constant 0 : i32
    %c0_i32_0 = arith.constant 0 : i32
    return %arg0, %c0_i32 : i32, i32
  }
  func.func @transform_5(%arg0: i32) -> (i32, i32) {
    %c0_i32 = arith.constant 0 : i32
    %c0_i32_0 = arith.constant 0 : i32
    %c0_i32_1 = arith.constant 0 : i32
    return %c0_i32, %c0_i32_0 : i32, i32
  }
  func.func @transform_6(%arg0: i32) -> (i32, i32) {
    %c0_i32 = arith.constant 0 : i32
    %c0_i32_0 = arith.constant 0 : i32
    %c0_i32_1 = arith.constant 0 : i32
    return %c0_i32, %c0_i32_0 : i32, i32
  }
  func.func @transform_7(%arg0: i32) -> (i32, i32) {
    %c0_i32 = arith.constant 0 : i32
    %c0_i32_0 = arith.constant 0 : i32
    %c0_i32_1 = arith.constant 0 : i32
    return %c0_i32, %c0_i32_0 : i32, i32
  }
  func.func @transform_8(%arg0: i32) -> (i32, i32) {
    %c0_i32 = arith.constant 0 : i32
    %c0_i32_0 = arith.constant 0 : i32
    %c0_i32_1 = arith.constant 0 : i32
    return %c0_i32, %c0_i32_0 : i32, i32
  }
}

module attributes {stable_mosaic.version = 11 : i64} {
  func.func @_msg_chain_kernel(%arg0: i32, %arg1: memref<48x96xf32, #tpu.memory_space<vmem>>, %arg2: memref<48x20xf32, #tpu.memory_space<vmem>>, %arg3: memref<48x20xf32, #tpu.memory_space<vmem>>, %arg4: memref<48x20xf32, #tpu.memory_space<vmem>>, %arg5: memref<20x20xbf16, #tpu.memory_space<vmem>>, %arg6: memref<96x32xbf16, #tpu.memory_space<vmem>>, %arg7: memref<20x32xbf16, #tpu.memory_space<vmem>>, %arg8: memref<1x32xf32, #tpu.memory_space<vmem>>, %arg9: memref<20x8xbf16, #tpu.memory_space<vmem>>, %arg10: memref<8x8xbf16, #tpu.memory_space<vmem>>, %arg11: memref<32x32xbf16, #tpu.memory_space<vmem>>, %arg12: memref<8x32xbf16, #tpu.memory_space<vmem>>, %arg13: memref<1x32xf32, #tpu.memory_space<vmem>>, %arg14: memref<8x8xbf16, #tpu.memory_space<vmem>>, %arg15: memref<8x8xbf16, #tpu.memory_space<vmem>>, %arg16: memref<32x32xbf16, #tpu.memory_space<vmem>>, %arg17: memref<8x32xbf16, #tpu.memory_space<vmem>>, %arg18: memref<1x32xf32, #tpu.memory_space<vmem>>, %arg19: memref<8x8xbf16, #tpu.memory_space<vmem>>, %arg20: memref<48x32xbf16, #tpu.memory_space<vmem>>, %arg21: memref<48x8xbf16, #tpu.memory_space<vmem>>, %arg22: memref<48x8xbf16, #tpu.memory_space<vmem>>, %arg23: memref<48x8xbf16, #tpu.memory_space<vmem>>) attributes {dimension_semantics = [#tpu.dimension_semantics<parallel>], iteration_bounds = array<i64: 1>, scalar_prefetch = 0 : i64, scratch_operands = 0 : i64, tpu.core_type = #tpu.core_type<tc>, window_params = [{transform_indices = @transform_0, window_bounds = array<i64: 48, 96>}, {transform_indices = @transform_1, window_bounds = array<i64: 48, 20>}, {transform_indices = @transform_2, window_bounds = array<i64: 48, 20>}, {transform_indices = @transform_3, window_bounds = array<i64: 48, 20>}, {pipeline_mode = #tpu.pipeline_mode<synchronous>, transform_indices = @transform_4, window_bounds = array<i64: 20, 20>}, {pipeline_mode = #tpu.pipeline_mode<synchronous>, transform_indices = @transform_5, window_bounds = array<i64: 96, 32>}, {pipeline_mode = #tpu.pipeline_mode<synchronous>, transform_indices = @transform_6, window_bounds = array<i64: 20, 32>}, {pipeline_mode = #tpu.pipeline_mode<synchronous>, transform_indices = @transform_7, window_bounds = array<i64: 1, 32>}, {pipeline_mode = #tpu.pipeline_mode<synchronous>, transform_indices = @transform_8, window_bounds = array<i64: 20, 8>}, {pipeline_mode = #tpu.pipeline_mode<synchronous>, transform_indices = @transform_9, window_bounds = array<i64: 8, 8>}, {pipeline_mode = #tpu.pipeline_mode<synchronous>, transform_indices = @transform_10, window_bounds = array<i64: 32, 32>}, {pipeline_mode = #tpu.pipeline_mode<synchronous>, transform_indices = @transform_11, window_bounds = array<i64: 8, 32>}, {pipeline_mode = #tpu.pipeline_mode<synchronous>, transform_indices = @transform_12, window_bounds = array<i64: 1, 32>}, {pipeline_mode = #tpu.pipeline_mode<synchronous>, transform_indices = @transform_13, window_bounds = array<i64: 8, 8>}, {pipeline_mode = #tpu.pipeline_mode<synchronous>, transform_indices = @transform_14, window_bounds = array<i64: 8, 8>}, {pipeline_mode = #tpu.pipeline_mode<synchronous>, transform_indices = @transform_15, window_bounds = array<i64: 32, 32>}, {pipeline_mode = #tpu.pipeline_mode<synchronous>, transform_indices = @transform_16, window_bounds = array<i64: 8, 32>}, {pipeline_mode = #tpu.pipeline_mode<synchronous>, transform_indices = @transform_17, window_bounds = array<i64: 1, 32>}, {pipeline_mode = #tpu.pipeline_mode<synchronous>, transform_indices = @transform_18, window_bounds = array<i64: 8, 8>}, {transform_indices = @transform_19, window_bounds = array<i64: 48, 32>}, {transform_indices = @transform_20, window_bounds = array<i64: 48, 8>}, {transform_indices = @transform_21, window_bounds = array<i64: 48, 8>}, {transform_indices = @transform_22, window_bounds = array<i64: 48, 8>}]} {
    %c0 = arith.constant 0 : index
    %c0_0 = arith.constant 0 : index
    %0 = vector.load %arg5[%c0, %c0_0] : memref<20x20xbf16, #tpu.memory_space<vmem>>, vector<20x20xbf16>
    %c0_1 = arith.constant 0 : index
    %c0_2 = arith.constant 0 : index
    %1 = vector.load %arg6[%c0_1, %c0_2] : memref<96x32xbf16, #tpu.memory_space<vmem>>, vector<96x32xbf16>
    %c0_3 = arith.constant 0 : index
    %c0_4 = arith.constant 0 : index
    %2 = vector.load %arg7[%c0_3, %c0_4] : memref<20x32xbf16, #tpu.memory_space<vmem>>, vector<20x32xbf16>
    %c0_5 = arith.constant 0 : index
    %c0_6 = arith.constant 0 : index
    %3 = vector.load %arg8[%c0_5, %c0_6] : memref<1x32xf32, #tpu.memory_space<vmem>>, vector<1x32xf32>
    %c0_7 = arith.constant 0 : index
    %c0_8 = arith.constant 0 : index
    %4 = vector.load %arg9[%c0_7, %c0_8] : memref<20x8xbf16, #tpu.memory_space<vmem>>, vector<20x8xbf16>
    %c0_9 = arith.constant 0 : index
    %c0_10 = arith.constant 0 : index
    %5 = vector.load %arg10[%c0_9, %c0_10] : memref<8x8xbf16, #tpu.memory_space<vmem>>, vector<8x8xbf16>
    %c0_11 = arith.constant 0 : index
    %c0_12 = arith.constant 0 : index
    %6 = vector.load %arg11[%c0_11, %c0_12] : memref<32x32xbf16, #tpu.memory_space<vmem>>, vector<32x32xbf16>
    %c0_13 = arith.constant 0 : index
    %c0_14 = arith.constant 0 : index
    %7 = vector.load %arg12[%c0_13, %c0_14] : memref<8x32xbf16, #tpu.memory_space<vmem>>, vector<8x32xbf16>
    %c0_15 = arith.constant 0 : index
    %c0_16 = arith.constant 0 : index
    %8 = vector.load %arg13[%c0_15, %c0_16] : memref<1x32xf32, #tpu.memory_space<vmem>>, vector<1x32xf32>
    %c0_17 = arith.constant 0 : index
    %c0_18 = arith.constant 0 : index
    %9 = vector.load %arg14[%c0_17, %c0_18] : memref<8x8xbf16, #tpu.memory_space<vmem>>, vector<8x8xbf16>
    %c0_19 = arith.constant 0 : index
    %c0_20 = arith.constant 0 : index
    %10 = vector.load %arg15[%c0_19, %c0_20] : memref<8x8xbf16, #tpu.memory_space<vmem>>, vector<8x8xbf16>
    %c0_21 = arith.constant 0 : index
    %c0_22 = arith.constant 0 : index
    %11 = vector.load %arg16[%c0_21, %c0_22] : memref<32x32xbf16, #tpu.memory_space<vmem>>, vector<32x32xbf16>
    %c0_23 = arith.constant 0 : index
    %c0_24 = arith.constant 0 : index
    %12 = vector.load %arg17[%c0_23, %c0_24] : memref<8x32xbf16, #tpu.memory_space<vmem>>, vector<8x32xbf16>
    %c0_25 = arith.constant 0 : index
    %c0_26 = arith.constant 0 : index
    %13 = vector.load %arg18[%c0_25, %c0_26] : memref<1x32xf32, #tpu.memory_space<vmem>>, vector<1x32xf32>
    %c0_27 = arith.constant 0 : index
    %c0_28 = arith.constant 0 : index
    %14 = vector.load %arg19[%c0_27, %c0_28] : memref<8x8xbf16, #tpu.memory_space<vmem>>, vector<8x8xbf16>
    %c0_29 = arith.constant 0 : index
    %c0_30 = arith.constant 0 : index
    %15 = vector.load %arg1[%c0_29, %c0_30] : memref<48x96xf32, #tpu.memory_space<vmem>>, vector<48x96xf32>
    %c0_31 = arith.constant 0 : index
    %c0_32 = arith.constant 0 : index
    %16 = vector.load %arg2[%c0_31, %c0_32] : memref<48x20xf32, #tpu.memory_space<vmem>>, vector<48x20xf32>
    %c0_33 = arith.constant 0 : index
    %c0_34 = arith.constant 0 : index
    %17 = vector.load %arg3[%c0_33, %c0_34] : memref<48x20xf32, #tpu.memory_space<vmem>>, vector<48x20xf32>
    %c0_35 = arith.constant 0 : index
    %c0_36 = arith.constant 0 : index
    %18 = vector.load %arg4[%c0_35, %c0_36] : memref<48x20xf32, #tpu.memory_space<vmem>>, vector<48x20xf32>
    %19 = tpu.concatenate %16, %17, %18 in 0 : vector<48x20xf32>, vector<48x20xf32>, vector<48x20xf32> -> vector<144x20xf32>
    %20 = arith.truncf %19 : vector<144x20xf32> to vector<144x20xbf16>
    %cst = arith.constant dense<0.000000e+00> : vector<144x20xf32>
    %21 = tpu.matmul %20, %0, %cst {dimension_numbers = #tpu.dot_dimension_numbers<[1], [0], [0], [1], [0, 0, 1, 1], [], []>} : vector<144x20xbf16>, vector<20x20xbf16>, vector<144x20xf32> -> vector<144x20xf32>
    %22 = vector.extract_strided_slice %21 {offsets = [0, 0], sizes = [48, 20], strides = [1, 1]} : vector<144x20xf32> to vector<48x20xf32>
    %23 = vector.extract_strided_slice %21 {offsets = [48, 0], sizes = [48, 20], strides = [1, 1]} : vector<144x20xf32> to vector<48x20xf32>
    %24 = vector.extract_strided_slice %21 {offsets = [96, 0], sizes = [48, 20], strides = [1, 1]} : vector<144x20xf32> to vector<48x20xf32>
    %25 = arith.mulf %22, %22 : vector<48x20xf32>
    %26 = arith.mulf %23, %23 : vector<48x20xf32>
    %27 = arith.addf %25, %26 : vector<48x20xf32>
    %28 = arith.mulf %24, %24 : vector<48x20xf32>
    %29 = arith.addf %27, %28 : vector<48x20xf32>
    %cst_37 = arith.constant 9.99999993E-9 : f32
    %30 = vector.broadcast %cst_37 : f32 to vector<48x20xf32>
    %31 = arith.maximumf %29, %30 : vector<48x20xf32>
    %32 = math.sqrt %31 : vector<48x20xf32>
    %33 = arith.truncf %15 : vector<48x96xf32> to vector<48x96xbf16>
    %cst_38 = arith.constant dense<0.000000e+00> : vector<48x32xf32>
    %34 = tpu.matmul %33, %1, %cst_38 {dimension_numbers = #tpu.dot_dimension_numbers<[1], [0], [0], [1], [0, 0, 1, 1], [], []>} : vector<48x96xbf16>, vector<96x32xbf16>, vector<48x32xf32> -> vector<48x32xf32>
    %35 = arith.truncf %32 : vector<48x20xf32> to vector<48x20xbf16>
    %cst_39 = arith.constant dense<0.000000e+00> : vector<48x32xf32>
    %36 = tpu.matmul %35, %2, %cst_39 {dimension_numbers = #tpu.dot_dimension_numbers<[1], [0], [0], [1], [0, 0, 1, 1], [], []>} : vector<48x20xbf16>, vector<20x32xbf16>, vector<48x32xf32> -> vector<48x32xf32>
    %37 = arith.addf %34, %36 : vector<48x32xf32>
    %38 = vector.broadcast %3 : vector<1x32xf32> to vector<48x32xf32>
    %39 = arith.addf %37, %38 : vector<48x32xf32>
    %cst_40 = arith.constant 0.000000e+00 : f32
    %40 = vector.broadcast %cst_40 : f32 to vector<48x32xf32>
    %41 = arith.maximumf %39, %40 : vector<48x32xf32>
    %42 = arith.truncf %21 : vector<144x20xf32> to vector<144x20xbf16>
    %cst_41 = arith.constant dense<0.000000e+00> : vector<144x8xf32>
    %43 = tpu.matmul %42, %4, %cst_41 {dimension_numbers = #tpu.dot_dimension_numbers<[1], [0], [0], [1], [0, 0, 1, 1], [], []>} : vector<144x20xbf16>, vector<20x8xbf16>, vector<144x8xf32> -> vector<144x8xf32>
    %44 = vector.extract_strided_slice %43 {offsets = [0, 0], sizes = [48, 8], strides = [1, 1]} : vector<144x8xf32> to vector<48x8xf32>
    %45 = vector.extract_strided_slice %43 {offsets = [48, 0], sizes = [48, 8], strides = [1, 1]} : vector<144x8xf32> to vector<48x8xf32>
    %46 = vector.extract_strided_slice %43 {offsets = [96, 0], sizes = [48, 8], strides = [1, 1]} : vector<144x8xf32> to vector<48x8xf32>
    %47 = arith.mulf %44, %44 : vector<48x8xf32>
    %48 = arith.mulf %45, %45 : vector<48x8xf32>
    %49 = arith.addf %47, %48 : vector<48x8xf32>
    %50 = arith.mulf %46, %46 : vector<48x8xf32>
    %51 = arith.addf %49, %50 : vector<48x8xf32>
    %cst_42 = arith.constant 9.99999993E-9 : f32
    %52 = vector.broadcast %cst_42 : f32 to vector<48x8xf32>
    %53 = arith.maximumf %51, %52 : vector<48x8xf32>
    %54 = math.sqrt %53 : vector<48x8xf32>
    %55 = arith.negf %54 : vector<48x8xf32>
    %56 = math.exp %55 : vector<48x8xf32>
    %cst_43 = arith.constant 1.000000e+00 : f32
    %57 = vector.broadcast %cst_43 : f32 to vector<48x8xf32>
    %58 = arith.addf %57, %56 : vector<48x8xf32>
    %59 = arith.divf %57, %58 : vector<48x8xf32>
    %60 = arith.mulf %44, %59 : vector<48x8xf32>
    %61 = arith.mulf %45, %59 : vector<48x8xf32>
    %62 = arith.mulf %46, %59 : vector<48x8xf32>
    %63 = tpu.concatenate %60, %61, %62 in 0 : vector<48x8xf32>, vector<48x8xf32>, vector<48x8xf32> -> vector<144x8xf32>
    %64 = arith.truncf %63 : vector<144x8xf32> to vector<144x8xbf16>
    %cst_44 = arith.constant dense<0.000000e+00> : vector<144x8xf32>
    %65 = tpu.matmul %64, %5, %cst_44 {dimension_numbers = #tpu.dot_dimension_numbers<[1], [0], [0], [1], [0, 0, 1, 1], [], []>} : vector<144x8xbf16>, vector<8x8xbf16>, vector<144x8xf32> -> vector<144x8xf32>
    %66 = vector.extract_strided_slice %65 {offsets = [0, 0], sizes = [48, 8], strides = [1, 1]} : vector<144x8xf32> to vector<48x8xf32>
    %67 = vector.extract_strided_slice %65 {offsets = [48, 0], sizes = [48, 8], strides = [1, 1]} : vector<144x8xf32> to vector<48x8xf32>
    %68 = vector.extract_strided_slice %65 {offsets = [96, 0], sizes = [48, 8], strides = [1, 1]} : vector<144x8xf32> to vector<48x8xf32>
    %69 = arith.mulf %66, %66 : vector<48x8xf32>
    %70 = arith.mulf %67, %67 : vector<48x8xf32>
    %71 = arith.addf %69, %70 : vector<48x8xf32>
    %72 = arith.mulf %68, %68 : vector<48x8xf32>
    %73 = arith.addf %71, %72 : vector<48x8xf32>
    %cst_45 = arith.constant 9.99999993E-9 : f32
    %74 = vector.broadcast %cst_45 : f32 to vector<48x8xf32>
    %75 = arith.maximumf %73, %74 : vector<48x8xf32>
    %76 = math.sqrt %75 : vector<48x8xf32>
    %77 = arith.truncf %41 : vector<48x32xf32> to vector<48x32xbf16>
    %cst_46 = arith.constant dense<0.000000e+00> : vector<48x32xf32>
    %78 = tpu.matmul %77, %6, %cst_46 {dimension_numbers = #tpu.dot_dimension_numbers<[1], [0], [0], [1], [0, 0, 1, 1], [], []>} : vector<48x32xbf16>, vector<32x32xbf16>, vector<48x32xf32> -> vector<48x32xf32>
    %79 = arith.truncf %76 : vector<48x8xf32> to vector<48x8xbf16>
    %cst_47 = arith.constant dense<0.000000e+00> : vector<48x32xf32>
    %80 = tpu.matmul %79, %7, %cst_47 {dimension_numbers = #tpu.dot_dimension_numbers<[1], [0], [0], [1], [0, 0, 1, 1], [], []>} : vector<48x8xbf16>, vector<8x32xbf16>, vector<48x32xf32> -> vector<48x32xf32>
    %81 = arith.addf %78, %80 : vector<48x32xf32>
    %82 = vector.broadcast %8 : vector<1x32xf32> to vector<48x32xf32>
    %83 = arith.addf %81, %82 : vector<48x32xf32>
    %cst_48 = arith.constant 0.000000e+00 : f32
    %84 = vector.broadcast %cst_48 : f32 to vector<48x32xf32>
    %85 = arith.maximumf %83, %84 : vector<48x32xf32>
    %86 = arith.truncf %65 : vector<144x8xf32> to vector<144x8xbf16>
    %cst_49 = arith.constant dense<0.000000e+00> : vector<144x8xf32>
    %87 = tpu.matmul %86, %9, %cst_49 {dimension_numbers = #tpu.dot_dimension_numbers<[1], [0], [0], [1], [0, 0, 1, 1], [], []>} : vector<144x8xbf16>, vector<8x8xbf16>, vector<144x8xf32> -> vector<144x8xf32>
    %88 = vector.extract_strided_slice %87 {offsets = [0, 0], sizes = [48, 8], strides = [1, 1]} : vector<144x8xf32> to vector<48x8xf32>
    %89 = vector.extract_strided_slice %87 {offsets = [48, 0], sizes = [48, 8], strides = [1, 1]} : vector<144x8xf32> to vector<48x8xf32>
    %90 = vector.extract_strided_slice %87 {offsets = [96, 0], sizes = [48, 8], strides = [1, 1]} : vector<144x8xf32> to vector<48x8xf32>
    %91 = arith.mulf %88, %88 : vector<48x8xf32>
    %92 = arith.mulf %89, %89 : vector<48x8xf32>
    %93 = arith.addf %91, %92 : vector<48x8xf32>
    %94 = arith.mulf %90, %90 : vector<48x8xf32>
    %95 = arith.addf %93, %94 : vector<48x8xf32>
    %cst_50 = arith.constant 9.99999993E-9 : f32
    %96 = vector.broadcast %cst_50 : f32 to vector<48x8xf32>
    %97 = arith.maximumf %95, %96 : vector<48x8xf32>
    %98 = math.sqrt %97 : vector<48x8xf32>
    %99 = arith.negf %98 : vector<48x8xf32>
    %100 = math.exp %99 : vector<48x8xf32>
    %cst_51 = arith.constant 1.000000e+00 : f32
    %101 = vector.broadcast %cst_51 : f32 to vector<48x8xf32>
    %102 = arith.addf %101, %100 : vector<48x8xf32>
    %103 = arith.divf %101, %102 : vector<48x8xf32>
    %104 = arith.mulf %88, %103 : vector<48x8xf32>
    %105 = arith.mulf %89, %103 : vector<48x8xf32>
    %106 = arith.mulf %90, %103 : vector<48x8xf32>
    %107 = tpu.concatenate %104, %105, %106 in 0 : vector<48x8xf32>, vector<48x8xf32>, vector<48x8xf32> -> vector<144x8xf32>
    %108 = arith.truncf %107 : vector<144x8xf32> to vector<144x8xbf16>
    %cst_52 = arith.constant dense<0.000000e+00> : vector<144x8xf32>
    %109 = tpu.matmul %108, %10, %cst_52 {dimension_numbers = #tpu.dot_dimension_numbers<[1], [0], [0], [1], [0, 0, 1, 1], [], []>} : vector<144x8xbf16>, vector<8x8xbf16>, vector<144x8xf32> -> vector<144x8xf32>
    %110 = vector.extract_strided_slice %109 {offsets = [0, 0], sizes = [48, 8], strides = [1, 1]} : vector<144x8xf32> to vector<48x8xf32>
    %111 = vector.extract_strided_slice %109 {offsets = [48, 0], sizes = [48, 8], strides = [1, 1]} : vector<144x8xf32> to vector<48x8xf32>
    %112 = vector.extract_strided_slice %109 {offsets = [96, 0], sizes = [48, 8], strides = [1, 1]} : vector<144x8xf32> to vector<48x8xf32>
    %113 = arith.mulf %110, %110 : vector<48x8xf32>
    %114 = arith.mulf %111, %111 : vector<48x8xf32>
    %115 = arith.addf %113, %114 : vector<48x8xf32>
    %116 = arith.mulf %112, %112 : vector<48x8xf32>
    %117 = arith.addf %115, %116 : vector<48x8xf32>
    %cst_53 = arith.constant 9.99999993E-9 : f32
    %118 = vector.broadcast %cst_53 : f32 to vector<48x8xf32>
    %119 = arith.maximumf %117, %118 : vector<48x8xf32>
    %120 = math.sqrt %119 : vector<48x8xf32>
    %121 = arith.truncf %85 : vector<48x32xf32> to vector<48x32xbf16>
    %cst_54 = arith.constant dense<0.000000e+00> : vector<48x32xf32>
    %122 = tpu.matmul %121, %11, %cst_54 {dimension_numbers = #tpu.dot_dimension_numbers<[1], [0], [0], [1], [0, 0, 1, 1], [], []>} : vector<48x32xbf16>, vector<32x32xbf16>, vector<48x32xf32> -> vector<48x32xf32>
    %123 = arith.truncf %120 : vector<48x8xf32> to vector<48x8xbf16>
    %cst_55 = arith.constant dense<0.000000e+00> : vector<48x32xf32>
    %124 = tpu.matmul %123, %12, %cst_55 {dimension_numbers = #tpu.dot_dimension_numbers<[1], [0], [0], [1], [0, 0, 1, 1], [], []>} : vector<48x8xbf16>, vector<8x32xbf16>, vector<48x32xf32> -> vector<48x32xf32>
    %125 = arith.addf %122, %124 : vector<48x32xf32>
    %126 = vector.broadcast %13 : vector<1x32xf32> to vector<48x32xf32>
    %127 = arith.addf %125, %126 : vector<48x32xf32>
    %128 = arith.truncf %109 : vector<144x8xf32> to vector<144x8xbf16>
    %cst_56 = arith.constant dense<0.000000e+00> : vector<144x8xf32>
    %129 = tpu.matmul %128, %14, %cst_56 {dimension_numbers = #tpu.dot_dimension_numbers<[1], [0], [0], [1], [0, 0, 1, 1], [], []>} : vector<144x8xbf16>, vector<8x8xbf16>, vector<144x8xf32> -> vector<144x8xf32>
    %130 = vector.extract_strided_slice %129 {offsets = [0, 0], sizes = [48, 8], strides = [1, 1]} : vector<144x8xf32> to vector<48x8xf32>
    %131 = vector.extract_strided_slice %129 {offsets = [48, 0], sizes = [48, 8], strides = [1, 1]} : vector<144x8xf32> to vector<48x8xf32>
    %132 = vector.extract_strided_slice %129 {offsets = [96, 0], sizes = [48, 8], strides = [1, 1]} : vector<144x8xf32> to vector<48x8xf32>
    %133 = arith.truncf %127 : vector<48x32xf32> to vector<48x32xbf16>
    %c0_57 = arith.constant 0 : index
    %c0_58 = arith.constant 0 : index
    %134 = vector.load %arg20[%c0_57, %c0_58] : memref<48x32xbf16, #tpu.memory_space<vmem>>, vector<48x32xbf16>
    tpu.vector_store %arg20[%c0_57, %c0_58], %133 {strides = array<i32>} : memref<48x32xbf16, #tpu.memory_space<vmem>>, vector<48x32xbf16>,
    %135 = arith.truncf %130 : vector<48x8xf32> to vector<48x8xbf16>
    %c0_59 = arith.constant 0 : index
    %c0_60 = arith.constant 0 : index
    %136 = vector.load %arg21[%c0_59, %c0_60] : memref<48x8xbf16, #tpu.memory_space<vmem>>, vector<48x8xbf16>
    tpu.vector_store %arg21[%c0_59, %c0_60], %135 {strides = array<i32>} : memref<48x8xbf16, #tpu.memory_space<vmem>>, vector<48x8xbf16>,
    %137 = arith.truncf %131 : vector<48x8xf32> to vector<48x8xbf16>
    %c0_61 = arith.constant 0 : index
    %c0_62 = arith.constant 0 : index
    %138 = vector.load %arg22[%c0_61, %c0_62] : memref<48x8xbf16, #tpu.memory_space<vmem>>, vector<48x8xbf16>
    tpu.vector_store %arg22[%c0_61, %c0_62], %137 {strides = array<i32>} : memref<48x8xbf16, #tpu.memory_space<vmem>>, vector<48x8xbf16>,
    %139 = arith.truncf %132 : vector<48x8xf32> to vector<48x8xbf16>
    %c0_63 = arith.constant 0 : index
    %c0_64 = arith.constant 0 : index
    %140 = vector.load %arg23[%c0_63, %c0_64] : memref<48x8xbf16, #tpu.memory_space<vmem>>, vector<48x8xbf16>
    tpu.vector_store %arg23[%c0_63, %c0_64], %139 {strides = array<i32>} : memref<48x8xbf16, #tpu.memory_space<vmem>>, vector<48x8xbf16>,
    return
  }
  func.func @transform_0(%arg0: i32) -> (i32, i32) {
    %c0_i32 = arith.constant 0 : i32
    %c0_i32_0 = arith.constant 0 : i32
    return %arg0, %c0_i32 : i32, i32
  }
  func.func @transform_1(%arg0: i32) -> (i32, i32) {
    %c0_i32 = arith.constant 0 : i32
    %c0_i32_0 = arith.constant 0 : i32
    return %arg0, %c0_i32 : i32, i32
  }
  func.func @transform_2(%arg0: i32) -> (i32, i32) {
    %c0_i32 = arith.constant 0 : i32
    %c0_i32_0 = arith.constant 0 : i32
    return %arg0, %c0_i32 : i32, i32
  }
  func.func @transform_3(%arg0: i32) -> (i32, i32) {
    %c0_i32 = arith.constant 0 : i32
    %c0_i32_0 = arith.constant 0 : i32
    return %arg0, %c0_i32 : i32, i32
  }
  func.func @transform_4(%arg0: i32) -> (i32, i32) {
    %c0_i32 = arith.constant 0 : i32
    %c0_i32_0 = arith.constant 0 : i32
    %c0_i32_1 = arith.constant 0 : i32
    return %c0_i32, %c0_i32_0 : i32, i32
  }
  func.func @transform_5(%arg0: i32) -> (i32, i32) {
    %c0_i32 = arith.constant 0 : i32
    %c0_i32_0 = arith.constant 0 : i32
    %c0_i32_1 = arith.constant 0 : i32
    return %c0_i32, %c0_i32_0 : i32, i32
  }
  func.func @transform_6(%arg0: i32) -> (i32, i32) {
    %c0_i32 = arith.constant 0 : i32
    %c0_i32_0 = arith.constant 0 : i32
    %c0_i32_1 = arith.constant 0 : i32
    return %c0_i32, %c0_i32_0 : i32, i32
  }
  func.func @transform_7(%arg0: i32) -> (i32, i32) {
    %c0_i32 = arith.constant 0 : i32
    %c0_i32_0 = arith.constant 0 : i32
    %c0_i32_1 = arith.constant 0 : i32
    return %c0_i32, %c0_i32_0 : i32, i32
  }
  func.func @transform_8(%arg0: i32) -> (i32, i32) {
    %c0_i32 = arith.constant 0 : i32
    %c0_i32_0 = arith.constant 0 : i32
    %c0_i32_1 = arith.constant 0 : i32
    return %c0_i32, %c0_i32_0 : i32, i32
  }
  func.func @transform_9(%arg0: i32) -> (i32, i32) {
    %c0_i32 = arith.constant 0 : i32
    %c0_i32_0 = arith.constant 0 : i32
    %c0_i32_1 = arith.constant 0 : i32
    return %c0_i32, %c0_i32_0 : i32, i32
  }
  func.func @transform_10(%arg0: i32) -> (i32, i32) {
    %c0_i32 = arith.constant 0 : i32
    %c0_i32_0 = arith.constant 0 : i32
    %c0_i32_1 = arith.constant 0 : i32
    return %c0_i32, %c0_i32_0 : i32, i32
  }
  func.func @transform_11(%arg0: i32) -> (i32, i32) {
    %c0_i32 = arith.constant 0 : i32
    %c0_i32_0 = arith.constant 0 : i32
    %c0_i32_1 = arith.constant 0 : i32
    return %c0_i32, %c0_i32_0 : i32, i32
  }
  func.func @transform_12(%arg0: i32) -> (i32, i32) {
    %c0_i32 = arith.constant 0 : i32
    %c0_i32_0 = arith.constant 0 : i32
    %c0_i32_1 = arith.constant 0 : i32
    return %c0_i32, %c0_i32_0 : i32, i32
  }
  func.func @transform_13(%arg0: i32) -> (i32, i32) {
    %c0_i32 = arith.constant 0 : i32
    %c0_i32_0 = arith.constant 0 : i32
    %c0_i32_1 = arith.constant 0 : i32
    return %c0_i32, %c0_i32_0 : i32, i32
  }
  func.func @transform_14(%arg0: i32) -> (i32, i32) {
    %c0_i32 = arith.constant 0 : i32
    %c0_i32_0 = arith.constant 0 : i32
    %c0_i32_1 = arith.constant 0 : i32
    return %c0_i32, %c0_i32_0 : i32, i32
  }
  func.func @transform_15(%arg0: i32) -> (i32, i32) {
    %c0_i32 = arith.constant 0 : i32
    %c0_i32_0 = arith.constant 0 : i32
    %c0_i32_1 = arith.constant 0 : i32
    return %c0_i32, %c0_i32_0 : i32, i32
  }
  func.func @transform_16(%arg0: i32) -> (i32, i32) {
    %c0_i32 = arith.constant 0 : i32
    %c0_i32_0 = arith.constant 0 : i32
    %c0_i32_1 = arith.constant 0 : i32
    return %c0_i32, %c0_i32_0 : i32, i32
  }
  func.func @transform_17(%arg0: i32) -> (i32, i32) {
    %c0_i32 = arith.constant 0 : i32
    %c0_i32_0 = arith.constant 0 : i32
    %c0_i32_1 = arith.constant 0 : i32
    return %c0_i32, %c0_i32_0 : i32, i32
  }
  func.func @transform_18(%arg0: i32) -> (i32, i32) {
    %c0_i32 = arith.constant 0 : i32
    %c0_i32_0 = arith.constant 0 : i32
    %c0_i32_1 = arith.constant 0 : i32
    return %c0_i32, %c0_i32_0 : i32, i32
  }
  func.func @transform_19(%arg0: i32) -> (i32, i32) {
    %c0_i32 = arith.constant 0 : i32
    %c0_i32_0 = arith.constant 0 : i32
    return %arg0, %c0_i32 : i32, i32
  }
  func.func @transform_20(%arg0: i32) -> (i32, i32) {
    %c0_i32 = arith.constant 0 : i32
    %c0_i32_0 = arith.constant 0 : i32
    return %arg0, %c0_i32 : i32, i32
  }
  func.func @transform_21(%arg0: i32) -> (i32, i32) {
    %c0_i32 = arith.constant 0 : i32
    %c0_i32_0 = arith.constant 0 : i32
    return %arg0, %c0_i32 : i32, i32
  }
  func.func @transform_22(%arg0: i32) -> (i32, i32) {
    %c0_i32 = arith.constant 0 : i32
    %c0_i32_0 = arith.constant 0 : i32
    return %arg0, %c0_i32 : i32, i32
  }
}

module attributes {stable_mosaic.version = 11 : i64} {
  func.func @_node_update_kernel(%arg0: i32, %arg1: memref<16x32xf32, #tpu.memory_space<vmem>>, %arg2: memref<16x8xf32, #tpu.memory_space<vmem>>, %arg3: memref<16x8xf32, #tpu.memory_space<vmem>>, %arg4: memref<16x8xf32, #tpu.memory_space<vmem>>, %arg5: memref<16x32xf32, #tpu.memory_space<vmem>>, %arg6: memref<16x8xf32, #tpu.memory_space<vmem>>, %arg7: memref<16x8xf32, #tpu.memory_space<vmem>>, %arg8: memref<16x8xf32, #tpu.memory_space<vmem>>, %arg9: memref<1x32xf32, #tpu.memory_space<vmem>>, %arg10: memref<1x32xf32, #tpu.memory_space<vmem>>, %arg11: memref<8x16xbf16, #tpu.memory_space<vmem>>, %arg12: memref<32x128xbf16, #tpu.memory_space<vmem>>, %arg13: memref<16x128xbf16, #tpu.memory_space<vmem>>, %arg14: memref<1x128xf32, #tpu.memory_space<vmem>>, %arg15: memref<16x16xbf16, #tpu.memory_space<vmem>>, %arg16: memref<16x16xbf16, #tpu.memory_space<vmem>>, %arg17: memref<128x32xbf16, #tpu.memory_space<vmem>>, %arg18: memref<16x32xbf16, #tpu.memory_space<vmem>>, %arg19: memref<1x32xf32, #tpu.memory_space<vmem>>, %arg20: memref<16x8xbf16, #tpu.memory_space<vmem>>, %arg21: memref<1x32xf32, #tpu.memory_space<vmem>>, %arg22: memref<1x32xf32, #tpu.memory_space<vmem>>, %arg23: memref<16x32xf32, #tpu.memory_space<vmem>>, %arg24: memref<16x8xf32, #tpu.memory_space<vmem>>, %arg25: memref<16x8xf32, #tpu.memory_space<vmem>>, %arg26: memref<16x8xf32, #tpu.memory_space<vmem>>) attributes {dimension_semantics = [#tpu.dimension_semantics<parallel>], iteration_bounds = array<i64: 1>, scalar_prefetch = 0 : i64, scratch_operands = 0 : i64, tpu.core_type = #tpu.core_type<tc>, window_params = [{transform_indices = @transform_0, window_bounds = array<i64: 16, 32>}, {transform_indices = @transform_1, window_bounds = array<i64: 16, 8>}, {transform_indices = @transform_2, window_bounds = array<i64: 16, 8>}, {transform_indices = @transform_3, window_bounds = array<i64: 16, 8>}, {transform_indices = @transform_4, window_bounds = array<i64: 16, 32>}, {transform_indices = @transform_5, window_bounds = array<i64: 16, 8>}, {transform_indices = @transform_6, window_bounds = array<i64: 16, 8>}, {transform_indices = @transform_7, window_bounds = array<i64: 16, 8>}, {pipeline_mode = #tpu.pipeline_mode<synchronous>, transform_indices = @transform_8, window_bounds = array<i64: 1, 32>}, {pipeline_mode = #tpu.pipeline_mode<synchronous>, transform_indices = @transform_9, window_bounds = array<i64: 1, 32>}, {pipeline_mode = #tpu.pipeline_mode<synchronous>, transform_indices = @transform_10, window_bounds = array<i64: 8, 16>}, {pipeline_mode = #tpu.pipeline_mode<synchronous>, transform_indices = @transform_11, window_bounds = array<i64: 32, 128>}, {pipeline_mode = #tpu.pipeline_mode<synchronous>, transform_indices = @transform_12, window_bounds = array<i64: 16, 128>}, {pipeline_mode = #tpu.pipeline_mode<synchronous>, transform_indices = @transform_13, window_bounds = array<i64: 1, 128>}, {pipeline_mode = #tpu.pipeline_mode<synchronous>, transform_indices = @transform_14, window_bounds = array<i64: 16, 16>}, {pipeline_mode = #tpu.pipeline_mode<synchronous>, transform_indices = @transform_15, window_bounds = array<i64: 16, 16>}, {pipeline_mode = #tpu.pipeline_mode<synchronous>, transform_indices = @transform_16, window_bounds = array<i64: 128, 32>}, {pipeline_mode = #tpu.pipeline_mode<synchronous>, transform_indices = @transform_17, window_bounds = array<i64: 16, 32>}, {pipeline_mode = #tpu.pipeline_mode<synchronous>, transform_indices = @transform_18, window_bounds = array<i64: 1, 32>}, {pipeline_mode = #tpu.pipeline_mode<synchronous>, transform_indices = @transform_19, window_bounds = array<i64: 16, 8>}, {pipeline_mode = #tpu.pipeline_mode<synchronous>, transform_indices = @transform_20, window_bounds = array<i64: 1, 32>}, {pipeline_mode = #tpu.pipeline_mode<synchronous>, transform_indices = @transform_21, window_bounds = array<i64: 1, 32>}, {transform_indices = @transform_22, window_bounds = array<i64: 16, 32>}, {transform_indices = @transform_23, window_bounds = array<i64: 16, 8>}, {transform_indices = @transform_24, window_bounds = array<i64: 16, 8>}, {transform_indices = @transform_25, window_bounds = array<i64: 16, 8>}]} {
    %c0 = arith.constant 0 : index
    %c0_0 = arith.constant 0 : index
    %0 = vector.load %arg9[%c0, %c0_0] : memref<1x32xf32, #tpu.memory_space<vmem>>, vector<1x32xf32>
    %c0_1 = arith.constant 0 : index
    %c0_2 = arith.constant 0 : index
    %1 = vector.load %arg10[%c0_1, %c0_2] : memref<1x32xf32, #tpu.memory_space<vmem>>, vector<1x32xf32>
    %c0_3 = arith.constant 0 : index
    %c0_4 = arith.constant 0 : index
    %2 = vector.load %arg11[%c0_3, %c0_4] : memref<8x16xbf16, #tpu.memory_space<vmem>>, vector<8x16xbf16>
    %c0_5 = arith.constant 0 : index
    %c0_6 = arith.constant 0 : index
    %3 = vector.load %arg12[%c0_5, %c0_6] : memref<32x128xbf16, #tpu.memory_space<vmem>>, vector<32x128xbf16>
    %c0_7 = arith.constant 0 : index
    %c0_8 = arith.constant 0 : index
    %4 = vector.load %arg13[%c0_7, %c0_8] : memref<16x128xbf16, #tpu.memory_space<vmem>>, vector<16x128xbf16>
    %c0_9 = arith.constant 0 : index
    %c0_10 = arith.constant 0 : index
    %5 = vector.load %arg14[%c0_9, %c0_10] : memref<1x128xf32, #tpu.memory_space<vmem>>, vector<1x128xf32>
    %c0_11 = arith.constant 0 : index
    %c0_12 = arith.constant 0 : index
    %6 = vector.load %arg15[%c0_11, %c0_12] : memref<16x16xbf16, #tpu.memory_space<vmem>>, vector<16x16xbf16>
    %c0_13 = arith.constant 0 : index
    %c0_14 = arith.constant 0 : index
    %7 = vector.load %arg16[%c0_13, %c0_14] : memref<16x16xbf16, #tpu.memory_space<vmem>>, vector<16x16xbf16>
    %c0_15 = arith.constant 0 : index
    %c0_16 = arith.constant 0 : index
    %8 = vector.load %arg17[%c0_15, %c0_16] : memref<128x32xbf16, #tpu.memory_space<vmem>>, vector<128x32xbf16>
    %c0_17 = arith.constant 0 : index
    %c0_18 = arith.constant 0 : index
    %9 = vector.load %arg18[%c0_17, %c0_18] : memref<16x32xbf16, #tpu.memory_space<vmem>>, vector<16x32xbf16>
    %c0_19 = arith.constant 0 : index
    %c0_20 = arith.constant 0 : index
    %10 = vector.load %arg19[%c0_19, %c0_20] : memref<1x32xf32, #tpu.memory_space<vmem>>, vector<1x32xf32>
    %c0_21 = arith.constant 0 : index
    %c0_22 = arith.constant 0 : index
    %11 = vector.load %arg20[%c0_21, %c0_22] : memref<16x8xbf16, #tpu.memory_space<vmem>>, vector<16x8xbf16>
    %c0_23 = arith.constant 0 : index
    %c0_24 = arith.constant 0 : index
    %12 = vector.load %arg21[%c0_23, %c0_24] : memref<1x32xf32, #tpu.memory_space<vmem>>, vector<1x32xf32>
    %c0_25 = arith.constant 0 : index
    %c0_26 = arith.constant 0 : index
    %13 = vector.load %arg22[%c0_25, %c0_26] : memref<1x32xf32, #tpu.memory_space<vmem>>, vector<1x32xf32>
    %c0_27 = arith.constant 0 : index
    %c0_28 = arith.constant 0 : index
    %14 = vector.load %arg1[%c0_27, %c0_28] : memref<16x32xf32, #tpu.memory_space<vmem>>, vector<16x32xf32>
    %c0_29 = arith.constant 0 : index
    %c0_30 = arith.constant 0 : index
    %15 = vector.load %arg5[%c0_29, %c0_30] : memref<16x32xf32, #tpu.memory_space<vmem>>, vector<16x32xf32>
    %16 = arith.addf %14, %15 : vector<16x32xf32>
    %c0_31 = arith.constant 0 : index
    %c0_32 = arith.constant 0 : index
    %17 = vector.load %arg2[%c0_31, %c0_32] : memref<16x8xf32, #tpu.memory_space<vmem>>, vector<16x8xf32>
    %c0_33 = arith.constant 0 : index
    %c0_34 = arith.constant 0 : index
    %18 = vector.load %arg6[%c0_33, %c0_34] : memref<16x8xf32, #tpu.memory_space<vmem>>, vector<16x8xf32>
    %19 = arith.addf %17, %18 : vector<16x8xf32>
    %c0_35 = arith.constant 0 : index
    %c0_36 = arith.constant 0 : index
    %20 = vector.load %arg3[%c0_35, %c0_36] : memref<16x8xf32, #tpu.memory_space<vmem>>, vector<16x8xf32>
    %c0_37 = arith.constant 0 : index
    %c0_38 = arith.constant 0 : index
    %21 = vector.load %arg7[%c0_37, %c0_38] : memref<16x8xf32, #tpu.memory_space<vmem>>, vector<16x8xf32>
    %22 = arith.addf %20, %21 : vector<16x8xf32>
    %c0_39 = arith.constant 0 : index
    %c0_40 = arith.constant 0 : index
    %23 = vector.load %arg4[%c0_39, %c0_40] : memref<16x8xf32, #tpu.memory_space<vmem>>, vector<16x8xf32>
    %c0_41 = arith.constant 0 : index
    %c0_42 = arith.constant 0 : index
    %24 = vector.load %arg8[%c0_41, %c0_42] : memref<16x8xf32, #tpu.memory_space<vmem>>, vector<16x8xf32>
    %25 = arith.addf %23, %24 : vector<16x8xf32>
    %cst = arith.constant dense<0.000000e+00> : vector<16xf32>
    %26 = vector.multi_reduction <add>, %16, %cst [1] : vector<16x32xf32> to vector<16xf32>
    %27 = vector.shape_cast %26 : vector<16xf32> to vector<16x1xf32>
    %cst_43 = arith.constant 3.200000e+01 : f32
    %28 = vector.broadcast %cst_43 : f32 to vector<16x1xf32>
    %29 = arith.divf %27, %28 : vector<16x1xf32>
    %30 = vector.broadcast %29 : vector<16x1xf32> to vector<16x32xf32>
    %31 = arith.subf %16, %30 : vector<16x32xf32>
    %32 = arith.mulf %31, %31 : vector<16x32xf32>
    %cst_44 = arith.constant dense<0.000000e+00> : vector<16xf32>
    %33 = vector.multi_reduction <add>, %32, %cst_44 [1] : vector<16x32xf32> to vector<16xf32>
    %34 = vector.shape_cast %33 : vector<16xf32> to vector<16x1xf32>
    %cst_45 = arith.constant 3.200000e+01 : f32
    %35 = vector.broadcast %cst_45 : f32 to vector<16x1xf32>
    %36 = arith.divf %34, %35 : vector<16x1xf32>
    %cst_46 = arith.constant 9.99999974E-6 : f32
    %37 = vector.broadcast %cst_46 : f32 to vector<16x1xf32>
    %38 = arith.addf %36, %37 : vector<16x1xf32>
    %39 = math.rsqrt %38 : vector<16x1xf32>
    %40 = vector.broadcast %39 : vector<16x1xf32> to vector<16x32xf32>
    %41 = arith.mulf %31, %40 : vector<16x32xf32>
    %42 = vector.broadcast %0 : vector<1x32xf32> to vector<16x32xf32>
    %43 = arith.mulf %41, %42 : vector<16x32xf32>
    %44 = vector.broadcast %1 : vector<1x32xf32> to vector<16x32xf32>
    %45 = arith.addf %43, %44 : vector<16x32xf32>
    %46 = arith.mulf %19, %19 : vector<16x8xf32>
    %47 = arith.mulf %22, %22 : vector<16x8xf32>
    %48 = arith.addf %46, %47 : vector<16x8xf32>
    %49 = arith.mulf %25, %25 : vector<16x8xf32>
    %50 = arith.addf %48, %49 : vector<16x8xf32>
    %cst_47 = arith.constant 9.99999993E-9 : f32
    %51 = vector.broadcast %cst_47 : f32 to vector<16x8xf32>
    %52 = arith.maximumf %50, %51 : vector<16x8xf32>
    %cst_48 = arith.constant dense<0.000000e+00> : vector<16xf32>
    %53 = vector.multi_reduction <add>, %52, %cst_48 [1] : vector<16x8xf32> to vector<16xf32>
    %54 = vector.shape_cast %53 : vector<16xf32> to vector<16x1xf32>
    %cst_49 = arith.constant 8.000000e+00 : f32
    %55 = vector.broadcast %cst_49 : f32 to vector<16x1xf32>
    %56 = arith.divf %54, %55 : vector<16x1xf32>
    %57 = math.rsqrt %56 : vector<16x1xf32>
    %58 = vector.broadcast %57 : vector<16x1xf32> to vector<16x8xf32>
    %59 = arith.mulf %19, %58 : vector<16x8xf32>
    %60 = vector.broadcast %57 : vector<16x1xf32> to vector<16x8xf32>
    %61 = arith.mulf %22, %60 : vector<16x8xf32>
    %62 = vector.broadcast %57 : vector<16x1xf32> to vector<16x8xf32>
    %63 = arith.mulf %25, %62 : vector<16x8xf32>
    %64 = tpu.concatenate %59, %61, %63 in 0 : vector<16x8xf32>, vector<16x8xf32>, vector<16x8xf32> -> vector<48x8xf32>
    %65 = arith.truncf %64 : vector<48x8xf32> to vector<48x8xbf16>
    %cst_50 = arith.constant dense<0.000000e+00> : vector<48x16xf32>
    %66 = tpu.matmul %65, %2, %cst_50 {dimension_numbers = #tpu.dot_dimension_numbers<[1], [0], [0], [1], [0, 0, 1, 1], [], []>} : vector<48x8xbf16>, vector<8x16xbf16>, vector<48x16xf32> -> vector<48x16xf32>
    %67 = vector.extract_strided_slice %66 {offsets = [0, 0], sizes = [16, 16], strides = [1, 1]} : vector<48x16xf32> to vector<16x16xf32>
    %68 = vector.extract_strided_slice %66 {offsets = [16, 0], sizes = [16, 16], strides = [1, 1]} : vector<48x16xf32> to vector<16x16xf32>
    %69 = vector.extract_strided_slice %66 {offsets = [32, 0], sizes = [16, 16], strides = [1, 1]} : vector<48x16xf32> to vector<16x16xf32>
    %70 = arith.mulf %67, %67 : vector<16x16xf32>
    %71 = arith.mulf %68, %68 : vector<16x16xf32>
    %72 = arith.addf %70, %71 : vector<16x16xf32>
    %73 = arith.mulf %69, %69 : vector<16x16xf32>
    %74 = arith.addf %72, %73 : vector<16x16xf32>
    %cst_51 = arith.constant 9.99999993E-9 : f32
    %75 = vector.broadcast %cst_51 : f32 to vector<16x16xf32>
    %76 = arith.maximumf %74, %75 : vector<16x16xf32>
    %77 = math.sqrt %76 : vector<16x16xf32>
    %78 = arith.truncf %45 : vector<16x32xf32> to vector<16x32xbf16>
    %cst_52 = arith.constant dense<0.000000e+00> : vector<16x128xf32>
    %79 = tpu.matmul %78, %3, %cst_52 {dimension_numbers = #tpu.dot_dimension_numbers<[1], [0], [0], [1], [0, 0, 1, 1], [], []>} : vector<16x32xbf16>, vector<32x128xbf16>, vector<16x128xf32> -> vector<16x128xf32>
    %80 = arith.truncf %77 : vector<16x16xf32> to vector<16x16xbf16>
    %cst_53 = arith.constant dense<0.000000e+00> : vector<16x128xf32>
    %81 = tpu.matmul %80, %4, %cst_53 {dimension_numbers = #tpu.dot_dimension_numbers<[1], [0], [0], [1], [0, 0, 1, 1], [], []>} : vector<16x16xbf16>, vector<16x128xbf16>, vector<16x128xf32> -> vector<16x128xf32>
    %82 = arith.addf %79, %81 : vector<16x128xf32>
    %83 = vector.broadcast %5 : vector<1x128xf32> to vector<16x128xf32>
    %84 = arith.addf %82, %83 : vector<16x128xf32>
    %cst_54 = arith.constant 0.000000e+00 : f32
    %85 = vector.broadcast %cst_54 : f32 to vector<16x128xf32>
    %86 = arith.maximumf %84, %85 : vector<16x128xf32>
    %87 = arith.truncf %66 : vector<48x16xf32> to vector<48x16xbf16>
    %cst_55 = arith.constant dense<0.000000e+00> : vector<48x16xf32>
    %88 = tpu.matmul %87, %6, %cst_55 {dimension_numbers = #tpu.dot_dimension_numbers<[1], [0], [0], [1], [0, 0, 1, 1], [], []>} : vector<48x16xbf16>, vector<16x16xbf16>, vector<48x16xf32> -> vector<48x16xf32>
    %89 = vector.extract_strided_slice %88 {offsets = [0, 0], sizes = [16, 16], strides = [1, 1]} : vector<48x16xf32> to vector<16x16xf32>
    %90 = vector.extract_strided_slice %88 {offsets = [16, 0], sizes = [16, 16], strides = [1, 1]} : vector<48x16xf32> to vector<16x16xf32>
    %91 = vector.extract_strided_slice %88 {offsets = [32, 0], sizes = [16, 16], strides = [1, 1]} : vector<48x16xf32> to vector<16x16xf32>
    %92 = arith.mulf %89, %89 : vector<16x16xf32>
    %93 = arith.mulf %90, %90 : vector<16x16xf32>
    %94 = arith.addf %92, %93 : vector<16x16xf32>
    %95 = arith.mulf %91, %91 : vector<16x16xf32>
    %96 = arith.addf %94, %95 : vector<16x16xf32>
    %cst_56 = arith.constant 9.99999993E-9 : f32
    %97 = vector.broadcast %cst_56 : f32 to vector<16x16xf32>
    %98 = arith.maximumf %96, %97 : vector<16x16xf32>
    %99 = math.sqrt %98 : vector<16x16xf32>
    %100 = arith.negf %99 : vector<16x16xf32>
    %101 = math.exp %100 : vector<16x16xf32>
    %cst_57 = arith.constant 1.000000e+00 : f32
    %102 = vector.broadcast %cst_57 : f32 to vector<16x16xf32>
    %103 = arith.addf %102, %101 : vector<16x16xf32>
    %104 = arith.divf %102, %103 : vector<16x16xf32>
    %105 = arith.mulf %89, %104 : vector<16x16xf32>
    %106 = arith.mulf %90, %104 : vector<16x16xf32>
    %107 = arith.mulf %91, %104 : vector<16x16xf32>
    %108 = tpu.concatenate %105, %106, %107 in 0 : vector<16x16xf32>, vector<16x16xf32>, vector<16x16xf32> -> vector<48x16xf32>
    %109 = arith.truncf %108 : vector<48x16xf32> to vector<48x16xbf16>
    %cst_58 = arith.constant dense<0.000000e+00> : vector<48x16xf32>
    %110 = tpu.matmul %109, %7, %cst_58 {dimension_numbers = #tpu.dot_dimension_numbers<[1], [0], [0], [1], [0, 0, 1, 1], [], []>} : vector<48x16xbf16>, vector<16x16xbf16>, vector<48x16xf32> -> vector<48x16xf32>
    %111 = vector.extract_strided_slice %110 {offsets = [0, 0], sizes = [16, 16], strides = [1, 1]} : vector<48x16xf32> to vector<16x16xf32>
    %112 = vector.extract_strided_slice %110 {offsets = [16, 0], sizes = [16, 16], strides = [1, 1]} : vector<48x16xf32> to vector<16x16xf32>
    %113 = vector.extract_strided_slice %110 {offsets = [32, 0], sizes = [16, 16], strides = [1, 1]} : vector<48x16xf32> to vector<16x16xf32>
    %114 = arith.mulf %111, %111 : vector<16x16xf32>
    %115 = arith.mulf %112, %112 : vector<16x16xf32>
    %116 = arith.addf %114, %115 : vector<16x16xf32>
    %117 = arith.mulf %113, %113 : vector<16x16xf32>
    %118 = arith.addf %116, %117 : vector<16x16xf32>
    %cst_59 = arith.constant 9.99999993E-9 : f32
    %119 = vector.broadcast %cst_59 : f32 to vector<16x16xf32>
    %120 = arith.maximumf %118, %119 : vector<16x16xf32>
    %121 = math.sqrt %120 : vector<16x16xf32>
    %122 = arith.truncf %86 : vector<16x128xf32> to vector<16x128xbf16>
    %cst_60 = arith.constant dense<0.000000e+00> : vector<16x32xf32>
    %123 = tpu.matmul %122, %8, %cst_60 {dimension_numbers = #tpu.dot_dimension_numbers<[1], [0], [0], [1], [0, 0, 1, 1], [], []>} : vector<16x128xbf16>, vector<128x32xbf16>, vector<16x32xf32> -> vector<16x32xf32>
    %124 = arith.truncf %121 : vector<16x16xf32> to vector<16x16xbf16>
    %cst_61 = arith.constant dense<0.000000e+00> : vector<16x32xf32>
    %125 = tpu.matmul %124, %9, %cst_61 {dimension_numbers = #tpu.dot_dimension_numbers<[1], [0], [0], [1], [0, 0, 1, 1], [], []>} : vector<16x16xbf16>, vector<16x32xbf16>, vector<16x32xf32> -> vector<16x32xf32>
    %126 = arith.addf %123, %125 : vector<16x32xf32>
    %127 = vector.broadcast %10 : vector<1x32xf32> to vector<16x32xf32>
    %128 = arith.addf %126, %127 : vector<16x32xf32>
    %129 = arith.truncf %110 : vector<48x16xf32> to vector<48x16xbf16>
    %cst_62 = arith.constant dense<0.000000e+00> : vector<48x8xf32>
    %130 = tpu.matmul %129, %11, %cst_62 {dimension_numbers = #tpu.dot_dimension_numbers<[1], [0], [0], [1], [0, 0, 1, 1], [], []>} : vector<48x16xbf16>, vector<16x8xbf16>, vector<48x8xf32> -> vector<48x8xf32>
    %131 = vector.extract_strided_slice %130 {offsets = [0, 0], sizes = [16, 8], strides = [1, 1]} : vector<48x8xf32> to vector<16x8xf32>
    %132 = vector.extract_strided_slice %130 {offsets = [16, 0], sizes = [16, 8], strides = [1, 1]} : vector<48x8xf32> to vector<16x8xf32>
    %133 = vector.extract_strided_slice %130 {offsets = [32, 0], sizes = [16, 8], strides = [1, 1]} : vector<48x8xf32> to vector<16x8xf32>
    %134 = arith.addf %45, %128 : vector<16x32xf32>
    %135 = arith.addf %59, %131 : vector<16x8xf32>
    %136 = arith.addf %61, %132 : vector<16x8xf32>
    %137 = arith.addf %63, %133 : vector<16x8xf32>
    %cst_63 = arith.constant dense<0.000000e+00> : vector<16xf32>
    %138 = vector.multi_reduction <add>, %134, %cst_63 [1] : vector<16x32xf32> to vector<16xf32>
    %139 = vector.shape_cast %138 : vector<16xf32> to vector<16x1xf32>
    %cst_64 = arith.constant 3.200000e+01 : f32
    %140 = vector.broadcast %cst_64 : f32 to vector<16x1xf32>
    %141 = arith.divf %139, %140 : vector<16x1xf32>
    %142 = vector.broadcast %141 : vector<16x1xf32> to vector<16x32xf32>
    %143 = arith.subf %134, %142 : vector<16x32xf32>
    %144 = arith.mulf %143, %143 : vector<16x32xf32>
    %cst_65 = arith.constant dense<0.000000e+00> : vector<16xf32>
    %145 = vector.multi_reduction <add>, %144, %cst_65 [1] : vector<16x32xf32> to vector<16xf32>
    %146 = vector.shape_cast %145 : vector<16xf32> to vector<16x1xf32>
    %cst_66 = arith.constant 3.200000e+01 : f32
    %147 = vector.broadcast %cst_66 : f32 to vector<16x1xf32>
    %148 = arith.divf %146, %147 : vector<16x1xf32>
    %cst_67 = arith.constant 9.99999974E-6 : f32
    %149 = vector.broadcast %cst_67 : f32 to vector<16x1xf32>
    %150 = arith.addf %148, %149 : vector<16x1xf32>
    %151 = math.rsqrt %150 : vector<16x1xf32>
    %152 = vector.broadcast %151 : vector<16x1xf32> to vector<16x32xf32>
    %153 = arith.mulf %143, %152 : vector<16x32xf32>
    %154 = vector.broadcast %12 : vector<1x32xf32> to vector<16x32xf32>
    %155 = arith.mulf %153, %154 : vector<16x32xf32>
    %156 = vector.broadcast %13 : vector<1x32xf32> to vector<16x32xf32>
    %157 = arith.addf %155, %156 : vector<16x32xf32>
    %158 = arith.mulf %135, %135 : vector<16x8xf32>
    %159 = arith.mulf %136, %136 : vector<16x8xf32>
    %160 = arith.addf %158, %159 : vector<16x8xf32>
    %161 = arith.mulf %137, %137 : vector<16x8xf32>
    %162 = arith.addf %160, %161 : vector<16x8xf32>
    %cst_68 = arith.constant 9.99999993E-9 : f32
    %163 = vector.broadcast %cst_68 : f32 to vector<16x8xf32>
    %164 = arith.maximumf %162, %163 : vector<16x8xf32>
    %cst_69 = arith.constant dense<0.000000e+00> : vector<16xf32>
    %165 = vector.multi_reduction <add>, %164, %cst_69 [1] : vector<16x8xf32> to vector<16xf32>
    %166 = vector.shape_cast %165 : vector<16xf32> to vector<16x1xf32>
    %cst_70 = arith.constant 8.000000e+00 : f32
    %167 = vector.broadcast %cst_70 : f32 to vector<16x1xf32>
    %168 = arith.divf %166, %167 : vector<16x1xf32>
    %169 = math.rsqrt %168 : vector<16x1xf32>
    %170 = vector.broadcast %169 : vector<16x1xf32> to vector<16x8xf32>
    %171 = arith.mulf %135, %170 : vector<16x8xf32>
    %172 = vector.broadcast %169 : vector<16x1xf32> to vector<16x8xf32>
    %173 = arith.mulf %136, %172 : vector<16x8xf32>
    %174 = vector.broadcast %169 : vector<16x1xf32> to vector<16x8xf32>
    %175 = arith.mulf %137, %174 : vector<16x8xf32>
    %c0_71 = arith.constant 0 : index
    %c0_72 = arith.constant 0 : index
    %176 = vector.load %arg23[%c0_71, %c0_72] : memref<16x32xf32, #tpu.memory_space<vmem>>, vector<16x32xf32>
    tpu.vector_store %arg23[%c0_71, %c0_72], %157 {strides = array<i32>} : memref<16x32xf32, #tpu.memory_space<vmem>>, vector<16x32xf32>,
    %c0_73 = arith.constant 0 : index
    %c0_74 = arith.constant 0 : index
    %177 = vector.load %arg24[%c0_73, %c0_74] : memref<16x8xf32, #tpu.memory_space<vmem>>, vector<16x8xf32>
    tpu.vector_store %arg24[%c0_73, %c0_74], %171 {strides = array<i32>} : memref<16x8xf32, #tpu.memory_space<vmem>>, vector<16x8xf32>,
    %c0_75 = arith.constant 0 : index
    %c0_76 = arith.constant 0 : index
    %178 = vector.load %arg25[%c0_75, %c0_76] : memref<16x8xf32, #tpu.memory_space<vmem>>, vector<16x8xf32>
    tpu.vector_store %arg25[%c0_75, %c0_76], %173 {strides = array<i32>} : memref<16x8xf32, #tpu.memory_space<vmem>>, vector<16x8xf32>,
    %c0_77 = arith.constant 0 : index
    %c0_78 = arith.constant 0 : index
    %179 = vector.load %arg26[%c0_77, %c0_78] : memref<16x8xf32, #tpu.memory_space<vmem>>, vector<16x8xf32>
    tpu.vector_store %arg26[%c0_77, %c0_78], %175 {strides = array<i32>} : memref<16x8xf32, #tpu.memory_space<vmem>>, vector<16x8xf32>,
    return
  }
  func.func @transform_0(%arg0: i32) -> (i32, i32) {
    %c0_i32 = arith.constant 0 : i32
    %c0_i32_0 = arith.constant 0 : i32
    return %arg0, %c0_i32 : i32, i32
  }
  func.func @transform_1(%arg0: i32) -> (i32, i32) {
    %c0_i32 = arith.constant 0 : i32
    %c0_i32_0 = arith.constant 0 : i32
    return %arg0, %c0_i32 : i32, i32
  }
  func.func @transform_2(%arg0: i32) -> (i32, i32) {
    %c0_i32 = arith.constant 0 : i32
    %c0_i32_0 = arith.constant 0 : i32
    return %arg0, %c0_i32 : i32, i32
  }
  func.func @transform_3(%arg0: i32) -> (i32, i32) {
    %c0_i32 = arith.constant 0 : i32
    %c0_i32_0 = arith.constant 0 : i32
    return %arg0, %c0_i32 : i32, i32
  }
  func.func @transform_4(%arg0: i32) -> (i32, i32) {
    %c0_i32 = arith.constant 0 : i32
    %c0_i32_0 = arith.constant 0 : i32
    return %arg0, %c0_i32 : i32, i32
  }
  func.func @transform_5(%arg0: i32) -> (i32, i32) {
    %c0_i32 = arith.constant 0 : i32
    %c0_i32_0 = arith.constant 0 : i32
    return %arg0, %c0_i32 : i32, i32
  }
  func.func @transform_6(%arg0: i32) -> (i32, i32) {
    %c0_i32 = arith.constant 0 : i32
    %c0_i32_0 = arith.constant 0 : i32
    return %arg0, %c0_i32 : i32, i32
  }
  func.func @transform_7(%arg0: i32) -> (i32, i32) {
    %c0_i32 = arith.constant 0 : i32
    %c0_i32_0 = arith.constant 0 : i32
    return %arg0, %c0_i32 : i32, i32
  }
  func.func @transform_8(%arg0: i32) -> (i32, i32) {
    %c0_i32 = arith.constant 0 : i32
    %c0_i32_0 = arith.constant 0 : i32
    %c0_i32_1 = arith.constant 0 : i32
    return %c0_i32, %c0_i32_0 : i32, i32
  }
  func.func @transform_9(%arg0: i32) -> (i32, i32) {
    %c0_i32 = arith.constant 0 : i32
    %c0_i32_0 = arith.constant 0 : i32
    %c0_i32_1 = arith.constant 0 : i32
    return %c0_i32, %c0_i32_0 : i32, i32
  }
  func.func @transform_10(%arg0: i32) -> (i32, i32) {
    %c0_i32 = arith.constant 0 : i32
    %c0_i32_0 = arith.constant 0 : i32
    %c0_i32_1 = arith.constant 0 : i32
    return %c0_i32, %c0_i32_0 : i32, i32
  }
  func.func @transform_11(%arg0: i32) -> (i32, i32) {
    %c0_i32 = arith.constant 0 : i32
    %c0_i32_0 = arith.constant 0 : i32
    %c0_i32_1 = arith.constant 0 : i32
    return %c0_i32, %c0_i32_0 : i32, i32
  }
  func.func @transform_12(%arg0: i32) -> (i32, i32) {
    %c0_i32 = arith.constant 0 : i32
    %c0_i32_0 = arith.constant 0 : i32
    %c0_i32_1 = arith.constant 0 : i32
    return %c0_i32, %c0_i32_0 : i32, i32
  }
  func.func @transform_13(%arg0: i32) -> (i32, i32) {
    %c0_i32 = arith.constant 0 : i32
    %c0_i32_0 = arith.constant 0 : i32
    %c0_i32_1 = arith.constant 0 : i32
    return %c0_i32, %c0_i32_0 : i32, i32
  }
  func.func @transform_14(%arg0: i32) -> (i32, i32) {
    %c0_i32 = arith.constant 0 : i32
    %c0_i32_0 = arith.constant 0 : i32
    %c0_i32_1 = arith.constant 0 : i32
    return %c0_i32, %c0_i32_0 : i32, i32
  }
  func.func @transform_15(%arg0: i32) -> (i32, i32) {
    %c0_i32 = arith.constant 0 : i32
    %c0_i32_0 = arith.constant 0 : i32
    %c0_i32_1 = arith.constant 0 : i32
    return %c0_i32, %c0_i32_0 : i32, i32
  }
  func.func @transform_16(%arg0: i32) -> (i32, i32) {
    %c0_i32 = arith.constant 0 : i32
    %c0_i32_0 = arith.constant 0 : i32
    %c0_i32_1 = arith.constant 0 : i32
    return %c0_i32, %c0_i32_0 : i32, i32
  }
  func.func @transform_17(%arg0: i32) -> (i32, i32) {
    %c0_i32 = arith.constant 0 : i32
    %c0_i32_0 = arith.constant 0 : i32
    %c0_i32_1 = arith.constant 0 : i32
    return %c0_i32, %c0_i32_0 : i32, i32
  }
  func.func @transform_18(%arg0: i32) -> (i32, i32) {
    %c0_i32 = arith.constant 0 : i32
    %c0_i32_0 = arith.constant 0 : i32
    %c0_i32_1 = arith.constant 0 : i32
    return %c0_i32, %c0_i32_0 : i32, i32
  }
  func.func @transform_19(%arg0: i32) -> (i32, i32) {
    %c0_i32 = arith.constant 0 : i32
    %c0_i32_0 = arith.constant 0 : i32
    %c0_i32_1 = arith.constant 0 : i32
    return %c0_i32, %c0_i32_0 : i32, i32
  }
  func.func @transform_20(%arg0: i32) -> (i32, i32) {
    %c0_i32 = arith.constant 0 : i32
    %c0_i32_0 = arith.constant 0 : i32
    %c0_i32_1 = arith.constant 0 : i32
    return %c0_i32, %c0_i32_0 : i32, i32
  }
  func.func @transform_21(%arg0: i32) -> (i32, i32) {
    %c0_i32 = arith.constant 0 : i32
    %c0_i32_0 = arith.constant 0 : i32
    %c0_i32_1 = arith.constant 0 : i32
    return %c0_i32, %c0_i32_0 : i32, i32
  }
  func.func @transform_22(%arg0: i32) -> (i32, i32) {
    %c0_i32 = arith.constant 0 : i32
    %c0_i32_0 = arith.constant 0 : i32
    return %arg0, %c0_i32 : i32, i32
  }
  func.func @transform_23(%arg0: i32) -> (i32, i32) {
    %c0_i32 = arith.constant 0 : i32
    %c0_i32_0 = arith.constant 0 : i32
    return %arg0, %c0_i32 : i32, i32
  }
  func.func @transform_24(%arg0: i32) -> (i32, i32) {
    %c0_i32 = arith.constant 0 : i32
    %c0_i32_0 = arith.constant 0 : i32
    return %arg0, %c0_i32 : i32, i32
  }
  func.func @transform_25(%arg0: i32) -> (i32, i32) {
    %c0_i32 = arith.constant 0 : i32
    %c0_i32_0 = arith.constant 0 : i32
    return %arg0, %c0_i32 : i32, i32
  }
}

module attributes {stable_mosaic.version = 11 : i64} {
  func.func @_ln_gvp_scalar_kernel(%arg0: i32, %arg1: memref<16x32xf32, #tpu.memory_space<vmem>>, %arg2: memref<16x8xf32, #tpu.memory_space<vmem>>, %arg3: memref<16x8xf32, #tpu.memory_space<vmem>>, %arg4: memref<16x8xf32, #tpu.memory_space<vmem>>, %arg5: memref<1x32xf32, #tpu.memory_space<vmem>>, %arg6: memref<1x32xf32, #tpu.memory_space<vmem>>, %arg7: memref<8x8xbf16, #tpu.memory_space<vmem>>, %arg8: memref<32x32xbf16, #tpu.memory_space<vmem>>, %arg9: memref<8x32xbf16, #tpu.memory_space<vmem>>, %arg10: memref<1x32xf32, #tpu.memory_space<vmem>>, %arg11: memref<16x32xf32, #tpu.memory_space<vmem>>) attributes {dimension_semantics = [#tpu.dimension_semantics<parallel>], iteration_bounds = array<i64: 1>, scalar_prefetch = 0 : i64, scratch_operands = 0 : i64, tpu.core_type = #tpu.core_type<tc>, window_params = [{transform_indices = @transform_0, window_bounds = array<i64: 16, 32>}, {transform_indices = @transform_1, window_bounds = array<i64: 16, 8>}, {transform_indices = @transform_2, window_bounds = array<i64: 16, 8>}, {transform_indices = @transform_3, window_bounds = array<i64: 16, 8>}, {pipeline_mode = #tpu.pipeline_mode<synchronous>, transform_indices = @transform_4, window_bounds = array<i64: 1, 32>}, {pipeline_mode = #tpu.pipeline_mode<synchronous>, transform_indices = @transform_5, window_bounds = array<i64: 1, 32>}, {pipeline_mode = #tpu.pipeline_mode<synchronous>, transform_indices = @transform_6, window_bounds = array<i64: 8, 8>}, {pipeline_mode = #tpu.pipeline_mode<synchronous>, transform_indices = @transform_7, window_bounds = array<i64: 32, 32>}, {pipeline_mode = #tpu.pipeline_mode<synchronous>, transform_indices = @transform_8, window_bounds = array<i64: 8, 32>}, {pipeline_mode = #tpu.pipeline_mode<synchronous>, transform_indices = @transform_9, window_bounds = array<i64: 1, 32>}, {transform_indices = @transform_10, window_bounds = array<i64: 16, 32>}]} {
    %c0 = arith.constant 0 : index
    %c0_0 = arith.constant 0 : index
    %0 = vector.load %arg1[%c0, %c0_0] : memref<16x32xf32, #tpu.memory_space<vmem>>, vector<16x32xf32>
    %c0_1 = arith.constant 0 : index
    %c0_2 = arith.constant 0 : index
    %1 = vector.load %arg2[%c0_1, %c0_2] : memref<16x8xf32, #tpu.memory_space<vmem>>, vector<16x8xf32>
    %c0_3 = arith.constant 0 : index
    %c0_4 = arith.constant 0 : index
    %2 = vector.load %arg3[%c0_3, %c0_4] : memref<16x8xf32, #tpu.memory_space<vmem>>, vector<16x8xf32>
    %c0_5 = arith.constant 0 : index
    %c0_6 = arith.constant 0 : index
    %3 = vector.load %arg4[%c0_5, %c0_6] : memref<16x8xf32, #tpu.memory_space<vmem>>, vector<16x8xf32>
    %c0_7 = arith.constant 0 : index
    %c0_8 = arith.constant 0 : index
    %4 = vector.load %arg5[%c0_7, %c0_8] : memref<1x32xf32, #tpu.memory_space<vmem>>, vector<1x32xf32>
    %c0_9 = arith.constant 0 : index
    %c0_10 = arith.constant 0 : index
    %5 = vector.load %arg6[%c0_9, %c0_10] : memref<1x32xf32, #tpu.memory_space<vmem>>, vector<1x32xf32>
    %cst = arith.constant dense<0.000000e+00> : vector<16xf32>
    %6 = vector.multi_reduction <add>, %0, %cst [1] : vector<16x32xf32> to vector<16xf32>
    %7 = vector.shape_cast %6 : vector<16xf32> to vector<16x1xf32>
    %cst_11 = arith.constant 3.200000e+01 : f32
    %8 = vector.broadcast %cst_11 : f32 to vector<16x1xf32>
    %9 = arith.divf %7, %8 : vector<16x1xf32>
    %10 = vector.broadcast %9 : vector<16x1xf32> to vector<16x32xf32>
    %11 = arith.subf %0, %10 : vector<16x32xf32>
    %12 = arith.mulf %11, %11 : vector<16x32xf32>
    %cst_12 = arith.constant dense<0.000000e+00> : vector<16xf32>
    %13 = vector.multi_reduction <add>, %12, %cst_12 [1] : vector<16x32xf32> to vector<16xf32>
    %14 = vector.shape_cast %13 : vector<16xf32> to vector<16x1xf32>
    %cst_13 = arith.constant 3.200000e+01 : f32
    %15 = vector.broadcast %cst_13 : f32 to vector<16x1xf32>
    %16 = arith.divf %14, %15 : vector<16x1xf32>
    %cst_14 = arith.constant 9.99999974E-6 : f32
    %17 = vector.broadcast %cst_14 : f32 to vector<16x1xf32>
    %18 = arith.addf %16, %17 : vector<16x1xf32>
    %19 = math.rsqrt %18 : vector<16x1xf32>
    %20 = vector.broadcast %19 : vector<16x1xf32> to vector<16x32xf32>
    %21 = arith.mulf %11, %20 : vector<16x32xf32>
    %22 = vector.broadcast %4 : vector<1x32xf32> to vector<16x32xf32>
    %23 = arith.mulf %21, %22 : vector<16x32xf32>
    %24 = vector.broadcast %5 : vector<1x32xf32> to vector<16x32xf32>
    %25 = arith.addf %23, %24 : vector<16x32xf32>
    %26 = arith.mulf %1, %1 : vector<16x8xf32>
    %27 = arith.mulf %2, %2 : vector<16x8xf32>
    %28 = arith.addf %26, %27 : vector<16x8xf32>
    %29 = arith.mulf %3, %3 : vector<16x8xf32>
    %30 = arith.addf %28, %29 : vector<16x8xf32>
    %cst_15 = arith.constant 9.99999993E-9 : f32
    %31 = vector.broadcast %cst_15 : f32 to vector<16x8xf32>
    %32 = arith.maximumf %30, %31 : vector<16x8xf32>
    %cst_16 = arith.constant dense<0.000000e+00> : vector<16xf32>
    %33 = vector.multi_reduction <add>, %32, %cst_16 [1] : vector<16x8xf32> to vector<16xf32>
    %34 = vector.shape_cast %33 : vector<16xf32> to vector<16x1xf32>
    %cst_17 = arith.constant 8.000000e+00 : f32
    %35 = vector.broadcast %cst_17 : f32 to vector<16x1xf32>
    %36 = arith.divf %34, %35 : vector<16x1xf32>
    %37 = math.rsqrt %36 : vector<16x1xf32>
    %38 = vector.broadcast %37 : vector<16x1xf32> to vector<16x8xf32>
    %39 = arith.mulf %1, %38 : vector<16x8xf32>
    %40 = vector.broadcast %37 : vector<16x1xf32> to vector<16x8xf32>
    %41 = arith.mulf %2, %40 : vector<16x8xf32>
    %42 = vector.broadcast %37 : vector<16x1xf32> to vector<16x8xf32>
    %43 = arith.mulf %3, %42 : vector<16x8xf32>
    %c0_18 = arith.constant 0 : index
    %c0_19 = arith.constant 0 : index
    %44 = vector.load %arg7[%c0_18, %c0_19] : memref<8x8xbf16, #tpu.memory_space<vmem>>, vector<8x8xbf16>
    %c0_20 = arith.constant 0 : index
    %c0_21 = arith.constant 0 : index
    %45 = vector.load %arg8[%c0_20, %c0_21] : memref<32x32xbf16, #tpu.memory_space<vmem>>, vector<32x32xbf16>
    %c0_22 = arith.constant 0 : index
    %c0_23 = arith.constant 0 : index
    %46 = vector.load %arg9[%c0_22, %c0_23] : memref<8x32xbf16, #tpu.memory_space<vmem>>, vector<8x32xbf16>
    %c0_24 = arith.constant 0 : index
    %c0_25 = arith.constant 0 : index
    %47 = vector.load %arg10[%c0_24, %c0_25] : memref<1x32xf32, #tpu.memory_space<vmem>>, vector<1x32xf32>
    %48 = tpu.concatenate %39, %41, %43 in 0 : vector<16x8xf32>, vector<16x8xf32>, vector<16x8xf32> -> vector<48x8xf32>
    %49 = arith.truncf %48 : vector<48x8xf32> to vector<48x8xbf16>
    %cst_26 = arith.constant dense<0.000000e+00> : vector<48x8xf32>
    %50 = tpu.matmul %49, %44, %cst_26 {dimension_numbers = #tpu.dot_dimension_numbers<[1], [0], [0], [1], [0, 0, 1, 1], [], []>} : vector<48x8xbf16>, vector<8x8xbf16>, vector<48x8xf32> -> vector<48x8xf32>
    %51 = vector.extract_strided_slice %50 {offsets = [0, 0], sizes = [16, 8], strides = [1, 1]} : vector<48x8xf32> to vector<16x8xf32>
    %52 = vector.extract_strided_slice %50 {offsets = [16, 0], sizes = [16, 8], strides = [1, 1]} : vector<48x8xf32> to vector<16x8xf32>
    %53 = vector.extract_strided_slice %50 {offsets = [32, 0], sizes = [16, 8], strides = [1, 1]} : vector<48x8xf32> to vector<16x8xf32>
    %54 = arith.mulf %51, %51 : vector<16x8xf32>
    %55 = arith.mulf %52, %52 : vector<16x8xf32>
    %56 = arith.addf %54, %55 : vector<16x8xf32>
    %57 = arith.mulf %53, %53 : vector<16x8xf32>
    %58 = arith.addf %56, %57 : vector<16x8xf32>
    %cst_27 = arith.constant 9.99999993E-9 : f32
    %59 = vector.broadcast %cst_27 : f32 to vector<16x8xf32>
    %60 = arith.maximumf %58, %59 : vector<16x8xf32>
    %61 = math.sqrt %60 : vector<16x8xf32>
    %62 = arith.truncf %25 : vector<16x32xf32> to vector<16x32xbf16>
    %cst_28 = arith.constant dense<0.000000e+00> : vector<16x32xf32>
    %63 = tpu.matmul %62, %45, %cst_28 {dimension_numbers = #tpu.dot_dimension_numbers<[1], [0], [0], [1], [0, 0, 1, 1], [], []>} : vector<16x32xbf16>, vector<32x32xbf16>, vector<16x32xf32> -> vector<16x32xf32>
    %64 = arith.truncf %61 : vector<16x8xf32> to vector<16x8xbf16>
    %cst_29 = arith.constant dense<0.000000e+00> : vector<16x32xf32>
    %65 = tpu.matmul %64, %46, %cst_29 {dimension_numbers = #tpu.dot_dimension_numbers<[1], [0], [0], [1], [0, 0, 1, 1], [], []>} : vector<16x8xbf16>, vector<8x32xbf16>, vector<16x32xf32> -> vector<16x32xf32>
    %66 = arith.addf %63, %65 : vector<16x32xf32>
    %67 = vector.broadcast %47 : vector<1x32xf32> to vector<16x32xf32>
    %68 = arith.addf %66, %67 : vector<16x32xf32>
    %cst_30 = arith.constant 0.000000e+00 : f32
    %69 = vector.broadcast %cst_30 : f32 to vector<16x32xf32>
    %70 = arith.maximumf %68, %69 : vector<16x32xf32>
    %c0_31 = arith.constant 0 : index
    %c0_32 = arith.constant 0 : index
    %71 = vector.load %arg11[%c0_31, %c0_32] : memref<16x32xf32, #tpu.memory_space<vmem>>, vector<16x32xf32>
    tpu.vector_store %arg11[%c0_31, %c0_32], %70 {strides = array<i32>} : memref<16x32xf32, #tpu.memory_space<vmem>>, vector<16x32xf32>,
    return
  }
  func.func @transform_0(%arg0: i32) -> (i32, i32) {
    %c0_i32 = arith.constant 0 : i32
    %c0_i32_0 = arith.constant 0 : i32
    return %arg0, %c0_i32 : i32, i32
  }
  func.func @transform_1(%arg0: i32) -> (i32, i32) {
    %c0_i32 = arith.constant 0 : i32
    %c0_i32_0 = arith.constant 0 : i32
    return %arg0, %c0_i32 : i32, i32
  }
  func.func @transform_2(%arg0: i32) -> (i32, i32) {
    %c0_i32 = arith.constant 0 : i32
    %c0_i32_0 = arith.constant 0 : i32
    return %arg0, %c0_i32 : i32, i32
  }
  func.func @transform_3(%arg0: i32) -> (i32, i32) {
    %c0_i32 = arith.constant 0 : i32
    %c0_i32_0 = arith.constant 0 : i32
    return %arg0, %c0_i32 : i32, i32
  }
  func.func @transform_4(%arg0: i32) -> (i32, i32) {
    %c0_i32 = arith.constant 0 : i32
    %c0_i32_0 = arith.constant 0 : i32
    %c0_i32_1 = arith.constant 0 : i32
    return %c0_i32, %c0_i32_0 : i32, i32
  }
  func.func @transform_5(%arg0: i32) -> (i32, i32) {
    %c0_i32 = arith.constant 0 : i32
    %c0_i32_0 = arith.constant 0 : i32
    %c0_i32_1 = arith.constant 0 : i32
    return %c0_i32, %c0_i32_0 : i32, i32
  }
  func.func @transform_6(%arg0: i32) -> (i32, i32) {
    %c0_i32 = arith.constant 0 : i32
    %c0_i32_0 = arith.constant 0 : i32
    %c0_i32_1 = arith.constant 0 : i32
    return %c0_i32, %c0_i32_0 : i32, i32
  }
  func.func @transform_7(%arg0: i32) -> (i32, i32) {
    %c0_i32 = arith.constant 0 : i32
    %c0_i32_0 = arith.constant 0 : i32
    %c0_i32_1 = arith.constant 0 : i32
    return %c0_i32, %c0_i32_0 : i32, i32
  }
  func.func @transform_8(%arg0: i32) -> (i32, i32) {
    %c0_i32 = arith.constant 0 : i32
    %c0_i32_0 = arith.constant 0 : i32
    %c0_i32_1 = arith.constant 0 : i32
    return %c0_i32, %c0_i32_0 : i32, i32
  }
  func.func @transform_9(%arg0: i32) -> (i32, i32) {
    %c0_i32 = arith.constant 0 : i32
    %c0_i32_0 = arith.constant 0 : i32
    %c0_i32_1 = arith.constant 0 : i32
    return %c0_i32, %c0_i32_0 : i32, i32
  }
  func.func @transform_10(%arg0: i32) -> (i32, i32) {
    %c0_i32 = arith.constant 0 : i32
    %c0_i32_0 = arith.constant 0 : i32
    return %arg0, %c0_i32 : i32, i32
  }
}

</mosaic_0001>

<llo_original>
// kernel: gvp_model_forward.9
$region0: #{gvp_model_forward.9}
  #allocation0 [shape = 'u32[]', space=smem, size = 0x4, offset = 0x4, fixed_abs, tag = 'smem constant byte address 0x4 - core index']
  #allocation1 [shape = 'u32[72,128]{1,0:T(1,128)}', space=vmem, size = 0x9000, scoped, tag = 'internal scratch']
  %s0 = inlined_call_operand.vmem [shape: f32[16,16], index: 0, kind: input, shape index: {}]
  %s1 = inlined_call_operand.vmem [shape: f32[16,3], index: 1, kind: input, shape index: {}]
  %s2 = inlined_call_operand.vmem [shape: f32[16,3], index: 2, kind: input, shape index: {}]
  %s3 = inlined_call_operand.vmem [shape: f32[16,3], index: 3, kind: input, shape index: {}]
  %s4 = inlined_call_operand.vmem [shape: f32[1,16], index: 4, kind: input, shape index: {}]
  %s5 = inlined_call_operand.vmem [shape: f32[1,16], index: 5, kind: input, shape index: {}]
  %s6 = inlined_call_operand.vmem [shape: bf16[3,8], index: 6, kind: input, shape index: {}]
  %s7 = inlined_call_operand.vmem [shape: bf16[16,32], index: 7, kind: input, shape index: {}]
  %s8 = inlined_call_operand.vmem [shape: bf16[8,32], index: 8, kind: input, shape index: {}]
  %s9 = inlined_call_operand.vmem [shape: f32[1,32], index: 9, kind: input, shape index: {}]
  %s10 = inlined_call_operand.vmem [shape: bf16[8,8], index: 10, kind: input, shape index: {}]
  %s11 = inlined_call_operand.vmem [shape: f32[16,32], index: 11, kind: output, shape index: {0}]
  %s12 = inlined_call_operand.vmem [shape: f32[16,8], index: 12, kind: output, shape index: {1}]
  %s13 = inlined_call_operand.vmem [shape: f32[16,8], index: 13, kind: output, shape index: {2}]
  %s14 = inlined_call_operand.vmem [shape: f32[16,8], index: 14, kind: output, shape index: {3}]
  %15 = xla_tuple %s11, %s12, %s13, %s14
  %s16 = sld [smem:[#allocation0]]
  $region78: #{gvp_model_forward.9} parent=0
    _
  %s18 = ssub.s32 1, %s16
  %s19 = scalar_select 0, %s18, %s16
  // Predicated region
  $region2: #{gvp_model_forward.9} parent=0 // pred_check
    _
  $region3: #{gvp_model_forward.9} parent=0 // pred_check_branch
    %21 = sbr.rel (0) target = $region5
  $region4: #{gvp_model_forward.9} parent=0 // pred_region
    _
  $region5: #{gvp_model_forward.9} parent=0 // pred_fallthru
    _
  // Predicated region
  $region6: #{gvp_model_forward.9} parent=0 // pred_check
    _
  $region7: #{gvp_model_forward.9} parent=0 // pred_check_branch
    %23 = sbr.rel (0) target = $region9
  $region8: #{gvp_model_forward.9} parent=0 // pred_region
    _
  $region9: #{gvp_model_forward.9} parent=0 // pred_fallthru
    _
  // Predicated region
  $region10: #{gvp_model_forward.9} parent=0 // pred_check
    _
  $region11: #{gvp_model_forward.9} parent=0 // pred_check_branch
    %25 = sbr.rel (0) target = $region13
  $region12: #{gvp_model_forward.9} parent=0 // pred_region
    _
  $region13: #{gvp_model_forward.9} parent=0 // pred_fallthru
    _
  // Predicated region
  $region14: #{gvp_model_forward.9} parent=0 // pred_check
    _
  $region15: #{gvp_model_forward.9} parent=0 // pred_check_branch
    %27 = sbr.rel (0) target = $region17
  $region16: #{gvp_model_forward.9} parent=0 // pred_region
    _
  $region17: #{gvp_model_forward.9} parent=0 // pred_fallthru
    _
  // Predicated region
  $region18: #{gvp_model_forward.9} parent=0 // pred_check
    _
  $region19: #{gvp_model_forward.9} parent=0 // pred_check_branch
    %29 = sbr.rel (0) target = $region21
  $region20: #{gvp_model_forward.9} parent=0 // pred_region
    _
  $region21: #{gvp_model_forward.9} parent=0 // pred_fallthru
    _
  // Predicated region
  $region22: #{gvp_model_forward.9} parent=0 // pred_check
    _
  $region23: #{gvp_model_forward.9} parent=0 // pred_check_branch
    %31 = sbr.rel (0) target = $region25
  $region24: #{gvp_model_forward.9} parent=0 // pred_region
    _
  $region25: #{gvp_model_forward.9} parent=0 // pred_fallthru
    _
  // Predicated region
  $region26: #{gvp_model_forward.9} parent=0 // pred_check
    _
  $region27: #{gvp_model_forward.9} parent=0 // pred_check_branch
    %33 = sbr.rel (0) target = $region29
  $region28: #{gvp_model_forward.9} parent=0 // pred_region
    _
  $region29: #{gvp_model_forward.9} parent=0 // pred_fallthru
    _
  // Predicated region
  $region30: #{gvp_model_forward.9} parent=0 // pred_check
    _
  $region31: #{gvp_model_forward.9} parent=0 // pred_check_branch
    %35 = sbr.rel (0) target = $region33
  $region32: #{gvp_model_forward.9} parent=0 // pred_region
    _
  $region33: #{gvp_model_forward.9} parent=0 // pred_fallthru
    _
  // Predicated region
  $region34: #{gvp_model_forward.9} parent=0 // pred_check
    _
  $region35: #{gvp_model_forward.9} parent=0 // pred_check_branch
    %37 = sbr.rel (0) target = $region37
  $region36: #{gvp_model_forward.9} parent=0 // pred_region
    _
  $region37: #{gvp_model_forward.9} parent=0 // pred_fallthru
    _
  // Predicated region
  $region38: #{gvp_model_forward.9} parent=0 // pred_check
    _
  $region39: #{gvp_model_forward.9} parent=0 // pred_check_branch
    %39 = sbr.rel (0) target = $region41
  $region40: #{gvp_model_forward.9} parent=0 // pred_region
    _
  $region41: #{gvp_model_forward.9} parent=0 // pred_fallthru
    _
  // Predicated region
  $region42: #{gvp_model_forward.9} parent=0 // pred_check
    _
  $region43: #{gvp_model_forward.9} parent=0 // pred_check_branch
    %41 = sbr.rel (0) target = $region45
  $region44: #{gvp_model_forward.9} parent=0 // pred_region
    _
  $region45: #{gvp_model_forward.9} parent=0 // pred_fallthru
    _
  %v43 = vld [vmem:[%s0] sm:$0xff]
  %v44 = vld [vmem:[%s0 + $0x8] sm:$0xff]
  %v45 = vld [vmem:[%s1] sm:$0xff]
  %v46 = vld [vmem:[%s1 + $0x8] sm:$0xff]
  %v47 = vld [vmem:[%s2] sm:$0xff]
  %v48 = vld [vmem:[%s2 + $0x8] sm:$0xff]
  %v49 = vld [vmem:[%s3] sm:$0xff]
  %v50 = vld [vmem:[%s3 + $0x8] sm:$0xff]
  %v51 = vld [vmem:[%s4] sm:$0x1]
  %v52 = vld [vmem:[%s5] sm:$0x1]
  %vm53 = vcmask 130048
  %v54 = vsel %vm53, %v43, 0.0
  %55 = vadd.xlane.f32.xlu0 %v54
  %v56 = vpop.xlane.xlu0 %55
  %v57 = vsel %vm53, %v44, 0.0
  %58 = vadd.xlane.f32.xlu0 %v57
  %v59 = vpop.xlane.xlu0 %58
  %v60 = vrcp.pop 16.0
  %v61 = vmul.f32 16.0, %v60
  %v62 = vsub.f32 1.0, %v61
  %v63 = vmul.f32 %v60, %v62
  %v64 = vadd.f32 %v60, %v63
  %vm65 = vweird.f32 %v60
  %v66 = vsel %vm65, %v60, %v64
  %v67 = vmul.f32 %v56, %v66
  %v68 = vmul.f32 %v59, %v66
  %v69 = vsub.f32 %v43, %v67
  %v70 = vsub.f32 %v44, %v68
  %v71 = vmul.f32 %v69, %v69
  %v72 = vmul.f32 %v70, %v70
  %v73 = vsel %vm53, %v71, 0.0
  %74 = vadd.xlane.f32.xlu0 %v73
  %v75 = vpop.xlane.xlu0 %74
  %v76 = vsel %vm53, %v72, 0.0
  %77 = vadd.xlane.f32.xlu0 %v76
  %v78 = vpop.xlane.xlu0 %77
  %v79 = vmul.f32 %v75, %v66
  %v80 = vmul.f32 %v78, %v66
  %v81 = vadd.f32 %v79, 1e-05
  %v82 = vadd.f32 %v80, 1e-05
  %v83 = vrsqrt.pop %v81
  %v84 = vmul.f32 %v83, %v81
  %v85 = vmul.f32 %v84, %v83
  %v86 = vmul.f32 0.5, %v85
  %v87 = vsub.f32 1.5, %v86
  %v88 = vmul.f32 %v83, %v87
  %vm89 = vweird.f32 %v81
  %vm90 = vweird.f32 %v83
  %vm91 = vmor %vm89, %vm90
  %v92 = vsel %vm91, %v83, %v88
  %v93 = vrsqrt.pop %v82
  %v94 = vmul.f32 %v93, %v82
  %v95 = vmul.f32 %v94, %v93
  %v96 = vmul.f32 0.5, %v95
  %v97 = vsub.f32 1.5, %v96
  %v98 = vmul.f32 %v93, %v97
  %vm99 = vweird.f32 %v82
  %vm100 = vweird.f32 %v93
  %vm101 = vmor %vm99, %vm100
  %v102 = vsel %vm101, %v93, %v98
  %v103 = vmul.f32 %v69, %v92
  %v104 = vmul.f32 %v70, %v102
  %v106 = vperm.slane %v51, 0
  %v108 = vmul.f32 %v103, %v106
  %v109 = vmul.f32 %v104, %v106
  %v111 = vperm.slane %v52, 0
  %v113 = vadd.f32 %v108, %v111
  %v114 = vadd.f32 %v109, %v111
  %v115 = vmul.f32 %v45, %v45
  %v116 = vmul.f32 %v46, %v46
  %v117 = vmul.f32 %v47, %v47
  %v118 = vmul.f32 %v48, %v48
  %v119 = vadd.f32 %v115, %v117
  %v120 = vadd.f32 %v116, %v118
  %v121 = vmul.f32 %v49, %v49
  %v122 = vmul.f32 %v50, %v50
  %v123 = vadd.f32 %v119, %v121
  %v124 = vadd.f32 %v120, %v122
  %v125 = vmax.f32 %v123, 1e-08
  %v126 = vmax.f32 %v124, 1e-08
  %vm127 = vcmask 23552
  %v128 = vsel %vm127, %v125, 0.0
  %129 = vadd.xlane.f32.xlu0 %v128
  %v130 = vpop.xlane.xlu0 %129
  %v131 = vsel %vm127, %v126, 0.0
  %132 = vadd.xlane.f32.xlu0 %v131
  %v133 = vpop.xlane.xlu0 %132
  %v134 = vrcp.pop 3.0
  %v135 = vmul.f32 3.0, %v134
  %v136 = vsub.f32 1.0, %v135
  %v137 = vmul.f32 %v134, %v136
  %v138 = vadd.f32 %v134, %v137
  %vm139 = vweird.f32 %v134
  %v140 = vsel %vm139, %v134, %v138
  %v141 = vmul.f32 %v130, %v140
  %v142 = vmul.f32 %v133, %v140
  %v143 = vrsqrt.pop %v141
  %v144 = vmul.f32 %v143, %v141
  %v145 = vmul.f32 %v144, %v143
  %v146 = vmul.f32 0.5, %v145
  %v147 = vsub.f32 1.5, %v146
  %v148 = vmul.f32 %v143, %v147
  %vm149 = vweird.f32 %v141
  %vm150 = vweird.f32 %v143
  %vm151 = vmor %vm149, %vm150
  %v152 = vsel %vm151, %v143, %v148
  %v153 = vrsqrt.pop %v142
  %v154 = vmul.f32 %v153, %v142
  %v155 = vmul.f32 %v154, %v153
  %v156 = vmul.f32 0.5, %v155
  %v157 = vsub.f32 1.5, %v156
  %v158 = vmul.f32 %v153, %v157
  %vm159 = vweird.f32 %v142
  %vm160 = vweird.f32 %v153
  %vm161 = vmor %vm159, %vm160
  %v162 = vsel %vm161, %v153, %v158
  %v163 = vmul.f32 %v45, %v152
  %v164 = vmul.f32 %v46, %v162
  %v165 = vmul.f32 %v47, %v152
  %v166 = vmul.f32 %v48, %v162
  %v167 = vmul.f32 %v49, %v152
  %v168 = vmul.f32 %v50, %v162
  %v169 = vld [vmem:[%s6] sm:$0x3]
  %v170 = vld [vmem:[%s7] sm:$0xf]
  %v171 = vld [vmem:[%s7 + $0x4] sm:$0xf]
  %v172 = vld [vmem:[%s8] sm:$0xf]
  %v173 = vld [vmem:[%s9] sm:$0x1]
  %v174 = vld [vmem:[%s10] sm:$0xf]
  %v175 = vpack.c.bf16 %v164, %v163
  %v176 = vpack.c.bf16 %v166, %v165
  %v177 = vpack.c.bf16 %v168, %v167
  %v179 = vsel %vm127, %v175, 0
  %v182 = vsel %vm127, %v176, 0
  %v185 = vsel %vm127, %v177, 0
  %vm187 = vcmask 1040384
  %vm188 = vcmask 1041408
  %v189 = vsel %vm187, 4294967295, 65535
  %v190 = vsel %vm188, %v189, 0
  %v192 = vand.u32 %v169, %v190
  %194 = vmatpush.bf16.msra.mxu0 0
  %195 = vmatpush.bf16.msra.mxu0 0
  %196 = vmatpush.bf16.msra.mxu0 0
  %197 = vmatpush.bf16.msra.mxu0 0
  %198 = vmatpush.bf16.msra.mxu0 0
  %199 = vmatpush.bf16.msra.mxu0 0
  %200 = vmatpush.bf16.msra.mxu0 0
  %201 = vmatpush.bf16.msra.mxu0 %v192
  %202 = vmatmul.bf16.gmra.mxu0 %v179
  %v203 = vpop.f32.mrf.mxu0
  %v204 = vadd.f32 0.0, %v203
  %v205 = vpop.f32.mrf.mxu0
  %v206 = vadd.f32 0.0, %v205
  %207 = vmatmul.bf16.gmra.mxu0 %v182
  %v208 = vpop.f32.mrf.mxu0
  %v209 = vadd.f32 0.0, %v208
  %v210 = vpop.f32.mrf.mxu0
  %v211 = vadd.f32 0.0, %v210
  %212 = vmatmul.bf16.gmra.mxu0 %v185
  %v213 = vpop.f32.mrf.mxu0
  %v214 = vadd.f32 0.0, %v213
  %v215 = vpop.f32.mrf.mxu0
  %v216 = vadd.f32 0.0, %v215
  %217 = vdwg.mxu0
  %v218 = vmul.f32 %v204, %v204
  %v219 = vmul.f32 %v206, %v206
  %v220 = vmul.f32 %v209, %v209
  %v221 = vmul.f32 %v211, %v211
  %v222 = vadd.f32 %v218, %v220
  %v223 = vadd.f32 %v219, %v221
  %v224 = vmul.f32 %v214, %v214
  %v225 = vmul.f32 %v216, %v216
  %v226 = vadd.f32 %v222, %v224
  %v227 = vadd.f32 %v223, %v225
  %v228 = vmax.f32 %v226, 1e-08
  %v229 = vmax.f32 %v227, 1e-08
  %v230 = vrsqrt.pop %v228
  %v231 = vmul.f32 %v230, %v228
  %v232 = vmul.f32 %v231, %v230
  %v233 = vmul.f32 0.5, %v232
  %v234 = vsub.f32 1.5, %v233
  %v235 = vmul.f32 %v230, %v234
  %v236 = vmul.f32 %v228, %v235
  %vm237 = vcmp.eq.f32.partialorder %v228, inf
  %v238 = vsel %vm237, %v228, %v236
  %vm239 = vcmp.eq.f32.partialorder %v228, 0.0
  %v240 = vand.u32 %v228, 2147483648
  %v241 = vsel %vm239, %v240, %v238
  %v242 = vrsqrt.pop %v229
  %v243 = vmul.f32 %v242, %v229
  %v244 = vmul.f32 %v243, %v242
  %v245 = vmul.f32 0.5, %v244
  %v246 = vsub.f32 1.5, %v245
  %v247 = vmul.f32 %v242, %v246
  %v248 = vmul.f32 %v229, %v247
  %vm249 = vcmp.eq.f32.partialorder %v229, inf
  %v250 = vsel %vm249, %v229, %v248
  %vm251 = vcmp.eq.f32.partialorder %v229, 0.0
  %v252 = vand.u32 %v229, 2147483648
  %v253 = vsel %vm251, %v252, %v250
  %v254 = vpack.c.bf16 %v114, %v113
  %v255 = vpack.c.bf16 %v253, %v241
  %vm256 = vcmask 64512
  %v258 = vsel %vm256, %v255, 0
  %vm260 = vcmask 1043456
  %v262 = vsel %vm260, %v172, 0
  %264 = vmatpush.bf16.msra.mxu0 0
  %265 = vmatpush.bf16.msra.mxu0 0
  %266 = vmatpush.bf16.msra.mxu0 0
  %267 = vmatpush.bf16.msra.mxu0 0
  %268 = vmatpush.bf16.msra.mxu0 0
  %269 = vmatpush.bf16.msra.mxu0 0
  %270 = vmatpush.bf16.msra.mxu0 0
  %271 = vmatpush.bf16.msra.mxu0 %v262
  %272 = vmatmul.bf16.gmra.mxu0 %v258
  %v273 = vpop.f32.mrf.mxu0
  %v274 = vadd.f32 0.0, %v273
  %v275 = vpop.f32.mrf.mxu0
  %v276 = vadd.f32 0.0, %v275
  %277 = vdwg.mxu0
  %v280 = vunpack.c.l.b16 %v170
  %v281 = vunpack.c.l.b16 %v171
  %v282 = vpack.c.b16 %v281, %v280
  %v285 = vsel %vm53, %v254, 0
  %287 = vmatpush.bf16.msra.mxu0 0
  %288 = vmatpush.bf16.msra.mxu0 0
  %289 = vmatpush.bf16.msra.mxu0 0
  %290 = vmatpush.bf16.msra.mxu0 0
  %291 = vmatpush.bf16.msra.mxu0 0
  %292 = vmatpush.bf16.msra.mxu0 0
  %293 = vmatpush.bf16.msra.mxu0 0
  %294 = vmatpush.bf16.msra.mxu0 %v282
  %295 = vmatmul.bf16.gmra.mxu0 %v285
  %v296 = vpop.f32.mrf.mxu0
  %v297 = vadd.f32 %v274, %v296
  %v298 = vpop.f32.mrf.mxu0
  %v299 = vadd.f32 %v276, %v298
  %300 = vdwg.mxu0
  %v302 = vperm.slane %v173, 0
  %v304 = vadd.f32 %v297, %v302
  %v305 = vadd.f32 %v299, %v302
  %v306 = vpack.c.bf16 %v206, %v204
  %v307 = vpack.c.bf16 %v211, %v209
  %v308 = vpack.c.bf16 %v216, %v214
  %v310 = vsel %vm256, %v306, 0
  %v313 = vsel %vm256, %v307, 0
  %v316 = vsel %vm256, %v308, 0
  %v319 = vsel %vm260, %v174, 0
  %321 = vmatpush.bf16.msra.mxu0 0
  %322 = vmatpush.bf16.msra.mxu0 0
  %323 = vmatpush.bf16.msra.mxu0 0
  %324 = vmatpush.bf16.msra.mxu0 0
  %325 = vmatpush.bf16.msra.mxu0 0
  %326 = vmatpush.bf16.msra.mxu0 0
  %327 = vmatpush.bf16.msra.mxu0 0
  %328 = vmatpush.bf16.msra.mxu0 %v319
  %329 = vmatmul.bf16.gmra.mxu0 %v310
  %v330 = vpop.f32.mrf.mxu0
  %v331 = vadd.f32 0.0, %v330
  %v332 = vpop.f32.mrf.mxu0
  %v333 = vadd.f32 0.0, %v332
  %334 = vmatmul.bf16.gmra.mxu0 %v313
  %v335 = vpop.f32.mrf.mxu0
  %v336 = vadd.f32 0.0, %v335
  %v337 = vpop.f32.mrf.mxu0
  %v338 = vadd.f32 0.0, %v337
  %339 = vmatmul.bf16.gmra.mxu0 %v316
  %v340 = vpop.f32.mrf.mxu0
  %v341 = vadd.f32 0.0, %v340
  %v342 = vpop.f32.mrf.mxu0
  %v343 = vadd.f32 0.0, %v342
  %344 = vdwg.mxu0
  %vm345 = vcmask 261120
  %346 = vst.msk [vmem:[%s11] sm:$0xff] %vm345, %v304
  %347 = vst.msk [vmem:[%s11 + $0x8] sm:$0xff] %vm345, %v305
  %348 = vst.msk [vmem:[%s12] sm:$0xff] %vm256, %v331
  %349 = vst.msk [vmem:[%s12 + $0x8] sm:$0xff] %vm256, %v333
  %350 = vst.msk [vmem:[%s13] sm:$0xff] %vm256, %v336
  %351 = vst.msk [vmem:[%s13 + $0x8] sm:$0xff] %vm256, %v338
  %352 = vst.msk [vmem:[%s14] sm:$0xff] %vm256, %v341
  %353 = vst.msk [vmem:[%s14 + $0x8] sm:$0xff] %vm256, %v343
  // Predicated region
  $region46: #{gvp_model_forward.9} parent=0 // pred_check
    _
  $region47: #{gvp_model_forward.9} parent=0 // pred_check_branch
    %355 = sbr.rel (0) target = $region49
  $region48: #{gvp_model_forward.9} parent=0 // pred_region
    _
  $region49: #{gvp_model_forward.9} parent=0 // pred_fallthru
    _
  // Predicated region
  $region50: #{gvp_model_forward.9} parent=0 // pred_check
    _
  $region51: #{gvp_model_forward.9} parent=0 // pred_check_branch
    %357 = sbr.rel (0) target = $region53
  $region52: #{gvp_model_forward.9} parent=0 // pred_region
    _
  $region53: #{gvp_model_forward.9} parent=0 // pred_fallthru
    _
  // Predicated region
  $region54: #{gvp_model_forward.9} parent=0 // pred_check
    _
  $region55: #{gvp_model_forward.9} parent=0 // pred_check_branch
    %359 = sbr.rel (0) target = $region57
  $region56: #{gvp_model_forward.9} parent=0 // pred_region
    _
  $region57: #{gvp_model_forward.9} parent=0 // pred_fallthru
    _
  // Predicated region
  $region58: #{gvp_model_forward.9} parent=0 // pred_check
    _
  $region59: #{gvp_model_forward.9} parent=0 // pred_check_branch
    %361 = sbr.rel (0) target = $region61
  $region60: #{gvp_model_forward.9} parent=0 // pred_region
    _
  $region61: #{gvp_model_forward.9} parent=0 // pred_fallthru
    _
  // Predicated region
  $region62: #{gvp_model_forward.9} parent=0 // pred_check
    _
  $region63: #{gvp_model_forward.9} parent=0 // pred_check_branch
    %363 = sbr.rel (0) target = $region65
  $region64: #{gvp_model_forward.9} parent=0 // pred_region
    _
  $region65: #{gvp_model_forward.9} parent=0 // pred_fallthru
    _
  // Predicated region
  $region66: #{gvp_model_forward.9} parent=0 // pred_check
    _
  $region67: #{gvp_model_forward.9} parent=0 // pred_check_branch
    %365 = sbr.rel (0) target = $region69
  $region68: #{gvp_model_forward.9} parent=0 // pred_region
    _
  $region69: #{gvp_model_forward.9} parent=0 // pred_fallthru
    _
  // Predicated region
  $region70: #{gvp_model_forward.9} parent=0 // pred_check
    _
  $region71: #{gvp_model_forward.9} parent=0 // pred_check_branch
    %367 = sbr.rel (0) target = $region73
  $region72: #{gvp_model_forward.9} parent=0 // pred_region
    _
  $region73: #{gvp_model_forward.9} parent=0 // pred_fallthru
    _
  // Predicated region
  $region74: #{gvp_model_forward.9} parent=0 // pred_check
    _
  $region75: #{gvp_model_forward.9} parent=0 // pred_check_branch
    %369 = sbr.rel (0) target = $region77
  $region76: #{gvp_model_forward.9} parent=0 // pred_region
    _
  $region77: #{gvp_model_forward.9} parent=0 // pred_fallthru
    _

// kernel: gvp_model_forward.10
$region0: #{gvp_model_forward.10}
  #allocation0 [shape = 'u32[]', space=smem, size = 0x4, offset = 0x4, fixed_abs, tag = 'smem constant byte address 0x4 - core index']
  #allocation1 [shape = 'u32[72,128]{1,0:T(1,128)}', space=vmem, size = 0x9000, scoped, tag = 'internal scratch']
  %s0 = inlined_call_operand.vmem [shape: f32[48,16], index: 0, kind: input, shape index: {}]
  %s1 = inlined_call_operand.vmem [shape: f32[48,1], index: 1, kind: input, shape index: {}]
  %s2 = inlined_call_operand.vmem [shape: f32[48,1], index: 2, kind: input, shape index: {}]
  %s3 = inlined_call_operand.vmem [shape: f32[48,1], index: 3, kind: input, shape index: {}]
  %s4 = inlined_call_operand.vmem [shape: f32[1,16], index: 4, kind: input, shape index: {}]
  %s5 = inlined_call_operand.vmem [shape: f32[1,16], index: 5, kind: input, shape index: {}]
  %s6 = inlined_call_operand.vmem [shape: bf16[1,4], index: 6, kind: input, shape index: {}]
  %s7 = inlined_call_operand.vmem [shape: bf16[16,32], index: 7, kind: input, shape index: {}]
  %s8 = inlined_call_operand.vmem [shape: bf16[4,32], index: 8, kind: input, shape index: {}]
  %s9 = inlined_call_operand.vmem [shape: f32[1,32], index: 9, kind: input, shape index: {}]
  %s10 = inlined_call_operand.vmem [shape: bf16[4,4], index: 10, kind: input, shape index: {}]
  %s11 = inlined_call_operand.vmem [shape: f32[48,32], index: 11, kind: output, shape index: {0}]
  %s12 = inlined_call_operand.vmem [shape: f32[48,4], index: 12, kind: output, shape index: {1}]
  %s13 = inlined_call_operand.vmem [shape: f32[48,4], index: 13, kind: output, shape index: {2}]
  %s14 = inlined_call_operand.vmem [shape: f32[48,4], index: 14, kind: output, shape index: {3}]
  %15 = xla_tuple %s11, %s12, %s13, %s14
  %s16 = sld [smem:[#allocation0]]
  $region78: #{gvp_model_forward.10} parent=0
    _
  %s18 = ssub.s32 1, %s16
  %s19 = scalar_select 0, %s18, %s16
  // Predicated region
  $region2: #{gvp_model_forward.10} parent=0 // pred_check
    _
  $region3: #{gvp_model_forward.10} parent=0 // pred_check_branch
    %21 = sbr.rel (0) target = $region5
  $region4: #{gvp_model_forward.10} parent=0 // pred_region
    _
  $region5: #{gvp_model_forward.10} parent=0 // pred_fallthru
    _
  // Predicated region
  $region6: #{gvp_model_forward.10} parent=0 // pred_check
    _
  $region7: #{gvp_model_forward.10} parent=0 // pred_check_branch
    %23 = sbr.rel (0) target = $region9
  $region8: #{gvp_model_forward.10} parent=0 // pred_region
    _
  $region9: #{gvp_model_forward.10} parent=0 // pred_fallthru
    _
  // Predicated region
  $region10: #{gvp_model_forward.10} parent=0 // pred_check
    _
  $region11: #{gvp_model_forward.10} parent=0 // pred_check_branch
    %25 = sbr.rel (0) target = $region13
  $region12: #{gvp_model_forward.10} parent=0 // pred_region
    _
  $region13: #{gvp_model_forward.10} parent=0 // pred_fallthru
    _
  // Predicated region
  $region14: #{gvp_model_forward.10} parent=0 // pred_check
    _
  $region15: #{gvp_model_forward.10} parent=0 // pred_check_branch
    %27 = sbr.rel (0) target = $region17
  $region16: #{gvp_model_forward.10} parent=0 // pred_region
    _
  $region17: #{gvp_model_forward.10} parent=0 // pred_fallthru
    _
  // Predicated region
  $region18: #{gvp_model_forward.10} parent=0 // pred_check
    _
  $region19: #{gvp_model_forward.10} parent=0 // pred_check_branch
    %29 = sbr.rel (0) target = $region21
  $region20: #{gvp_model_forward.10} parent=0 // pred_region
    _
  $region21: #{gvp_model_forward.10} parent=0 // pred_fallthru
    _
  // Predicated region
  $region22: #{gvp_model_forward.10} parent=0 // pred_check
    _
  $region23: #{gvp_model_forward.10} parent=0 // pred_check_branch
    %31 = sbr.rel (0) target = $region25
  $region24: #{gvp_model_forward.10} parent=0 // pred_region
    _
  $region25: #{gvp_model_forward.10} parent=0 // pred_fallthru
    _
  // Predicated region
  $region26: #{gvp_model_forward.10} parent=0 // pred_check
    _
  $region27: #{gvp_model_forward.10} parent=0 // pred_check_branch
    %33 = sbr.rel (0) target = $region29
  $region28: #{gvp_model_forward.10} parent=0 // pred_region
    _
  $region29: #{gvp_model_forward.10} parent=0 // pred_fallthru
    _
  // Predicated region
  $region30: #{gvp_model_forward.10} parent=0 // pred_check
    _
  $region31: #{gvp_model_forward.10} parent=0 // pred_check_branch
    %35 = sbr.rel (0) target = $region33
  $region32: #{gvp_model_forward.10} parent=0 // pred_region
    _
  $region33: #{gvp_model_forward.10} parent=0 // pred_fallthru
    _
  // Predicated region
  $region34: #{gvp_model_forward.10} parent=0 // pred_check
    _
  $region35: #{gvp_model_forward.10} parent=0 // pred_check_branch
    %37 = sbr.rel (0) target = $region37
  $region36: #{gvp_model_forward.10} parent=0 // pred_region
    _
  $region37: #{gvp_model_forward.10} parent=0 // pred_fallthru
    _
  // Predicated region
  $region38: #{gvp_model_forward.10} parent=0 // pred_check
    _
  $region39: #{gvp_model_forward.10} parent=0 // pred_check_branch
    %39 = sbr.rel (0) target = $region41
  $region40: #{gvp_model_forward.10} parent=0 // pred_region
    _
  $region41: #{gvp_model_forward.10} parent=0 // pred_fallthru
    _
  // Predicated region
  $region42: #{gvp_model_forward.10} parent=0 // pred_check
    _
  $region43: #{gvp_model_forward.10} parent=0 // pred_check_branch
    %41 = sbr.rel (0) target = $region45
  $region44: #{gvp_model_forward.10} parent=0 // pred_region
    _
  $region45: #{gvp_model_forward.10} parent=0 // pred_fallthru
    _
  %v43 = vld [vmem:[%s0] sm:$0xff]
  %v44 = vld [vmem:[%s0 + $0x8] sm:$0xff]
  %v45 = vld [vmem:[%s0 + $0x10] sm:$0xff]
  %v46 = vld [vmem:[%s0 + $0x18] sm:$0xff]
  %v47 = vld [vmem:[%s0 + $0x20] sm:$0xff]
  %v48 = vld [vmem:[%s0 + $0x28] sm:$0xff]
  %v49 = vld [vmem:[%s1] sm:$0xff]
  %v50 = vld [vmem:[%s1 + $0x8] sm:$0xff]
  %v51 = vld [vmem:[%s1 + $0x10] sm:$0xff]
  %v52 = vld [vmem:[%s1 + $0x18] sm:$0xff]
  %v53 = vld [vmem:[%s1 + $0x20] sm:$0xff]
  %v54 = vld [vmem:[%s1 + $0x28] sm:$0xff]
  %v55 = vld [vmem:[%s2] sm:$0xff]
  %v56 = vld [vmem:[%s2 + $0x8] sm:$0xff]
  %v57 = vld [vmem:[%s2 + $0x10] sm:$0xff]
  %v58 = vld [vmem:[%s2 + $0x18] sm:$0xff]
  %v59 = vld [vmem:[%s2 + $0x20] sm:$0xff]
  %v60 = vld [vmem:[%s2 + $0x28] sm:$0xff]
  %v61 = vld [vmem:[%s3] sm:$0xff]
  %v62 = vld [vmem:[%s3 + $0x8] sm:$0xff]
  %v63 = vld [vmem:[%s3 + $0x10] sm:$0xff]
  %v64 = vld [vmem:[%s3 + $0x18] sm:$0xff]
  %v65 = vld [vmem:[%s3 + $0x20] sm:$0xff]
  %v66 = vld [vmem:[%s3 + $0x28] sm:$0xff]
  %v67 = vld [vmem:[%s4] sm:$0x1]
  %v68 = vld [vmem:[%s5] sm:$0x1]
  %vm69 = vcmask 130048
  %v70 = vsel %vm69, %v43, 0.0
  %71 = vadd.xlane.f32.xlu0 %v70
  %v72 = vpop.xlane.xlu0 %71
  %v73 = vsel %vm69, %v44, 0.0
  %74 = vadd.xlane.f32.xlu0 %v73
  %v75 = vpop.xlane.xlu0 %74
  %v76 = vsel %vm69, %v45, 0.0
  %77 = vadd.xlane.f32.xlu0 %v76
  %v78 = vpop.xlane.xlu0 %77
  %v79 = vsel %vm69, %v46, 0.0
  %80 = vadd.xlane.f32.xlu0 %v79
  %v81 = vpop.xlane.xlu0 %80
  %v82 = vsel %vm69, %v47, 0.0
  %83 = vadd.xlane.f32.xlu0 %v82
  %v84 = vpop.xlane.xlu0 %83
  %v85 = vsel %vm69, %v48, 0.0
  %86 = vadd.xlane.f32.xlu0 %v85
  %v87 = vpop.xlane.xlu0 %86
  %v88 = vrcp.pop 16.0
  %v89 = vmul.f32 16.0, %v88
  %v90 = vsub.f32 1.0, %v89
  %v91 = vmul.f32 %v88, %v90
  %v92 = vadd.f32 %v88, %v91
  %vm93 = vweird.f32 %v88
  %v94 = vsel %vm93, %v88, %v92
  %v95 = vmul.f32 %v72, %v94
  %v96 = vmul.f32 %v75, %v94
  %v97 = vmul.f32 %v78, %v94
  %v98 = vmul.f32 %v81, %v94
  %v99 = vmul.f32 %v84, %v94
  %v100 = vmul.f32 %v87, %v94
  %v101 = vsub.f32 %v43, %v95
  %v102 = vsub.f32 %v44, %v96
  %v103 = vsub.f32 %v45, %v97
  %v104 = vsub.f32 %v46, %v98
  %v105 = vsub.f32 %v47, %v99
  %v106 = vsub.f32 %v48, %v100
  %v107 = vmul.f32 %v101, %v101
  %v108 = vmul.f32 %v102, %v102
  %v109 = vmul.f32 %v103, %v103
  %v110 = vmul.f32 %v104, %v104
  %v111 = vmul.f32 %v105, %v105
  %v112 = vmul.f32 %v106, %v106
  %v113 = vsel %vm69, %v107, 0.0
  %114 = vadd.xlane.f32.xlu0 %v113
  %v115 = vpop.xlane.xlu0 %114
  %v116 = vsel %vm69, %v108, 0.0
  %117 = vadd.xlane.f32.xlu0 %v116
  %v118 = vpop.xlane.xlu0 %117
  %v119 = vsel %vm69, %v109, 0.0
  %120 = vadd.xlane.f32.xlu0 %v119
  %v121 = vpop.xlane.xlu0 %120
  %v122 = vsel %vm69, %v110, 0.0
  %123 = vadd.xlane.f32.xlu0 %v122
  %v124 = vpop.xlane.xlu0 %123
  %v125 = vsel %vm69, %v111, 0.0
  %126 = vadd.xlane.f32.xlu0 %v125
  %v127 = vpop.xlane.xlu0 %126
  %v128 = vsel %vm69, %v112, 0.0
  %129 = vadd.xlane.f32.xlu0 %v128
  %v130 = vpop.xlane.xlu0 %129
  %v131 = vmul.f32 %v115, %v94
  %v132 = vmul.f32 %v118, %v94
  %v133 = vmul.f32 %v121, %v94
  %v134 = vmul.f32 %v124, %v94
  %v135 = vmul.f32 %v127, %v94
  %v136 = vmul.f32 %v130, %v94
  %v137 = vadd.f32 %v131, 1e-05
  %v138 = vadd.f32 %v132, 1e-05
  %v139 = vadd.f32 %v133, 1e-05
  %v140 = vadd.f32 %v134, 1e-05
  %v141 = vadd.f32 %v135, 1e-05
  %v142 = vadd.f32 %v136, 1e-05
  %v143 = vrsqrt.pop %v137
  %v144 = vmul.f32 %v143, %v137
  %v145 = vmul.f32 %v144, %v143
  %v146 = vmul.f32 0.5, %v145
  %v147 = vsub.f32 1.5, %v146
  %v148 = vmul.f32 %v143, %v147
  %vm149 = vweird.f32 %v137
  %vm150 = vweird.f32 %v143
  %vm151 = vmor %vm149, %vm150
  %v152 = vsel %vm151, %v143, %v148
  %v153 = vrsqrt.pop %v138
  %v154 = vmul.f32 %v153, %v138
  %v155 = vmul.f32 %v154, %v153
  %v156 = vmul.f32 0.5, %v155
  %v157 = vsub.f32 1.5, %v156
  %v158 = vmul.f32 %v153, %v157
  %vm159 = vweird.f32 %v138
  %vm160 = vweird.f32 %v153
  %vm161 = vmor %vm159, %vm160
  %v162 = vsel %vm161, %v153, %v158
  %v163 = vrsqrt.pop %v139
  %v164 = vmul.f32 %v163, %v139
  %v165 = vmul.f32 %v164, %v163
  %v166 = vmul.f32 0.5, %v165
  %v167 = vsub.f32 1.5, %v166
  %v168 = vmul.f32 %v163, %v167
  %vm169 = vweird.f32 %v139
  %vm170 = vweird.f32 %v163
  %vm171 = vmor %vm169, %vm170
  %v172 = vsel %vm171, %v163, %v168
  %v173 = vrsqrt.pop %v140
  %v174 = vmul.f32 %v173, %v140
  %v175 = vmul.f32 %v174, %v173
  %v176 = vmul.f32 0.5, %v175
  %v177 = vsub.f32 1.5, %v176
  %v178 = vmul.f32 %v173, %v177
  %vm179 = vweird.f32 %v140
  %vm180 = vweird.f32 %v173
  %vm181 = vmor %vm179, %vm180
  %v182 = vsel %vm181, %v173, %v178
  %v183 = vrsqrt.pop %v141
  %v184 = vmul.f32 %v183, %v141
  %v185 = vmul.f32 %v184, %v183
  %v186 = vmul.f32 0.5, %v185
  %v187 = vsub.f32 1.5, %v186
  %v188 = vmul.f32 %v183, %v187
  %vm189 = vweird.f32 %v141
  %vm190 = vweird.f32 %v183
  %vm191 = vmor %vm189, %vm190
  %v192 = vsel %vm191, %v183, %v188
  %v193 = vrsqrt.pop %v142
  %v194 = vmul.f32 %v193, %v142
  %v195 = vmul.f32 %v194, %v193
  %v196 = vmul.f32 0.5, %v195
  %v197 = vsub.f32 1.5, %v196
  %v198 = vmul.f32 %v193, %v197
  %vm199 = vweird.f32 %v142
  %vm200 = vweird.f32 %v193
  %vm201 = vmor %vm199, %vm200
  %v202 = vsel %vm201, %v193, %v198
  %v203 = vmul.f32 %v101, %v152
  %v204 = vmul.f32 %v102, %v162
  %v205 = vmul.f32 %v103, %v172
  %v206 = vmul.f32 %v104, %v182
  %v207 = vmul.f32 %v105, %v192
  %v208 = vmul.f32 %v106, %v202
  %v210 = vperm.slane %v67, 0
  %v212 = vmul.f32 %v203, %v210
  %v213 = vmul.f32 %v204, %v210
  %v214 = vmul.f32 %v205, %v210
  %v215 = vmul.f32 %v206, %v210
  %v216 = vmul.f32 %v207, %v210
  %v217 = vmul.f32 %v208, %v210
  %v219 = vperm.slane %v68, 0
  %v221 = vadd.f32 %v212, %v219
  %v222 = vadd.f32 %v213, %v219
  %v223 = vadd.f32 %v214, %v219
  %v224 = vadd.f32 %v215, %v219
  %v225 = vadd.f32 %v216, %v219
  %v226 = vadd.f32 %v217, %v219
  %v227 = vmul.f32 %v49, %v49
  %v228 = vmul.f32 %v50, %v50
  %v229 = vmul.f32 %v51, %v51
  %v230 = vmul.f32 %v52, %v52
  %v231 = vmul.f32 %v53, %v53
  %v232 = vmul.f32 %v54, %v54
  %v233 = vmul.f32 %v55, %v55
  %v234 = vmul.f32 %v56, %v56
  %v235 = vmul.f32 %v57, %v57
  %v236 = vmul.f32 %v58, %v58
  %v237 = vmul.f32 %v59, %v59
  %v238 = vmul.f32 %v60, %v60
  %v239 = vadd.f32 %v227, %v233
  %v240 = vadd.f32 %v228, %v234
  %v241 = vadd.f32 %v229, %v235
  %v242 = vadd.f32 %v230, %v236
  %v243 = vadd.f32 %v231, %v237
  %v244 = vadd.f32 %v232, %v238
  %v245 = vmul.f32 %v61, %v61
  %v246 = vmul.f32 %v62, %v62
  %v247 = vmul.f32 %v63, %v63
  %v248 = vmul.f32 %v64, %v64
  %v249 = vmul.f32 %v65, %v65
  %v250 = vmul.f32 %v66, %v66
  %v251 = vadd.f32 %v239, %v245
  %v252 = vadd.f32 %v240, %v246
  %v253 = vadd.f32 %v241, %v247
  %v254 = vadd.f32 %v242, %v248
  %v255 = vadd.f32 %v243, %v249
  %v256 = vadd.f32 %v244, %v250
  %v257 = vmax.f32 %v251, 1e-08
  %v258 = vmax.f32 %v252, 1e-08
  %v259 = vmax.f32 %v253, 1e-08
  %v260 = vmax.f32 %v254, 1e-08
  %v261 = vmax.f32 %v255, 1e-08
  %v262 = vmax.f32 %v256, 1e-08
  %v263 = vadd.f32 %v257, 0.0
  %v264 = vadd.f32 %v258, 0.0
  %v265 = vadd.f32 %v259, 0.0
  %v266 = vadd.f32 %v260, 0.0
  %v267 = vadd.f32 %v261, 0.0
  %v268 = vadd.f32 %v262, 0.0
  %v269 = vrsqrt.pop %v263
  %v270 = vmul.f32 %v269, %v263
  %v271 = vmul.f32 %v270, %v269
  %v272 = vmul.f32 0.5, %v271
  %v273 = vsub.f32 1.5, %v272
  %v274 = vmul.f32 %v269, %v273
  %vm275 = vweird.f32 %v263
  %vm276 = vweird.f32 %v269
  %vm277 = vmor %vm275, %vm276
  %v278 = vsel %vm277, %v269, %v274
  %v279 = vrsqrt.pop %v264
  %v280 = vmul.f32 %v279, %v264
  %v281 = vmul.f32 %v280, %v279
  %v282 = vmul.f32 0.5, %v281
  %v283 = vsub.f32 1.5, %v282
  %v284 = vmul.f32 %v279, %v283
  %vm285 = vweird.f32 %v264
  %vm286 = vweird.f32 %v279
  %vm287 = vmor %vm285, %vm286
  %v288 = vsel %vm287, %v279, %v284
  %v289 = vrsqrt.pop %v265
  %v290 = vmul.f32 %v289, %v265
  %v291 = vmul.f32 %v290, %v289
  %v292 = vmul.f32 0.5, %v291
  %v293 = vsub.f32 1.5, %v292
  %v294 = vmul.f32 %v289, %v293
  %vm295 = vweird.f32 %v265
  %vm296 = vweird.f32 %v289
  %vm297 = vmor %vm295, %vm296
  %v298 = vsel %vm297, %v289, %v294
  %v299 = vrsqrt.pop %v266
  %v300 = vmul.f32 %v299, %v266
  %v301 = vmul.f32 %v300, %v299
  %v302 = vmul.f32 0.5, %v301
  %v303 = vsub.f32 1.5, %v302
  %v304 = vmul.f32 %v299, %v303
  %vm305 = vweird.f32 %v266
  %vm306 = vweird.f32 %v299
  %vm307 = vmor %vm305, %vm306
  %v308 = vsel %vm307, %v299, %v304
  %v309 = vrsqrt.pop %v267
  %v310 = vmul.f32 %v309, %v267
  %v311 = vmul.f32 %v310, %v309
  %v312 = vmul.f32 0.5, %v311
  %v313 = vsub.f32 1.5, %v312
  %v314 = vmul.f32 %v309, %v313
  %vm315 = vweird.f32 %v267
  %vm316 = vweird.f32 %v309
  %vm317 = vmor %vm315, %vm316
  %v318 = vsel %vm317, %v309, %v314
  %v319 = vrsqrt.pop %v268
  %v320 = vmul.f32 %v319, %v268
  %v321 = vmul.f32 %v320, %v319
  %v322 = vmul.f32 0.5, %v321
  %v323 = vsub.f32 1.5, %v322
  %v324 = vmul.f32 %v319, %v323
  %vm325 = vweird.f32 %v268
  %vm326 = vweird.f32 %v319
  %vm327 = vmor %vm325, %vm326
  %v328 = vsel %vm327, %v319, %v324
  %v329 = vmul.f32 %v49, %v278
  %v330 = vmul.f32 %v50, %v288
  %v331 = vmul.f32 %v51, %v298
  %v332 = vmul.f32 %v52, %v308
  %v333 = vmul.f32 %v53, %v318
  %v334 = vmul.f32 %v54, %v328
  %v335 = vmul.f32 %v55, %v278
  %v336 = vmul.f32 %v56, %v288
  %v337 = vmul.f32 %v57, %v298
  %v338 = vmul.f32 %v58, %v308
  %v339 = vmul.f32 %v59, %v318
  %v340 = vmul.f32 %v60, %v328
  %v341 = vmul.f32 %v61, %v278
  %v342 = vmul.f32 %v62, %v288
  %v343 = vmul.f32 %v63, %v298
  %v344 = vmul.f32 %v64, %v308
  %v345 = vmul.f32 %v65, %v318
  %v346 = vmul.f32 %v66, %v328
  %v347 = vld [vmem:[%s6] sm:$0x1]
  %v348 = vld [vmem:[%s7] sm:$0xf]
  %v349 = vld [vmem:[%s7 + $0x4] sm:$0xf]
  %v350 = vld [vmem:[%s8] sm:$0x3]
  %v351 = vld [vmem:[%s9] sm:$0x1]
  %v352 = vld [vmem:[%s10] sm:$0x3]
  %v353 = vpack.c.bf16 %v330, %v329
  %v354 = vpack.c.bf16 %v332, %v331
  %v355 = vpack.c.bf16 %v334, %v333
  %v356 = vpack.c.bf16 %v336, %v335
  %v357 = vpack.c.bf16 %v338, %v337
  %v358 = vpack.c.bf16 %v340, %v339
  %v359 = vpack.c.bf16 %v342, %v341
  %v360 = vpack.c.bf16 %v344, %v343
  %v361 = vpack.c.bf16 %v346, %v345
  %vm362 = vcmask 7168
  %v364 = vsel %vm362, %v353, 0
  %v367 = vsel %vm362, %v354, 0
  %v370 = vsel %vm362, %v355, 0
  %v373 = vsel %vm362, %v356, 0
  %v376 = vsel %vm362, %v357, 0
  %v379 = vsel %vm362, %v358, 0
  %v382 = vsel %vm362, %v359, 0
  %v385 = vsel %vm362, %v360, 0
  %v388 = vsel %vm362, %v361, 0
  %vm390 = vcmask 1040384
  %v391 = vsel 0, 4294967295, 65535
  %v392 = vsel %vm390, %v391, 0
  %v394 = vand.u32 %v347, %v392
  %396 = vmatpush.bf16.msra.mxu0 0
  %397 = vmatpush.bf16.msra.mxu0 0
  %398 = vmatpush.bf16.msra.mxu0 0
  %399 = vmatpush.bf16.msra.mxu0 0
  %400 = vmatpush.bf16.msra.mxu0 0
  %401 = vmatpush.bf16.msra.mxu0 0
  %402 = vmatpush.bf16.msra.mxu0 0
  %403 = vmatpush.bf16.msra.mxu0 %v394
  %404 = vmatmul.bf16.gmra.mxu0 %v364
  %v405 = vpop.f32.mrf.mxu0
  %v406 = vadd.f32 0.0, %v405
  %v407 = vpop.f32.mrf.mxu0
  %v408 = vadd.f32 0.0, %v407
  %409 = vmatmul.bf16.gmra.mxu0 %v367
  %v410 = vpop.f32.mrf.mxu0
  %v411 = vadd.f32 0.0, %v410
  %v412 = vpop.f32.mrf.mxu0
  %v413 = vadd.f32 0.0, %v412
  %414 = vmatmul.bf16.gmra.mxu0 %v370
  %v415 = vpop.f32.mrf.mxu0
  %v416 = vadd.f32 0.0, %v415
  %v417 = vpop.f32.mrf.mxu0
  %v418 = vadd.f32 0.0, %v417
  %419 = vmatmul.bf16.gmra.mxu0 %v373
  %v420 = vpop.f32.mrf.mxu0
  %v421 = vadd.f32 0.0, %v420
  %v422 = vpop.f32.mrf.mxu0
  %v423 = vadd.f32 0.0, %v422
  %424 = vmatmul.bf16.gmra.mxu0 %v376
  %v425 = vpop.f32.mrf.mxu0
  %v426 = vadd.f32 0.0, %v425
  %v427 = vpop.f32.mrf.mxu0
  %v428 = vadd.f32 0.0, %v427
  %429 = vmatmul.bf16.gmra.mxu0 %v379
  %v430 = vpop.f32.mrf.mxu0
  %v431 = vadd.f32 0.0, %v430
  %v432 = vpop.f32.mrf.mxu0
  %v433 = vadd.f32 0.0, %v432
  %434 = vmatmul.bf16.gmra.mxu0 %v382
  %v435 = vpop.f32.mrf.mxu0
  %v436 = vadd.f32 0.0, %v435
  %v437 = vpop.f32.mrf.mxu0
  %v438 = vadd.f32 0.0, %v437
  %439 = vmatmul.bf16.gmra.mxu0 %v385
  %v440 = vpop.f32.mrf.mxu0
  %v441 = vadd.f32 0.0, %v440
  %v442 = vpop.f32.mrf.mxu0
  %v443 = vadd.f32 0.0, %v442
  %444 = vmatmul.bf16.gmra.mxu0 %v388
  %v445 = vpop.f32.mrf.mxu0
  %v446 = vadd.f32 0.0, %v445
  %v447 = vpop.f32.mrf.mxu0
  %v448 = vadd.f32 0.0, %v447
  %449 = vdwg.mxu0
  %v450 = vmul.f32 %v406, %v406
  %v451 = vmul.f32 %v408, %v408
  %v452 = vmul.f32 %v411, %v411
  %v453 = vmul.f32 %v413, %v413
  %v454 = vmul.f32 %v416, %v416
  %v455 = vmul.f32 %v418, %v418
  %v456 = vmul.f32 %v421, %v421
  %v457 = vmul.f32 %v423, %v423
  %v458 = vmul.f32 %v426, %v426
  %v459 = vmul.f32 %v428, %v428
  %v460 = vmul.f32 %v431, %v431
  %v461 = vmul.f32 %v433, %v433
  %v462 = vadd.f32 %v450, %v456
  %v463 = vadd.f32 %v451, %v457
  %v464 = vadd.f32 %v452, %v458
  %v465 = vadd.f32 %v453, %v459
  %v466 = vadd.f32 %v454, %v460
  %v467 = vadd.f32 %v455, %v461
  %v468 = vmul.f32 %v436, %v436
  %v469 = vmul.f32 %v438, %v438
  %v470 = vmul.f32 %v441, %v441
  %v471 = vmul.f32 %v443, %v443
  %v472 = vmul.f32 %v446, %v446
  %v473 = vmul.f32 %v448, %v448
  %v474 = vadd.f32 %v462, %v468
  %v475 = vadd.f32 %v463, %v469
  %v476 = vadd.f32 %v464, %v470
  %v477 = vadd.f32 %v465, %v471
  %v478 = vadd.f32 %v466, %v472
  %v479 = vadd.f32 %v467, %v473
  %v480 = vmax.f32 %v474, 1e-08
  %v481 = vmax.f32 %v475, 1e-08
  %v482 = vmax.f32 %v476, 1e-08
  %v483 = vmax.f32 %v477, 1e-08
  %v484 = vmax.f32 %v478, 1e-08
  %v485 = vmax.f32 %v479, 1e-08
  %v486 = vrsqrt.pop %v480
  %v487 = vmul.f32 %v486, %v480
  %v488 = vmul.f32 %v487, %v486
  %v489 = vmul.f32 0.5, %v488
  %v490 = vsub.f32 1.5, %v489
  %v491 = vmul.f32 %v486, %v490
  %v492 = vmul.f32 %v480, %v491
  %vm493 = vcmp.eq.f32.partialorder %v480, inf
  %v494 = vsel %vm493, %v480, %v492
  %vm495 = vcmp.eq.f32.partialorder %v480, 0.0
  %v496 = vand.u32 %v480, 2147483648
  %v497 = vsel %vm495, %v496, %v494
  %v498 = vrsqrt.pop %v481
  %v499 = vmul.f32 %v498, %v481
  %v500 = vmul.f32 %v499, %v498
  %v501 = vmul.f32 0.5, %v500
  %v502 = vsub.f32 1.5, %v501
  %v503 = vmul.f32 %v498, %v502
  %v504 = vmul.f32 %v481, %v503
  %vm505 = vcmp.eq.f32.partialorder %v481, inf
  %v506 = vsel %vm505, %v481, %v504
  %vm507 = vcmp.eq.f32.partialorder %v481, 0.0
  %v508 = vand.u32 %v481, 2147483648
  %v509 = vsel %vm507, %v508, %v506
  %v510 = vrsqrt.pop %v482
  %v511 = vmul.f32 %v510, %v482
  %v512 = vmul.f32 %v511, %v510
  %v513 = vmul.f32 0.5, %v512
  %v514 = vsub.f32 1.5, %v513
  %v515 = vmul.f32 %v510, %v514
  %v516 = vmul.f32 %v482, %v515
  %vm517 = vcmp.eq.f32.partialorder %v482, inf
  %v518 = vsel %vm517, %v482, %v516
  %vm519 = vcmp.eq.f32.partialorder %v482, 0.0
  %v520 = vand.u32 %v482, 2147483648
  %v521 = vsel %vm519, %v520, %v518
  %v522 = vrsqrt.pop %v483
  %v523 = vmul.f32 %v522, %v483
  %v524 = vmul.f32 %v523, %v522
  %v525 = vmul.f32 0.5, %v524
  %v526 = vsub.f32 1.5, %v525
  %v527 = vmul.f32 %v522, %v526
  %v528 = vmul.f32 %v483, %v527
  %vm529 = vcmp.eq.f32.partialorder %v483, inf
  %v530 = vsel %vm529, %v483, %v528
  %vm531 = vcmp.eq.f32.partialorder %v483, 0.0
  %v532 = vand.u32 %v483, 2147483648
  %v533 = vsel %vm531, %v532, %v530
  %v534 = vrsqrt.pop %v484
  %v535 = vmul.f32 %v534, %v484
  %v536 = vmul.f32 %v535, %v534
  %v537 = vmul.f32 0.5, %v536
  %v538 = vsub.f32 1.5, %v537
  %v539 = vmul.f32 %v534, %v538
  %v540 = vmul.f32 %v484, %v539
  %vm541 = vcmp.eq.f32.partialorder %v484, inf
  %v542 = vsel %vm541, %v484, %v540
  %vm543 = vcmp.eq.f32.partialorder %v484, 0.0
  %v544 = vand.u32 %v484, 2147483648
  %v545 = vsel %vm543, %v544, %v542
  %v546 = vrsqrt.pop %v485
  %v547 = vmul.f32 %v546, %v485
  %v548 = vmul.f32 %v547, %v546
  %v549 = vmul.f32 0.5, %v548
  %v550 = vsub.f32 1.5, %v549
  %v551 = vmul.f32 %v546, %v550
  %v552 = vmul.f32 %v485, %v551
  %vm553 = vcmp.eq.f32.partialorder %v485, inf
  %v554 = vsel %vm553, %v485, %v552
  %vm555 = vcmp.eq.f32.partialorder %v485, 0.0
  %v556 = vand.u32 %v485, 2147483648
  %v557 = vsel %vm555, %v556, %v554
  %v558 = vpack.c.bf16 %v222, %v221
  %v559 = vpack.c.bf16 %v224, %v223
  %v560 = vpack.c.bf16 %v226, %v225
  %v561 = vpack.c.bf16 %v509, %v497
  %v562 = vpack.c.bf16 %v533, %v521
  %v563 = vpack.c.bf16 %v557, %v545
  %vm564 = vcmask 31744
  %v566 = vsel %vm564, %v561, 0
  %v569 = vsel %vm564, %v562, 0
  %v572 = vsel %vm564, %v563, 0
  %vm574 = vcmask 1041408
  %v576 = vsel %vm574, %v350, 0
  %578 = vmatpush.bf16.msra.mxu0 0
  %579 = vmatpush.bf16.msra.mxu0 0
  %580 = vmatpush.bf16.msra.mxu0 0
  %581 = vmatpush.bf16.msra.mxu0 0
  %582 = vmatpush.bf16.msra.mxu0 0
  %583 = vmatpush.bf16.msra.mxu0 0
  %584 = vmatpush.bf16.msra.mxu0 0
  %585 = vmatpush.bf16.msra.mxu0 %v576
  %586 = vmatmul.bf16.gmra.mxu0 %v566
  %v587 = vpop.f32.mrf.mxu0
  %v588 = vadd.f32 0.0, %v587
  %v589 = vpop.f32.mrf.mxu0
  %v590 = vadd.f32 0.0, %v589
  %591 = vmatmul.bf16.gmra.mxu0 %v569
  %v592 = vpop.f32.mrf.mxu0
  %v593 = vadd.f32 0.0, %v592
  %v594 = vpop.f32.mrf.mxu0
  %v595 = vadd.f32 0.0, %v594
  %596 = vmatmul.bf16.gmra.mxu0 %v572
  %v597 = vpop.f32.mrf.mxu0
  %v598 = vadd.f32 0.0, %v597
  %v599 = vpop.f32.mrf.mxu0
  %v600 = vadd.f32 0.0, %v599
  %601 = vdwg.mxu0
  %v604 = vunpack.c.l.b16 %v348
  %v605 = vunpack.c.l.b16 %v349
  %v606 = vpack.c.b16 %v605, %v604
  %v609 = vsel %vm69, %v558, 0
  %v612 = vsel %vm69, %v559, 0
  %v615 = vsel %vm69, %v560, 0
  %617 = vmatpush.bf16.msra.mxu0 0
  %618 = vmatpush.bf16.msra.mxu0 0
  %619 = vmatpush.bf16.msra.mxu0 0
  %620 = vmatpush.bf16.msra.mxu0 0
  %621 = vmatpush.bf16.msra.mxu0 0
  %622 = vmatpush.bf16.msra.mxu0 0
  %623 = vmatpush.bf16.msra.mxu0 0
  %624 = vmatpush.bf16.msra.mxu0 %v606
  %625 = vmatmul.bf16.gmra.mxu0 %v609
  %v626 = vpop.f32.mrf.mxu0
  %v627 = vadd.f32 %v588, %v626
  %v628 = vpop.f32.mrf.mxu0
  %v629 = vadd.f32 %v590, %v628
  %630 = vmatmul.bf16.gmra.mxu0 %v612
  %v631 = vpop.f32.mrf.mxu0
  %v632 = vadd.f32 %v593, %v631
  %v633 = vpop.f32.mrf.mxu0
  %v634 = vadd.f32 %v595, %v633
  %635 = vmatmul.bf16.gmra.mxu0 %v615
  %v636 = vpop.f32.mrf.mxu0
  %v637 = vadd.f32 %v598, %v636
  %v638 = vpop.f32.mrf.mxu0
  %v639 = vadd.f32 %v600, %v638
  %640 = vdwg.mxu0
  %v642 = vperm.slane %v351, 0
  %v644 = vadd.f32 %v627, %v642
  %v645 = vadd.f32 %v629, %v642
  %v646 = vadd.f32 %v632, %v642
  %v647 = vadd.f32 %v634, %v642
  %v648 = vadd.f32 %v637, %v642
  %v649 = vadd.f32 %v639, %v642
  %v650 = vpack.c.bf16 %v408, %v406
  %v651 = vpack.c.bf16 %v413, %v411
  %v652 = vpack.c.bf16 %v418, %v416
  %v653 = vpack.c.bf16 %v423, %v421
  %v654 = vpack.c.bf16 %v428, %v426
  %v655 = vpack.c.bf16 %v433, %v431
  %v656 = vpack.c.bf16 %v438, %v436
  %v657 = vpack.c.bf16 %v443, %v441
  %v658 = vpack.c.bf16 %v448, %v446
  %v660 = vsel %vm564, %v650, 0
  %v663 = vsel %vm564, %v651, 0
  %v666 = vsel %vm564, %v652, 0
  %v669 = vsel %vm564, %v653, 0
  %v672 = vsel %vm564, %v654, 0
  %v675 = vsel %vm564, %v655, 0
  %v678 = vsel %vm564, %v656, 0
  %v681 = vsel %vm564, %v657, 0
  %v684 = vsel %vm564, %v658, 0
  %v687 = vsel %vm574, %v352, 0
  %689 = vmatpush.bf16.msra.mxu0 0
  %690 = vmatpush.bf16.msra.mxu0 0
  %691 = vmatpush.bf16.msra.mxu0 0
  %692 = vmatpush.bf16.msra.mxu0 0
  %693 = vmatpush.bf16.msra.mxu0 0
  %694 = vmatpush.bf16.msra.mxu0 0
  %695 = vmatpush.bf16.msra.mxu0 0
  %696 = vmatpush.bf16.msra.mxu0 %v687
  %697 = vmatmul.bf16.gmra.mxu0 %v660
  %v698 = vpop.f32.mrf.mxu0
  %v699 = vadd.f32 0.0, %v698
  %v700 = vpop.f32.mrf.mxu0
  %v701 = vadd.f32 0.0, %v700
  %702 = vmatmul.bf16.gmra.mxu0 %v663
  %v703 = vpop.f32.mrf.mxu0
  %v704 = vadd.f32 0.0, %v703
  %v705 = vpop.f32.mrf.mxu0
  %v706 = vadd.f32 0.0, %v705
  %707 = vmatmul.bf16.gmra.mxu0 %v666
  %v708 = vpop.f32.mrf.mxu0
  %v709 = vadd.f32 0.0, %v708
  %v710 = vpop.f32.mrf.mxu0
  %v711 = vadd.f32 0.0, %v710
  %712 = vmatmul.bf16.gmra.mxu0 %v669
  %v713 = vpop.f32.mrf.mxu0
  %v714 = vadd.f32 0.0, %v713
  %v715 = vpop.f32.mrf.mxu0
  %v716 = vadd.f32 0.0, %v715
  %717 = vmatmul.bf16.gmra.mxu0 %v672
  %v718 = vpop.f32.mrf.mxu0
  %v719 = vadd.f32 0.0, %v718
  %v720 = vpop.f32.mrf.mxu0
  %v721 = vadd.f32 0.0, %v720
  %722 = vmatmul.bf16.gmra.mxu0 %v675
  %v723 = vpop.f32.mrf.mxu0
  %v724 = vadd.f32 0.0, %v723
  %v725 = vpop.f32.mrf.mxu0
  %v726 = vadd.f32 0.0, %v725
  %727 = vmatmul.bf16.gmra.mxu0 %v678
  %v728 = vpop.f32.mrf.mxu0
  %v729 = vadd.f32 0.0, %v728
  %v730 = vpop.f32.mrf.mxu0
  %v731 = vadd.f32 0.0, %v730
  %732 = vmatmul.bf16.gmra.mxu0 %v681
  %v733 = vpop.f32.mrf.mxu0
  %v734 = vadd.f32 0.0, %v733
  %v735 = vpop.f32.mrf.mxu0
  %v736 = vadd.f32 0.0, %v735
  %737 = vmatmul.bf16.gmra.mxu0 %v684
  %v738 = vpop.f32.mrf.mxu0
  %v739 = vadd.f32 0.0, %v738
  %v740 = vpop.f32.mrf.mxu0
  %v741 = vadd.f32 0.0, %v740
  %742 = vdwg.mxu0
  %vm743 = vcmask 261120
  %744 = vst.msk [vmem:[%s11] sm:$0xff] %vm743, %v644
  %745 = vst.msk [vmem:[%s11 + $0x8] sm:$0xff] %vm743, %v645
  %746 = vst.msk [vmem:[%s11 + $0x10] sm:$0xff] %vm743, %v646
  %747 = vst.msk [vmem:[%s11 + $0x18] sm:$0xff] %vm743, %v647
  %748 = vst.msk [vmem:[%s11 + $0x20] sm:$0xff] %vm743, %v648
  %749 = vst.msk [vmem:[%s11 + $0x28] sm:$0xff] %vm743, %v649
  %750 = vst.msk [vmem:[%s12] sm:$0xff] %vm564, %v699
  %751 = vst.msk [vmem:[%s12 + $0x8] sm:$0xff] %vm564, %v701
  %752 = vst.msk [vmem:[%s12 + $0x10] sm:$0xff] %vm564, %v704
  %753 = vst.msk [vmem:[%s12 + $0x18] sm:$0xff] %vm564, %v706
  %754 = vst.msk [vmem:[%s12 + $0x20] sm:$0xff] %vm564, %v709
  %755 = vst.msk [vmem:[%s12 + $0x28] sm:$0xff] %vm564, %v711
  %756 = vst.msk [vmem:[%s13] sm:$0xff] %vm564, %v714
  %757 = vst.msk [vmem:[%s13 + $0x8] sm:$0xff] %vm564, %v716
  %758 = vst.msk [vmem:[%s13 + $0x10] sm:$0xff] %vm564, %v719
  %759 = vst.msk [vmem:[%s13 + $0x18] sm:$0xff] %vm564, %v721
  %760 = vst.msk [vmem:[%s13 + $0x20] sm:$0xff] %vm564, %v724
  %761 = vst.msk [vmem:[%s13 + $0x28] sm:$0xff] %vm564, %v726
  %762 = vst.msk [vmem:[%s14] sm:$0xff] %vm564, %v729
  %763 = vst.msk [vmem:[%s14 + $0x8] sm:$0xff] %vm564, %v731
  %764 = vst.msk [vmem:[%s14 + $0x10] sm:$0xff] %vm564, %v734
  %765 = vst.msk [vmem:[%s14 + $0x18] sm:$0xff] %vm564, %v736
  %766 = vst.msk [vmem:[%s14 + $0x20] sm:$0xff] %vm564, %v739
  %767 = vst.msk [vmem:[%s14 + $0x28] sm:$0xff] %vm564, %v741
  // Predicated region
  $region46: #{gvp_model_forward.10} parent=0 // pred_check
    _
  $region47: #{gvp_model_forward.10} parent=0 // pred_check_branch
    %769 = sbr.rel (0) target = $region49
  $region48: #{gvp_model_forward.10} parent=0 // pred_region
    _
  $region49: #{gvp_model_forward.10} parent=0 // pred_fallthru
    _
  // Predicated region
  $region50: #{gvp_model_forward.10} parent=0 // pred_check
    _
  $region51: #{gvp_model_forward.10} parent=0 // pred_check_branch
    %771 = sbr.rel (0) target = $region53
  $region52: #{gvp_model_forward.10} parent=0 // pred_region
    _
  $region53: #{gvp_model_forward.10} parent=0 // pred_fallthru
    _
  // Predicated region
  $region54: #{gvp_model_forward.10} parent=0 // pred_check
    _
  $region55: #{gvp_model_forward.10} parent=0 // pred_check_branch
    %773 = sbr.rel (0) target = $region57
  $region56: #{gvp_model_forward.10} parent=0 // pred_region
    _
  $region57: #{gvp_model_forward.10} parent=0 // pred_fallthru
    _
  // Predicated region
  $region58: #{gvp_model_forward.10} parent=0 // pred_check
    _
  $region59: #{gvp_model_forward.10} parent=0 // pred_check_branch
    %775 = sbr.rel (0) target = $region61
  $region60: #{gvp_model_forward.10} parent=0 // pred_region
    _
  $region61: #{gvp_model_forward.10} parent=0 // pred_fallthru
    _
  // Predicated region
  $region62: #{gvp_model_forward.10} parent=0 // pred_check
    _
  $region63: #{gvp_model_forward.10} parent=0 // pred_check_branch
    %777 = sbr.rel (0) target = $region65
  $region64: #{gvp_model_forward.10} parent=0 // pred_region
    _
  $region65: #{gvp_model_forward.10} parent=0 // pred_fallthru
    _
  // Predicated region
  $region66: #{gvp_model_forward.10} parent=0 // pred_check
    _
  $region67: #{gvp_model_forward.10} parent=0 // pred_check_branch
    %779 = sbr.rel (0) target = $region69
  $region68: #{gvp_model_forward.10} parent=0 // pred_region
    _
  $region69: #{gvp_model_forward.10} parent=0 // pred_fallthru
    _
  // Predicated region
  $region70: #{gvp_model_forward.10} parent=0 // pred_check
    _
  $region71: #{gvp_model_forward.10} parent=0 // pred_check_branch
    %781 = sbr.rel (0) target = $region73
  $region72: #{gvp_model_forward.10} parent=0 // pred_region
    _
  $region73: #{gvp_model_forward.10} parent=0 // pred_fallthru
    _
  // Predicated region
  $region74: #{gvp_model_forward.10} parent=0 // pred_check
    _
  $region75: #{gvp_model_forward.10} parent=0 // pred_check_branch
    %783 = sbr.rel (0) target = $region77
  $region76: #{gvp_model_forward.10} parent=0 // pred_region
    _
  $region77: #{gvp_model_forward.10} parent=0 // pred_fallthru
    _

// kernel: gvp_model_forward.12
$region0: #{gvp_model_forward.12}
  #allocation0 [shape = 'u32[]', space=smem, size = 0x4, offset = 0x4, fixed_abs, tag = 'smem constant byte address 0x4 - core index']
  #allocation1 [shape = 'u32[72,128]{1,0:T(1,128)}', space=vmem, size = 0x9000, scoped, tag = 'internal scratch']
  #allocation2 [shape = 'f32[16,1]{1,0:T(8,128)}', space=vmem, size = 0x2000, scoped, tag = 'scratch operand']
  %s0 = inlined_call_operand.vmem [shape: s32[1,48], index: 0, kind: input, shape index: {}]
  %s1 = inlined_call_operand.vmem [shape: bf16[48,32], index: 1, kind: input, shape index: {}]
  %s2 = inlined_call_operand.vmem [shape: bf16[48,8], index: 2, kind: input, shape index: {}]
  %s3 = inlined_call_operand.vmem [shape: bf16[48,8], index: 3, kind: input, shape index: {}]
  %s4 = inlined_call_operand.vmem [shape: bf16[48,8], index: 4, kind: input, shape index: {}]
  %s5 = inlined_call_operand.vmem [shape: f32[16,32], index: 5, kind: output, shape index: {0}]
  %s6 = inlined_call_operand.vmem [shape: f32[16,8], index: 6, kind: output, shape index: {1}]
  %s7 = inlined_call_operand.vmem [shape: f32[16,8], index: 7, kind: output, shape index: {2}]
  %s8 = inlined_call_operand.vmem [shape: f32[16,8], index: 8, kind: output, shape index: {3}]
  %9 = xla_tuple %s5, %s6, %s7, %s8
  %s10 = sld [smem:[#allocation0]]
  $region62: #{gvp_model_forward.12} parent=0
    _
  %s12 = ssub.s32 1, %s10
  %s13 = scalar_select 0, %s12, %s10
  // Predicated region
  $region2: #{gvp_model_forward.12} parent=0 // pred_check
    _
  $region3: #{gvp_model_forward.12} parent=0 // pred_check_branch
    %15 = sbr.rel (0) target = $region5
  $region4: #{gvp_model_forward.12} parent=0 // pred_region
    _
  $region5: #{gvp_model_forward.12} parent=0 // pred_fallthru
    _
  // Predicated region
  $region6: #{gvp_model_forward.12} parent=0 // pred_check
    _
  $region7: #{gvp_model_forward.12} parent=0 // pred_check_branch
    %17 = sbr.rel (0) target = $region9
  $region8: #{gvp_model_forward.12} parent=0 // pred_region
    _
  $region9: #{gvp_model_forward.12} parent=0 // pred_fallthru
    _
  // Predicated region
  $region10: #{gvp_model_forward.12} parent=0 // pred_check
    _
  $region11: #{gvp_model_forward.12} parent=0 // pred_check_branch
    %19 = sbr.rel (0) target = $region13
  $region12: #{gvp_model_forward.12} parent=0 // pred_region
    _
  $region13: #{gvp_model_forward.12} parent=0 // pred_fallthru
    _
  // Predicated region
  $region14: #{gvp_model_forward.12} parent=0 // pred_check
    _
  $region15: #{gvp_model_forward.12} parent=0 // pred_check_branch
    %21 = sbr.rel (0) target = $region17
  $region16: #{gvp_model_forward.12} parent=0 // pred_region
    _
  $region17: #{gvp_model_forward.12} parent=0 // pred_fallthru
    _
  // Predicated region
  $region18: #{gvp_model_forward.12} parent=0 // pred_check
    _
  $region19: #{gvp_model_forward.12} parent=0 // pred_check_branch
    %23 = sbr.rel (0) target = $region21
  $region20: #{gvp_model_forward.12} parent=0 // pred_region
    _
  $region21: #{gvp_model_forward.12} parent=0 // pred_fallthru
    _
  %p25 = scmp.eq.s32.totalorder 0, 0
  // Predicated region
  $region22: #{gvp_model_forward.12} parent=0 // pred_check
    %p26 = pneg %p25
  $region23: #{gvp_model_forward.12} parent=0 // pred_check_branch
    %28 = sbr.rel (%p26) target = $region25
  $region24: #{gvp_model_forward.12} parent=0 // pred_region
    %vm29 = vcmask 261120
    %30 = vst.msk [vmem:[%s5] sm:$0xff] %vm29, 0.0
    %31 = vst.msk [vmem:[%s5 + $0x8] sm:$0xff] %vm29, 0.0
    %vm32 = vcmask 64512
    %33 = vst.msk [vmem:[%s6] sm:$0xff] %vm32, 0.0
    %34 = vst.msk [vmem:[%s6 + $0x8] sm:$0xff] %vm32, 0.0
    %35 = vst.msk [vmem:[%s7] sm:$0xff] %vm32, 0.0
    %36 = vst.msk [vmem:[%s7 + $0x8] sm:$0xff] %vm32, 0.0
    %37 = vst.msk [vmem:[%s8] sm:$0xff] %vm32, 0.0
    %38 = vst.msk [vmem:[%s8 + $0x8] sm:$0xff] %vm32, 0.0
    %vm39 = vcmask 7168
    %40 = vst.msk [vmem:[#allocation2] sm:$0xff] %vm39, 0.0
    %41 = vst.msk [vmem:[#allocation2 + $0x8] sm:$0xff] %vm39, 0.0
  $region25: #{gvp_model_forward.12} parent=0 // pred_fallthru
    _
  %v42 = vld [vmem:[%s0] sm:$0x1]
  %v43 = vlaneseq
  %v44 = vshrl.u32 %v43, 7
  %v45 = vadd.s32 %v44, 8
  %v46 = vperm.slane %v42, 0
  %vm47 = vcmp.eq.s32.totalorder %v44, %v46
  %vm48 = vcmp.eq.s32.totalorder %v45, %v46
  %v49 = vsel %vm47, 1, 0
  %v50 = vsel %vm48, 1, 0
  %v51 = vcvt.s32.f32 %v49
  %v52 = vcvt.s32.f32 %v50
  %v53 = vld [vmem:[#allocation2] sm:$0xff]
  %v54 = vld [vmem:[#allocation2 + $0x8] sm:$0xff]
  %vm55 = vcmask 392192
  %v56 = vsel %vm55, %v51, 0.0
  %57 = vadd.xlane.f32.xlu0 %v56
  %v58 = vpop.xlane.xlu0 %57
  %v59 = vsel %vm55, %v52, 0.0
  %60 = vadd.xlane.f32.xlu0 %v59
  %v61 = vpop.xlane.xlu0 %60
  %v62 = vadd.f32 %v53, %v58
  %v63 = vadd.f32 %v54, %v61
  %vm64 = vcmask 7168
  %65 = vst.msk [vmem:[#allocation2] sm:$0xff] %vm64, %v62
  %66 = vst.msk [vmem:[#allocation2 + $0x8] sm:$0xff] %vm64, %v63
  %v67 = vpack.c.bf16 %v52, %v51
  %v68 = vld [vmem:[%s5] sm:$0xff]
  %v69 = vld [vmem:[%s5 + $0x8] sm:$0xff]
  %v70 = vld [vmem:[%s1] sm:$0xf]
  %v71 = vld [vmem:[%s1 + $0x4] sm:$0xf]
  %v72 = vld [vmem:[%s1 + $0x8] sm:$0xf]
  %v73 = vld [vmem:[%s1 + $0xc] sm:$0xf]
  %v74 = vld [vmem:[%s1 + $0x10] sm:$0xf]
  %v75 = vld [vmem:[%s1 + $0x14] sm:$0xf]
  %v82 = vunpack.c.l.b16 %v70
  %v83 = vunpack.c.l.b16 %v71
  %v84 = vunpack.c.l.b16 %v72
  %v85 = vunpack.c.l.b16 %v73
  %v86 = vunpack.c.l.b16 %v74
  %v87 = vunpack.c.l.b16 %v75
  %v88 = vpack.c.b16 %v83, %v82
  %v89 = vpack.c.b16 %v85, %v84
  %v90 = vpack.c.b16 %v87, %v86
  %v95 = vsel %vm55, %v67, 0
  %97 = vmatpush.bf16.msra.mxu0 0
  %98 = vmatpush.bf16.msra.mxu0 0
  %99 = vmatpush.bf16.msra.mxu0 0
  %100 = vmatpush.bf16.msra.mxu0 0
  %101 = vmatpush.bf16.msra.mxu0 0
  %102 = vmatpush.bf16.msra.mxu0 %v90
  %103 = vmatpush.bf16.msra.mxu0 %v89
  %104 = vmatpush.bf16.msra.mxu0 %v88
  %105 = vmatmul.bf16.gmra.mxu0 %v95
  %v106 = vpop.f32.mrf.mxu0
  %v107 = vadd.f32 0.0, %v106
  %v108 = vpop.f32.mrf.mxu0
  %v109 = vadd.f32 0.0, %v108
  %110 = vdwg.mxu0
  %v111 = vadd.f32 %v68, %v107
  %v112 = vadd.f32 %v69, %v109
  %vm113 = vcmask 261120
  %114 = vst.msk [vmem:[%s5] sm:$0xff] %vm113, %v111
  %115 = vst.msk [vmem:[%s5 + $0x8] sm:$0xff] %vm113, %v112
  %v116 = vld [vmem:[%s6] sm:$0xff]
  %v117 = vld [vmem:[%s6 + $0x8] sm:$0xff]
  %v118 = vld [vmem:[%s2] sm:$0xf]
  %v119 = vld [vmem:[%s2 + $0x4] sm:$0xf]
  %v120 = vld [vmem:[%s2 + $0x8] sm:$0xf]
  %v121 = vld [vmem:[%s2 + $0xc] sm:$0xf]
  %v122 = vld [vmem:[%s2 + $0x10] sm:$0xf]
  %v123 = vld [vmem:[%s2 + $0x14] sm:$0xf]
  %v130 = vunpack.c.l.b16 %v118
  %v131 = vunpack.c.l.b16 %v119
  %v132 = vunpack.c.l.b16 %v120
  %v133 = vunpack.c.l.b16 %v121
  %v134 = vunpack.c.l.b16 %v122
  %v135 = vunpack.c.l.b16 %v123
  %v136 = vpack.c.b16 %v131, %v130
  %v137 = vpack.c.b16 %v133, %v132
  %v138 = vpack.c.b16 %v135, %v134
  %142 = vmatpush.bf16.msra.mxu0 0
  %143 = vmatpush.bf16.msra.mxu0 0
  %144 = vmatpush.bf16.msra.mxu0 0
  %145 = vmatpush.bf16.msra.mxu0 0
  %146 = vmatpush.bf16.msra.mxu0 0
  %147 = vmatpush.bf16.msra.mxu0 %v138
  %148 = vmatpush.bf16.msra.mxu0 %v137
  %149 = vmatpush.bf16.msra.mxu0 %v136
  %150 = vmatmul.bf16.gmra.mxu0 %v95
  %v151 = vpop.f32.mrf.mxu0
  %v152 = vadd.f32 0.0, %v151
  %v153 = vpop.f32.mrf.mxu0
  %v154 = vadd.f32 0.0, %v153
  %155 = vdwg.mxu0
  %v156 = vadd.f32 %v116, %v152
  %v157 = vadd.f32 %v117, %v154
  %vm158 = vcmask 64512
  %159 = vst.msk [vmem:[%s6] sm:$0xff] %vm158, %v156
  %160 = vst.msk [vmem:[%s6 + $0x8] sm:$0xff] %vm158, %v157
  %v161 = vld [vmem:[%s7] sm:$0xff]
  %v162 = vld [vmem:[%s7 + $0x8] sm:$0xff]
  %v163 = vld [vmem:[%s3] sm:$0xf]
  %v164 = vld [vmem:[%s3 + $0x4] sm:$0xf]
  %v165 = vld [vmem:[%s3 + $0x8] sm:$0xf]
  %v166 = vld [vmem:[%s3 + $0xc] sm:$0xf]
  %v167 = vld [vmem:[%s3 + $0x10] sm:$0xf]
  %v168 = vld [vmem:[%s3 + $0x14] sm:$0xf]
  %v175 = vunpack.c.l.b16 %v163
  %v176 = vunpack.c.l.b16 %v164
  %v177 = vunpack.c.l.b16 %v165
  %v178 = vunpack.c.l.b16 %v166
  %v179 = vunpack.c.l.b16 %v167
  %v180 = vunpack.c.l.b16 %v168
  %v181 = vpack.c.b16 %v176, %v175
  %v182 = vpack.c.b16 %v178, %v177
  %v183 = vpack.c.b16 %v180, %v179
  %187 = vmatpush.bf16.msra.mxu0 0
  %188 = vmatpush.bf16.msra.mxu0 0
  %189 = vmatpush.bf16.msra.mxu0 0
  %190 = vmatpush.bf16.msra.mxu0 0
  %191 = vmatpush.bf16.msra.mxu0 0
  %192 = vmatpush.bf16.msra.mxu0 %v183
  %193 = vmatpush.bf16.msra.mxu0 %v182
  %194 = vmatpush.bf16.msra.mxu0 %v181
  %195 = vmatmul.bf16.gmra.mxu0 %v95
  %v196 = vpop.f32.mrf.mxu0
  %v197 = vadd.f32 0.0, %v196
  %v198 = vpop.f32.mrf.mxu0
  %v199 = vadd.f32 0.0, %v198
  %200 = vdwg.mxu0
  %v201 = vadd.f32 %v161, %v197
  %v202 = vadd.f32 %v162, %v199
  %203 = vst.msk [vmem:[%s7] sm:$0xff] %vm158, %v201
  %204 = vst.msk [vmem:[%s7 + $0x8] sm:$0xff] %vm158, %v202
  %v205 = vld [vmem:[%s8] sm:$0xff]
  %v206 = vld [vmem:[%s8 + $0x8] sm:$0xff]
  %v207 = vld [vmem:[%s4] sm:$0xf]
  %v208 = vld [vmem:[%s4 + $0x4] sm:$0xf]
  %v209 = vld [vmem:[%s4 + $0x8] sm:$0xf]
  %v210 = vld [vmem:[%s4 + $0xc] sm:$0xf]
  %v211 = vld [vmem:[%s4 + $0x10] sm:$0xf]
  %v212 = vld [vmem:[%s4 + $0x14] sm:$0xf]
  %v219 = vunpack.c.l.b16 %v207
  %v220 = vunpack.c.l.b16 %v208
  %v221 = vunpack.c.l.b16 %v209
  %v222 = vunpack.c.l.b16 %v210
  %v223 = vunpack.c.l.b16 %v211
  %v224 = vunpack.c.l.b16 %v212
  %v225 = vpack.c.b16 %v220, %v219
  %v226 = vpack.c.b16 %v222, %v221
  %v227 = vpack.c.b16 %v224, %v223
  %231 = vmatpush.bf16.msra.mxu0 0
  %232 = vmatpush.bf16.msra.mxu0 0
  %233 = vmatpush.bf16.msra.mxu0 0
  %234 = vmatpush.bf16.msra.mxu0 0
  %235 = vmatpush.bf16.msra.mxu0 0
  %236 = vmatpush.bf16.msra.mxu0 %v227
  %237 = vmatpush.bf16.msra.mxu0 %v226
  %238 = vmatpush.bf16.msra.mxu0 %v225
  %239 = vmatmul.bf16.gmra.mxu0 %v95
  %v240 = vpop.f32.mrf.mxu0
  %v241 = vadd.f32 0.0, %v240
  %v242 = vpop.f32.mrf.mxu0
  %v243 = vadd.f32 0.0, %v242
  %244 = vdwg.mxu0
  %v245 = vadd.f32 %v205, %v241
  %v246 = vadd.f32 %v206, %v243
  %247 = vst.msk [vmem:[%s8] sm:$0xff] %vm158, %v245
  %248 = vst.msk [vmem:[%s8 + $0x8] sm:$0xff] %vm158, %v246
  // Predicated region
  $region26: #{gvp_model_forward.12} parent=0 // pred_check
    %p249 = pneg %p25
  $region27: #{gvp_model_forward.12} parent=0 // pred_check_branch
    %251 = sbr.rel (%p249) target = $region29
  $region28: #{gvp_model_forward.12} parent=0 // pred_region
    %v252 = vld [vmem:[#allocation2] sm:$0xff]
    %v253 = vld [vmem:[#allocation2 + $0x8] sm:$0xff]
    %v254 = vmax.f32 %v252, 1.0
    %v255 = vmax.f32 %v253, 1.0
    %v256 = vrcp.pop %v254
    %v257 = vrcp.pop %v255
    %v258 = vld [vmem:[%s5] sm:$0xff]
    %v259 = vld [vmem:[%s5 + $0x8] sm:$0xff]
    %261 = vset.pattern.permute.xlu0 0
    %262 = vperm.xlu0 %261, %v256
    %v263 = vpop.permute.xlu0 %262
    %266 = vset.pattern.permute.xlu0 0
    %267 = vperm.xlu0 %266, %v257
    %v268 = vpop.permute.xlu0 %267
    %v270 = vmul.f32 %v258, %v263
    %v271 = vmul.f32 %v259, %v268
    %272 = vst.msk [vmem:[%s5] sm:$0xff] %vm113, %v270
    %273 = vst.msk [vmem:[%s5 + $0x8] sm:$0xff] %vm113, %v271
    %v274 = vld [vmem:[%s6] sm:$0xff]
    %v275 = vld [vmem:[%s6 + $0x8] sm:$0xff]
    %v276 = vmul.f32 %v274, %v263
    %v277 = vmul.f32 %v275, %v268
    %278 = vst.msk [vmem:[%s6] sm:$0xff] %vm158, %v276
    %279 = vst.msk [vmem:[%s6 + $0x8] sm:$0xff] %vm158, %v277
    %v280 = vld [vmem:[%s7] sm:$0xff]
    %v281 = vld [vmem:[%s7 + $0x8] sm:$0xff]
    %v282 = vmul.f32 %v280, %v263
    %v283 = vmul.f32 %v281, %v268
    %284 = vst.msk [vmem:[%s7] sm:$0xff] %vm158, %v282
    %285 = vst.msk [vmem:[%s7 + $0x8] sm:$0xff] %vm158, %v283
    %v286 = vld [vmem:[%s8] sm:$0xff]
    %v287 = vld [vmem:[%s8 + $0x8] sm:$0xff]
    %v288 = vmul.f32 %v286, %v263
    %v289 = vmul.f32 %v287, %v268
    %290 = vst.msk [vmem:[%s8] sm:$0xff] %vm158, %v288
    %291 = vst.msk [vmem:[%s8 + $0x8] sm:$0xff] %vm158, %v289
  $region29: #{gvp_model_forward.12} parent=0 // pred_fallthru
    _
  // Predicated region
  $region30: #{gvp_model_forward.12} parent=0 // pred_check
    _
  $region31: #{gvp_model_forward.12} parent=0 // pred_check_branch
    %293 = sbr.rel (0) target = $region33
  $region32: #{gvp_model_forward.12} parent=0 // pred_region
    _
  $region33: #{gvp_model_forward.12} parent=0 // pred_fallthru
    _
  // Predicated region
  $region34: #{gvp_model_forward.12} parent=0 // pred_check
    _
  $region35: #{gvp_model_forward.12} parent=0 // pred_check_branch
    %295 = sbr.rel (0) target = $region37
  $region36: #{gvp_model_forward.12} parent=0 // pred_region
    _
  $region37: #{gvp_model_forward.12} parent=0 // pred_fallthru
    _
  // Predicated region
  $region38: #{gvp_model_forward.12} parent=0 // pred_check
    _
  $region39: #{gvp_model_forward.12} parent=0 // pred_check_branch
    %297 = sbr.rel (0) target = $region41
  $region40: #{gvp_model_forward.12} parent=0 // pred_region
    _
  $region41: #{gvp_model_forward.12} parent=0 // pred_fallthru
    _
  // Predicated region
  $region42: #{gvp_model_forward.12} parent=0 // pred_check
    _
  $region43: #{gvp_model_forward.12} parent=0 // pred_check_branch
    %299 = sbr.rel (0) target = $region45
  $region44: #{gvp_model_forward.12} parent=0 // pred_region
    _
  $region45: #{gvp_model_forward.12} parent=0 // pred_fallthru
    _
  // Predicated region
  $region46: #{gvp_model_forward.12} parent=0 // pred_check
    _
  $region47: #{gvp_model_forward.12} parent=0 // pred_check_branch
    %301 = sbr.rel (0) target = $region49
  $region48: #{gvp_model_forward.12} parent=0 // pred_region
    _
  $region49: #{gvp_model_forward.12} parent=0 // pred_fallthru
    _
  // Predicated region
  $region50: #{gvp_model_forward.12} parent=0 // pred_check
    _
  $region51: #{gvp_model_forward.12} parent=0 // pred_check_branch
    %303 = sbr.rel (0) target = $region53
  $region52: #{gvp_model_forward.12} parent=0 // pred_region
    _
  $region53: #{gvp_model_forward.12} parent=0 // pred_fallthru
    _
  // Predicated region
  $region54: #{gvp_model_forward.12} parent=0 // pred_check
    _
  $region55: #{gvp_model_forward.12} parent=0 // pred_check_branch
    %305 = sbr.rel (0) target = $region57
  $region56: #{gvp_model_forward.12} parent=0 // pred_region
    _
  $region57: #{gvp_model_forward.12} parent=0 // pred_fallthru
    _
  // Predicated region
  $region58: #{gvp_model_forward.12} parent=0 // pred_check
    _
  $region59: #{gvp_model_forward.12} parent=0 // pred_check_branch
    %307 = sbr.rel (0) target = $region61
  $region60: #{gvp_model_forward.12} parent=0 // pred_region
    _
  $region61: #{gvp_model_forward.12} parent=0 // pred_fallthru
    _

// kernel: gvp_model_forward.11
$region0: #{gvp_model_forward.11}
  #allocation0 [shape = 'u32[]', space=smem, size = 0x4, offset = 0x4, fixed_abs, tag = 'smem constant byte address 0x4 - core index']
  #allocation1 [shape = 'u32[72,128]{1,0:T(1,128)}', space=vmem, size = 0x9000, scoped, tag = 'internal scratch']
  %s0 = inlined_call_operand.vmem [shape: f32[48,96], index: 0, kind: input, shape index: {}]
  %s1 = inlined_call_operand.vmem [shape: f32[48,20], index: 1, kind: input, shape index: {}]
  %s2 = inlined_call_operand.vmem [shape: f32[48,20], index: 2, kind: input, shape index: {}]
  %s3 = inlined_call_operand.vmem [shape: f32[48,20], index: 3, kind: input, shape index: {}]
  %s4 = inlined_call_operand.vmem [shape: bf16[20,20], index: 4, kind: input, shape index: {}]
  %s5 = inlined_call_operand.vmem [shape: bf16[96,32], index: 5, kind: input, shape index: {}]
  %s6 = inlined_call_operand.vmem [shape: bf16[20,32], index: 6, kind: input, shape index: {}]
  %s7 = inlined_call_operand.vmem [shape: f32[1,32], index: 7, kind: input, shape index: {}]
  %s8 = inlined_call_operand.vmem [shape: bf16[20,8], index: 8, kind: input, shape index: {}]
  %s9 = inlined_call_operand.vmem [shape: bf16[8,8], index: 9, kind: input, shape index: {}]
  %s10 = inlined_call_operand.vmem [shape: bf16[32,32], index: 10, kind: input, shape index: {}]
  %s11 = inlined_call_operand.vmem [shape: bf16[8,32], index: 11, kind: input, shape index: {}]
  %s12 = inlined_call_operand.vmem [shape: f32[1,32], index: 12, kind: input, shape index: {}]
  %s13 = inlined_call_operand.vmem [shape: bf16[8,8], index: 13, kind: input, shape index: {}]
  %s14 = inlined_call_operand.vmem [shape: bf16[8,8], index: 14, kind: input, shape index: {}]
  %s15 = inlined_call_operand.vmem [shape: bf16[32,32], index: 15, kind: input, shape index: {}]
  %s16 = inlined_call_operand.vmem [shape: bf16[8,32], index: 16, kind: input, shape index: {}]
  %s17 = inlined_call_operand.vmem [shape: f32[1,32], index: 17, kind: input, shape index: {}]
  %s18 = inlined_call_operand.vmem [shape: bf16[8,8], index: 18, kind: input, shape index: {}]
  %s19 = inlined_call_operand.vmem [shape: bf16[48,32], index: 19, kind: output, shape index: {0}]
  %s20 = inlined_call_operand.vmem [shape: bf16[48,8], index: 20, kind: output, shape index: {1}]
  %s21 = inlined_call_operand.vmem [shape: bf16[48,8], index: 21, kind: output, shape index: {2}]
  %s22 = inlined_call_operand.vmem [shape: bf16[48,8], index: 22, kind: output, shape index: {3}]
  %23 = xla_tuple %s19, %s20, %s21, %s22
  %s24 = sld [smem:[#allocation0]]
  $region110: #{gvp_model_forward.11} parent=0
    _
  %s26 = ssub.s32 1, %s24
  %s27 = scalar_select 0, %s26, %s24
  // Predicated region
  $region2: #{gvp_model_forward.11} parent=0 // pred_check
    _
  $region3: #{gvp_model_forward.11} parent=0 // pred_check_branch
    %29 = sbr.rel (0) target = $region5
  $region4: #{gvp_model_forward.11} parent=0 // pred_region
    _
  $region5: #{gvp_model_forward.11} parent=0 // pred_fallthru
    _
  // Predicated region
  $region6: #{gvp_model_forward.11} parent=0 // pred_check
    _
  $region7: #{gvp_model_forward.11} parent=0 // pred_check_branch
    %31 = sbr.rel (0) target = $region9
  $region8: #{gvp_model_forward.11} parent=0 // pred_region
    _
  $region9: #{gvp_model_forward.11} parent=0 // pred_fallthru
    _
  // Predicated region
  $region10: #{gvp_model_forward.11} parent=0 // pred_check
    _
  $region11: #{gvp_model_forward.11} parent=0 // pred_check_branch
    %33 = sbr.rel (0) target = $region13
  $region12: #{gvp_model_forward.11} parent=0 // pred_region
    _
  $region13: #{gvp_model_forward.11} parent=0 // pred_fallthru
    _
  // Predicated region
  $region14: #{gvp_model_forward.11} parent=0 // pred_check
    _
  $region15: #{gvp_model_forward.11} parent=0 // pred_check_branch
    %35 = sbr.rel (0) target = $region17
  $region16: #{gvp_model_forward.11} parent=0 // pred_region
    _
  $region17: #{gvp_model_forward.11} parent=0 // pred_fallthru
    _
  // Predicated region
  $region18: #{gvp_model_forward.11} parent=0 // pred_check
    _
  $region19: #{gvp_model_forward.11} parent=0 // pred_check_branch
    %37 = sbr.rel (0) target = $region21
  $region20: #{gvp_model_forward.11} parent=0 // pred_region
    _
  $region21: #{gvp_model_forward.11} parent=0 // pred_fallthru
    _
  // Predicated region
  $region22: #{gvp_model_forward.11} parent=0 // pred_check
    _
  $region23: #{gvp_model_forward.11} parent=0 // pred_check_branch
    %39 = sbr.rel (0) target = $region25
  $region24: #{gvp_model_forward.11} parent=0 // pred_region
    _
  $region25: #{gvp_model_forward.11} parent=0 // pred_fallthru
    _
  // Predicated region
  $region26: #{gvp_model_forward.11} parent=0 // pred_check
    _
  $region27: #{gvp_model_forward.11} parent=0 // pred_check_branch
    %41 = sbr.rel (0) target = $region29
  $region28: #{gvp_model_forward.11} parent=0 // pred_region
    _
  $region29: #{gvp_model_forward.11} parent=0 // pred_fallthru
    _
  // Predicated region
  $region30: #{gvp_model_forward.11} parent=0 // pred_check
    _
  $region31: #{gvp_model_forward.11} parent=0 // pred_check_branch
    %43 = sbr.rel (0) target = $region33
  $region32: #{gvp_model_forward.11} parent=0 // pred_region
    _
  $region33: #{gvp_model_forward.11} parent=0 // pred_fallthru
    _
  // Predicated region
  $region34: #{gvp_model_forward.11} parent=0 // pred_check
    _
  $region35: #{gvp_model_forward.11} parent=0 // pred_check_branch
    %45 = sbr.rel (0) target = $region37
  $region36: #{gvp_model_forward.11} parent=0 // pred_region
    _
  $region37: #{gvp_model_forward.11} parent=0 // pred_fallthru
    _
  // Predicated region
  $region38: #{gvp_model_forward.11} parent=0 // pred_check
    _
  $region39: #{gvp_model_forward.11} parent=0 // pred_check_branch
    %47 = sbr.rel (0) target = $region41
  $region40: #{gvp_model_forward.11} parent=0 // pred_region
    _
  $region41: #{gvp_model_forward.11} parent=0 // pred_fallthru
    _
  // Predicated region
  $region42: #{gvp_model_forward.11} parent=0 // pred_check
    _
  $region43: #{gvp_model_forward.11} parent=0 // pred_check_branch
    %49 = sbr.rel (0) target = $region45
  $region44: #{gvp_model_forward.11} parent=0 // pred_region
    _
  $region45: #{gvp_model_forward.11} parent=0 // pred_fallthru
    _
  // Predicated region
  $region46: #{gvp_model_forward.11} parent=0 // pred_check
    _
  $region47: #{gvp_model_forward.11} parent=0 // pred_check_branch
    %51 = sbr.rel (0) target = $region49
  $region48: #{gvp_model_forward.11} parent=0 // pred_region
    _
  $region49: #{gvp_model_forward.11} parent=0 // pred_fallthru
    _
  // Predicated region
  $region50: #{gvp_model_forward.11} parent=0 // pred_check
    _
  $region51: #{gvp_model_forward.11} parent=0 // pred_check_branch
    %53 = sbr.rel (0) target = $region53
  $region52: #{gvp_model_forward.11} parent=0 // pred_region
    _
  $region53: #{gvp_model_forward.11} parent=0 // pred_fallthru
    _
  // Predicated region
  $region54: #{gvp_model_forward.11} parent=0 // pred_check
    _
  $region55: #{gvp_model_forward.11} parent=0 // pred_check_branch
    %55 = sbr.rel (0) target = $region57
  $region56: #{gvp_model_forward.11} parent=0 // pred_region
    _
  $region57: #{gvp_model_forward.11} parent=0 // pred_fallthru
    _
  // Predicated region
  $region58: #{gvp_model_forward.11} parent=0 // pred_check
    _
  $region59: #{gvp_model_forward.11} parent=0 // pred_check_branch
    %57 = sbr.rel (0) target = $region61
  $region60: #{gvp_model_forward.11} parent=0 // pred_region
    _
  $region61: #{gvp_model_forward.11} parent=0 // pred_fallthru
    _
  // Predicated region
  $region62: #{gvp_model_forward.11} parent=0 // pred_check
    _
  $region63: #{gvp_model_forward.11} parent=0 // pred_check_branch
    %59 = sbr.rel (0) target = $region65
  $region64: #{gvp_model_forward.11} parent=0 // pred_region
    _
  $region65: #{gvp_model_forward.11} parent=0 // pred_fallthru
    _
  // Predicated region
  $region66: #{gvp_model_forward.11} parent=0 // pred_check
    _
  $region67: #{gvp_model_forward.11} parent=0 // pred_check_branch
    %61 = sbr.rel (0) target = $region69
  $region68: #{gvp_model_forward.11} parent=0 // pred_region
    _
  $region69: #{gvp_model_forward.11} parent=0 // pred_fallthru
    _
  // Predicated region
  $region70: #{gvp_model_forward.11} parent=0 // pred_check
    _
  $region71: #{gvp_model_forward.11} parent=0 // pred_check_branch
    %63 = sbr.rel (0) target = $region73
  $region72: #{gvp_model_forward.11} parent=0 // pred_region
    _
  $region73: #{gvp_model_forward.11} parent=0 // pred_fallthru
    _
  // Predicated region
  $region74: #{gvp_model_forward.11} parent=0 // pred_check
    _
  $region75: #{gvp_model_forward.11} parent=0 // pred_check_branch
    %65 = sbr.rel (0) target = $region77
  $region76: #{gvp_model_forward.11} parent=0 // pred_region
    _
  $region77: #{gvp_model_forward.11} parent=0 // pred_fallthru
    _
  %v67 = vld [vmem:[%s4] sm:$0xf]
  %v68 = vld [vmem:[%s4 + $0x4] sm:$0xf]
  %v69 = vld [vmem:[%s4 + $0x8] sm:$0x3]
  %v70 = vld [vmem:[%s5] sm:$0xf]
  %v71 = vld [vmem:[%s5 + $0x4] sm:$0xf]
  %v72 = vld [vmem:[%s5 + $0x8] sm:$0xf]
  %v73 = vld [vmem:[%s5 + $0xc] sm:$0xf]
  %v74 = vld [vmem:[%s5 + $0x10] sm:$0xf]
  %v75 = vld [vmem:[%s5 + $0x14] sm:$0xf]
  %v76 = vld [vmem:[%s5 + $0x18] sm:$0xf]
  %v77 = vld [vmem:[%s5 + $0x1c] sm:$0xf]
  %v78 = vld [vmem:[%s5 + $0x20] sm:$0xf]
  %v79 = vld [vmem:[%s5 + $0x24] sm:$0xf]
  %v80 = vld [vmem:[%s5 + $0x28] sm:$0xf]
  %v81 = vld [vmem:[%s5 + $0x2c] sm:$0xf]
  %v82 = vld [vmem:[%s6] sm:$0xf]
  %v83 = vld [vmem:[%s6 + $0x4] sm:$0xf]
  %v84 = vld [vmem:[%s6 + $0x8] sm:$0x3]
  %v85 = vld [vmem:[%s7] sm:$0x1]
  %v86 = vld [vmem:[%s8] sm:$0xf]
  %v87 = vld [vmem:[%s8 + $0x4] sm:$0xf]
  %v88 = vld [vmem:[%s8 + $0x8] sm:$0x3]
  %v89 = vld [vmem:[%s9] sm:$0xf]
  %v90 = vld [vmem:[%s10] sm:$0xf]
  %v91 = vld [vmem:[%s10 + $0x4] sm:$0xf]
  %v92 = vld [vmem:[%s10 + $0x8] sm:$0xf]
  %v93 = vld [vmem:[%s10 + $0xc] sm:$0xf]
  %v94 = vld [vmem:[%s11] sm:$0xf]
  %v95 = vld [vmem:[%s12] sm:$0x1]
  %v96 = vld [vmem:[%s13] sm:$0xf]
  %v97 = vld [vmem:[%s14] sm:$0xf]
  %v98 = vld [vmem:[%s15] sm:$0xf]
  %v99 = vld [vmem:[%s15 + $0x4] sm:$0xf]
  %v100 = vld [vmem:[%s15 + $0x8] sm:$0xf]
  %v101 = vld [vmem:[%s15 + $0xc] sm:$0xf]
  %v102 = vld [vmem:[%s16] sm:$0xf]
  %v103 = vld [vmem:[%s17] sm:$0x1]
  %v104 = vld [vmem:[%s18] sm:$0xf]
  %v105 = vld [vmem:[%s0] sm:$0xff]
  %v106 = vld [vmem:[%s0 + $0x8] sm:$0xff]
  %v107 = vld [vmem:[%s0 + $0x10] sm:$0xff]
  %v108 = vld [vmem:[%s0 + $0x18] sm:$0xff]
  %v109 = vld [vmem:[%s0 + $0x20] sm:$0xff]
  %v110 = vld [vmem:[%s0 + $0x28] sm:$0xff]
  %v111 = vld [vmem:[%s1] sm:$0xff]
  %v112 = vld [vmem:[%s1 + $0x8] sm:$0xff]
  %v113 = vld [vmem:[%s1 + $0x10] sm:$0xff]
  %v114 = vld [vmem:[%s1 + $0x18] sm:$0xff]
  %v115 = vld [vmem:[%s1 + $0x20] sm:$0xff]
  %v116 = vld [vmem:[%s1 + $0x28] sm:$0xff]
  %v117 = vld [vmem:[%s2] sm:$0xff]
  %v118 = vld [vmem:[%s2 + $0x8] sm:$0xff]
  %v119 = vld [vmem:[%s2 + $0x10] sm:$0xff]
  %v120 = vld [vmem:[%s2 + $0x18] sm:$0xff]
  %v121 = vld [vmem:[%s2 + $0x20] sm:$0xff]
  %v122 = vld [vmem:[%s2 + $0x28] sm:$0xff]
  %v123 = vld [vmem:[%s3] sm:$0xff]
  %v124 = vld [vmem:[%s3 + $0x8] sm:$0xff]
  %v125 = vld [vmem:[%s3 + $0x10] sm:$0xff]
  %v126 = vld [vmem:[%s3 + $0x18] sm:$0xff]
  %v127 = vld [vmem:[%s3 + $0x20] sm:$0xff]
  %v128 = vld [vmem:[%s3 + $0x28] sm:$0xff]
  %v129 = vpack.c.bf16 %v112, %v111
  %v130 = vpack.c.bf16 %v114, %v113
  %v131 = vpack.c.bf16 %v116, %v115
  %v132 = vpack.c.bf16 %v118, %v117
  %v133 = vpack.c.bf16 %v120, %v119
  %v134 = vpack.c.bf16 %v122, %v121
  %v135 = vpack.c.bf16 %v124, %v123
  %v136 = vpack.c.bf16 %v126, %v125
  %v137 = vpack.c.bf16 %v128, %v127
  %v141 = vunpack.c.l.b16 %v67
  %v142 = vunpack.c.l.b16 %v68
  %v143 = vunpack.c.l.b16 %v69
  %v144 = vpack.c.b16 %v142, %v141
  %v145 = vpack.c.b16 %v143, %v143
  %vm147 = vcmask 162816
  %v149 = vsel %vm147, %v129, 0
  %v152 = vsel %vm147, %v130, 0
  %v155 = vsel %vm147, %v131, 0
  %v158 = vsel %vm147, %v132, 0
  %v161 = vsel %vm147, %v133, 0
  %v164 = vsel %vm147, %v134, 0
  %v167 = vsel %vm147, %v135, 0
  %v170 = vsel %vm147, %v136, 0
  %v173 = vsel %vm147, %v137, 0
  %vm175 = vcmask 1041408
  %v177 = vsel %vm175, %v145, 0
  %179 = vmatpush.bf16.msra.mxu0 0
  %180 = vmatpush.bf16.msra.mxu0 0
  %181 = vmatpush.bf16.msra.mxu0 0
  %182 = vmatpush.bf16.msra.mxu0 0
  %183 = vmatpush.bf16.msra.mxu0 0
  %184 = vmatpush.bf16.msra.mxu0 0
  %185 = vmatpush.bf16.msra.mxu0 %v177
  %186 = vmatpush.bf16.msra.mxu0 %v144
  %187 = vmatmul.bf16.gmra.mxu0 %v149
  %v188 = vpop.f32.mrf.mxu0
  %v189 = vadd.f32 0.0, %v188
  %v190 = vpop.f32.mrf.mxu0
  %v191 = vadd.f32 0.0, %v190
  %192 = vmatmul.bf16.gmra.mxu0 %v152
  %v193 = vpop.f32.mrf.mxu0
  %v194 = vadd.f32 0.0, %v193
  %v195 = vpop.f32.mrf.mxu0
  %v196 = vadd.f32 0.0, %v195
  %197 = vmatmul.bf16.gmra.mxu0 %v155
  %v198 = vpop.f32.mrf.mxu0
  %v199 = vadd.f32 0.0, %v198
  %v200 = vpop.f32.mrf.mxu0
  %v201 = vadd.f32 0.0, %v200
  %202 = vmatmul.bf16.gmra.mxu0 %v158
  %v203 = vpop.f32.mrf.mxu0
  %v204 = vadd.f32 0.0, %v203
  %v205 = vpop.f32.mrf.mxu0
  %v206 = vadd.f32 0.0, %v205
  %207 = vmatmul.bf16.gmra.mxu0 %v161
  %v208 = vpop.f32.mrf.mxu0
  %v209 = vadd.f32 0.0, %v208
  %v210 = vpop.f32.mrf.mxu0
  %v211 = vadd.f32 0.0, %v210
  %212 = vmatmul.bf16.gmra.mxu0 %v164
  %v213 = vpop.f32.mrf.mxu0
  %v214 = vadd.f32 0.0, %v213
  %v215 = vpop.f32.mrf.mxu0
  %v216 = vadd.f32 0.0, %v215
  %217 = vmatmul.bf16.gmra.mxu0 %v167
  %v218 = vpop.f32.mrf.mxu0
  %v219 = vadd.f32 0.0, %v218
  %v220 = vpop.f32.mrf.mxu0
  %v221 = vadd.f32 0.0, %v220
  %222 = vmatmul.bf16.gmra.mxu0 %v170
  %v223 = vpop.f32.mrf.mxu0
  %v224 = vadd.f32 0.0, %v223
  %v225 = vpop.f32.mrf.mxu0
  %v226 = vadd.f32 0.0, %v225
  %227 = vmatmul.bf16.gmra.mxu0 %v173
  %v228 = vpop.f32.mrf.mxu0
  %v229 = vadd.f32 0.0, %v228
  %v230 = vpop.f32.mrf.mxu0
  %v231 = vadd.f32 0.0, %v230
  %232 = vdwg.mxu0
  %v233 = vmul.f32 %v189, %v189
  %v234 = vmul.f32 %v191, %v191
  %v235 = vmul.f32 %v194, %v194
  %v236 = vmul.f32 %v196, %v196
  %v237 = vmul.f32 %v199, %v199
  %v238 = vmul.f32 %v201, %v201
  %v239 = vmul.f32 %v204, %v204
  %v240 = vmul.f32 %v206, %v206
  %v241 = vmul.f32 %v209, %v209
  %v242 = vmul.f32 %v211, %v211
  %v243 = vmul.f32 %v214, %v214
  %v244 = vmul.f32 %v216, %v216
  %v245 = vadd.f32 %v233, %v239
  %v246 = vadd.f32 %v234, %v240
  %v247 = vadd.f32 %v235, %v241
  %v248 = vadd.f32 %v236, %v242
  %v249 = vadd.f32 %v237, %v243
  %v250 = vadd.f32 %v238, %v244
  %v251 = vmul.f32 %v219, %v219
  %v252 = vmul.f32 %v221, %v221
  %v253 = vmul.f32 %v224, %v224
  %v254 = vmul.f32 %v226, %v226
  %v255 = vmul.f32 %v229, %v229
  %v256 = vmul.f32 %v231, %v231
  %v257 = vadd.f32 %v245, %v251
  %v258 = vadd.f32 %v246, %v252
  %v259 = vadd.f32 %v247, %v253
  %v260 = vadd.f32 %v248, %v254
  %v261 = vadd.f32 %v249, %v255
  %v262 = vadd.f32 %v250, %v256
  %v263 = vmax.f32 %v257, 1e-08
  %v264 = vmax.f32 %v258, 1e-08
  %v265 = vmax.f32 %v259, 1e-08
  %v266 = vmax.f32 %v260, 1e-08
  %v267 = vmax.f32 %v261, 1e-08
  %v268 = vmax.f32 %v262, 1e-08
  %v269 = vrsqrt.pop %v263
  %v270 = vmul.f32 %v269, %v263
  %v271 = vmul.f32 %v270, %v269
  %v272 = vmul.f32 0.5, %v271
  %v273 = vsub.f32 1.5, %v272
  %v274 = vmul.f32 %v269, %v273
  %v275 = vmul.f32 %v263, %v274
  %vm276 = vcmp.eq.f32.partialorder %v263, inf
  %v277 = vsel %vm276, %v263, %v275
  %vm278 = vcmp.eq.f32.partialorder %v263, 0.0
  %v279 = vand.u32 %v263, 2147483648
  %v280 = vsel %vm278, %v279, %v277
  %v281 = vrsqrt.pop %v264
  %v282 = vmul.f32 %v281, %v264
  %v283 = vmul.f32 %v282, %v281
  %v284 = vmul.f32 0.5, %v283
  %v285 = vsub.f32 1.5, %v284
  %v286 = vmul.f32 %v281, %v285
  %v287 = vmul.f32 %v264, %v286
  %vm288 = vcmp.eq.f32.partialorder %v264, inf
  %v289 = vsel %vm288, %v264, %v287
  %vm290 = vcmp.eq.f32.partialorder %v264, 0.0
  %v291 = vand.u32 %v264, 2147483648
  %v292 = vsel %vm290, %v291, %v289
  %v293 = vrsqrt.pop %v265
  %v294 = vmul.f32 %v293, %v265
  %v295 = vmul.f32 %v294, %v293
  %v296 = vmul.f32 0.5, %v295
  %v297 = vsub.f32 1.5, %v296
  %v298 = vmul.f32 %v293, %v297
  %v299 = vmul.f32 %v265, %v298
  %vm300 = vcmp.eq.f32.partialorder %v265, inf
  %v301 = vsel %vm300, %v265, %v299
  %vm302 = vcmp.eq.f32.partialorder %v265, 0.0
  %v303 = vand.u32 %v265, 2147483648
  %v304 = vsel %vm302, %v303, %v301
  %v305 = vrsqrt.pop %v266
  %v306 = vmul.f32 %v305, %v266
  %v307 = vmul.f32 %v306, %v305
  %v308 = vmul.f32 0.5, %v307
  %v309 = vsub.f32 1.5, %v308
  %v310 = vmul.f32 %v305, %v309
  %v311 = vmul.f32 %v266, %v310
  %vm312 = vcmp.eq.f32.partialorder %v266, inf
  %v313 = vsel %vm312, %v266, %v311
  %vm314 = vcmp.eq.f32.partialorder %v266, 0.0
  %v315 = vand.u32 %v266, 2147483648
  %v316 = vsel %vm314, %v315, %v313
  %v317 = vrsqrt.pop %v267
  %v318 = vmul.f32 %v317, %v267
  %v319 = vmul.f32 %v318, %v317
  %v320 = vmul.f32 0.5, %v319
  %v321 = vsub.f32 1.5, %v320
  %v322 = vmul.f32 %v317, %v321
  %v323 = vmul.f32 %v267, %v322
  %vm324 = vcmp.eq.f32.partialorder %v267, inf
  %v325 = vsel %vm324, %v267, %v323
  %vm326 = vcmp.eq.f32.partialorder %v267, 0.0
  %v327 = vand.u32 %v267, 2147483648
  %v328 = vsel %vm326, %v327, %v325
  %v329 = vrsqrt.pop %v268
  %v330 = vmul.f32 %v329, %v268
  %v331 = vmul.f32 %v330, %v329
  %v332 = vmul.f32 0.5, %v331
  %v333 = vsub.f32 1.5, %v332
  %v334 = vmul.f32 %v329, %v333
  %v335 = vmul.f32 %v268, %v334
  %vm336 = vcmp.eq.f32.partialorder %v268, inf
  %v337 = vsel %vm336, %v268, %v335
  %vm338 = vcmp.eq.f32.partialorder %v268, 0.0
  %v339 = vand.u32 %v268, 2147483648
  %v340 = vsel %vm338, %v339, %v337
  %v341 = vpack.c.bf16 %v106, %v105
  %v342 = vpack.c.bf16 %v108, %v107
  %v343 = vpack.c.bf16 %v110, %v109
  %v344 = vpack.c.bf16 %v292, %v280
  %v345 = vpack.c.bf16 %v316, %v304
  %v346 = vpack.c.bf16 %v340, %v328
  %v350 = vunpack.c.l.b16 %v82
  %v351 = vunpack.c.l.b16 %v83
  %v352 = vunpack.c.l.b16 %v84
  %v353 = vpack.c.b16 %v351, %v350
  %v354 = vpack.c.b16 %v352, %v352
  %v357 = vsel %vm147, %v344, 0
  %v360 = vsel %vm147, %v345, 0
  %v363 = vsel %vm147, %v346, 0
  %v366 = vsel %vm175, %v354, 0
  %368 = vmatpush.bf16.msra.mxu0 0
  %369 = vmatpush.bf16.msra.mxu0 0
  %370 = vmatpush.bf16.msra.mxu0 0
  %371 = vmatpush.bf16.msra.mxu0 0
  %372 = vmatpush.bf16.msra.mxu0 0
  %373 = vmatpush.bf16.msra.mxu0 0
  %374 = vmatpush.bf16.msra.mxu0 %v366
  %375 = vmatpush.bf16.msra.mxu0 %v353
  %376 = vmatmul.bf16.gmra.mxu0 %v357
  %v377 = vpop.f32.mrf.mxu0
  %v378 = vadd.f32 0.0, %v377
  %v379 = vpop.f32.mrf.mxu0
  %v380 = vadd.f32 0.0, %v379
  %381 = vmatmul.bf16.gmra.mxu0 %v360
  %v382 = vpop.f32.mrf.mxu0
  %v383 = vadd.f32 0.0, %v382
  %v384 = vpop.f32.mrf.mxu0
  %v385 = vadd.f32 0.0, %v384
  %386 = vmatmul.bf16.gmra.mxu0 %v363
  %v387 = vpop.f32.mrf.mxu0
  %v388 = vadd.f32 0.0, %v387
  %v389 = vpop.f32.mrf.mxu0
  %v390 = vadd.f32 0.0, %v389
  %391 = vdwg.mxu0
  %v404 = vunpack.c.l.b16 %v70
  %v405 = vunpack.c.l.b16 %v71
  %v406 = vunpack.c.l.b16 %v72
  %v407 = vunpack.c.l.b16 %v73
  %v408 = vunpack.c.l.b16 %v74
  %v409 = vunpack.c.l.b16 %v75
  %v410 = vunpack.c.l.b16 %v76
  %v411 = vunpack.c.l.b16 %v77
  %v412 = vunpack.c.l.b16 %v78
  %v413 = vunpack.c.l.b16 %v79
  %v414 = vunpack.c.l.b16 %v80
  %v415 = vunpack.c.l.b16 %v81
  %v416 = vpack.c.b16 %v405, %v404
  %v417 = vpack.c.b16 %v407, %v406
  %v418 = vpack.c.b16 %v409, %v408
  %v419 = vpack.c.b16 %v411, %v410
  %v420 = vpack.c.b16 %v413, %v412
  %v421 = vpack.c.b16 %v415, %v414
  %vm428 = vcmask 785408
  %v430 = vsel %vm428, %v341, 0
  %v433 = vsel %vm428, %v342, 0
  %v436 = vsel %vm428, %v343, 0
  %438 = vmatpush.bf16.msra.mxu0 0
  %439 = vmatpush.bf16.msra.mxu0 0
  %440 = vmatpush.bf16.msra.mxu0 %v421
  %441 = vmatpush.bf16.msra.mxu0 %v420
  %442 = vmatpush.bf16.msra.mxu0 %v419
  %443 = vmatpush.bf16.msra.mxu0 %v418
  %444 = vmatpush.bf16.msra.mxu0 %v417
  %445 = vmatpush.bf16.msra.mxu0 %v416
  %446 = vmatmul.bf16.gmra.mxu0 %v430
  %v447 = vpop.f32.mrf.mxu0
  %v448 = vadd.f32 %v378, %v447
  %v449 = vpop.f32.mrf.mxu0
  %v450 = vadd.f32 %v380, %v449
  %451 = vmatmul.bf16.gmra.mxu0 %v433
  %v452 = vpop.f32.mrf.mxu0
  %v453 = vadd.f32 %v383, %v452
  %v454 = vpop.f32.mrf.mxu0
  %v455 = vadd.f32 %v385, %v454
  %456 = vmatmul.bf16.gmra.mxu0 %v436
  %v457 = vpop.f32.mrf.mxu0
  %v458 = vadd.f32 %v388, %v457
  %v459 = vpop.f32.mrf.mxu0
  %v460 = vadd.f32 %v390, %v459
  %461 = vdwg.mxu0
  %v463 = vperm.slane %v85, 0
  %v465 = vadd.f32 %v448, %v463
  %v466 = vadd.f32 %v450, %v463
  %v467 = vadd.f32 %v453, %v463
  %v468 = vadd.f32 %v455, %v463
  %v469 = vadd.f32 %v458, %v463
  %v470 = vadd.f32 %v460, %v463
  %v471 = vmax.f32 %v465, 0.0
  %v472 = vmax.f32 %v466, 0.0
  %v473 = vmax.f32 %v467, 0.0
  %v474 = vmax.f32 %v468, 0.0
  %v475 = vmax.f32 %v469, 0.0
  %v476 = vmax.f32 %v470, 0.0
  %v477 = vpack.c.bf16 %v191, %v189
  %v478 = vpack.c.bf16 %v196, %v194
  %v479 = vpack.c.bf16 %v201, %v199
  %v480 = vpack.c.bf16 %v206, %v204
  %v481 = vpack.c.bf16 %v211, %v209
  %v482 = vpack.c.bf16 %v216, %v214
  %v483 = vpack.c.bf16 %v221, %v219
  %v484 = vpack.c.bf16 %v226, %v224
  %v485 = vpack.c.bf16 %v231, %v229
  %v489 = vunpack.c.l.b16 %v86
  %v490 = vunpack.c.l.b16 %v87
  %v491 = vunpack.c.l.b16 %v88
  %v492 = vpack.c.b16 %v490, %v489
  %v493 = vpack.c.b16 %v491, %v491
  %v496 = vsel %vm147, %v477, 0
  %v499 = vsel %vm147, %v478, 0
  %v502 = vsel %vm147, %v479, 0
  %v505 = vsel %vm147, %v480, 0
  %v508 = vsel %vm147, %v481, 0
  %v511 = vsel %vm147, %v482, 0
  %v514 = vsel %vm147, %v483, 0
  %v517 = vsel %vm147, %v484, 0
  %v520 = vsel %vm147, %v485, 0
  %v523 = vsel %vm175, %v493, 0
  %525 = vmatpush.bf16.msra.mxu0 0
  %526 = vmatpush.bf16.msra.mxu0 0
  %527 = vmatpush.bf16.msra.mxu0 0
  %528 = vmatpush.bf16.msra.mxu0 0
  %529 = vmatpush.bf16.msra.mxu0 0
  %530 = vmatpush.bf16.msra.mxu0 0
  %531 = vmatpush.bf16.msra.mxu0 %v523
  %532 = vmatpush.bf16.msra.mxu0 %v492
  %533 = vmatmul.bf16.gmra.mxu0 %v496
  %v534 = vpop.f32.mrf.mxu0
  %v535 = vadd.f32 0.0, %v534
  %v536 = vpop.f32.mrf.mxu0
  %v537 = vadd.f32 0.0, %v536
  %538 = vmatmul.bf16.gmra.mxu0 %v499
  %v539 = vpop.f32.mrf.mxu0
  %v540 = vadd.f32 0.0, %v539
  %v541 = vpop.f32.mrf.mxu0
  %v542 = vadd.f32 0.0, %v541
  %543 = vmatmul.bf16.gmra.mxu0 %v502
  %v544 = vpop.f32.mrf.mxu0
  %v545 = vadd.f32 0.0, %v544
  %v546 = vpop.f32.mrf.mxu0
  %v547 = vadd.f32 0.0, %v546
  %548 = vmatmul.bf16.gmra.mxu0 %v505
  %v549 = vpop.f32.mrf.mxu0
  %v550 = vadd.f32 0.0, %v549
  %v551 = vpop.f32.mrf.mxu0
  %v552 = vadd.f32 0.0, %v551
  %553 = vmatmul.bf16.gmra.mxu0 %v508
  %v554 = vpop.f32.mrf.mxu0
  %v555 = vadd.f32 0.0, %v554
  %v556 = vpop.f32.mrf.mxu0
  %v557 = vadd.f32 0.0, %v556
  %558 = vmatmul.bf16.gmra.mxu0 %v511
  %v559 = vpop.f32.mrf.mxu0
  %v560 = vadd.f32 0.0, %v559
  %v561 = vpop.f32.mrf.mxu0
  %v562 = vadd.f32 0.0, %v561
  %563 = vmatmul.bf16.gmra.mxu0 %v514
  %v564 = vpop.f32.mrf.mxu0
  %v565 = vadd.f32 0.0, %v564
  %v566 = vpop.f32.mrf.mxu0
  %v567 = vadd.f32 0.0, %v566
  %568 = vmatmul.bf16.gmra.mxu0 %v517
  %v569 = vpop.f32.mrf.mxu0
  %v570 = vadd.f32 0.0, %v569
  %v571 = vpop.f32.mrf.mxu0
  %v572 = vadd.f32 0.0, %v571
  %573 = vmatmul.bf16.gmra.mxu0 %v520
  %v574 = vpop.f32.mrf.mxu0
  %v575 = vadd.f32 0.0, %v574
  %v576 = vpop.f32.mrf.mxu0
  %v577 = vadd.f32 0.0, %v576
  %578 = vdwg.mxu0
  %v579 = vmul.f32 %v535, %v535
  %v580 = vmul.f32 %v537, %v537
  %v581 = vmul.f32 %v540, %v540
  %v582 = vmul.f32 %v542, %v542
  %v583 = vmul.f32 %v545, %v545
  %v584 = vmul.f32 %v547, %v547
  %v585 = vmul.f32 %v550, %v550
  %v586 = vmul.f32 %v552, %v552
  %v587 = vmul.f32 %v555, %v555
  %v588 = vmul.f32 %v557, %v557
  %v589 = vmul.f32 %v560, %v560
  %v590 = vmul.f32 %v562, %v562
  %v591 = vadd.f32 %v579, %v585
  %v592 = vadd.f32 %v580, %v586
  %v593 = vadd.f32 %v581, %v587
  %v594 = vadd.f32 %v582, %v588
  %v595 = vadd.f32 %v583, %v589
  %v596 = vadd.f32 %v584, %v590
  %v597 = vmul.f32 %v565, %v565
  %v598 = vmul.f32 %v567, %v567
  %v599 = vmul.f32 %v570, %v570
  %v600 = vmul.f32 %v572, %v572
  %v601 = vmul.f32 %v575, %v575
  %v602 = vmul.f32 %v577, %v577
  %v603 = vadd.f32 %v591, %v597
  %v604 = vadd.f32 %v592, %v598
  %v605 = vadd.f32 %v593, %v599
  %v606 = vadd.f32 %v594, %v600
  %v607 = vadd.f32 %v595, %v601
  %v608 = vadd.f32 %v596, %v602
  %v609 = vmax.f32 %v603, 1e-08
  %v610 = vmax.f32 %v604, 1e-08
  %v611 = vmax.f32 %v605, 1e-08
  %v612 = vmax.f32 %v606, 1e-08
  %v613 = vmax.f32 %v607, 1e-08
  %v614 = vmax.f32 %v608, 1e-08
  %v615 = vrsqrt.pop %v609
  %v616 = vmul.f32 %v615, %v609
  %v617 = vmul.f32 %v616, %v615
  %v618 = vmul.f32 0.5, %v617
  %v619 = vsub.f32 1.5, %v618
  %v620 = vmul.f32 %v615, %v619
  %v621 = vmul.f32 %v609, %v620
  %vm622 = vcmp.eq.f32.partialorder %v609, inf
  %v623 = vsel %vm622, %v609, %v621
  %vm624 = vcmp.eq.f32.partialorder %v609, 0.0
  %v625 = vand.u32 %v609, 2147483648
  %v626 = vsel %vm624, %v625, %v623
  %v627 = vrsqrt.pop %v610
  %v628 = vmul.f32 %v627, %v610
  %v629 = vmul.f32 %v628, %v627
  %v630 = vmul.f32 0.5, %v629
  %v631 = vsub.f32 1.5, %v630
  %v632 = vmul.f32 %v627, %v631
  %v633 = vmul.f32 %v610, %v632
  %vm634 = vcmp.eq.f32.partialorder %v610, inf
  %v635 = vsel %vm634, %v610, %v633
  %vm636 = vcmp.eq.f32.partialorder %v610, 0.0
  %v637 = vand.u32 %v610, 2147483648
  %v638 = vsel %vm636, %v637, %v635
  %v639 = vrsqrt.pop %v611
  %v640 = vmul.f32 %v639, %v611
  %v641 = vmul.f32 %v640, %v639
  %v642 = vmul.f32 0.5, %v641
  %v643 = vsub.f32 1.5, %v642
  %v644 = vmul.f32 %v639, %v643
  %v645 = vmul.f32 %v611, %v644
  %vm646 = vcmp.eq.f32.partialorder %v611, inf
  %v647 = vsel %vm646, %v611, %v645
  %vm648 = vcmp.eq.f32.partialorder %v611, 0.0
  %v649 = vand.u32 %v611, 2147483648
  %v650 = vsel %vm648, %v649, %v647
  %v651 = vrsqrt.pop %v612
  %v652 = vmul.f32 %v651, %v612
  %v653 = vmul.f32 %v652, %v651
  %v654 = vmul.f32 0.5, %v653
  %v655 = vsub.f32 1.5, %v654
  %v656 = vmul.f32 %v651, %v655
  %v657 = vmul.f32 %v612, %v656
  %vm658 = vcmp.eq.f32.partialorder %v612, inf
  %v659 = vsel %vm658, %v612, %v657
  %vm660 = vcmp.eq.f32.partialorder %v612, 0.0
  %v661 = vand.u32 %v612, 2147483648
  %v662 = vsel %vm660, %v661, %v659
  %v663 = vrsqrt.pop %v613
  %v664 = vmul.f32 %v663, %v613
  %v665 = vmul.f32 %v664, %v663
  %v666 = vmul.f32 0.5, %v665
  %v667 = vsub.f32 1.5, %v666
  %v668 = vmul.f32 %v663, %v667
  %v669 = vmul.f32 %v613, %v668
  %vm670 = vcmp.eq.f32.partialorder %v613, inf
  %v671 = vsel %vm670, %v613, %v669
  %vm672 = vcmp.eq.f32.partialorder %v613, 0.0
  %v673 = vand.u32 %v613, 2147483648
  %v674 = vsel %vm672, %v673, %v671
  %v675 = vrsqrt.pop %v614
  %v676 = vmul.f32 %v675, %v614
  %v677 = vmul.f32 %v676, %v675
  %v678 = vmul.f32 0.5, %v677
  %v679 = vsub.f32 1.5, %v678
  %v680 = vmul.f32 %v675, %v679
  %v681 = vmul.f32 %v614, %v680
  %vm682 = vcmp.eq.f32.partialorder %v614, inf
  %v683 = vsel %vm682, %v614, %v681
  %vm684 = vcmp.eq.f32.partialorder %v614, 0.0
  %v685 = vand.u32 %v614, 2147483648
  %v686 = vsel %vm684, %v685, %v683
  %v687 = vxor.u32 %v626, 2147483648
  %v688 = vxor.u32 %v638, 2147483648
  %v689 = vxor.u32 %v650, 2147483648
  %v690 = vxor.u32 %v662, 2147483648
  %v691 = vxor.u32 %v674, 2147483648
  %v692 = vxor.u32 %v686, 2147483648
  %v693 = vmul.f32 %v687, 1.442695
  %v694 = vpow.pop %v693
  %v695 = vmul.f32 %v688, 1.442695
  %v696 = vpow.pop %v695
  %v697 = vmul.f32 %v689, 1.442695
  %v698 = vpow.pop %v697
  %v699 = vmul.f32 %v690, 1.442695
  %v700 = vpow.pop %v699
  %v701 = vmul.f32 %v691, 1.442695
  %v702 = vpow.pop %v701
  %v703 = vmul.f32 %v692, 1.442695
  %v704 = vpow.pop %v703
  %v705 = vadd.f32 %v694, 1.0
  %v706 = vadd.f32 %v696, 1.0
  %v707 = vadd.f32 %v698, 1.0
  %v708 = vadd.f32 %v700, 1.0
  %v709 = vadd.f32 %v702, 1.0
  %v710 = vadd.f32 %v704, 1.0
  %v711 = vrcp.pop %v705
  %v712 = vmul.f32 %v705, %v711
  %v713 = vsub.f32 1.0, %v712
  %v714 = vmul.f32 %v711, %v713
  %v715 = vadd.f32 %v711, %v714
  %vm716 = vweird.f32 %v705
  %vm717 = vweird.f32 %v711
  %vm718 = vmor %vm716, %vm717
  %v719 = vsel %vm718, %v711, %v715
  %v720 = vand.u32 2147483647, %v705
  %vm721 = vcmp.eq.f32.partialorder %v720, 8.507059e+37
  %v722 = vand.u32 %v705, 2147483648
  %v723 = vor.u32 1.1754944e-38, %v722
  %v724 = vsel %vm721, %v723, %v719
  %v725 = vmul.f32 1.0, %v724
  %v726 = vrcp.pop %v706
  %v727 = vmul.f32 %v706, %v726
  %v728 = vsub.f32 1.0, %v727
  %v729 = vmul.f32 %v726, %v728
  %v730 = vadd.f32 %v726, %v729
  %vm731 = vweird.f32 %v706
  %vm732 = vweird.f32 %v726
  %vm733 = vmor %vm731, %vm732
  %v734 = vsel %vm733, %v726, %v730
  %v735 = vand.u32 2147483647, %v706
  %vm736 = vcmp.eq.f32.partialorder %v735, 8.507059e+37
  %v737 = vand.u32 %v706, 2147483648
  %v738 = vor.u32 1.1754944e-38, %v737
  %v739 = vsel %vm736, %v738, %v734
  %v740 = vmul.f32 1.0, %v739
  %v741 = vrcp.pop %v707
  %v742 = vmul.f32 %v707, %v741
  %v743 = vsub.f32 1.0, %v742
  %v744 = vmul.f32 %v741, %v743
  %v745 = vadd.f32 %v741, %v744
  %vm746 = vweird.f32 %v707
  %vm747 = vweird.f32 %v741
  %vm748 = vmor %vm746, %vm747
  %v749 = vsel %vm748, %v741, %v745
  %v750 = vand.u32 2147483647, %v707
  %vm751 = vcmp.eq.f32.partialorder %v750, 8.507059e+37
  %v752 = vand.u32 %v707, 2147483648
  %v753 = vor.u32 1.1754944e-38, %v752
  %v754 = vsel %vm751, %v753, %v749
  %v755 = vmul.f32 1.0, %v754
  %v756 = vrcp.pop %v708
  %v757 = vmul.f32 %v708, %v756
  %v758 = vsub.f32 1.0, %v757
  %v759 = vmul.f32 %v756, %v758
  %v760 = vadd.f32 %v756, %v759
  %vm761 = vweird.f32 %v708
  %vm762 = vweird.f32 %v756
  %vm763 = vmor %vm761, %vm762
  %v764 = vsel %vm763, %v756, %v760
  %v765 = vand.u32 2147483647, %v708
  %vm766 = vcmp.eq.f32.partialorder %v765, 8.507059e+37
  %v767 = vand.u32 %v708, 2147483648
  %v768 = vor.u32 1.1754944e-38, %v767
  %v769 = vsel %vm766, %v768, %v764
  %v770 = vmul.f32 1.0, %v769
  %v771 = vrcp.pop %v709
  %v772 = vmul.f32 %v709, %v771
  %v773 = vsub.f32 1.0, %v772
  %v774 = vmul.f32 %v771, %v773
  %v775 = vadd.f32 %v771, %v774
  %vm776 = vweird.f32 %v709
  %vm777 = vweird.f32 %v771
  %vm778 = vmor %vm776, %vm777
  %v779 = vsel %vm778, %v771, %v775
  %v780 = vand.u32 2147483647, %v709
  %vm781 = vcmp.eq.f32.partialorder %v780, 8.507059e+37
  %v782 = vand.u32 %v709, 2147483648
  %v783 = vor.u32 1.1754944e-38, %v782
  %v784 = vsel %vm781, %v783, %v779
  %v785 = vmul.f32 1.0, %v784
  %v786 = vrcp.pop %v710
  %v787 = vmul.f32 %v710, %v786
  %v788 = vsub.f32 1.0, %v787
  %v789 = vmul.f32 %v786, %v788
  %v790 = vadd.f32 %v786, %v789
  %vm791 = vweird.f32 %v710
  %vm792 = vweird.f32 %v786
  %vm793 = vmor %vm791, %vm792
  %v794 = vsel %vm793, %v786, %v790
  %v795 = vand.u32 2147483647, %v710
  %vm796 = vcmp.eq.f32.partialorder %v795, 8.507059e+37
  %v797 = vand.u32 %v710, 2147483648
  %v798 = vor.u32 1.1754944e-38, %v797
  %v799 = vsel %vm796, %v798, %v794
  %v800 = vmul.f32 1.0, %v799
  %v801 = vmul.f32 %v535, %v725
  %v802 = vmul.f32 %v537, %v740
  %v803 = vmul.f32 %v540, %v755
  %v804 = vmul.f32 %v542, %v770
  %v805 = vmul.f32 %v545, %v785
  %v806 = vmul.f32 %v547, %v800
  %v807 = vmul.f32 %v550, %v725
  %v808 = vmul.f32 %v552, %v740
  %v809 = vmul.f32 %v555, %v755
  %v810 = vmul.f32 %v557, %v770
  %v811 = vmul.f32 %v560, %v785
  %v812 = vmul.f32 %v562, %v800
  %v813 = vmul.f32 %v565, %v725
  %v814 = vmul.f32 %v567, %v740
  %v815 = vmul.f32 %v570, %v755
  %v816 = vmul.f32 %v572, %v770
  %v817 = vmul.f32 %v575, %v785
  %v818 = vmul.f32 %v577, %v800
  %v819 = vpack.c.bf16 %v802, %v801
  %v820 = vpack.c.bf16 %v804, %v803
  %v821 = vpack.c.bf16 %v806, %v805
  %v822 = vpack.c.bf16 %v808, %v807
  %v823 = vpack.c.bf16 %v810, %v809
  %v824 = vpack.c.bf16 %v812, %v811
  %v825 = vpack.c.bf16 %v814, %v813
  %v826 = vpack.c.bf16 %v816, %v815
  %v827 = vpack.c.bf16 %v818, %v817
  %vm828 = vcmask 64512
  %v830 = vsel %vm828, %v819, 0
  %v833 = vsel %vm828, %v820, 0
  %v836 = vsel %vm828, %v821, 0
  %v839 = vsel %vm828, %v822, 0
  %v842 = vsel %vm828, %v823, 0
  %v845 = vsel %vm828, %v824, 0
  %v848 = vsel %vm828, %v825, 0
  %v851 = vsel %vm828, %v826, 0
  %v854 = vsel %vm828, %v827, 0
  %vm856 = vcmask 1043456
  %v858 = vsel %vm856, %v89, 0
  %860 = vmatpush.bf16.msra.mxu0 0
  %861 = vmatpush.bf16.msra.mxu0 0
  %862 = vmatpush.bf16.msra.mxu0 0
  %863 = vmatpush.bf16.msra.mxu0 0
  %864 = vmatpush.bf16.msra.mxu0 0
  %865 = vmatpush.bf16.msra.mxu0 0
  %866 = vmatpush.bf16.msra.mxu0 0
  %867 = vmatpush.bf16.msra.mxu0 %v858
  %868 = vmatmul.bf16.gmra.mxu0 %v830
  %v869 = vpop.f32.mrf.mxu0
  %v870 = vadd.f32 0.0, %v869
  %v871 = vpop.f32.mrf.mxu0
  %v872 = vadd.f32 0.0, %v871
  %873 = vmatmul.bf16.gmra.mxu0 %v833
  %v874 = vpop.f32.mrf.mxu0
  %v875 = vadd.f32 0.0, %v874
  %v876 = vpop.f32.mrf.mxu0
  %v877 = vadd.f32 0.0, %v876
  %878 = vmatmul.bf16.gmra.mxu0 %v836
  %v879 = vpop.f32.mrf.mxu0
  %v880 = vadd.f32 0.0, %v879
  %v881 = vpop.f32.mrf.mxu0
  %v882 = vadd.f32 0.0, %v881
  %883 = vmatmul.bf16.gmra.mxu0 %v839
  %v884 = vpop.f32.mrf.mxu0
  %v885 = vadd.f32 0.0, %v884
  %v886 = vpop.f32.mrf.mxu0
  %v887 = vadd.f32 0.0, %v886
  %888 = vmatmul.bf16.gmra.mxu0 %v842
  %v889 = vpop.f32.mrf.mxu0
  %v890 = vadd.f32 0.0, %v889
  %v891 = vpop.f32.mrf.mxu0
  %v892 = vadd.f32 0.0, %v891
  %893 = vmatmul.bf16.gmra.mxu0 %v845
  %v894 = vpop.f32.mrf.mxu0
  %v895 = vadd.f32 0.0, %v894
  %v896 = vpop.f32.mrf.mxu0
  %v897 = vadd.f32 0.0, %v896
  %898 = vmatmul.bf16.gmra.mxu0 %v848
  %v899 = vpop.f32.mrf.mxu0
  %v900 = vadd.f32 0.0, %v899
  %v901 = vpop.f32.mrf.mxu0
  %v902 = vadd.f32 0.0, %v901
  %903 = vmatmul.bf16.gmra.mxu0 %v851
  %v904 = vpop.f32.mrf.mxu0
  %v905 = vadd.f32 0.0, %v904
  %v906 = vpop.f32.mrf.mxu0
  %v907 = vadd.f32 0.0, %v906
  %908 = vmatmul.bf16.gmra.mxu0 %v854
  %v909 = vpop.f32.mrf.mxu0
  %v910 = vadd.f32 0.0, %v909
  %v911 = vpop.f32.mrf.mxu0
  %v912 = vadd.f32 0.0, %v911
  %913 = vdwg.mxu0
  %v914 = vmul.f32 %v870, %v870
  %v915 = vmul.f32 %v872, %v872
  %v916 = vmul.f32 %v875, %v875
  %v917 = vmul.f32 %v877, %v877
  %v918 = vmul.f32 %v880, %v880
  %v919 = vmul.f32 %v882, %v882
  %v920 = vmul.f32 %v885, %v885
  %v921 = vmul.f32 %v887, %v887
  %v922 = vmul.f32 %v890, %v890
  %v923 = vmul.f32 %v892, %v892
  %v924 = vmul.f32 %v895, %v895
  %v925 = vmul.f32 %v897, %v897
  %v926 = vadd.f32 %v914, %v920
  %v927 = vadd.f32 %v915, %v921
  %v928 = vadd.f32 %v916, %v922
  %v929 = vadd.f32 %v917, %v923
  %v930 = vadd.f32 %v918, %v924
  %v931 = vadd.f32 %v919, %v925
  %v932 = vmul.f32 %v900, %v900
  %v933 = vmul.f32 %v902, %v902
  %v934 = vmul.f32 %v905, %v905
  %v935 = vmul.f32 %v907, %v907
  %v936 = vmul.f32 %v910, %v910
  %v937 = vmul.f32 %v912, %v912
  %v938 = vadd.f32 %v926, %v932
  %v939 = vadd.f32 %v927, %v933
  %v940 = vadd.f32 %v928, %v934
  %v941 = vadd.f32 %v929, %v935
  %v942 = vadd.f32 %v930, %v936
  %v943 = vadd.f32 %v931, %v937
  %v944 = vmax.f32 %v938, 1e-08
  %v945 = vmax.f32 %v939, 1e-08
  %v946 = vmax.f32 %v940, 1e-08
  %v947 = vmax.f32 %v941, 1e-08
  %v948 = vmax.f32 %v942, 1e-08
  %v949 = vmax.f32 %v943, 1e-08
  %v950 = vrsqrt.pop %v944
  %v951 = vmul.f32 %v950, %v944
  %v952 = vmul.f32 %v951, %v950
  %v953 = vmul.f32 0.5, %v952
  %v954 = vsub.f32 1.5, %v953
  %v955 = vmul.f32 %v950, %v954
  %v956 = vmul.f32 %v944, %v955
  %vm957 = vcmp.eq.f32.partialorder %v944, inf
  %v958 = vsel %vm957, %v944, %v956
  %vm959 = vcmp.eq.f32.partialorder %v944, 0.0
  %v960 = vand.u32 %v944, 2147483648
  %v961 = vsel %vm959, %v960, %v958
  %v962 = vrsqrt.pop %v945
  %v963 = vmul.f32 %v962, %v945
  %v964 = vmul.f32 %v963, %v962
  %v965 = vmul.f32 0.5, %v964
  %v966 = vsub.f32 1.5, %v965
  %v967 = vmul.f32 %v962, %v966
  %v968 = vmul.f32 %v945, %v967
  %vm969 = vcmp.eq.f32.partialorder %v945, inf
  %v970 = vsel %vm969, %v945, %v968
  %vm971 = vcmp.eq.f32.partialorder %v945, 0.0
  %v972 = vand.u32 %v945, 2147483648
  %v973 = vsel %vm971, %v972, %v970
  %v974 = vrsqrt.pop %v946
  %v975 = vmul.f32 %v974, %v946
  %v976 = vmul.f32 %v975, %v974
  %v977 = vmul.f32 0.5, %v976
  %v978 = vsub.f32 1.5, %v977
  %v979 = vmul.f32 %v974, %v978
  %v980 = vmul.f32 %v946, %v979
  %vm981 = vcmp.eq.f32.partialorder %v946, inf
  %v982 = vsel %vm981, %v946, %v980
  %vm983 = vcmp.eq.f32.partialorder %v946, 0.0
  %v984 = vand.u32 %v946, 2147483648
  %v985 = vsel %vm983, %v984, %v982
  %v986 = vrsqrt.pop %v947
  %v987 = vmul.f32 %v986, %v947
  %v988 = vmul.f32 %v987, %v986
  %v989 = vmul.f32 0.5, %v988
  %v990 = vsub.f32 1.5, %v989
  %v991 = vmul.f32 %v986, %v990
  %v992 = vmul.f32 %v947, %v991
  %vm993 = vcmp.eq.f32.partialorder %v947, inf
  %v994 = vsel %vm993, %v947, %v992
  %vm995 = vcmp.eq.f32.partialorder %v947, 0.0
  %v996 = vand.u32 %v947, 2147483648
  %v997 = vsel %vm995, %v996, %v994
  %v998 = vrsqrt.pop %v948
  %v999 = vmul.f32 %v998, %v948
  %v1000 = vmul.f32 %v999, %v998
  %v1001 = vmul.f32 0.5, %v1000
  %v1002 = vsub.f32 1.5, %v1001
  %v1003 = vmul.f32 %v998, %v1002
  %v1004 = vmul.f32 %v948, %v1003
  %vm1005 = vcmp.eq.f32.partialorder %v948, inf
  %v1006 = vsel %vm1005, %v948, %v1004
  %vm1007 = vcmp.eq.f32.partialorder %v948, 0.0
  %v1008 = vand.u32 %v948, 2147483648
  %v1009 = vsel %vm1007, %v1008, %v1006
  %v1010 = vrsqrt.pop %v949
  %v1011 = vmul.f32 %v1010, %v949
  %v1012 = vmul.f32 %v1011, %v1010
  %v1013 = vmul.f32 0.5, %v1012
  %v1014 = vsub.f32 1.5, %v1013
  %v1015 = vmul.f32 %v1010, %v1014
  %v1016 = vmul.f32 %v949, %v1015
  %vm1017 = vcmp.eq.f32.partialorder %v949, inf
  %v1018 = vsel %vm1017, %v949, %v1016
  %vm1019 = vcmp.eq.f32.partialorder %v949, 0.0
  %v1020 = vand.u32 %v949, 2147483648
  %v1021 = vsel %vm1019, %v1020, %v1018
  %v1022 = vpack.c.bf16 %v472, %v471
  %v1023 = vpack.c.bf16 %v474, %v473
  %v1024 = vpack.c.bf16 %v476, %v475
  %v1025 = vpack.c.bf16 %v973, %v961
  %v1026 = vpack.c.bf16 %v997, %v985
  %v1027 = vpack.c.bf16 %v1021, %v1009
  %v1029 = vsel %vm828, %v1025, 0
  %v1032 = vsel %vm828, %v1026, 0
  %v1035 = vsel %vm828, %v1027, 0
  %v1038 = vsel %vm856, %v94, 0
  %1040 = vmatpush.bf16.msra.mxu0 0
  %1041 = vmatpush.bf16.msra.mxu0 0
  %1042 = vmatpush.bf16.msra.mxu0 0
  %1043 = vmatpush.bf16.msra.mxu0 0
  %1044 = vmatpush.bf16.msra.mxu0 0
  %1045 = vmatpush.bf16.msra.mxu0 0
  %1046 = vmatpush.bf16.msra.mxu0 0
  %1047 = vmatpush.bf16.msra.mxu0 %v1038
  %1048 = vmatmul.bf16.gmra.mxu0 %v1029
  %v1049 = vpop.f32.mrf.mxu0
  %v1050 = vadd.f32 0.0, %v1049
  %v1051 = vpop.f32.mrf.mxu0
  %v1052 = vadd.f32 0.0, %v1051
  %1053 = vmatmul.bf16.gmra.mxu0 %v1032
  %v1054 = vpop.f32.mrf.mxu0
  %v1055 = vadd.f32 0.0, %v1054
  %v1056 = vpop.f32.mrf.mxu0
  %v1057 = vadd.f32 0.0, %v1056
  %1058 = vmatmul.bf16.gmra.mxu0 %v1035
  %v1059 = vpop.f32.mrf.mxu0
  %v1060 = vadd.f32 0.0, %v1059
  %v1061 = vpop.f32.mrf.mxu0
  %v1062 = vadd.f32 0.0, %v1061
  %1063 = vdwg.mxu0
  %v1068 = vunpack.c.l.b16 %v90
  %v1069 = vunpack.c.l.b16 %v91
  %v1070 = vunpack.c.l.b16 %v92
  %v1071 = vunpack.c.l.b16 %v93
  %v1072 = vpack.c.b16 %v1069, %v1068
  %v1073 = vpack.c.b16 %v1071, %v1070
  %vm1076 = vcmask 261120
  %v1078 = vsel %vm1076, %v1022, 0
  %v1081 = vsel %vm1076, %v1023, 0
  %v1084 = vsel %vm1076, %v1024, 0
  %1086 = vmatpush.bf16.msra.mxu0 0
  %1087 = vmatpush.bf16.msra.mxu0 0
  %1088 = vmatpush.bf16.msra.mxu0 0
  %1089 = vmatpush.bf16.msra.mxu0 0
  %1090 = vmatpush.bf16.msra.mxu0 0
  %1091 = vmatpush.bf16.msra.mxu0 0
  %1092 = vmatpush.bf16.msra.mxu0 %v1073
  %1093 = vmatpush.bf16.msra.mxu0 %v1072
  %1094 = vmatmul.bf16.gmra.mxu0 %v1078
  %v1095 = vpop.f32.mrf.mxu0
  %v1096 = vadd.f32 %v1050, %v1095
  %v1097 = vpop.f32.mrf.mxu0
  %v1098 = vadd.f32 %v1052, %v1097
  %1099 = vmatmul.bf16.gmra.mxu0 %v1081
  %v1100 = vpop.f32.mrf.mxu0
  %v1101 = vadd.f32 %v1055, %v1100
  %v1102 = vpop.f32.mrf.mxu0
  %v1103 = vadd.f32 %v1057, %v1102
  %1104 = vmatmul.bf16.gmra.mxu0 %v1084
  %v1105 = vpop.f32.mrf.mxu0
  %v1106 = vadd.f32 %v1060, %v1105
  %v1107 = vpop.f32.mrf.mxu0
  %v1108 = vadd.f32 %v1062, %v1107
  %1109 = vdwg.mxu0
  %v1111 = vperm.slane %v95, 0
  %v1113 = vadd.f32 %v1096, %v1111
  %v1114 = vadd.f32 %v1098, %v1111
  %v1115 = vadd.f32 %v1101, %v1111
  %v1116 = vadd.f32 %v1103, %v1111
  %v1117 = vadd.f32 %v1106, %v1111
  %v1118 = vadd.f32 %v1108, %v1111
  %v1119 = vmax.f32 %v1113, 0.0
  %v1120 = vmax.f32 %v1114, 0.0
  %v1121 = vmax.f32 %v1115, 0.0
  %v1122 = vmax.f32 %v1116, 0.0
  %v1123 = vmax.f32 %v1117, 0.0
  %v1124 = vmax.f32 %v1118, 0.0
  %v1125 = vpack.c.bf16 %v872, %v870
  %v1126 = vpack.c.bf16 %v877, %v875
  %v1127 = vpack.c.bf16 %v882, %v880
  %v1128 = vpack.c.bf16 %v887, %v885
  %v1129 = vpack.c.bf16 %v892, %v890
  %v1130 = vpack.c.bf16 %v897, %v895
  %v1131 = vpack.c.bf16 %v902, %v900
  %v1132 = vpack.c.bf16 %v907, %v905
  %v1133 = vpack.c.bf16 %v912, %v910
  %v1135 = vsel %vm828, %v1125, 0
  %v1138 = vsel %vm828, %v1126, 0
  %v1141 = vsel %vm828, %v1127, 0
  %v1144 = vsel %vm828, %v1128, 0
  %v1147 = vsel %vm828, %v1129, 0
  %v1150 = vsel %vm828, %v1130, 0
  %v1153 = vsel %vm828, %v1131, 0
  %v1156 = vsel %vm828, %v1132, 0
  %v1159 = vsel %vm828, %v1133, 0
  %v1162 = vsel %vm856, %v96, 0
  %1164 = vmatpush.bf16.msra.mxu0 0
  %1165 = vmatpush.bf16.msra.mxu0 0
  %1166 = vmatpush.bf16.msra.mxu0 0
  %1167 = vmatpush.bf16.msra.mxu0 0
  %1168 = vmatpush.bf16.msra.mxu0 0
  %1169 = vmatpush.bf16.msra.mxu0 0
  %1170 = vmatpush.bf16.msra.mxu0 0
  %1171 = vmatpush.bf16.msra.mxu0 %v1162
  %1172 = vmatmul.bf16.gmra.mxu0 %v1135
  %v1173 = vpop.f32.mrf.mxu0
  %v1174 = vadd.f32 0.0, %v1173
  %v1175 = vpop.f32.mrf.mxu0
  %v1176 = vadd.f32 0.0, %v1175
  %1177 = vmatmul.bf16.gmra.mxu0 %v1138
  %v1178 = vpop.f32.mrf.mxu0
  %v1179 = vadd.f32 0.0, %v1178
  %v1180 = vpop.f32.mrf.mxu0
  %v1181 = vadd.f32 0.0, %v1180
  %1182 = vmatmul.bf16.gmra.mxu0 %v1141
  %v1183 = vpop.f32.mrf.mxu0
  %v1184 = vadd.f32 0.0, %v1183
  %v1185 = vpop.f32.mrf.mxu0
  %v1186 = vadd.f32 0.0, %v1185
  %1187 = vmatmul.bf16.gmra.mxu0 %v1144
  %v1188 = vpop.f32.mrf.mxu0
  %v1189 = vadd.f32 0.0, %v1188
  %v1190 = vpop.f32.mrf.mxu0
  %v1191 = vadd.f32 0.0, %v1190
  %1192 = vmatmul.bf16.gmra.mxu0 %v1147
  %v1193 = vpop.f32.mrf.mxu0
  %v1194 = vadd.f32 0.0, %v1193
  %v1195 = vpop.f32.mrf.mxu0
  %v1196 = vadd.f32 0.0, %v1195
  %1197 = vmatmul.bf16.gmra.mxu0 %v1150
  %v1198 = vpop.f32.mrf.mxu0
  %v1199 = vadd.f32 0.0, %v1198
  %v1200 = vpop.f32.mrf.mxu0
  %v1201 = vadd.f32 0.0, %v1200
  %1202 = vmatmul.bf16.gmra.mxu0 %v1153
  %v1203 = vpop.f32.mrf.mxu0
  %v1204 = vadd.f32 0.0, %v1203
  %v1205 = vpop.f32.mrf.mxu0
  %v1206 = vadd.f32 0.0, %v1205
  %1207 = vmatmul.bf16.gmra.mxu0 %v1156
  %v1208 = vpop.f32.mrf.mxu0
  %v1209 = vadd.f32 0.0, %v1208
  %v1210 = vpop.f32.mrf.mxu0
  %v1211 = vadd.f32 0.0, %v1210
  %1212 = vmatmul.bf16.gmra.mxu0 %v1159
  %v1213 = vpop.f32.mrf.mxu0
  %v1214 = vadd.f32 0.0, %v1213
  %v1215 = vpop.f32.mrf.mxu0
  %v1216 = vadd.f32 0.0, %v1215
  %1217 = vdwg.mxu0
  %v1218 = vmul.f32 %v1174, %v1174
  %v1219 = vmul.f32 %v1176, %v1176
  %v1220 = vmul.f32 %v1179, %v1179
  %v1221 = vmul.f32 %v1181, %v1181
  %v1222 = vmul.f32 %v1184, %v1184
  %v1223 = vmul.f32 %v1186, %v1186
  %v1224 = vmul.f32 %v1189, %v1189
  %v1225 = vmul.f32 %v1191, %v1191
  %v1226 = vmul.f32 %v1194, %v1194
  %v1227 = vmul.f32 %v1196, %v1196
  %v1228 = vmul.f32 %v1199, %v1199
  %v1229 = vmul.f32 %v1201, %v1201
  %v1230 = vadd.f32 %v1218, %v1224
  %v1231 = vadd.f32 %v1219, %v1225
  %v1232 = vadd.f32 %v1220, %v1226
  %v1233 = vadd.f32 %v1221, %v1227
  %v1234 = vadd.f32 %v1222, %v1228
  %v1235 = vadd.f32 %v1223, %v1229
  %v1236 = vmul.f32 %v1204, %v1204
  %v1237 = vmul.f32 %v1206, %v1206
  %v1238 = vmul.f32 %v1209, %v1209
  %v1239 = vmul.f32 %v1211, %v1211
  %v1240 = vmul.f32 %v1214, %v1214
  %v1241 = vmul.f32 %v1216, %v1216
  %v1242 = vadd.f32 %v1230, %v1236
  %v1243 = vadd.f32 %v1231, %v1237
  %v1244 = vadd.f32 %v1232, %v1238
  %v1245 = vadd.f32 %v1233, %v1239
  %v1246 = vadd.f32 %v1234, %v1240
  %v1247 = vadd.f32 %v1235, %v1241
  %v1248 = vmax.f32 %v1242, 1e-08
  %v1249 = vmax.f32 %v1243, 1e-08
  %v1250 = vmax.f32 %v1244, 1e-08
  %v1251 = vmax.f32 %v1245, 1e-08
  %v1252 = vmax.f32 %v1246, 1e-08
  %v1253 = vmax.f32 %v1247, 1e-08
  %v1254 = vrsqrt.pop %v1248
  %v1255 = vmul.f32 %v1254, %v1248
  %v1256 = vmul.f32 %v1255, %v1254
  %v1257 = vmul.f32 0.5, %v1256
  %v1258 = vsub.f32 1.5, %v1257
  %v1259 = vmul.f32 %v1254, %v1258
  %v1260 = vmul.f32 %v1248, %v1259
  %vm1261 = vcmp.eq.f32.partialorder %v1248, inf
  %v1262 = vsel %vm1261, %v1248, %v1260
  %vm1263 = vcmp.eq.f32.partialorder %v1248, 0.0
  %v1264 = vand.u32 %v1248, 2147483648
  %v1265 = vsel %vm1263, %v1264, %v1262
  %v1266 = vrsqrt.pop %v1249
  %v1267 = vmul.f32 %v1266, %v1249
  %v1268 = vmul.f32 %v1267, %v1266
  %v1269 = vmul.f32 0.5, %v1268
  %v1270 = vsub.f32 1.5, %v1269
  %v1271 = vmul.f32 %v1266, %v1270
  %v1272 = vmul.f32 %v1249, %v1271
  %vm1273 = vcmp.eq.f32.partialorder %v1249, inf
  %v1274 = vsel %vm1273, %v1249, %v1272
  %vm1275 = vcmp.eq.f32.partialorder %v1249, 0.0
  %v1276 = vand.u32 %v1249, 2147483648
  %v1277 = vsel %vm1275, %v1276, %v1274
  %v1278 = vrsqrt.pop %v1250
  %v1279 = vmul.f32 %v1278, %v1250
  %v1280 = vmul.f32 %v1279, %v1278
  %v1281 = vmul.f32 0.5, %v1280
  %v1282 = vsub.f32 1.5, %v1281
  %v1283 = vmul.f32 %v1278, %v1282
  %v1284 = vmul.f32 %v1250, %v1283
  %vm1285 = vcmp.eq.f32.partialorder %v1250, inf
  %v1286 = vsel %vm1285, %v1250, %v1284
  %vm1287 = vcmp.eq.f32.partialorder %v1250, 0.0
  %v1288 = vand.u32 %v1250, 2147483648
  %v1289 = vsel %vm1287, %v1288, %v1286
  %v1290 = vrsqrt.pop %v1251
  %v1291 = vmul.f32 %v1290, %v1251
  %v1292 = vmul.f32 %v1291, %v1290
  %v1293 = vmul.f32 0.5, %v1292
  %v1294 = vsub.f32 1.5, %v1293
  %v1295 = vmul.f32 %v1290, %v1294
  %v1296 = vmul.f32 %v1251, %v1295
  %vm1297 = vcmp.eq.f32.partialorder %v1251, inf
  %v1298 = vsel %vm1297, %v1251, %v1296
  %vm1299 = vcmp.eq.f32.partialorder %v1251, 0.0
  %v1300 = vand.u32 %v1251, 2147483648
  %v1301 = vsel %vm1299, %v1300, %v1298
  %v1302 = vrsqrt.pop %v1252
  %v1303 = vmul.f32 %v1302, %v1252
  %v1304 = vmul.f32 %v1303, %v1302
  %v1305 = vmul.f32 0.5, %v1304
  %v1306 = vsub.f32 1.5, %v1305
  %v1307 = vmul.f32 %v1302, %v1306
  %v1308 = vmul.f32 %v1252, %v1307
  %vm1309 = vcmp.eq.f32.partialorder %v1252, inf
  %v1310 = vsel %vm1309, %v1252, %v1308
  %vm1311 = vcmp.eq.f32.partialorder %v1252, 0.0
  %v1312 = vand.u32 %v1252, 2147483648
  %v1313 = vsel %vm1311, %v1312, %v1310
  %v1314 = vrsqrt.pop %v1253
  %v1315 = vmul.f32 %v1314, %v1253
  %v1316 = vmul.f32 %v1315, %v1314
  %v1317 = vmul.f32 0.5, %v1316
  %v1318 = vsub.f32 1.5, %v1317
  %v1319 = vmul.f32 %v1314, %v1318
  %v1320 = vmul.f32 %v1253, %v1319
  %vm1321 = vcmp.eq.f32.partialorder %v1253, inf
  %v1322 = vsel %vm1321, %v1253, %v1320
  %vm1323 = vcmp.eq.f32.partialorder %v1253, 0.0
  %v1324 = vand.u32 %v1253, 2147483648
  %v1325 = vsel %vm1323, %v1324, %v1322
  %v1326 = vxor.u32 %v1265, 2147483648
  %v1327 = vxor.u32 %v1277, 2147483648
  %v1328 = vxor.u32 %v1289, 2147483648
  %v1329 = vxor.u32 %v1301, 2147483648
  %v1330 = vxor.u32 %v1313, 2147483648
  %v1331 = vxor.u32 %v1325, 2147483648
  %v1332 = vmul.f32 %v1326, 1.442695
  %v1333 = vpow.pop %v1332
  %v1334 = vmul.f32 %v1327, 1.442695
  %v1335 = vpow.pop %v1334
  %v1336 = vmul.f32 %v1328, 1.442695
  %v1337 = vpow.pop %v1336
  %v1338 = vmul.f32 %v1329, 1.442695
  %v1339 = vpow.pop %v1338
  %v1340 = vmul.f32 %v1330, 1.442695
  %v1341 = vpow.pop %v1340
  %v1342 = vmul.f32 %v1331, 1.442695
  %v1343 = vpow.pop %v1342
  %v1344 = vadd.f32 %v1333, 1.0
  %v1345 = vadd.f32 %v1335, 1.0
  %v1346 = vadd.f32 %v1337, 1.0
  %v1347 = vadd.f32 %v1339, 1.0
  %v1348 = vadd.f32 %v1341, 1.0
  %v1349 = vadd.f32 %v1343, 1.0
  %v1350 = vrcp.pop %v1344
  %v1351 = vmul.f32 %v1344, %v1350
  %v1352 = vsub.f32 1.0, %v1351
  %v1353 = vmul.f32 %v1350, %v1352
  %v1354 = vadd.f32 %v1350, %v1353
  %vm1355 = vweird.f32 %v1344
  %vm1356 = vweird.f32 %v1350
  %vm1357 = vmor %vm1355, %vm1356
  %v1358 = vsel %vm1357, %v1350, %v1354
  %v1359 = vand.u32 2147483647, %v1344
  %vm1360 = vcmp.eq.f32.partialorder %v1359, 8.507059e+37
  %v1361 = vand.u32 %v1344, 2147483648
  %v1362 = vor.u32 1.1754944e-38, %v1361
  %v1363 = vsel %vm1360, %v1362, %v1358
  %v1364 = vmul.f32 1.0, %v1363
  %v1365 = vrcp.pop %v1345
  %v1366 = vmul.f32 %v1345, %v1365
  %v1367 = vsub.f32 1.0, %v1366
  %v1368 = vmul.f32 %v1365, %v1367
  %v1369 = vadd.f32 %v1365, %v1368
  %vm1370 = vweird.f32 %v1345
  %vm1371 = vweird.f32 %v1365
  %vm1372 = vmor %vm1370, %vm1371
  %v1373 = vsel %vm1372, %v1365, %v1369
  %v1374 = vand.u32 2147483647, %v1345
  %vm1375 = vcmp.eq.f32.partialorder %v1374, 8.507059e+37
  %v1376 = vand.u32 %v1345, 2147483648
  %v1377 = vor.u32 1.1754944e-38, %v1376
  %v1378 = vsel %vm1375, %v1377, %v1373
  %v1379 = vmul.f32 1.0, %v1378
  %v1380 = vrcp.pop %v1346
  %v1381 = vmul.f32 %v1346, %v1380
  %v1382 = vsub.f32 1.0, %v1381
  %v1383 = vmul.f32 %v1380, %v1382
  %v1384 = vadd.f32 %v1380, %v1383
  %vm1385 = vweird.f32 %v1346
  %vm1386 = vweird.f32 %v1380
  %vm1387 = vmor %vm1385, %vm1386
  %v1388 = vsel %vm1387, %v1380, %v1384
  %v1389 = vand.u32 2147483647, %v1346
  %vm1390 = vcmp.eq.f32.partialorder %v1389, 8.507059e+37
  %v1391 = vand.u32 %v1346, 2147483648
  %v1392 = vor.u32 1.1754944e-38, %v1391
  %v1393 = vsel %vm1390, %v1392, %v1388
  %v1394 = vmul.f32 1.0, %v1393
  %v1395 = vrcp.pop %v1347
  %v1396 = vmul.f32 %v1347, %v1395
  %v1397 = vsub.f32 1.0, %v1396
  %v1398 = vmul.f32 %v1395, %v1397
  %v1399 = vadd.f32 %v1395, %v1398
  %vm1400 = vweird.f32 %v1347
  %vm1401 = vweird.f32 %v1395
  %vm1402 = vmor %vm1400, %vm1401
  %v1403 = vsel %vm1402, %v1395, %v1399
  %v1404 = vand.u32 2147483647, %v1347
  %vm1405 = vcmp.eq.f32.partialorder %v1404, 8.507059e+37
  %v1406 = vand.u32 %v1347, 2147483648
  %v1407 = vor.u32 1.1754944e-38, %v1406
  %v1408 = vsel %vm1405, %v1407, %v1403
  %v1409 = vmul.f32 1.0, %v1408
  %v1410 = vrcp.pop %v1348
  %v1411 = vmul.f32 %v1348, %v1410
  %v1412 = vsub.f32 1.0, %v1411
  %v1413 = vmul.f32 %v1410, %v1412
  %v1414 = vadd.f32 %v1410, %v1413
  %vm1415 = vweird.f32 %v1348
  %vm1416 = vweird.f32 %v1410
  %vm1417 = vmor %vm1415, %vm1416
  %v1418 = vsel %vm1417, %v1410, %v1414
  %v1419 = vand.u32 2147483647, %v1348
  %vm1420 = vcmp.eq.f32.partialorder %v1419, 8.507059e+37
  %v1421 = vand.u32 %v1348, 2147483648
  %v1422 = vor.u32 1.1754944e-38, %v1421
  %v1423 = vsel %vm1420, %v1422, %v1418
  %v1424 = vmul.f32 1.0, %v1423
  %v1425 = vrcp.pop %v1349
  %v1426 = vmul.f32 %v1349, %v1425
  %v1427 = vsub.f32 1.0, %v1426
  %v1428 = vmul.f32 %v1425, %v1427
  %v1429 = vadd.f32 %v1425, %v1428
  %vm1430 = vweird.f32 %v1349
  %vm1431 = vweird.f32 %v1425
  %vm1432 = vmor %vm1430, %vm1431
  %v1433 = vsel %vm1432, %v1425, %v1429
  %v1434 = vand.u32 2147483647, %v1349
  %vm1435 = vcmp.eq.f32.partialorder %v1434, 8.507059e+37
  %v1436 = vand.u32 %v1349, 2147483648
  %v1437 = vor.u32 1.1754944e-38, %v1436
  %v1438 = vsel %vm1435, %v1437, %v1433
  %v1439 = vmul.f32 1.0, %v1438
  %v1440 = vmul.f32 %v1174, %v1364
  %v1441 = vmul.f32 %v1176, %v1379
  %v1442 = vmul.f32 %v1179, %v1394
  %v1443 = vmul.f32 %v1181, %v1409
  %v1444 = vmul.f32 %v1184, %v1424
  %v1445 = vmul.f32 %v1186, %v1439
  %v1446 = vmul.f32 %v1189, %v1364
  %v1447 = vmul.f32 %v1191, %v1379
  %v1448 = vmul.f32 %v1194, %v1394
  %v1449 = vmul.f32 %v1196, %v1409
  %v1450 = vmul.f32 %v1199, %v1424
  %v1451 = vmul.f32 %v1201, %v1439
  %v1452 = vmul.f32 %v1204, %v1364
  %v1453 = vmul.f32 %v1206, %v1379
  %v1454 = vmul.f32 %v1209, %v1394
  %v1455 = vmul.f32 %v1211, %v1409
  %v1456 = vmul.f32 %v1214, %v1424
  %v1457 = vmul.f32 %v1216, %v1439
  %v1458 = vpack.c.bf16 %v1441, %v1440
  %v1459 = vpack.c.bf16 %v1443, %v1442
  %v1460 = vpack.c.bf16 %v1445, %v1444
  %v1461 = vpack.c.bf16 %v1447, %v1446
  %v1462 = vpack.c.bf16 %v1449, %v1448
  %v1463 = vpack.c.bf16 %v1451, %v1450
  %v1464 = vpack.c.bf16 %v1453, %v1452
  %v1465 = vpack.c.bf16 %v1455, %v1454
  %v1466 = vpack.c.bf16 %v1457, %v1456
  %v1468 = vsel %vm828, %v1458, 0
  %v1471 = vsel %vm828, %v1459, 0
  %v1474 = vsel %vm828, %v1460, 0
  %v1477 = vsel %vm828, %v1461, 0
  %v1480 = vsel %vm828, %v1462, 0
  %v1483 = vsel %vm828, %v1463, 0
  %v1486 = vsel %vm828, %v1464, 0
  %v1489 = vsel %vm828, %v1465, 0
  %v1492 = vsel %vm828, %v1466, 0
  %v1495 = vsel %vm856, %v97, 0
  %1497 = vmatpush.bf16.msra.mxu0 0
  %1498 = vmatpush.bf16.msra.mxu0 0
  %1499 = vmatpush.bf16.msra.mxu0 0
  %1500 = vmatpush.bf16.msra.mxu0 0
  %1501 = vmatpush.bf16.msra.mxu0 0
  %1502 = vmatpush.bf16.msra.mxu0 0
  %1503 = vmatpush.bf16.msra.mxu0 0
  %1504 = vmatpush.bf16.msra.mxu0 %v1495
  %1505 = vmatmul.bf16.gmra.mxu0 %v1468
  %v1506 = vpop.f32.mrf.mxu0
  %v1507 = vadd.f32 0.0, %v1506
  %v1508 = vpop.f32.mrf.mxu0
  %v1509 = vadd.f32 0.0, %v1508
  %1510 = vmatmul.bf16.gmra.mxu0 %v1471
  %v1511 = vpop.f32.mrf.mxu0
  %v1512 = vadd.f32 0.0, %v1511
  %v1513 = vpop.f32.mrf.mxu0
  %v1514 = vadd.f32 0.0, %v1513
  %1515 = vmatmul.bf16.gmra.mxu0 %v1474
  %v1516 = vpop.f32.mrf.mxu0
  %v1517 = vadd.f32 0.0, %v1516
  %v1518 = vpop.f32.mrf.mxu0
  %v1519 = vadd.f32 0.0, %v1518
  %1520 = vmatmul.bf16.gmra.mxu0 %v1477
  %v1521 = vpop.f32.mrf.mxu0
  %v1522 = vadd.f32 0.0, %v1521
  %v1523 = vpop.f32.mrf.mxu0
  %v1524 = vadd.f32 0.0, %v1523
  %1525 = vmatmul.bf16.gmra.mxu0 %v1480
  %v1526 = vpop.f32.mrf.mxu0
  %v1527 = vadd.f32 0.0, %v1526
  %v1528 = vpop.f32.mrf.mxu0
  %v1529 = vadd.f32 0.0, %v1528
  %1530 = vmatmul.bf16.gmra.mxu0 %v1483
  %v1531 = vpop.f32.mrf.mxu0
  %v1532 = vadd.f32 0.0, %v1531
  %v1533 = vpop.f32.mrf.mxu0
  %v1534 = vadd.f32 0.0, %v1533
  %1535 = vmatmul.bf16.gmra.mxu0 %v1486
  %v1536 = vpop.f32.mrf.mxu0
  %v1537 = vadd.f32 0.0, %v1536
  %v1538 = vpop.f32.mrf.mxu0
  %v1539 = vadd.f32 0.0, %v1538
  %1540 = vmatmul.bf16.gmra.mxu0 %v1489
  %v1541 = vpop.f32.mrf.mxu0
  %v1542 = vadd.f32 0.0, %v1541
  %v1543 = vpop.f32.mrf.mxu0
  %v1544 = vadd.f32 0.0, %v1543
  %1545 = vmatmul.bf16.gmra.mxu0 %v1492
  %v1546 = vpop.f32.mrf.mxu0
  %v1547 = vadd.f32 0.0, %v1546
  %v1548 = vpop.f32.mrf.mxu0
  %v1549 = vadd.f32 0.0, %v1548
  %1550 = vdwg.mxu0
  %v1551 = vmul.f32 %v1507, %v1507
  %v1552 = vmul.f32 %v1509, %v1509
  %v1553 = vmul.f32 %v1512, %v1512
  %v1554 = vmul.f32 %v1514, %v1514
  %v1555 = vmul.f32 %v1517, %v1517
  %v1556 = vmul.f32 %v1519, %v1519
  %v1557 = vmul.f32 %v1522, %v1522
  %v1558 = vmul.f32 %v1524, %v1524
  %v1559 = vmul.f32 %v1527, %v1527
  %v1560 = vmul.f32 %v1529, %v1529
  %v1561 = vmul.f32 %v1532, %v1532
  %v1562 = vmul.f32 %v1534, %v1534
  %v1563 = vadd.f32 %v1551, %v1557
  %v1564 = vadd.f32 %v1552, %v1558
  %v1565 = vadd.f32 %v1553, %v1559
  %v1566 = vadd.f32 %v1554, %v1560
  %v1567 = vadd.f32 %v1555, %v1561
  %v1568 = vadd.f32 %v1556, %v1562
  %v1569 = vmul.f32 %v1537, %v1537
  %v1570 = vmul.f32 %v1539, %v1539
  %v1571 = vmul.f32 %v1542, %v1542
  %v1572 = vmul.f32 %v1544, %v1544
  %v1573 = vmul.f32 %v1547, %v1547
  %v1574 = vmul.f32 %v1549, %v1549
  %v1575 = vadd.f32 %v1563, %v1569
  %v1576 = vadd.f32 %v1564, %v1570
  %v1577 = vadd.f32 %v1565, %v1571
  %v1578 = vadd.f32 %v1566, %v1572
  %v1579 = vadd.f32 %v1567, %v1573
  %v1580 = vadd.f32 %v1568, %v1574
  %v1581 = vmax.f32 %v1575, 1e-08
  %v1582 = vmax.f32 %v1576, 1e-08
  %v1583 = vmax.f32 %v1577, 1e-08
  %v1584 = vmax.f32 %v1578, 1e-08
  %v1585 = vmax.f32 %v1579, 1e-08
  %v1586 = vmax.f32 %v1580, 1e-08
  %v1587 = vrsqrt.pop %v1581
  %v1588 = vmul.f32 %v1587, %v1581
  %v1589 = vmul.f32 %v1588, %v1587
  %v1590 = vmul.f32 0.5, %v1589
  %v1591 = vsub.f32 1.5, %v1590
  %v1592 = vmul.f32 %v1587, %v1591
  %v1593 = vmul.f32 %v1581, %v1592
  %vm1594 = vcmp.eq.f32.partialorder %v1581, inf
  %v1595 = vsel %vm1594, %v1581, %v1593
  %vm1596 = vcmp.eq.f32.partialorder %v1581, 0.0
  %v1597 = vand.u32 %v1581, 2147483648
  %v1598 = vsel %vm1596, %v1597, %v1595
  %v1599 = vrsqrt.pop %v1582
  %v1600 = vmul.f32 %v1599, %v1582
  %v1601 = vmul.f32 %v1600, %v1599
  %v1602 = vmul.f32 0.5, %v1601
  %v1603 = vsub.f32 1.5, %v1602
  %v1604 = vmul.f32 %v1599, %v1603
  %v1605 = vmul.f32 %v1582, %v1604
  %vm1606 = vcmp.eq.f32.partialorder %v1582, inf
  %v1607 = vsel %vm1606, %v1582, %v1605
  %vm1608 = vcmp.eq.f32.partialorder %v1582, 0.0
  %v1609 = vand.u32 %v1582, 2147483648
  %v1610 = vsel %vm1608, %v1609, %v1607
  %v1611 = vrsqrt.pop %v1583
  %v1612 = vmul.f32 %v1611, %v1583
  %v1613 = vmul.f32 %v1612, %v1611
  %v1614 = vmul.f32 0.5, %v1613
  %v1615 = vsub.f32 1.5, %v1614
  %v1616 = vmul.f32 %v1611, %v1615
  %v1617 = vmul.f32 %v1583, %v1616
  %vm1618 = vcmp.eq.f32.partialorder %v1583, inf
  %v1619 = vsel %vm1618, %v1583, %v1617
  %vm1620 = vcmp.eq.f32.partialorder %v1583, 0.0
  %v1621 = vand.u32 %v1583, 2147483648
  %v1622 = vsel %vm1620, %v1621, %v1619
  %v1623 = vrsqrt.pop %v1584
  %v1624 = vmul.f32 %v1623, %v1584
  %v1625 = vmul.f32 %v1624, %v1623
  %v1626 = vmul.f32 0.5, %v1625
  %v1627 = vsub.f32 1.5, %v1626
  %v1628 = vmul.f32 %v1623, %v1627
  %v1629 = vmul.f32 %v1584, %v1628
  %vm1630 = vcmp.eq.f32.partialorder %v1584, inf
  %v1631 = vsel %vm1630, %v1584, %v1629
  %vm1632 = vcmp.eq.f32.partialorder %v1584, 0.0
  %v1633 = vand.u32 %v1584, 2147483648
  %v1634 = vsel %vm1632, %v1633, %v1631
  %v1635 = vrsqrt.pop %v1585
  %v1636 = vmul.f32 %v1635, %v1585
  %v1637 = vmul.f32 %v1636, %v1635
  %v1638 = vmul.f32 0.5, %v1637
  %v1639 = vsub.f32 1.5, %v1638
  %v1640 = vmul.f32 %v1635, %v1639
  %v1641 = vmul.f32 %v1585, %v1640
  %vm1642 = vcmp.eq.f32.partialorder %v1585, inf
  %v1643 = vsel %vm1642, %v1585, %v1641
  %vm1644 = vcmp.eq.f32.partialorder %v1585, 0.0
  %v1645 = vand.u32 %v1585, 2147483648
  %v1646 = vsel %vm1644, %v1645, %v1643
  %v1647 = vrsqrt.pop %v1586
  %v1648 = vmul.f32 %v1647, %v1586
  %v1649 = vmul.f32 %v1648, %v1647
  %v1650 = vmul.f32 0.5, %v1649
  %v1651 = vsub.f32 1.5, %v1650
  %v1652 = vmul.f32 %v1647, %v1651
  %v1653 = vmul.f32 %v1586, %v1652
  %vm1654 = vcmp.eq.f32.partialorder %v1586, inf
  %v1655 = vsel %vm1654, %v1586, %v1653
  %vm1656 = vcmp.eq.f32.partialorder %v1586, 0.0
  %v1657 = vand.u32 %v1586, 2147483648
  %v1658 = vsel %vm1656, %v1657, %v1655
  %v1659 = vpack.c.bf16 %v1120, %v1119
  %v1660 = vpack.c.bf16 %v1122, %v1121
  %v1661 = vpack.c.bf16 %v1124, %v1123
  %v1662 = vpack.c.bf16 %v1610, %v1598
  %v1663 = vpack.c.bf16 %v1634, %v1622
  %v1664 = vpack.c.bf16 %v1658, %v1646
  %v1666 = vsel %vm828, %v1662, 0
  %v1669 = vsel %vm828, %v1663, 0
  %v1672 = vsel %vm828, %v1664, 0
  %v1675 = vsel %vm856, %v102, 0
  %1677 = vmatpush.bf16.msra.mxu0 0
  %1678 = vmatpush.bf16.msra.mxu0 0
  %1679 = vmatpush.bf16.msra.mxu0 0
  %1680 = vmatpush.bf16.msra.mxu0 0
  %1681 = vmatpush.bf16.msra.mxu0 0
  %1682 = vmatpush.bf16.msra.mxu0 0
  %1683 = vmatpush.bf16.msra.mxu0 0
  %1684 = vmatpush.bf16.msra.mxu0 %v1675
  %1685 = vmatmul.bf16.gmra.mxu0 %v1666
  %v1686 = vpop.f32.mrf.mxu0
  %v1687 = vadd.f32 0.0, %v1686
  %v1688 = vpop.f32.mrf.mxu0
  %v1689 = vadd.f32 0.0, %v1688
  %1690 = vmatmul.bf16.gmra.mxu0 %v1669
  %v1691 = vpop.f32.mrf.mxu0
  %v1692 = vadd.f32 0.0, %v1691
  %v1693 = vpop.f32.mrf.mxu0
  %v1694 = vadd.f32 0.0, %v1693
  %1695 = vmatmul.bf16.gmra.mxu0 %v1672
  %v1696 = vpop.f32.mrf.mxu0
  %v1697 = vadd.f32 0.0, %v1696
  %v1698 = vpop.f32.mrf.mxu0
  %v1699 = vadd.f32 0.0, %v1698
  %1700 = vdwg.mxu0
  %v1705 = vunpack.c.l.b16 %v98
  %v1706 = vunpack.c.l.b16 %v99
  %v1707 = vunpack.c.l.b16 %v100
  %v1708 = vunpack.c.l.b16 %v101
  %v1709 = vpack.c.b16 %v1706, %v1705
  %v1710 = vpack.c.b16 %v1708, %v1707
  %v1714 = vsel %vm1076, %v1659, 0
  %v1717 = vsel %vm1076, %v1660, 0
  %v1720 = vsel %vm1076, %v1661, 0
  %1722 = vmatpush.bf16.msra.mxu0 0
  %1723 = vmatpush.bf16.msra.mxu0 0
  %1724 = vmatpush.bf16.msra.mxu0 0
  %1725 = vmatpush.bf16.msra.mxu0 0
  %1726 = vmatpush.bf16.msra.mxu0 0
  %1727 = vmatpush.bf16.msra.mxu0 0
  %1728 = vmatpush.bf16.msra.mxu0 %v1710
  %1729 = vmatpush.bf16.msra.mxu0 %v1709
  %1730 = vmatmul.bf16.gmra.mxu0 %v1714
  %v1731 = vpop.f32.mrf.mxu0
  %v1732 = vadd.f32 %v1687, %v1731
  %v1733 = vpop.f32.mrf.mxu0
  %v1734 = vadd.f32 %v1689, %v1733
  %1735 = vmatmul.bf16.gmra.mxu0 %v1717
  %v1736 = vpop.f32.mrf.mxu0
  %v1737 = vadd.f32 %v1692, %v1736
  %v1738 = vpop.f32.mrf.mxu0
  %v1739 = vadd.f32 %v1694, %v1738
  %1740 = vmatmul.bf16.gmra.mxu0 %v1720
  %v1741 = vpop.f32.mrf.mxu0
  %v1742 = vadd.f32 %v1697, %v1741
  %v1743 = vpop.f32.mrf.mxu0
  %v1744 = vadd.f32 %v1699, %v1743
  %1745 = vdwg.mxu0
  %v1747 = vperm.slane %v103, 0
  %v1749 = vadd.f32 %v1732, %v1747
  %v1750 = vadd.f32 %v1734, %v1747
  %v1751 = vadd.f32 %v1737, %v1747
  %v1752 = vadd.f32 %v1739, %v1747
  %v1753 = vadd.f32 %v1742, %v1747
  %v1754 = vadd.f32 %v1744, %v1747
  %v1755 = vpack.c.bf16 %v1509, %v1507
  %v1756 = vpack.c.bf16 %v1514, %v1512
  %v1757 = vpack.c.bf16 %v1519, %v1517
  %v1758 = vpack.c.bf16 %v1524, %v1522
  %v1759 = vpack.c.bf16 %v1529, %v1527
  %v1760 = vpack.c.bf16 %v1534, %v1532
  %v1761 = vpack.c.bf16 %v1539, %v1537
  %v1762 = vpack.c.bf16 %v1544, %v1542
  %v1763 = vpack.c.bf16 %v1549, %v1547
  %v1765 = vsel %vm828, %v1755, 0
  %v1768 = vsel %vm828, %v1756, 0
  %v1771 = vsel %vm828, %v1757, 0
  %v1774 = vsel %vm828, %v1758, 0
  %v1777 = vsel %vm828, %v1759, 0
  %v1780 = vsel %vm828, %v1760, 0
  %v1783 = vsel %vm828, %v1761, 0
  %v1786 = vsel %vm828, %v1762, 0
  %v1789 = vsel %vm828, %v1763, 0
  %v1792 = vsel %vm856, %v104, 0
  %1794 = vmatpush.bf16.msra.mxu0 0
  %1795 = vmatpush.bf16.msra.mxu0 0
  %1796 = vmatpush.bf16.msra.mxu0 0
  %1797 = vmatpush.bf16.msra.mxu0 0
  %1798 = vmatpush.bf16.msra.mxu0 0
  %1799 = vmatpush.bf16.msra.mxu0 0
  %1800 = vmatpush.bf16.msra.mxu0 0
  %1801 = vmatpush.bf16.msra.mxu0 %v1792
  %1802 = vmatmul.bf16.gmra.mxu0 %v1765
  %v1803 = vpop.f32.mrf.mxu0
  %v1804 = vadd.f32 0.0, %v1803
  %v1805 = vpop.f32.mrf.mxu0
  %v1806 = vadd.f32 0.0, %v1805
  %1807 = vmatmul.bf16.gmra.mxu0 %v1768
  %v1808 = vpop.f32.mrf.mxu0
  %v1809 = vadd.f32 0.0, %v1808
  %v1810 = vpop.f32.mrf.mxu0
  %v1811 = vadd.f32 0.0, %v1810
  %1812 = vmatmul.bf16.gmra.mxu0 %v1771
  %v1813 = vpop.f32.mrf.mxu0
  %v1814 = vadd.f32 0.0, %v1813
  %v1815 = vpop.f32.mrf.mxu0
  %v1816 = vadd.f32 0.0, %v1815
  %1817 = vmatmul.bf16.gmra.mxu0 %v1774
  %v1818 = vpop.f32.mrf.mxu0
  %v1819 = vadd.f32 0.0, %v1818
  %v1820 = vpop.f32.mrf.mxu0
  %v1821 = vadd.f32 0.0, %v1820
  %1822 = vmatmul.bf16.gmra.mxu0 %v1777
  %v1823 = vpop.f32.mrf.mxu0
  %v1824 = vadd.f32 0.0, %v1823
  %v1825 = vpop.f32.mrf.mxu0
  %v1826 = vadd.f32 0.0, %v1825
  %1827 = vmatmul.bf16.gmra.mxu0 %v1780
  %v1828 = vpop.f32.mrf.mxu0
  %v1829 = vadd.f32 0.0, %v1828
  %v1830 = vpop.f32.mrf.mxu0
  %v1831 = vadd.f32 0.0, %v1830
  %1832 = vmatmul.bf16.gmra.mxu0 %v1783
  %v1833 = vpop.f32.mrf.mxu0
  %v1834 = vadd.f32 0.0, %v1833
  %v1835 = vpop.f32.mrf.mxu0
  %v1836 = vadd.f32 0.0, %v1835
  %1837 = vmatmul.bf16.gmra.mxu0 %v1786
  %v1838 = vpop.f32.mrf.mxu0
  %v1839 = vadd.f32 0.0, %v1838
  %v1840 = vpop.f32.mrf.mxu0
  %v1841 = vadd.f32 0.0, %v1840
  %1842 = vmatmul.bf16.gmra.mxu0 %v1789
  %v1843 = vpop.f32.mrf.mxu0
  %v1844 = vadd.f32 0.0, %v1843
  %v1845 = vpop.f32.mrf.mxu0
  %v1846 = vadd.f32 0.0, %v1845
  %1847 = vdwg.mxu0
  %v1848 = vpack.c.bf16 %v1749, %v1749
  %v1849 = vpack.c.bf16 %v1750, %v1750
  %v1850 = vpack.c.bf16 %v1751, %v1751
  %v1851 = vpack.c.bf16 %v1752, %v1752
  %v1852 = vpack.c.bf16 %v1753, %v1753
  %v1853 = vpack.c.bf16 %v1754, %v1754
  %vm1854 = vcmask 257024
  %1855 = vst.msk [vmem:[%s19] sm:$0xf] %vm1854, %v1848
  %1856 = vst.msk [vmem:[%s19 + $0x4] sm:$0xf] %vm1854, %v1849
  %1857 = vst.msk [vmem:[%s19 + $0x8] sm:$0xf] %vm1854, %v1850
  %1858 = vst.msk [vmem:[%s19 + $0xc] sm:$0xf] %vm1854, %v1851
  %1859 = vst.msk [vmem:[%s19 + $0x10] sm:$0xf] %vm1854, %v1852
  %1860 = vst.msk [vmem:[%s19 + $0x14] sm:$0xf] %vm1854, %v1853
  %v1861 = vpack.c.bf16 %v1804, %v1804
  %v1862 = vpack.c.bf16 %v1806, %v1806
  %v1863 = vpack.c.bf16 %v1809, %v1809
  %v1864 = vpack.c.bf16 %v1811, %v1811
  %v1865 = vpack.c.bf16 %v1814, %v1814
  %v1866 = vpack.c.bf16 %v1816, %v1816
  %vm1867 = vcmask 60416
  %1868 = vst.msk [vmem:[%s20] sm:$0xf] %vm1867, %v1861
  %1869 = vst.msk [vmem:[%s20 + $0x4] sm:$0xf] %vm1867, %v1862
  %1870 = vst.msk [vmem:[%s20 + $0x8] sm:$0xf] %vm1867, %v1863
  %1871 = vst.msk [vmem:[%s20 + $0xc] sm:$0xf] %vm1867, %v1864
  %1872 = vst.msk [vmem:[%s20 + $0x10] sm:$0xf] %vm1867, %v1865
  %1873 = vst.msk [vmem:[%s20 + $0x14] sm:$0xf] %vm1867, %v1866
  %v1874 = vpack.c.bf16 %v1819, %v1819
  %v1875 = vpack.c.bf16 %v1821, %v1821
  %v1876 = vpack.c.bf16 %v1824, %v1824
  %v1877 = vpack.c.bf16 %v1826, %v1826
  %v1878 = vpack.c.bf16 %v1829, %v1829
  %v1879 = vpack.c.bf16 %v1831, %v1831
  %1880 = vst.msk [vmem:[%s21] sm:$0xf] %vm1867, %v1874
  %1881 = vst.msk [vmem:[%s21 + $0x4] sm:$0xf] %vm1867, %v1875
  %1882 = vst.msk [vmem:[%s21 + $0x8] sm:$0xf] %vm1867, %v1876
  %1883 = vst.msk [vmem:[%s21 + $0xc] sm:$0xf] %vm1867, %v1877
  %1884 = vst.msk [vmem:[%s21 + $0x10] sm:$0xf] %vm1867, %v1878
  %1885 = vst.msk [vmem:[%s21 + $0x14] sm:$0xf] %vm1867, %v1879
  %v1886 = vpack.c.bf16 %v1834, %v1834
  %v1887 = vpack.c.bf16 %v1836, %v1836
  %v1888 = vpack.c.bf16 %v1839, %v1839
  %v1889 = vpack.c.bf16 %v1841, %v1841
  %v1890 = vpack.c.bf16 %v1844, %v1844
  %v1891 = vpack.c.bf16 %v1846, %v1846
  %1892 = vst.msk [vmem:[%s22] sm:$0xf] %vm1867, %v1886
  %1893 = vst.msk [vmem:[%s22 + $0x4] sm:$0xf] %vm1867, %v1887
  %1894 = vst.msk [vmem:[%s22 + $0x8] sm:$0xf] %vm1867, %v1888
  %1895 = vst.msk [vmem:[%s22 + $0xc] sm:$0xf] %vm1867, %v1889
  %1896 = vst.msk [vmem:[%s22 + $0x10] sm:$0xf] %vm1867, %v1890
  %1897 = vst.msk [vmem:[%s22 + $0x14] sm:$0xf] %vm1867, %v1891
  // Predicated region
  $region78: #{gvp_model_forward.11} parent=0 // pred_check
    _
  $region79: #{gvp_model_forward.11} parent=0 // pred_check_branch
    %1899 = sbr.rel (0) target = $region81
  $region80: #{gvp_model_forward.11} parent=0 // pred_region
    _
  $region81: #{gvp_model_forward.11} parent=0 // pred_fallthru
    _
  // Predicated region
  $region82: #{gvp_model_forward.11} parent=0 // pred_check
    _
  $region83: #{gvp_model_forward.11} parent=0 // pred_check_branch
    %1901 = sbr.rel (0) target = $region85
  $region84: #{gvp_model_forward.11} parent=0 // pred_region
    _
  $region85: #{gvp_model_forward.11} parent=0 // pred_fallthru
    _
  // Predicated region
  $region86: #{gvp_model_forward.11} parent=0 // pred_check
    _
  $region87: #{gvp_model_forward.11} parent=0 // pred_check_branch
    %1903 = sbr.rel (0) target = $region89
  $region88: #{gvp_model_forward.11} parent=0 // pred_region
    _
  $region89: #{gvp_model_forward.11} parent=0 // pred_fallthru
    _
  // Predicated region
  $region90: #{gvp_model_forward.11} parent=0 // pred_check
    _
  $region91: #{gvp_model_forward.11} parent=0 // pred_check_branch
    %1905 = sbr.rel (0) target = $region93
  $region92: #{gvp_model_forward.11} parent=0 // pred_region
    _
  $region93: #{gvp_model_forward.11} parent=0 // pred_fallthru
    _
  // Predicated region
  $region94: #{gvp_model_forward.11} parent=0 // pred_check
    _
  $region95: #{gvp_model_forward.11} parent=0 // pred_check_branch
    %1907 = sbr.rel (0) target = $region97
  $region96: #{gvp_model_forward.11} parent=0 // pred_region
    _
  $region97: #{gvp_model_forward.11} parent=0 // pred_fallthru
    _
  // Predicated region
  $region98: #{gvp_model_forward.11} parent=0 // pred_check
    _
  $region99: #{gvp_model_forward.11} parent=0 // pred_check_branch
    %1909 = sbr.rel (0) target = $region101
  $region100: #{gvp_model_forward.11} parent=0 // pred_region
    _
  $region101: #{gvp_model_forward.11} parent=0 // pred_fallthru
    _
  // Predicated region
  $region102: #{gvp_model_forward.11} parent=0 // pred_check
    _
  $region103: #{gvp_model_forward.11} parent=0 // pred_check_branch
    %1911 = sbr.rel (0) target = $region105
  $region104: #{gvp_model_forward.11} parent=0 // pred_region
    _
  $region105: #{gvp_model_forward.11} parent=0 // pred_fallthru
    _
  // Predicated region
  $region106: #{gvp_model_forward.11} parent=0 // pred_check
    _
  $region107: #{gvp_model_forward.11} parent=0 // pred_check_branch
    %1913 = sbr.rel (0) target = $region109
  $region108: #{gvp_model_forward.11} parent=0 // pred_region
    _
  $region109: #{gvp_model_forward.11} parent=0 // pred_fallthru
    _

// kernel: gvp_model_forward.13
$region0: #{gvp_model_forward.13}
  #allocation0 [shape = 'u32[]', space=smem, size = 0x4, offset = 0x4, fixed_abs, tag = 'smem constant byte address 0x4 - core index']
  #allocation1 [shape = 'u32[72,128]{1,0:T(1,128)}', space=vmem, size = 0x9000, scoped, tag = 'internal scratch']
  %s0 = inlined_call_operand.vmem [shape: f32[16,32], index: 0, kind: input, shape index: {}]
  %s1 = inlined_call_operand.vmem [shape: f32[16,8], index: 1, kind: input, shape index: {}]
  %s2 = inlined_call_operand.vmem [shape: f32[16,8], index: 2, kind: input, shape index: {}]
  %s3 = inlined_call_operand.vmem [shape: f32[16,8], index: 3, kind: input, shape index: {}]
  %s4 = inlined_call_operand.vmem [shape: f32[16,32], index: 4, kind: input, shape index: {}]
  %s5 = inlined_call_operand.vmem [shape: f32[16,8], index: 5, kind: input, shape index: {}]
  %s6 = inlined_call_operand.vmem [shape: f32[16,8], index: 6, kind: input, shape index: {}]
  %s7 = inlined_call_operand.vmem [shape: f32[16,8], index: 7, kind: input, shape index: {}]
  %s8 = inlined_call_operand.vmem [shape: f32[1,32], index: 8, kind: input, shape index: {}, may-alias: {8,20}]
  %s9 = inlined_call_operand.vmem [shape: f32[1,32], index: 9, kind: input, shape index: {}, may-alias: {9,21}]
  %s10 = inlined_call_operand.vmem [shape: bf16[8,16], index: 10, kind: input, shape index: {}]
  %s11 = inlined_call_operand.vmem [shape: bf16[32,128], index: 11, kind: input, shape index: {}]
  %s12 = inlined_call_operand.vmem [shape: bf16[16,128], index: 12, kind: input, shape index: {}]
  %s13 = inlined_call_operand.vmem [shape: f32[1,128], index: 13, kind: input, shape index: {}]
  %s14 = inlined_call_operand.vmem [shape: bf16[16,16], index: 14, kind: input, shape index: {}]
  %s15 = inlined_call_operand.vmem [shape: bf16[16,16], index: 15, kind: input, shape index: {}]
  %s16 = inlined_call_operand.vmem [shape: bf16[128,32], index: 16, kind: input, shape index: {}]
  %s17 = inlined_call_operand.vmem [shape: bf16[16,32], index: 17, kind: input, shape index: {}]
  %s18 = inlined_call_operand.vmem [shape: f32[1,32], index: 18, kind: input, shape index: {}]
  %s19 = inlined_call_operand.vmem [shape: bf16[16,8], index: 19, kind: input, shape index: {}]
  %s20 = inlined_call_operand.vmem [shape: f32[1,32], index: 20, kind: input, shape index: {}, may-alias: {8,20}]
  %s21 = inlined_call_operand.vmem [shape: f32[1,32], index: 21, kind: input, shape index: {}, may-alias: {9,21}]
  %s22 = inlined_call_operand.vmem [shape: f32[16,32], index: 22, kind: output, shape index: {0}]
  %s23 = inlined_call_operand.vmem [shape: f32[16,8], index: 23, kind: output, shape index: {1}]
  %s24 = inlined_call_operand.vmem [shape: f32[16,8], index: 24, kind: output, shape index: {2}]
  %s25 = inlined_call_operand.vmem [shape: f32[16,8], index: 25, kind: output, shape index: {3}]
  %26 = xla_tuple %s22, %s23, %s24, %s25
  %s27 = sld [smem:[#allocation0]]
  $region122: #{gvp_model_forward.13} parent=0
    _
  %s29 = ssub.s32 1, %s27
  %s30 = scalar_select 0, %s29, %s27
  // Predicated region
  $region2: #{gvp_model_forward.13} parent=0 // pred_check
    _
  $region3: #{gvp_model_forward.13} parent=0 // pred_check_branch
    %32 = sbr.rel (0) target = $region5
  $region4: #{gvp_model_forward.13} parent=0 // pred_region
    _
  $region5: #{gvp_model_forward.13} parent=0 // pred_fallthru
    _
  // Predicated region
  $region6: #{gvp_model_forward.13} parent=0 // pred_check
    _
  $region7: #{gvp_model_forward.13} parent=0 // pred_check_branch
    %34 = sbr.rel (0) target = $region9
  $region8: #{gvp_model_forward.13} parent=0 // pred_region
    _
  $region9: #{gvp_model_forward.13} parent=0 // pred_fallthru
    _
  // Predicated region
  $region10: #{gvp_model_forward.13} parent=0 // pred_check
    _
  $region11: #{gvp_model_forward.13} parent=0 // pred_check_branch
    %36 = sbr.rel (0) target = $region13
  $region12: #{gvp_model_forward.13} parent=0 // pred_region
    _
  $region13: #{gvp_model_forward.13} parent=0 // pred_fallthru
    _
  // Predicated region
  $region14: #{gvp_model_forward.13} parent=0 // pred_check
    _
  $region15: #{gvp_model_forward.13} parent=0 // pred_check_branch
    %38 = sbr.rel (0) target = $region17
  $region16: #{gvp_model_forward.13} parent=0 // pred_region
    _
  $region17: #{gvp_model_forward.13} parent=0 // pred_fallthru
    _
  // Predicated region
  $region18: #{gvp_model_forward.13} parent=0 // pred_check
    _
  $region19: #{gvp_model_forward.13} parent=0 // pred_check_branch
    %40 = sbr.rel (0) target = $region21
  $region20: #{gvp_model_forward.13} parent=0 // pred_region
    _
  $region21: #{gvp_model_forward.13} parent=0 // pred_fallthru
    _
  // Predicated region
  $region22: #{gvp_model_forward.13} parent=0 // pred_check
    _
  $region23: #{gvp_model_forward.13} parent=0 // pred_check_branch
    %42 = sbr.rel (0) target = $region25
  $region24: #{gvp_model_forward.13} parent=0 // pred_region
    _
  $region25: #{gvp_model_forward.13} parent=0 // pred_fallthru
    _
  // Predicated region
  $region26: #{gvp_model_forward.13} parent=0 // pred_check
    _
  $region27: #{gvp_model_forward.13} parent=0 // pred_check_branch
    %44 = sbr.rel (0) target = $region29
  $region28: #{gvp_model_forward.13} parent=0 // pred_region
    _
  $region29: #{gvp_model_forward.13} parent=0 // pred_fallthru
    _
  // Predicated region
  $region30: #{gvp_model_forward.13} parent=0 // pred_check
    _
  $region31: #{gvp_model_forward.13} parent=0 // pred_check_branch
    %46 = sbr.rel (0) target = $region33
  $region32: #{gvp_model_forward.13} parent=0 // pred_region
    _
  $region33: #{gvp_model_forward.13} parent=0 // pred_fallthru
    _
  // Predicated region
  $region34: #{gvp_model_forward.13} parent=0 // pred_check
    _
  $region35: #{gvp_model_forward.13} parent=0 // pred_check_branch
    %48 = sbr.rel (0) target = $region37
  $region36: #{gvp_model_forward.13} parent=0 // pred_region
    _
  $region37: #{gvp_model_forward.13} parent=0 // pred_fallthru
    _
  // Predicated region
  $region38: #{gvp_model_forward.13} parent=0 // pred_check
    _
  $region39: #{gvp_model_forward.13} parent=0 // pred_check_branch
    %50 = sbr.rel (0) target = $region41
  $region40: #{gvp_model_forward.13} parent=0 // pred_region
    _
  $region41: #{gvp_model_forward.13} parent=0 // pred_fallthru
    _
  // Predicated region
  $region42: #{gvp_model_forward.13} parent=0 // pred_check
    _
  $region43: #{gvp_model_forward.13} parent=0 // pred_check_branch
    %52 = sbr.rel (0) target = $region45
  $region44: #{gvp_model_forward.13} parent=0 // pred_region
    _
  $region45: #{gvp_model_forward.13} parent=0 // pred_fallthru
    _
  // Predicated region
  $region46: #{gvp_model_forward.13} parent=0 // pred_check
    _
  $region47: #{gvp_model_forward.13} parent=0 // pred_check_branch
    %54 = sbr.rel (0) target = $region49
  $region48: #{gvp_model_forward.13} parent=0 // pred_region
    _
  $region49: #{gvp_model_forward.13} parent=0 // pred_fallthru
    _
  // Predicated region
  $region50: #{gvp_model_forward.13} parent=0 // pred_check
    _
  $region51: #{gvp_model_forward.13} parent=0 // pred_check_branch
    %56 = sbr.rel (0) target = $region53
  $region52: #{gvp_model_forward.13} parent=0 // pred_region
    _
  $region53: #{gvp_model_forward.13} parent=0 // pred_fallthru
    _
  // Predicated region
  $region54: #{gvp_model_forward.13} parent=0 // pred_check
    _
  $region55: #{gvp_model_forward.13} parent=0 // pred_check_branch
    %58 = sbr.rel (0) target = $region57
  $region56: #{gvp_model_forward.13} parent=0 // pred_region
    _
  $region57: #{gvp_model_forward.13} parent=0 // pred_fallthru
    _
  // Predicated region
  $region58: #{gvp_model_forward.13} parent=0 // pred_check
    _
  $region59: #{gvp_model_forward.13} parent=0 // pred_check_branch
    %60 = sbr.rel (0) target = $region61
  $region60: #{gvp_model_forward.13} parent=0 // pred_region
    _
  $region61: #{gvp_model_forward.13} parent=0 // pred_fallthru
    _
  // Predicated region
  $region62: #{gvp_model_forward.13} parent=0 // pred_check
    _
  $region63: #{gvp_model_forward.13} parent=0 // pred_check_branch
    %62 = sbr.rel (0) target = $region65
  $region64: #{gvp_model_forward.13} parent=0 // pred_region
    _
  $region65: #{gvp_model_forward.13} parent=0 // pred_fallthru
    _
  // Predicated region
  $region66: #{gvp_model_forward.13} parent=0 // pred_check
    _
  $region67: #{gvp_model_forward.13} parent=0 // pred_check_branch
    %64 = sbr.rel (0) target = $region69
  $region68: #{gvp_model_forward.13} parent=0 // pred_region
    _
  $region69: #{gvp_model_forward.13} parent=0 // pred_fallthru
    _
  // Predicated region
  $region70: #{gvp_model_forward.13} parent=0 // pred_check
    _
  $region71: #{gvp_model_forward.13} parent=0 // pred_check_branch
    %66 = sbr.rel (0) target = $region73
  $region72: #{gvp_model_forward.13} parent=0 // pred_region
    _
  $region73: #{gvp_model_forward.13} parent=0 // pred_fallthru
    _
  // Predicated region
  $region74: #{gvp_model_forward.13} parent=0 // pred_check
    _
  $region75: #{gvp_model_forward.13} parent=0 // pred_check_branch
    %68 = sbr.rel (0) target = $region77
  $region76: #{gvp_model_forward.13} parent=0 // pred_region
    _
  $region77: #{gvp_model_forward.13} parent=0 // pred_fallthru
    _
  // Predicated region
  $region78: #{gvp_model_forward.13} parent=0 // pred_check
    _
  $region79: #{gvp_model_forward.13} parent=0 // pred_check_branch
    %70 = sbr.rel (0) target = $region81
  $region80: #{gvp_model_forward.13} parent=0 // pred_region
    _
  $region81: #{gvp_model_forward.13} parent=0 // pred_fallthru
    _
  // Predicated region
  $region82: #{gvp_model_forward.13} parent=0 // pred_check
    _
  $region83: #{gvp_model_forward.13} parent=0 // pred_check_branch
    %72 = sbr.rel (0) target = $region85
  $region84: #{gvp_model_forward.13} parent=0 // pred_region
    _
  $region85: #{gvp_model_forward.13} parent=0 // pred_fallthru
    _
  // Predicated region
  $region86: #{gvp_model_forward.13} parent=0 // pred_check
    _
  $region87: #{gvp_model_forward.13} parent=0 // pred_check_branch
    %74 = sbr.rel (0) target = $region89
  $region88: #{gvp_model_forward.13} parent=0 // pred_region
    _
  $region89: #{gvp_model_forward.13} parent=0 // pred_fallthru
    _
  %v76 = vld [vmem:[%s8] sm:$0x1]
  %v77 = vld [vmem:[%s9] sm:$0x1]
  %v78 = vld [vmem:[%s10] sm:$0xf]
  %v79 = vld [vmem:[%s11] sm:$0xf]
  %v80 = vld [vmem:[%s11 + $0x4] sm:$0xf]
  %v81 = vld [vmem:[%s11 + $0x8] sm:$0xf]
  %v82 = vld [vmem:[%s11 + $0xc] sm:$0xf]
  %v83 = vld [vmem:[%s12] sm:$0xf]
  %v84 = vld [vmem:[%s12 + $0x4] sm:$0xf]
  %v85 = vld [vmem:[%s13] sm:$0x1]
  %v86 = vld [vmem:[%s14] sm:$0xf]
  %v87 = vld [vmem:[%s14 + $0x4] sm:$0xf]
  %v88 = vld [vmem:[%s15] sm:$0xf]
  %v89 = vld [vmem:[%s15 + $0x4] sm:$0xf]
  %v90 = vld [vmem:[%s16] sm:$0xf]
  %v91 = vld [vmem:[%s16 + $0x4] sm:$0xf]
  %v92 = vld [vmem:[%s16 + $0x8] sm:$0xf]
  %v93 = vld [vmem:[%s16 + $0xc] sm:$0xf]
  %v94 = vld [vmem:[%s16 + $0x10] sm:$0xf]
  %v95 = vld [vmem:[%s16 + $0x14] sm:$0xf]
  %v96 = vld [vmem:[%s16 + $0x18] sm:$0xf]
  %v97 = vld [vmem:[%s16 + $0x1c] sm:$0xf]
  %v98 = vld [vmem:[%s16 + $0x20] sm:$0xf]
  %v99 = vld [vmem:[%s16 + $0x24] sm:$0xf]
  %v100 = vld [vmem:[%s16 + $0x28] sm:$0xf]
  %v101 = vld [vmem:[%s16 + $0x2c] sm:$0xf]
  %v102 = vld [vmem:[%s16 + $0x30] sm:$0xf]
  %v103 = vld [vmem:[%s16 + $0x34] sm:$0xf]
  %v104 = vld [vmem:[%s16 + $0x38] sm:$0xf]
  %v105 = vld [vmem:[%s16 + $0x3c] sm:$0xf]
  %v106 = vld [vmem:[%s17] sm:$0xf]
  %v107 = vld [vmem:[%s17 + $0x4] sm:$0xf]
  %v108 = vld [vmem:[%s18] sm:$0x1]
  %v109 = vld [vmem:[%s19] sm:$0xf]
  %v110 = vld [vmem:[%s19 + $0x4] sm:$0xf]
  %v111 = vld [vmem:[%s20] sm:$0x1]
  %v112 = vld [vmem:[%s21] sm:$0x1]
  %v113 = vld [vmem:[%s0] sm:$0xff]
  %v114 = vld [vmem:[%s0 + $0x8] sm:$0xff]
  %v115 = vld [vmem:[%s4] sm:$0xff]
  %v116 = vld [vmem:[%s4 + $0x8] sm:$0xff]
  %v117 = vadd.f32 %v113, %v115
  %v118 = vadd.f32 %v114, %v116
  %v119 = vld [vmem:[%s1] sm:$0xff]
  %v120 = vld [vmem:[%s1 + $0x8] sm:$0xff]
  %v121 = vld [vmem:[%s5] sm:$0xff]
  %v122 = vld [vmem:[%s5 + $0x8] sm:$0xff]
  %v123 = vadd.f32 %v119, %v121
  %v124 = vadd.f32 %v120, %v122
  %v125 = vld [vmem:[%s2] sm:$0xff]
  %v126 = vld [vmem:[%s2 + $0x8] sm:$0xff]
  %v127 = vld [vmem:[%s6] sm:$0xff]
  %v128 = vld [vmem:[%s6 + $0x8] sm:$0xff]
  %v129 = vadd.f32 %v125, %v127
  %v130 = vadd.f32 %v126, %v128
  %v131 = vld [vmem:[%s3] sm:$0xff]
  %v132 = vld [vmem:[%s3 + $0x8] sm:$0xff]
  %v133 = vld [vmem:[%s7] sm:$0xff]
  %v134 = vld [vmem:[%s7 + $0x8] sm:$0xff]
  %v135 = vadd.f32 %v131, %v133
  %v136 = vadd.f32 %v132, %v134
  %vm137 = vcmask 261120
  %v138 = vsel %vm137, %v117, 0.0
  %139 = vadd.xlane.f32.xlu0 %v138
  %v140 = vpop.xlane.xlu0 %139
  %v141 = vsel %vm137, %v118, 0.0
  %142 = vadd.xlane.f32.xlu0 %v141
  %v143 = vpop.xlane.xlu0 %142
  %v144 = vrcp.pop 32.0
  %v145 = vmul.f32 32.0, %v144
  %v146 = vsub.f32 1.0, %v145
  %v147 = vmul.f32 %v144, %v146
  %v148 = vadd.f32 %v144, %v147
  %vm149 = vweird.f32 %v144
  %v150 = vsel %vm149, %v144, %v148
  %v151 = vmul.f32 %v140, %v150
  %v152 = vmul.f32 %v143, %v150
  %v153 = vsub.f32 %v117, %v151
  %v154 = vsub.f32 %v118, %v152
  %v155 = vmul.f32 %v153, %v153
  %v156 = vmul.f32 %v154, %v154
  %v157 = vsel %vm137, %v155, 0.0
  %158 = vadd.xlane.f32.xlu0 %v157
  %v159 = vpop.xlane.xlu0 %158
  %v160 = vsel %vm137, %v156, 0.0
  %161 = vadd.xlane.f32.xlu0 %v160
  %v162 = vpop.xlane.xlu0 %161
  %v163 = vmul.f32 %v159, %v150
  %v164 = vmul.f32 %v162, %v150
  %v165 = vadd.f32 %v163, 1e-05
  %v166 = vadd.f32 %v164, 1e-05
  %v167 = vrsqrt.pop %v165
  %v168 = vmul.f32 %v167, %v165
  %v169 = vmul.f32 %v168, %v167
  %v170 = vmul.f32 0.5, %v169
  %v171 = vsub.f32 1.5, %v170
  %v172 = vmul.f32 %v167, %v171
  %vm173 = vweird.f32 %v165
  %vm174 = vweird.f32 %v167
  %vm175 = vmor %vm173, %vm174
  %v176 = vsel %vm175, %v167, %v172
  %v177 = vrsqrt.pop %v166
  %v178 = vmul.f32 %v177, %v166
  %v179 = vmul.f32 %v178, %v177
  %v180 = vmul.f32 0.5, %v179
  %v181 = vsub.f32 1.5, %v180
  %v182 = vmul.f32 %v177, %v181
  %vm183 = vweird.f32 %v166
  %vm184 = vweird.f32 %v177
  %vm185 = vmor %vm183, %vm184
  %v186 = vsel %vm185, %v177, %v182
  %v187 = vmul.f32 %v153, %v176
  %v188 = vmul.f32 %v154, %v186
  %v190 = vperm.slane %v76, 0
  %v192 = vmul.f32 %v187, %v190
  %v193 = vmul.f32 %v188, %v190
  %v195 = vperm.slane %v77, 0
  %v197 = vadd.f32 %v192, %v195
  %v198 = vadd.f32 %v193, %v195
  %v199 = vmul.f32 %v123, %v123
  %v200 = vmul.f32 %v124, %v124
  %v201 = vmul.f32 %v129, %v129
  %v202 = vmul.f32 %v130, %v130
  %v203 = vadd.f32 %v199, %v201
  %v204 = vadd.f32 %v200, %v202
  %v205 = vmul.f32 %v135, %v135
  %v206 = vmul.f32 %v136, %v136
  %v207 = vadd.f32 %v203, %v205
  %v208 = vadd.f32 %v204, %v206
  %v209 = vmax.f32 %v207, 1e-08
  %v210 = vmax.f32 %v208, 1e-08
  %vm211 = vcmask 64512
  %v212 = vsel %vm211, %v209, 0.0
  %213 = vadd.xlane.f32.xlu0 %v212
  %v214 = vpop.xlane.xlu0 %213
  %v215 = vsel %vm211, %v210, 0.0
  %216 = vadd.xlane.f32.xlu0 %v215
  %v217 = vpop.xlane.xlu0 %216
  %v218 = vrcp.pop 8.0
  %v219 = vmul.f32 8.0, %v218
  %v220 = vsub.f32 1.0, %v219
  %v221 = vmul.f32 %v218, %v220
  %v222 = vadd.f32 %v218, %v221
  %vm223 = vweird.f32 %v218
  %v224 = vsel %vm223, %v218, %v222
  %v225 = vmul.f32 %v214, %v224
  %v226 = vmul.f32 %v217, %v224
  %v227 = vrsqrt.pop %v225
  %v228 = vmul.f32 %v227, %v225
  %v229 = vmul.f32 %v228, %v227
  %v230 = vmul.f32 0.5, %v229
  %v231 = vsub.f32 1.5, %v230
  %v232 = vmul.f32 %v227, %v231
  %vm233 = vweird.f32 %v225
  %vm234 = vweird.f32 %v227
  %vm235 = vmor %vm233, %vm234
  %v236 = vsel %vm235, %v227, %v232
  %v237 = vrsqrt.pop %v226
  %v238 = vmul.f32 %v237, %v226
  %v239 = vmul.f32 %v238, %v237
  %v240 = vmul.f32 0.5, %v239
  %v241 = vsub.f32 1.5, %v240
  %v242 = vmul.f32 %v237, %v241
  %vm243 = vweird.f32 %v226
  %vm244 = vweird.f32 %v237
  %vm245 = vmor %vm243, %vm244
  %v246 = vsel %vm245, %v237, %v242
  %v247 = vmul.f32 %v123, %v236
  %v248 = vmul.f32 %v124, %v246
  %v249 = vmul.f32 %v129, %v236
  %v250 = vmul.f32 %v130, %v246
  %v251 = vmul.f32 %v135, %v236
  %v252 = vmul.f32 %v136, %v246
  %v253 = vpack.c.bf16 %v248, %v247
  %v254 = vpack.c.bf16 %v250, %v249
  %v255 = vpack.c.bf16 %v252, %v251
  %v257 = vsel %vm211, %v253, 0
  %v260 = vsel %vm211, %v254, 0
  %v263 = vsel %vm211, %v255, 0
  %vm265 = vcmask 1043456
  %v267 = vsel %vm265, %v78, 0
  %269 = vmatpush.bf16.msra.mxu0 0
  %270 = vmatpush.bf16.msra.mxu0 0
  %271 = vmatpush.bf16.msra.mxu0 0
  %272 = vmatpush.bf16.msra.mxu0 0
  %273 = vmatpush.bf16.msra.mxu0 0
  %274 = vmatpush.bf16.msra.mxu0 0
  %275 = vmatpush.bf16.msra.mxu0 0
  %276 = vmatpush.bf16.msra.mxu0 %v267
  %277 = vmatmul.bf16.gmra.mxu0 %v257
  %v278 = vpop.f32.mrf.mxu0
  %v279 = vadd.f32 0.0, %v278
  %v280 = vpop.f32.mrf.mxu0
  %v281 = vadd.f32 0.0, %v280
  %282 = vmatmul.bf16.gmra.mxu0 %v260
  %v283 = vpop.f32.mrf.mxu0
  %v284 = vadd.f32 0.0, %v283
  %v285 = vpop.f32.mrf.mxu0
  %v286 = vadd.f32 0.0, %v285
  %287 = vmatmul.bf16.gmra.mxu0 %v263
  %v288 = vpop.f32.mrf.mxu0
  %v289 = vadd.f32 0.0, %v288
  %v290 = vpop.f32.mrf.mxu0
  %v291 = vadd.f32 0.0, %v290
  %292 = vdwg.mxu0
  %v293 = vmul.f32 %v279, %v279
  %v294 = vmul.f32 %v281, %v281
  %v295 = vmul.f32 %v284, %v284
  %v296 = vmul.f32 %v286, %v286
  %v297 = vadd.f32 %v293, %v295
  %v298 = vadd.f32 %v294, %v296
  %v299 = vmul.f32 %v289, %v289
  %v300 = vmul.f32 %v291, %v291
  %v301 = vadd.f32 %v297, %v299
  %v302 = vadd.f32 %v298, %v300
  %v303 = vmax.f32 %v301, 1e-08
  %v304 = vmax.f32 %v302, 1e-08
  %v305 = vrsqrt.pop %v303
  %v306 = vmul.f32 %v305, %v303
  %v307 = vmul.f32 %v306, %v305
  %v308 = vmul.f32 0.5, %v307
  %v309 = vsub.f32 1.5, %v308
  %v310 = vmul.f32 %v305, %v309
  %v311 = vmul.f32 %v303, %v310
  %vm312 = vcmp.eq.f32.partialorder %v303, inf
  %v313 = vsel %vm312, %v303, %v311
  %vm314 = vcmp.eq.f32.partialorder %v303, 0.0
  %v315 = vand.u32 %v303, 2147483648
  %v316 = vsel %vm314, %v315, %v313
  %v317 = vrsqrt.pop %v304
  %v318 = vmul.f32 %v317, %v304
  %v319 = vmul.f32 %v318, %v317
  %v320 = vmul.f32 0.5, %v319
  %v321 = vsub.f32 1.5, %v320
  %v322 = vmul.f32 %v317, %v321
  %v323 = vmul.f32 %v304, %v322
  %vm324 = vcmp.eq.f32.partialorder %v304, inf
  %v325 = vsel %vm324, %v304, %v323
  %vm326 = vcmp.eq.f32.partialorder %v304, 0.0
  %v327 = vand.u32 %v304, 2147483648
  %v328 = vsel %vm326, %v327, %v325
  %v329 = vpack.c.bf16 %v198, %v197
  %v330 = vpack.c.bf16 %v328, %v316
  %v333 = vunpack.c.l.b16 %v83
  %v334 = vunpack.c.l.b16 %v84
  %v335 = vpack.c.b16 %v334, %v333
  %vm337 = vcmask 130048
  %v339 = vsel %vm337, %v330, 0
  %341 = vmatpush.bf16.msra.mxu0 0
  %342 = vmatpush.bf16.msra.mxu0 0
  %343 = vmatpush.bf16.msra.mxu0 0
  %344 = vmatpush.bf16.msra.mxu0 0
  %345 = vmatpush.bf16.msra.mxu0 0
  %346 = vmatpush.bf16.msra.mxu0 0
  %347 = vmatpush.bf16.msra.mxu0 0
  %348 = vmatpush.bf16.msra.mxu0 %v335
  %349 = vmatmul.bf16.gmra.mxu0 %v339
  %v350 = vpop.f32.mrf.mxu0
  %v351 = vadd.f32 0.0, %v350
  %v352 = vpop.f32.mrf.mxu0
  %v353 = vadd.f32 0.0, %v352
  %354 = vdwg.mxu0
  %v359 = vunpack.c.l.b16 %v79
  %v360 = vunpack.c.l.b16 %v80
  %v361 = vunpack.c.l.b16 %v81
  %v362 = vunpack.c.l.b16 %v82
  %v363 = vpack.c.b16 %v360, %v359
  %v364 = vpack.c.b16 %v362, %v361
  %v368 = vsel %vm137, %v329, 0
  %370 = vmatpush.bf16.msra.mxu0 0
  %371 = vmatpush.bf16.msra.mxu0 0
  %372 = vmatpush.bf16.msra.mxu0 0
  %373 = vmatpush.bf16.msra.mxu0 0
  %374 = vmatpush.bf16.msra.mxu0 0
  %375 = vmatpush.bf16.msra.mxu0 0
  %376 = vmatpush.bf16.msra.mxu0 %v364
  %377 = vmatpush.bf16.msra.mxu0 %v363
  %378 = vmatmul.bf16.gmra.mxu0 %v368
  %v379 = vpop.f32.mrf.mxu0
  %v380 = vadd.f32 %v351, %v379
  %v381 = vpop.f32.mrf.mxu0
  %v382 = vadd.f32 %v353, %v381
  %383 = vdwg.mxu0
  %v385 = vperm.slane %v85, 0
  %v387 = vadd.f32 %v380, %v385
  %v388 = vadd.f32 %v382, %v385
  %v389 = vmax.f32 %v387, 0.0
  %v390 = vmax.f32 %v388, 0.0
  %v391 = vpack.c.bf16 %v281, %v279
  %v392 = vpack.c.bf16 %v286, %v284
  %v393 = vpack.c.bf16 %v291, %v289
  %v396 = vunpack.c.l.b16 %v86
  %v397 = vunpack.c.l.b16 %v87
  %v398 = vpack.c.b16 %v397, %v396
  %v401 = vsel %vm337, %v391, 0
  %v404 = vsel %vm337, %v392, 0
  %v407 = vsel %vm337, %v393, 0
  %409 = vmatpush.bf16.msra.mxu0 0
  %410 = vmatpush.bf16.msra.mxu0 0
  %411 = vmatpush.bf16.msra.mxu0 0
  %412 = vmatpush.bf16.msra.mxu0 0
  %413 = vmatpush.bf16.msra.mxu0 0
  %414 = vmatpush.bf16.msra.mxu0 0
  %415 = vmatpush.bf16.msra.mxu0 0
  %416 = vmatpush.bf16.msra.mxu0 %v398
  %417 = vmatmul.bf16.gmra.mxu0 %v401
  %v418 = vpop.f32.mrf.mxu0
  %v419 = vadd.f32 0.0, %v418
  %v420 = vpop.f32.mrf.mxu0
  %v421 = vadd.f32 0.0, %v420
  %422 = vmatmul.bf16.gmra.mxu0 %v404
  %v423 = vpop.f32.mrf.mxu0
  %v424 = vadd.f32 0.0, %v423
  %v425 = vpop.f32.mrf.mxu0
  %v426 = vadd.f32 0.0, %v425
  %427 = vmatmul.bf16.gmra.mxu0 %v407
  %v428 = vpop.f32.mrf.mxu0
  %v429 = vadd.f32 0.0, %v428
  %v430 = vpop.f32.mrf.mxu0
  %v431 = vadd.f32 0.0, %v430
  %432 = vdwg.mxu0
  %v433 = vmul.f32 %v419, %v419
  %v434 = vmul.f32 %v421, %v421
  %v435 = vmul.f32 %v424, %v424
  %v436 = vmul.f32 %v426, %v426
  %v437 = vadd.f32 %v433, %v435
  %v438 = vadd.f32 %v434, %v436
  %v439 = vmul.f32 %v429, %v429
  %v440 = vmul.f32 %v431, %v431
  %v441 = vadd.f32 %v437, %v439
  %v442 = vadd.f32 %v438, %v440
  %v443 = vmax.f32 %v441, 1e-08
  %v444 = vmax.f32 %v442, 1e-08
  %v445 = vrsqrt.pop %v443
  %v446 = vmul.f32 %v445, %v443
  %v447 = vmul.f32 %v446, %v445
  %v448 = vmul.f32 0.5, %v447
  %v449 = vsub.f32 1.5, %v448
  %v450 = vmul.f32 %v445, %v449
  %v451 = vmul.f32 %v443, %v450
  %vm452 = vcmp.eq.f32.partialorder %v443, inf
  %v453 = vsel %vm452, %v443, %v451
  %vm454 = vcmp.eq.f32.partialorder %v443, 0.0
  %v455 = vand.u32 %v443, 2147483648
  %v456 = vsel %vm454, %v455, %v453
  %v457 = vrsqrt.pop %v444
  %v458 = vmul.f32 %v457, %v444
  %v459 = vmul.f32 %v458, %v457
  %v460 = vmul.f32 0.5, %v459
  %v461 = vsub.f32 1.5, %v460
  %v462 = vmul.f32 %v457, %v461
  %v463 = vmul.f32 %v444, %v462
  %vm464 = vcmp.eq.f32.partialorder %v444, inf
  %v465 = vsel %vm464, %v444, %v463
  %vm466 = vcmp.eq.f32.partialorder %v444, 0.0
  %v467 = vand.u32 %v444, 2147483648
  %v468 = vsel %vm466, %v467, %v465
  %v469 = vxor.u32 %v456, 2147483648
  %v470 = vxor.u32 %v468, 2147483648
  %v471 = vmul.f32 %v469, 1.442695
  %v472 = vpow.pop %v471
  %v473 = vmul.f32 %v470, 1.442695
  %v474 = vpow.pop %v473
  %v475 = vadd.f32 %v472, 1.0
  %v476 = vadd.f32 %v474, 1.0
  %v477 = vrcp.pop %v475
  %v478 = vmul.f32 %v475, %v477
  %v479 = vsub.f32 1.0, %v478
  %v480 = vmul.f32 %v477, %v479
  %v481 = vadd.f32 %v477, %v480
  %vm482 = vweird.f32 %v475
  %vm483 = vweird.f32 %v477
  %vm484 = vmor %vm482, %vm483
  %v485 = vsel %vm484, %v477, %v481
  %v486 = vand.u32 2147483647, %v475
  %vm487 = vcmp.eq.f32.partialorder %v486, 8.507059e+37
  %v488 = vand.u32 %v475, 2147483648
  %v489 = vor.u32 1.1754944e-38, %v488
  %v490 = vsel %vm487, %v489, %v485
  %v491 = vmul.f32 1.0, %v490
  %v492 = vrcp.pop %v476
  %v493 = vmul.f32 %v476, %v492
  %v494 = vsub.f32 1.0, %v493
  %v495 = vmul.f32 %v492, %v494
  %v496 = vadd.f32 %v492, %v495
  %vm497 = vweird.f32 %v476
  %vm498 = vweird.f32 %v492
  %vm499 = vmor %vm497, %vm498
  %v500 = vsel %vm499, %v492, %v496
  %v501 = vand.u32 2147483647, %v476
  %vm502 = vcmp.eq.f32.partialorder %v501, 8.507059e+37
  %v503 = vand.u32 %v476, 2147483648
  %v504 = vor.u32 1.1754944e-38, %v503
  %v505 = vsel %vm502, %v504, %v500
  %v506 = vmul.f32 1.0, %v505
  %v507 = vmul.f32 %v419, %v491
  %v508 = vmul.f32 %v421, %v506
  %v509 = vmul.f32 %v424, %v491
  %v510 = vmul.f32 %v426, %v506
  %v511 = vmul.f32 %v429, %v491
  %v512 = vmul.f32 %v431, %v506
  %v513 = vpack.c.bf16 %v508, %v507
  %v514 = vpack.c.bf16 %v510, %v509
  %v515 = vpack.c.bf16 %v512, %v511
  %v518 = vunpack.c.l.b16 %v88
  %v519 = vunpack.c.l.b16 %v89
  %v520 = vpack.c.b16 %v519, %v518
  %v523 = vsel %vm337, %v513, 0
  %v526 = vsel %vm337, %v514, 0
  %v529 = vsel %vm337, %v515, 0
  %531 = vmatpush.bf16.msra.mxu0 0
  %532 = vmatpush.bf16.msra.mxu0 0
  %533 = vmatpush.bf16.msra.mxu0 0
  %534 = vmatpush.bf16.msra.mxu0 0
  %535 = vmatpush.bf16.msra.mxu0 0
  %536 = vmatpush.bf16.msra.mxu0 0
  %537 = vmatpush.bf16.msra.mxu0 0
  %538 = vmatpush.bf16.msra.mxu0 %v520
  %539 = vmatmul.bf16.gmra.mxu0 %v523
  %v540 = vpop.f32.mrf.mxu0
  %v541 = vadd.f32 0.0, %v540
  %v542 = vpop.f32.mrf.mxu0
  %v543 = vadd.f32 0.0, %v542
  %544 = vmatmul.bf16.gmra.mxu0 %v526
  %v545 = vpop.f32.mrf.mxu0
  %v546 = vadd.f32 0.0, %v545
  %v547 = vpop.f32.mrf.mxu0
  %v548 = vadd.f32 0.0, %v547
  %549 = vmatmul.bf16.gmra.mxu0 %v529
  %v550 = vpop.f32.mrf.mxu0
  %v551 = vadd.f32 0.0, %v550
  %v552 = vpop.f32.mrf.mxu0
  %v553 = vadd.f32 0.0, %v552
  %554 = vdwg.mxu0
  %v555 = vmul.f32 %v541, %v541
  %v556 = vmul.f32 %v543, %v543
  %v557 = vmul.f32 %v546, %v546
  %v558 = vmul.f32 %v548, %v548
  %v559 = vadd.f32 %v555, %v557
  %v560 = vadd.f32 %v556, %v558
  %v561 = vmul.f32 %v551, %v551
  %v562 = vmul.f32 %v553, %v553
  %v563 = vadd.f32 %v559, %v561
  %v564 = vadd.f32 %v560, %v562
  %v565 = vmax.f32 %v563, 1e-08
  %v566 = vmax.f32 %v564, 1e-08
  %v567 = vrsqrt.pop %v565
  %v568 = vmul.f32 %v567, %v565
  %v569 = vmul.f32 %v568, %v567
  %v570 = vmul.f32 0.5, %v569
  %v571 = vsub.f32 1.5, %v570
  %v572 = vmul.f32 %v567, %v571
  %v573 = vmul.f32 %v565, %v572
  %vm574 = vcmp.eq.f32.partialorder %v565, inf
  %v575 = vsel %vm574, %v565, %v573
  %vm576 = vcmp.eq.f32.partialorder %v565, 0.0
  %v577 = vand.u32 %v565, 2147483648
  %v578 = vsel %vm576, %v577, %v575
  %v579 = vrsqrt.pop %v566
  %v580 = vmul.f32 %v579, %v566
  %v581 = vmul.f32 %v580, %v579
  %v582 = vmul.f32 0.5, %v581
  %v583 = vsub.f32 1.5, %v582
  %v584 = vmul.f32 %v579, %v583
  %v585 = vmul.f32 %v566, %v584
  %vm586 = vcmp.eq.f32.partialorder %v566, inf
  %v587 = vsel %vm586, %v566, %v585
  %vm588 = vcmp.eq.f32.partialorder %v566, 0.0
  %v589 = vand.u32 %v566, 2147483648
  %v590 = vsel %vm588, %v589, %v587
  %v591 = vpack.c.bf16 %v390, %v389
  %v592 = vpack.c.bf16 %v590, %v578
  %v595 = vunpack.c.l.b16 %v106
  %v596 = vunpack.c.l.b16 %v107
  %v597 = vpack.c.b16 %v596, %v595
  %v600 = vsel %vm337, %v592, 0
  %602 = vmatpush.bf16.msra.mxu0 0
  %603 = vmatpush.bf16.msra.mxu0 0
  %604 = vmatpush.bf16.msra.mxu0 0
  %605 = vmatpush.bf16.msra.mxu0 0
  %606 = vmatpush.bf16.msra.mxu0 0
  %607 = vmatpush.bf16.msra.mxu0 0
  %608 = vmatpush.bf16.msra.mxu0 0
  %609 = vmatpush.bf16.msra.mxu0 %v597
  %610 = vmatmul.bf16.gmra.mxu0 %v600
  %v611 = vpop.f32.mrf.mxu0
  %v612 = vadd.f32 0.0, %v611
  %v613 = vpop.f32.mrf.mxu0
  %v614 = vadd.f32 0.0, %v613
  %615 = vdwg.mxu0
  %v632 = vunpack.c.l.b16 %v90
  %v633 = vunpack.c.l.b16 %v91
  %v634 = vunpack.c.l.b16 %v92
  %v635 = vunpack.c.l.b16 %v93
  %v636 = vunpack.c.l.b16 %v94
  %v637 = vunpack.c.l.b16 %v95
  %v638 = vunpack.c.l.b16 %v96
  %v639 = vunpack.c.l.b16 %v97
  %v640 = vunpack.c.l.b16 %v98
  %v641 = vunpack.c.l.b16 %v99
  %v642 = vunpack.c.l.b16 %v100
  %v643 = vunpack.c.l.b16 %v101
  %v644 = vunpack.c.l.b16 %v102
  %v645 = vunpack.c.l.b16 %v103
  %v646 = vunpack.c.l.b16 %v104
  %v647 = vunpack.c.l.b16 %v105
  %v648 = vpack.c.b16 %v633, %v632
  %v649 = vpack.c.b16 %v635, %v634
  %v650 = vpack.c.b16 %v637, %v636
  %v651 = vpack.c.b16 %v639, %v638
  %v652 = vpack.c.b16 %v641, %v640
  %v653 = vpack.c.b16 %v643, %v642
  %v654 = vpack.c.b16 %v645, %v644
  %v655 = vpack.c.b16 %v647, %v646
  %664 = vmatpush.bf16.msra.mxu0 %v655
  %665 = vmatpush.bf16.msra.mxu0 %v654
  %666 = vmatpush.bf16.msra.mxu0 %v653
  %667 = vmatpush.bf16.msra.mxu0 %v652
  %668 = vmatpush.bf16.msra.mxu0 %v651
  %669 = vmatpush.bf16.msra.mxu0 %v650
  %670 = vmatpush.bf16.msra.mxu0 %v649
  %671 = vmatpush.bf16.msra.mxu0 %v648
  %672 = vmatmul.bf16.gmra.mxu0 %v591
  %v673 = vpop.f32.mrf.mxu0
  %v674 = vadd.f32 %v612, %v673
  %v675 = vpop.f32.mrf.mxu0
  %v676 = vadd.f32 %v614, %v675
  %677 = vdwg.mxu0
  %v679 = vperm.slane %v108, 0
  %v681 = vadd.f32 %v674, %v679
  %v682 = vadd.f32 %v676, %v679
  %v683 = vpack.c.bf16 %v543, %v541
  %v684 = vpack.c.bf16 %v548, %v546
  %v685 = vpack.c.bf16 %v553, %v551
  %v688 = vunpack.c.l.b16 %v109
  %v689 = vunpack.c.l.b16 %v110
  %v690 = vpack.c.b16 %v689, %v688
  %v693 = vsel %vm337, %v683, 0
  %v696 = vsel %vm337, %v684, 0
  %v699 = vsel %vm337, %v685, 0
  %701 = vmatpush.bf16.msra.mxu0 0
  %702 = vmatpush.bf16.msra.mxu0 0
  %703 = vmatpush.bf16.msra.mxu0 0
  %704 = vmatpush.bf16.msra.mxu0 0
  %705 = vmatpush.bf16.msra.mxu0 0
  %706 = vmatpush.bf16.msra.mxu0 0
  %707 = vmatpush.bf16.msra.mxu0 0
  %708 = vmatpush.bf16.msra.mxu0 %v690
  %709 = vmatmul.bf16.gmra.mxu0 %v693
  %v710 = vpop.f32.mrf.mxu0
  %v711 = vadd.f32 0.0, %v710
  %v712 = vpop.f32.mrf.mxu0
  %v713 = vadd.f32 0.0, %v712
  %714 = vmatmul.bf16.gmra.mxu0 %v696
  %v715 = vpop.f32.mrf.mxu0
  %v716 = vadd.f32 0.0, %v715
  %v717 = vpop.f32.mrf.mxu0
  %v718 = vadd.f32 0.0, %v717
  %719 = vmatmul.bf16.gmra.mxu0 %v699
  %v720 = vpop.f32.mrf.mxu0
  %v721 = vadd.f32 0.0, %v720
  %v722 = vpop.f32.mrf.mxu0
  %v723 = vadd.f32 0.0, %v722
  %724 = vdwg.mxu0
  %v725 = vadd.f32 %v197, %v681
  %v726 = vadd.f32 %v198, %v682
  %v727 = vadd.f32 %v247, %v711
  %v728 = vadd.f32 %v248, %v713
  %v729 = vadd.f32 %v249, %v716
  %v730 = vadd.f32 %v250, %v718
  %v731 = vadd.f32 %v251, %v721
  %v732 = vadd.f32 %v252, %v723
  %v733 = vsel %vm137, %v725, 0.0
  %734 = vadd.xlane.f32.xlu0 %v733
  %v735 = vpop.xlane.xlu0 %734
  %v736 = vsel %vm137, %v726, 0.0
  %737 = vadd.xlane.f32.xlu0 %v736
  %v738 = vpop.xlane.xlu0 %737
  %v739 = vmul.f32 %v735, %v150
  %v740 = vmul.f32 %v738, %v150
  %v741 = vsub.f32 %v725, %v739
  %v742 = vsub.f32 %v726, %v740
  %v743 = vmul.f32 %v741, %v741
  %v744 = vmul.f32 %v742, %v742
  %v745 = vsel %vm137, %v743, 0.0
  %746 = vadd.xlane.f32.xlu0 %v745
  %v747 = vpop.xlane.xlu0 %746
  %v748 = vsel %vm137, %v744, 0.0
  %749 = vadd.xlane.f32.xlu0 %v748
  %v750 = vpop.xlane.xlu0 %749
  %v751 = vmul.f32 %v747, %v150
  %v752 = vmul.f32 %v750, %v150
  %v753 = vadd.f32 %v751, 1e-05
  %v754 = vadd.f32 %v752, 1e-05
  %v755 = vrsqrt.pop %v753
  %v756 = vmul.f32 %v755, %v753
  %v757 = vmul.f32 %v756, %v755
  %v758 = vmul.f32 0.5, %v757
  %v759 = vsub.f32 1.5, %v758
  %v760 = vmul.f32 %v755, %v759
  %vm761 = vweird.f32 %v753
  %vm762 = vweird.f32 %v755
  %vm763 = vmor %vm761, %vm762
  %v764 = vsel %vm763, %v755, %v760
  %v765 = vrsqrt.pop %v754
  %v766 = vmul.f32 %v765, %v754
  %v767 = vmul.f32 %v766, %v765
  %v768 = vmul.f32 0.5, %v767
  %v769 = vsub.f32 1.5, %v768
  %v770 = vmul.f32 %v765, %v769
  %vm771 = vweird.f32 %v754
  %vm772 = vweird.f32 %v765
  %vm773 = vmor %vm771, %vm772
  %v774 = vsel %vm773, %v765, %v770
  %v775 = vmul.f32 %v741, %v764
  %v776 = vmul.f32 %v742, %v774
  %v778 = vperm.slane %v111, 0
  %v780 = vmul.f32 %v775, %v778
  %v781 = vmul.f32 %v776, %v778
  %v783 = vperm.slane %v112, 0
  %v785 = vadd.f32 %v780, %v783
  %v786 = vadd.f32 %v781, %v783
  %v787 = vmul.f32 %v727, %v727
  %v788 = vmul.f32 %v728, %v728
  %v789 = vmul.f32 %v729, %v729
  %v790 = vmul.f32 %v730, %v730
  %v791 = vadd.f32 %v787, %v789
  %v792 = vadd.f32 %v788, %v790
  %v793 = vmul.f32 %v731, %v731
  %v794 = vmul.f32 %v732, %v732
  %v795 = vadd.f32 %v791, %v793
  %v796 = vadd.f32 %v792, %v794
  %v797 = vmax.f32 %v795, 1e-08
  %v798 = vmax.f32 %v796, 1e-08
  %v799 = vsel %vm211, %v797, 0.0
  %800 = vadd.xlane.f32.xlu0 %v799
  %v801 = vpop.xlane.xlu0 %800
  %v802 = vsel %vm211, %v798, 0.0
  %803 = vadd.xlane.f32.xlu0 %v802
  %v804 = vpop.xlane.xlu0 %803
  %v805 = vmul.f32 %v801, %v224
  %v806 = vmul.f32 %v804, %v224
  %v807 = vrsqrt.pop %v805
  %v808 = vmul.f32 %v807, %v805
  %v809 = vmul.f32 %v808, %v807
  %v810 = vmul.f32 0.5, %v809
  %v811 = vsub.f32 1.5, %v810
  %v812 = vmul.f32 %v807, %v811
  %vm813 = vweird.f32 %v805
  %vm814 = vweird.f32 %v807
  %vm815 = vmor %vm813, %vm814
  %v816 = vsel %vm815, %v807, %v812
  %v817 = vrsqrt.pop %v806
  %v818 = vmul.f32 %v817, %v806
  %v819 = vmul.f32 %v818, %v817
  %v820 = vmul.f32 0.5, %v819
  %v821 = vsub.f32 1.5, %v820
  %v822 = vmul.f32 %v817, %v821
  %vm823 = vweird.f32 %v806
  %vm824 = vweird.f32 %v817
  %vm825 = vmor %vm823, %vm824
  %v826 = vsel %vm825, %v817, %v822
  %v827 = vmul.f32 %v727, %v816
  %v828 = vmul.f32 %v728, %v826
  %v829 = vmul.f32 %v729, %v816
  %v830 = vmul.f32 %v730, %v826
  %v831 = vmul.f32 %v731, %v816
  %v832 = vmul.f32 %v732, %v826
  %833 = vst.msk [vmem:[%s22] sm:$0xff] %vm137, %v785
  %834 = vst.msk [vmem:[%s22 + $0x8] sm:$0xff] %vm137, %v786
  %835 = vst.msk [vmem:[%s23] sm:$0xff] %vm211, %v827
  %836 = vst.msk [vmem:[%s23 + $0x8] sm:$0xff] %vm211, %v828
  %837 = vst.msk [vmem:[%s24] sm:$0xff] %vm211, %v829
  %838 = vst.msk [vmem:[%s24 + $0x8] sm:$0xff] %vm211, %v830
  %839 = vst.msk [vmem:[%s25] sm:$0xff] %vm211, %v831
  %840 = vst.msk [vmem:[%s25 + $0x8] sm:$0xff] %vm211, %v832
  // Predicated region
  $region90: #{gvp_model_forward.13} parent=0 // pred_check
    _
  $region91: #{gvp_model_forward.13} parent=0 // pred_check_branch
    %842 = sbr.rel (0) target = $region93
  $region92: #{gvp_model_forward.13} parent=0 // pred_region
    _
  $region93: #{gvp_model_forward.13} parent=0 // pred_fallthru
    _
  // Predicated region
  $region94: #{gvp_model_forward.13} parent=0 // pred_check
    _
  $region95: #{gvp_model_forward.13} parent=0 // pred_check_branch
    %844 = sbr.rel (0) target = $region97
  $region96: #{gvp_model_forward.13} parent=0 // pred_region
    _
  $region97: #{gvp_model_forward.13} parent=0 // pred_fallthru
    _
  // Predicated region
  $region98: #{gvp_model_forward.13} parent=0 // pred_check
    _
  $region99: #{gvp_model_forward.13} parent=0 // pred_check_branch
    %846 = sbr.rel (0) target = $region101
  $region100: #{gvp_model_forward.13} parent=0 // pred_region
    _
  $region101: #{gvp_model_forward.13} parent=0 // pred_fallthru
    _
  // Predicated region
  $region102: #{gvp_model_forward.13} parent=0 // pred_check
    _
  $region103: #{gvp_model_forward.13} parent=0 // pred_check_branch
    %848 = sbr.rel (0) target = $region105
  $region104: #{gvp_model_forward.13} parent=0 // pred_region
    _
  $region105: #{gvp_model_forward.13} parent=0 // pred_fallthru
    _
  // Predicated region
  $region106: #{gvp_model_forward.13} parent=0 // pred_check
    _
  $region107: #{gvp_model_forward.13} parent=0 // pred_check_branch
    %850 = sbr.rel (0) target = $region109
  $region108: #{gvp_model_forward.13} parent=0 // pred_region
    _
  $region109: #{gvp_model_forward.13} parent=0 // pred_fallthru
    _
  // Predicated region
  $region110: #{gvp_model_forward.13} parent=0 // pred_check
    _
  $region111: #{gvp_model_forward.13} parent=0 // pred_check_branch
    %852 = sbr.rel (0) target = $region113
  $region112: #{gvp_model_forward.13} parent=0 // pred_region
    _
  $region113: #{gvp_model_forward.13} parent=0 // pred_fallthru
    _
  // Predicated region
  $region114: #{gvp_model_forward.13} parent=0 // pred_check
    _
  $region115: #{gvp_model_forward.13} parent=0 // pred_check_branch
    %854 = sbr.rel (0) target = $region117
  $region116: #{gvp_model_forward.13} parent=0 // pred_region
    _
  $region117: #{gvp_model_forward.13} parent=0 // pred_fallthru
    _
  // Predicated region
  $region118: #{gvp_model_forward.13} parent=0 // pred_check
    _
  $region119: #{gvp_model_forward.13} parent=0 // pred_check_branch
    %856 = sbr.rel (0) target = $region121
  $region120: #{gvp_model_forward.13} parent=0 // pred_region
    _
  $region121: #{gvp_model_forward.13} parent=0 // pred_fallthru
    _

// kernel: gvp_model_forward.17
$region0: #{gvp_model_forward.17}
  #allocation0 [shape = 'u32[]', space=smem, size = 0x4, offset = 0x4, fixed_abs, tag = 'smem constant byte address 0x4 - core index']
  #allocation1 [shape = 'u32[72,128]{1,0:T(1,128)}', space=vmem, size = 0x9000, scoped, tag = 'internal scratch']
  %s0 = inlined_call_operand.vmem [shape: f32[16,32], index: 0, kind: input, shape index: {}]
  %s1 = inlined_call_operand.vmem [shape: f32[16,8], index: 1, kind: input, shape index: {}]
  %s2 = inlined_call_operand.vmem [shape: f32[16,8], index: 2, kind: input, shape index: {}]
  %s3 = inlined_call_operand.vmem [shape: f32[16,8], index: 3, kind: input, shape index: {}]
  %s4 = inlined_call_operand.vmem [shape: f32[1,32], index: 4, kind: input, shape index: {}]
  %s5 = inlined_call_operand.vmem [shape: f32[1,32], index: 5, kind: input, shape index: {}]
  %s6 = inlined_call_operand.vmem [shape: bf16[8,8], index: 6, kind: input, shape index: {}]
  %s7 = inlined_call_operand.vmem [shape: bf16[32,32], index: 7, kind: input, shape index: {}]
  %s8 = inlined_call_operand.vmem [shape: bf16[8,32], index: 8, kind: input, shape index: {}]
  %s9 = inlined_call_operand.vmem [shape: f32[1,32], index: 9, kind: input, shape index: {}]
  %s10 = inlined_call_operand.hbm [shape: f32[16,32], index: 10, kind: output, shape index: {}]
  %s11 = sld [smem:[#allocation0]]
  $region50: #{gvp_model_forward.17} parent=0
    _
  %s13 = ssub.s32 1, %s11
  %s14 = scalar_select 0, %s13, %s11
  $region1: #{gvp_model_forward.17} parent=0
    #allocation2 [shape = 'u8[8192]{0}', space=vmem, size = 0x2000, scoped, tag = 'output window, operand 0, single buffered']
    #allocation3 [shape = 's32[1]{0}', space=sflag, size = 0x4, scoped, tag = 'scoped memory for gvp_model_forward.17']
    %15 = vsyncpa [#allocation3], 0
    // Predicated region
    $region2: #{gvp_model_forward.17} parent=1 // pred_check
      _
    $region3: #{gvp_model_forward.17} parent=1 // pred_check_branch
      %17 = sbr.rel (0) target = $region5
    $region4: #{gvp_model_forward.17} parent=1 // pred_region
      _
    $region5: #{gvp_model_forward.17} parent=1 // pred_fallthru
      _
    // Predicated region
    $region6: #{gvp_model_forward.17} parent=1 // pred_check
      _
    $region7: #{gvp_model_forward.17} parent=1 // pred_check_branch
      %19 = sbr.rel (0) target = $region9
    $region8: #{gvp_model_forward.17} parent=1 // pred_region
      _
    $region9: #{gvp_model_forward.17} parent=1 // pred_fallthru
      _
    // Predicated region
    $region10: #{gvp_model_forward.17} parent=1 // pred_check
      _
    $region11: #{gvp_model_forward.17} parent=1 // pred_check_branch
      %21 = sbr.rel (0) target = $region13
    $region12: #{gvp_model_forward.17} parent=1 // pred_region
      _
    $region13: #{gvp_model_forward.17} parent=1 // pred_fallthru
      _
    // Predicated region
    $region14: #{gvp_model_forward.17} parent=1 // pred_check
      _
    $region15: #{gvp_model_forward.17} parent=1 // pred_check_branch
      %23 = sbr.rel (0) target = $region17
    $region16: #{gvp_model_forward.17} parent=1 // pred_region
      _
    $region17: #{gvp_model_forward.17} parent=1 // pred_fallthru
      _
    // Predicated region
    $region18: #{gvp_model_forward.17} parent=1 // pred_check
      _
    $region19: #{gvp_model_forward.17} parent=1 // pred_check_branch
      %25 = sbr.rel (0) target = $region21
    $region20: #{gvp_model_forward.17} parent=1 // pred_region
      _
    $region21: #{gvp_model_forward.17} parent=1 // pred_fallthru
      _
    // Predicated region
    $region22: #{gvp_model_forward.17} parent=1 // pred_check
      _
    $region23: #{gvp_model_forward.17} parent=1 // pred_check_branch
      %27 = sbr.rel (0) target = $region25
    $region24: #{gvp_model_forward.17} parent=1 // pred_region
      _
    $region25: #{gvp_model_forward.17} parent=1 // pred_fallthru
      _
    // Predicated region
    $region26: #{gvp_model_forward.17} parent=1 // pred_check
      _
    $region27: #{gvp_model_forward.17} parent=1 // pred_check_branch
      %29 = sbr.rel (0) target = $region29
    $region28: #{gvp_model_forward.17} parent=1 // pred_region
      _
    $region29: #{gvp_model_forward.17} parent=1 // pred_fallthru
      _
    // Predicated region
    $region30: #{gvp_model_forward.17} parent=1 // pred_check
      _
    $region31: #{gvp_model_forward.17} parent=1 // pred_check_branch
      %31 = sbr.rel (0) target = $region33
    $region32: #{gvp_model_forward.17} parent=1 // pred_region
      _
    $region33: #{gvp_model_forward.17} parent=1 // pred_fallthru
      _
    // Predicated region
    $region34: #{gvp_model_forward.17} parent=1 // pred_check
      _
    $region35: #{gvp_model_forward.17} parent=1 // pred_check_branch
      %33 = sbr.rel (0) target = $region37
    $region36: #{gvp_model_forward.17} parent=1 // pred_region
      _
    $region37: #{gvp_model_forward.17} parent=1 // pred_fallthru
      _
    // Predicated region
    $region38: #{gvp_model_forward.17} parent=1 // pred_check
      _
    $region39: #{gvp_model_forward.17} parent=1 // pred_check_branch
      %35 = sbr.rel (0) target = $region41
    $region40: #{gvp_model_forward.17} parent=1 // pred_region
      _
    $region41: #{gvp_model_forward.17} parent=1 // pred_fallthru
      _
    %v37 = vld [vmem:[%s0] sm:$0xff]
    %v38 = vld [vmem:[%s0 + $0x8] sm:$0xff]
    %v39 = vld [vmem:[%s1] sm:$0xff]
    %v40 = vld [vmem:[%s1 + $0x8] sm:$0xff]
    %v41 = vld [vmem:[%s2] sm:$0xff]
    %v42 = vld [vmem:[%s2 + $0x8] sm:$0xff]
    %v43 = vld [vmem:[%s3] sm:$0xff]
    %v44 = vld [vmem:[%s3 + $0x8] sm:$0xff]
    %v45 = vld [vmem:[%s4] sm:$0x1]
    %v46 = vld [vmem:[%s5] sm:$0x1]
    %vm47 = vcmask 261120
    %v48 = vsel %vm47, %v37, 0.0
    %49 = vadd.xlane.f32.xlu0 %v48
    %v50 = vpop.xlane.xlu0 %49
    %v51 = vsel %vm47, %v38, 0.0
    %52 = vadd.xlane.f32.xlu0 %v51
    %v53 = vpop.xlane.xlu0 %52
    %v54 = vrcp.pop 32.0
    %v55 = vmul.f32 32.0, %v54
    %v56 = vsub.f32 1.0, %v55
    %v57 = vmul.f32 %v54, %v56
    %v58 = vadd.f32 %v54, %v57
    %vm59 = vweird.f32 %v54
    %v60 = vsel %vm59, %v54, %v58
    %v61 = vmul.f32 %v50, %v60
    %v62 = vmul.f32 %v53, %v60
    %v63 = vsub.f32 %v37, %v61
    %v64 = vsub.f32 %v38, %v62
    %v65 = vmul.f32 %v63, %v63
    %v66 = vmul.f32 %v64, %v64
    %v67 = vsel %vm47, %v65, 0.0
    %68 = vadd.xlane.f32.xlu0 %v67
    %v69 = vpop.xlane.xlu0 %68
    %v70 = vsel %vm47, %v66, 0.0
    %71 = vadd.xlane.f32.xlu0 %v70
    %v72 = vpop.xlane.xlu0 %71
    %v73 = vmul.f32 %v69, %v60
    %v74 = vmul.f32 %v72, %v60
    %v75 = vadd.f32 %v73, 1e-05
    %v76 = vadd.f32 %v74, 1e-05
    %v77 = vrsqrt.pop %v75
    %v78 = vmul.f32 %v77, %v75
    %v79 = vmul.f32 %v78, %v77
    %v80 = vmul.f32 0.5, %v79
    %v81 = vsub.f32 1.5, %v80
    %v82 = vmul.f32 %v77, %v81
    %vm83 = vweird.f32 %v75
    %vm84 = vweird.f32 %v77
    %vm85 = vmor %vm83, %vm84
    %v86 = vsel %vm85, %v77, %v82
    %v87 = vrsqrt.pop %v76
    %v88 = vmul.f32 %v87, %v76
    %v89 = vmul.f32 %v88, %v87
    %v90 = vmul.f32 0.5, %v89
    %v91 = vsub.f32 1.5, %v90
    %v92 = vmul.f32 %v87, %v91
    %vm93 = vweird.f32 %v76
    %vm94 = vweird.f32 %v87
    %vm95 = vmor %vm93, %vm94
    %v96 = vsel %vm95, %v87, %v92
    %v97 = vmul.f32 %v63, %v86
    %v98 = vmul.f32 %v64, %v96
    %v100 = vperm.slane %v45, 0
    %v102 = vmul.f32 %v97, %v100
    %v103 = vmul.f32 %v98, %v100
    %v105 = vperm.slane %v46, 0
    %v107 = vadd.f32 %v102, %v105
    %v108 = vadd.f32 %v103, %v105
    %v109 = vmul.f32 %v39, %v39
    %v110 = vmul.f32 %v40, %v40
    %v111 = vmul.f32 %v41, %v41
    %v112 = vmul.f32 %v42, %v42
    %v113 = vadd.f32 %v109, %v111
    %v114 = vadd.f32 %v110, %v112
    %v115 = vmul.f32 %v43, %v43
    %v116 = vmul.f32 %v44, %v44
    %v117 = vadd.f32 %v113, %v115
    %v118 = vadd.f32 %v114, %v116
    %v119 = vmax.f32 %v117, 1e-08
    %v120 = vmax.f32 %v118, 1e-08
    %vm121 = vcmask 64512
    %v122 = vsel %vm121, %v119, 0.0
    %123 = vadd.xlane.f32.xlu0 %v122
    %v124 = vpop.xlane.xlu0 %123
    %v125 = vsel %vm121, %v120, 0.0
    %126 = vadd.xlane.f32.xlu0 %v125
    %v127 = vpop.xlane.xlu0 %126
    %v128 = vrcp.pop 8.0
    %v129 = vmul.f32 8.0, %v128
    %v130 = vsub.f32 1.0, %v129
    %v131 = vmul.f32 %v128, %v130
    %v132 = vadd.f32 %v128, %v131
    %vm133 = vweird.f32 %v128
    %v134 = vsel %vm133, %v128, %v132
    %v135 = vmul.f32 %v124, %v134
    %v136 = vmul.f32 %v127, %v134
    %v137 = vrsqrt.pop %v135
    %v138 = vmul.f32 %v137, %v135
    %v139 = vmul.f32 %v138, %v137
    %v140 = vmul.f32 0.5, %v139
    %v141 = vsub.f32 1.5, %v140
    %v142 = vmul.f32 %v137, %v141
    %vm143 = vweird.f32 %v135
    %vm144 = vweird.f32 %v137
    %vm145 = vmor %vm143, %vm144
    %v146 = vsel %vm145, %v137, %v142
    %v147 = vrsqrt.pop %v136
    %v148 = vmul.f32 %v147, %v136
    %v149 = vmul.f32 %v148, %v147
    %v150 = vmul.f32 0.5, %v149
    %v151 = vsub.f32 1.5, %v150
    %v152 = vmul.f32 %v147, %v151
    %vm153 = vweird.f32 %v136
    %vm154 = vweird.f32 %v147
    %vm155 = vmor %vm153, %vm154
    %v156 = vsel %vm155, %v147, %v152
    %v157 = vmul.f32 %v39, %v146
    %v158 = vmul.f32 %v40, %v156
    %v159 = vmul.f32 %v41, %v146
    %v160 = vmul.f32 %v42, %v156
    %v161 = vmul.f32 %v43, %v146
    %v162 = vmul.f32 %v44, %v156
    %v163 = vld [vmem:[%s6] sm:$0xf]
    %v164 = vld [vmem:[%s7] sm:$0xf]
    %v165 = vld [vmem:[%s7 + $0x4] sm:$0xf]
    %v166 = vld [vmem:[%s7 + $0x8] sm:$0xf]
    %v167 = vld [vmem:[%s7 + $0xc] sm:$0xf]
    %v168 = vld [vmem:[%s8] sm:$0xf]
    %v169 = vld [vmem:[%s9] sm:$0x1]
    %v170 = vpack.c.bf16 %v158, %v157
    %v171 = vpack.c.bf16 %v160, %v159
    %v172 = vpack.c.bf16 %v162, %v161
    %v174 = vsel %vm121, %v170, 0
    %v177 = vsel %vm121, %v171, 0
    %v180 = vsel %vm121, %v172, 0
    %vm182 = vcmask 1043456
    %v184 = vsel %vm182, %v163, 0
    %186 = vmatpush.bf16.msra.mxu0 0
    %187 = vmatpush.bf16.msra.mxu0 0
    %188 = vmatpush.bf16.msra.mxu0 0
    %189 = vmatpush.bf16.msra.mxu0 0
    %190 = vmatpush.bf16.msra.mxu0 0
    %191 = vmatpush.bf16.msra.mxu0 0
    %192 = vmatpush.bf16.msra.mxu0 0
    %193 = vmatpush.bf16.msra.mxu0 %v184
    %194 = vmatmul.bf16.gmra.mxu0 %v174
    %v195 = vpop.f32.mrf.mxu0
    %v196 = vadd.f32 0.0, %v195
    %v197 = vpop.f32.mrf.mxu0
    %v198 = vadd.f32 0.0, %v197
    %199 = vmatmul.bf16.gmra.mxu0 %v177
    %v200 = vpop.f32.mrf.mxu0
    %v201 = vadd.f32 0.0, %v200
    %v202 = vpop.f32.mrf.mxu0
    %v203 = vadd.f32 0.0, %v202
    %204 = vmatmul.bf16.gmra.mxu0 %v180
    %v205 = vpop.f32.mrf.mxu0
    %v206 = vadd.f32 0.0, %v205
    %v207 = vpop.f32.mrf.mxu0
    %v208 = vadd.f32 0.0, %v207
    %209 = vdwg.mxu0
    %v210 = vmul.f32 %v196, %v196
    %v211 = vmul.f32 %v198, %v198
    %v212 = vmul.f32 %v201, %v201
    %v213 = vmul.f32 %v203, %v203
    %v214 = vadd.f32 %v210, %v212
    %v215 = vadd.f32 %v211, %v213
    %v216 = vmul.f32 %v206, %v206
    %v217 = vmul.f32 %v208, %v208
    %v218 = vadd.f32 %v214, %v216
    %v219 = vadd.f32 %v215, %v217
    %v220 = vmax.f32 %v218, 1e-08
    %v221 = vmax.f32 %v219, 1e-08
    %v222 = vrsqrt.pop %v220
    %v223 = vmul.f32 %v222, %v220
    %v224 = vmul.f32 %v223, %v222
    %v225 = vmul.f32 0.5, %v224
    %v226 = vsub.f32 1.5, %v225
    %v227 = vmul.f32 %v222, %v226
    %v228 = vmul.f32 %v220, %v227
    %vm229 = vcmp.eq.f32.partialorder %v220, inf
    %v230 = vsel %vm229, %v220, %v228
    %vm231 = vcmp.eq.f32.partialorder %v220, 0.0
    %v232 = vand.u32 %v220, 2147483648
    %v233 = vsel %vm231, %v232, %v230
    %v234 = vrsqrt.pop %v221
    %v235 = vmul.f32 %v234, %v221
    %v236 = vmul.f32 %v235, %v234
    %v237 = vmul.f32 0.5, %v236
    %v238 = vsub.f32 1.5, %v237
    %v239 = vmul.f32 %v234, %v238
    %v240 = vmul.f32 %v221, %v239
    %vm241 = vcmp.eq.f32.partialorder %v221, inf
    %v242 = vsel %vm241, %v221, %v240
    %vm243 = vcmp.eq.f32.partialorder %v221, 0.0
    %v244 = vand.u32 %v221, 2147483648
    %v245 = vsel %vm243, %v244, %v242
    %v246 = vpack.c.bf16 %v108, %v107
    %v247 = vpack.c.bf16 %v245, %v233
    %v249 = vsel %vm121, %v247, 0
    %v252 = vsel %vm182, %v168, 0
    %254 = vmatpush.bf16.msra.mxu0 0
    %255 = vmatpush.bf16.msra.mxu0 0
    %256 = vmatpush.bf16.msra.mxu0 0
    %257 = vmatpush.bf16.msra.mxu0 0
    %258 = vmatpush.bf16.msra.mxu0 0
    %259 = vmatpush.bf16.msra.mxu0 0
    %260 = vmatpush.bf16.msra.mxu0 0
    %261 = vmatpush.bf16.msra.mxu0 %v252
    %262 = vmatmul.bf16.gmra.mxu0 %v249
    %v263 = vpop.f32.mrf.mxu0
    %v264 = vadd.f32 0.0, %v263
    %v265 = vpop.f32.mrf.mxu0
    %v266 = vadd.f32 0.0, %v265
    %267 = vdwg.mxu0
    %v272 = vunpack.c.l.b16 %v164
    %v273 = vunpack.c.l.b16 %v165
    %v274 = vunpack.c.l.b16 %v166
    %v275 = vunpack.c.l.b16 %v167
    %v276 = vpack.c.b16 %v273, %v272
    %v277 = vpack.c.b16 %v275, %v274
    %v281 = vsel %vm47, %v246, 0
    %283 = vmatpush.bf16.msra.mxu0 0
    %284 = vmatpush.bf16.msra.mxu0 0
    %285 = vmatpush.bf16.msra.mxu0 0
    %286 = vmatpush.bf16.msra.mxu0 0
    %287 = vmatpush.bf16.msra.mxu0 0
    %288 = vmatpush.bf16.msra.mxu0 0
    %289 = vmatpush.bf16.msra.mxu0 %v277
    %290 = vmatpush.bf16.msra.mxu0 %v276
    %291 = vmatmul.bf16.gmra.mxu0 %v281
    %v292 = vpop.f32.mrf.mxu0
    %v293 = vadd.f32 %v264, %v292
    %v294 = vpop.f32.mrf.mxu0
    %v295 = vadd.f32 %v266, %v294
    %296 = vdwg.mxu0
    %v298 = vperm.slane %v169, 0
    %v300 = vadd.f32 %v293, %v298
    %v301 = vadd.f32 %v295, %v298
    %v302 = vmax.f32 %v300, 0.0
    %v303 = vmax.f32 %v301, 0.0
    %304 = vst.msk [vmem:[#allocation2] sm:$0xff] %vm47, %v302
    %305 = vst.msk [vmem:[#allocation2 + $0x8] sm:$0xff] %vm47, %v303
    // Predicated region
    $region42: #{gvp_model_forward.17} parent=1 // pred_check
      _
    $region43: #{gvp_model_forward.17} parent=1 // pred_check_branch
      %307 = sbr.rel (0) target = $region45
    $region44: #{gvp_model_forward.17} parent=1 // pred_region
      %309 = vsyncadd [#allocation3], 0
      %s310 = sshll.u32 [#allocation2], 4
      %s311 = int_to_ptr.vmem [resolvable:$true] %s310
      %s312 = sshll.u32 %s10, 4
      %s313 = int_to_ptr.hbm [resolvable:$true] %s312
      %318 = dma.vmem_to_hbm [thread:$0]  %s311, 256, %s313, [#allocation3], 128, 128, 8
    $region45: #{gvp_model_forward.17} parent=1 // pred_fallthru
      _
    // Predicated region
    $region46: #{gvp_model_forward.17} parent=1 // pred_check
      _
    $region47: #{gvp_model_forward.17} parent=1 // pred_check_branch
      %320 = sbr.rel (0) target = $region49
    $region48: #{gvp_model_forward.17} parent=1 // pred_region
      %322 = dma.done [#allocation3], 256
    $region49: #{gvp_model_forward.17} parent=1 // pred_fallthru
      _
    %323 = vsyncpa [#allocation3], 1

</llo_original>
